<compile_context>
chip_gen: v7x
topology: tpu7x:2x2x1
jax: 0.10.0
libtpu: 0.0.40
codegen_flags: <defaults>
</compile_context>

<pallas_src>
import functools
import math

import jax
import jax.numpy as jnp
from jax import lax
from jax.experimental import pallas as pl
from jax.experimental.pallas import tpu as pltpu

NEG_INF = -1e9

PARAM_ORDER = [
    "wq1", "bq1", "wk1", "bk1", "wv1", "bv1", "wo1", "bo1",
    "wq2", "bq2", "wk2", "bk2", "wv2", "bv2", "wo2", "bo2",
    "n1a", "n1b", "n2a", "n2b",
    "wff1", "bff1", "wff2", "bff2",
]
# Only the big matmul operands are eligible for bf16; biases/LN params stay f32.
MATRIX_PARAMS = {"wq1", "wk1", "wv1", "wo1", "wq2", "wk2", "wv2", "wo2",
                 "wff1", "wff2"}
# Params that absorb the 1/sqrt(head_dim) score scale at stacking time.
SCALE_FOLDED_PARAMS = {"wq1", "bq1", "wq2", "bq2"}


# ---------------------------------------------------------------------------
# In-kernel math helpers (traced inside the Pallas kernel body)
# ---------------------------------------------------------------------------
def _layer_norm(x, alpha, beta, eps=1e-6):
    # LeafNATS LayerNormalization: alpha * (x - mu) / (std + eps) + beta
    # torch.std is unbiased (ddof = 1); eps is added to std (not var).
    # (Intentionally NOT standard LayerNorm -- do not "fix".)
    d = x.shape[-1]
    mu = jnp.mean(x, axis=-1, keepdims=True)
    var = jnp.sum((x - mu) ** 2, axis=-1, keepdims=True) * (1.0 / (d - 1))
    inv = pl.reciprocal(jnp.sqrt(var) + eps, approx=True)   # EUP slot
    return alpha * (x - mu) * inv + beta


def _softmax(x):
    m = jnp.max(x, axis=-1, keepdims=True)
    e = jnp.exp(x - m)
    return e * pl.reciprocal(jnp.sum(e, axis=-1, keepdims=True), approx=True)


def _mha(x2d, kv2d, bt, sq, sk, wq, bq, wk, bk, wv, bv, wo, bo,
         n_heads, mask, compute_dtype):
    """Multi-head attention on a (bt*sq, D) query slab and (bt*sk, D) kv slab.

    * Projections are single full-width matmuls (K = N = D -> full MXU).
    * The 1/sqrt(hh) scale is already folded into wq/bq by the wrapper.
    * q/k/v are cast to the compute dtype once (whole slab), not per head.
    * Per-head score/context products stay as rank-3, single-leading-batch-dim
      einsums (the dot_general form Mosaic is known to lower cleanly).  The
      K=hh contraction there is inherent to MHA; what is no longer split per
      head is the OUTPUT projection: contexts are concatenated once and a
      single K=D dot with wo is issued.
    """
    d = wq.shape[0]
    hh = d // n_heads

    xc = x2d.astype(compute_dtype)
    kvc = kv2d.astype(compute_dtype)
    q = jnp.dot(xc, wq, preferred_element_type=jnp.float32) + bq   # scale pre-folded
    k = jnp.dot(kvc, wk, preferred_element_type=jnp.float32) + bk
    v = jnp.dot(kvc, wv, preferred_element_type=jnp.float32) + bv

    # One whole-slab cast (no-op when compute_dtype == f32).
    qc = q.astype(compute_dtype)
    kc = k.astype(compute_dtype)
    vc = v.astype(compute_dtype)

    # TODO(synk): fold heads into the leading batch dim ((bt*H, sq, hh)) with a
    # single all-heads einsum once multi-batch dot_general / 4-D transposes are
    # validated on Mosaic, and flash-tile the key axis (online softmax) for
    # long Sk so the (bt, sq, sk) f32 scores never fully materialize.
    ctx_heads = []
    for h in range(n_heads):               # static, small loop (n_heads)
        lo = h * hh
        qh = qc[:, lo:lo + hh].reshape(bt, sq, hh)
        kh = kc[:, lo:lo + hh].reshape(bt, sk, hh)
        vh = vc[:, lo:lo + hh].reshape(bt, sk, hh)
        s = jnp.einsum("bqd,bkd->bqk", qh, kh,
                       preferred_element_type=jnp.float32)
        if mask is not None:
            s = jnp.where(mask, s, NEG_INF)
        p = _softmax(s)                    # f32
        ctx_heads.append(
            jnp.einsum("bqk,bkd->bqd", p.astype(compute_dtype), vh,
                       preferred_element_type=jnp.float32).reshape(bt * sq, hh))

    # Head-merge once, then ONE K=D output projection.
    ctx = jnp.concatenate(ctx_heads, axis=-1)           # (bt*sq, D), f32
    return jnp.dot(ctx.astype(compute_dtype), wo,
                   preferred_element_type=jnp.float32) + bo.astype(jnp.float32)


# ---------------------------------------------------------------------------
# Pallas kernel: one decoder-layer step of the fused (batch_tile, layer) grid.
# The running activation is carried in the resident output block.
# ---------------------------------------------------------------------------
def decoder_layer_kernel(
    src_ref, tgt_ref,
    wq1_ref, bq1_ref, wk1_ref, bk1_ref, wv1_ref, bv1_ref, wo1_ref, bo1_ref,
    wq2_ref, bq2_ref, wk2_ref, bk2_ref, wv2_ref, bv2_ref, wo2_ref, bo2_ref,
    n1a_ref, n1b_ref, n2a_ref, n2b_ref,
    wff1_ref, bff1_ref, wff2_ref, bff2_ref,
    out_ref,
    *, n_heads, compute_dtype,
):
    layer = pl.program_id(1)

    # Layer 0: seed the carried activation (out block is resident across l).
    @pl.when(layer == 0)
    def _():
        out_ref[...] = tgt_ref[...]

    bt, sq, d = out_ref.shape
    sk = src_ref.shape[1]

    x = out_ref[...].reshape(bt * sq, d)          # (bt*Sq, D), f32 carry
    src2d = src_ref[...].reshape(bt * sk, d)      # (bt*Sk, D)

    # causal mask: keep (j <= i); torch code masks the strict upper triangle
    row = lax.broadcasted_iota(jnp.int32, (sq, sq), 0)
    col = lax.broadcasted_iota(jnp.int32, (sq, sq), 1)
    causal = (col <= row)[None, :, :]             # broadcasts over the bt axis

    # --- self attention + residual + norm1 ---
    a1 = _mha(x, x, bt, sq, sq,
              wq1_ref[0], bq1_ref[0], wk1_ref[0], bk1_ref[0],
              wv1_ref[0], bv1_ref[0], wo1_ref[0], bo1_ref[0],
              n_heads, causal, compute_dtype)
    x = _layer_norm(x + a1, n1a_ref[0], n1b_ref[0])

    # --- encoder attention + residual + norm2 (src_mask = None) ---
    a2 = _mha(x, src2d, bt, sq, sk,
              wq2_ref[0], bq2_ref[0], wk2_ref[0], bk2_ref[0],
              wv2_ref[0], bv2_ref[0], wo2_ref[0], bo2_ref[0],
              n_heads, None, compute_dtype)
    x = _layer_norm(x + a2, n2a_ref[0], n2b_ref[0])

    # --- position-wise FFN + residual + norm2 (module reuses norm2) ---
    # TODO(synk): for v7x (64 MiB VMEM) at D >= 1024, tile wff1/wff2 along the
    # 4D hidden axis (inner grid axis or pltpu.emit_pipeline over pl.ANY HBM
    # refs with an FFN accumulator) so double-buffered weight prefetch fits.
    h = jnp.maximum(
        jnp.dot(x.astype(compute_dtype), wff1_ref[0],
                preferred_element_type=jnp.float32) + bff1_ref[0], 0.0)
    ff = jnp.dot(h.astype(compute_dtype), wff2_ref[0],
                 preferred_element_type=jnp.float32) + bff2_ref[0]
    x = _layer_norm(x + ff, n2a_ref[0], n2b_ref[0])

    out_ref[...] = x.reshape(bt, sq, d)           # final dropout is identity


# ---------------------------------------------------------------------------
# Wrapper: single pallas_call over grid = (batch_tiles, n_layers)
# ---------------------------------------------------------------------------
def _default_vmem_limit_bytes():
    """~85% of this chip's physical VMEM (v5e/v6e 128 MiB -> ~109 MiB,
    v7x 64 MiB -> ~54 MiB).  Conservative fallback if the query fails."""
    try:
        cap = int(pltpu.get_tpu_info().vmem_capacity_bytes)
    except Exception:
        cap = 64 * 1024 * 1024
    return max(32 * 1024 * 1024, int(cap * 0.85))


def transformer_decoder_pallas(src, tgt, layer_params, n_heads,
                               *, batch_tile=None,
                               compute_dtype=jnp.float32,
                               vmem_limit_bytes=None):
    B, Sq, D = tgt.shape
    _, Sk, _ = src.shape
    L = len(layer_params)
    assert D % n_heads == 0
    if batch_tile is None:
        # Whole batch in one block: on v5e/v6e (single TC) any nb>1 only
        # multiplies weight HBM traffic by nb.  On v7x pass batch_tile=B//2
        # explicitly so both TensorCores get a parallel grid slice.
        batch_tile = B
    assert B % batch_tile == 0
    nb = B // batch_tile

    if vmem_limit_bytes is None:
        vmem_limit_bytes = _default_vmem_limit_bytes()

    src = src.astype(jnp.float32)
    tgt = tgt.astype(jnp.float32)

    # Stack per-layer params on a leading L axis.  The 1/sqrt(head_dim) score
    # scale is folded into wq/bq here (zero in-kernel cost); weight matrices
    # are optionally cast to bf16 at the boundary (halves weight HBM/VMEM
    # traffic, 2x MXU rate).  Biases / LN params stay f32.
    scale = 1.0 / math.sqrt(D // n_heads)
    stacked = []
    for name in PARAM_ORDER:
        a = jnp.stack([p[name] for p in layer_params], axis=0)
        if name in SCALE_FOLDED_PARAMS:
            a = a * scale
        a = a.astype(compute_dtype if name in MATRIX_PARAMS else jnp.float32)
        stacked.append(a)

    def wspec(a):                            # (L, r, c) -> one layer's block per l
        # Block index ignores b, but when b advances (nb > 1) the l index
        # rewinds, so the whole weight stack is re-DMA'd once per batch tile:
        # total weight HBM traffic scales by nb.  Keep nb small.
        return pl.BlockSpec((1,) + a.shape[1:], lambda b, l: (l, 0, 0))

    in_specs = (
        [pl.BlockSpec((batch_tile, Sk, D), lambda b, l: (b, 0, 0)),
         pl.BlockSpec((batch_tile, Sq, D), lambda b, l: (b, 0, 0))]
        + [wspec(a) for a in stacked]
    )
    # Output block index depends only on b -> resident across the layer axis;
    # it doubles as the carried activation (written back when b advances).
    # This is only correct with the layer axis as the innermost grid axis.
    # Lane-density: at production D (multiple of 128; 256 preferred on
    # v6e/v7x) the last dim is lane-dense and writebacks are full `vst`s; the
    # toy D=32 accepts masked stores rather than paying an in-kernel relayout.
    out_spec = pl.BlockSpec((batch_tile, Sq, D), lambda b, l: (b, 0, 0))

    kernel = functools.partial(decoder_layer_kernel,
                               n_heads=n_heads, compute_dtype=compute_dtype)
    return pl.pallas_call(
        kernel,
        grid=(nb, L),                        # layer axis MUST stay innermost
        in_specs=in_specs,
        out_specs=out_spec,
        out_shape=jax.ShapeDtypeStruct((B, Sq, D), jnp.float32),
        compiler_params=pltpu.CompilerParams(
            # batch tiles are independent (megacore-shardable on v7x);
            # the layer axis carries state -> arbitrary (sequential).
            dimension_semantics=("parallel", "arbitrary"),
            vmem_limit_bytes=vmem_limit_bytes,
        ),
    )(src, tgt, *stacked)


# ---------------------------------------------------------------------------
# Pure-JAX reference (mirrors the PyTorch module) for correctness checking
# ---------------------------------------------------------------------------
def _ref_layer(src, tgt, p, n_heads):
    def mha(q_in, kv_in, wq, bq, wk, bk, wv, bv, wo, bo, mask):
        B, Sq, D = q_in.shape
        Sk = kv_in.shape[1]
        hh = D // n_heads
        q = (q_in @ wq + bq).reshape(B, Sq, n_heads, hh).transpose(0, 2, 1, 3)
        k = (kv_in @ wk + bk).reshape(B, Sk, n_heads, hh).transpose(0, 2, 1, 3)
        v = (kv_in @ wv + bv).reshape(B, Sk, n_heads, hh).transpose(0, 2, 1, 3)
        s = jnp.einsum("bhqd,bhkd->bhqk", q, k) / math.sqrt(hh)
        if mask is not None:
            s = jnp.where(mask, s, NEG_INF)
        a = jax.nn.softmax(s, axis=-1)
        cv = jnp.einsum("bhqk,bhkd->bhqd", a, v).transpose(0, 2, 1, 3).reshape(B, Sq, D)
        return cv @ wo + bo

    def ln(x, a, b, eps=1e-6):
        d = x.shape[-1]
        mu = jnp.mean(x, -1, keepdims=True)
        std = jnp.sqrt(jnp.sum((x - mu) ** 2, -1, keepdims=True) / (d - 1))
        return a * (x - mu) / (std + eps) + b

    Sq = tgt.shape[1]
    causal = (jnp.arange(Sq)[None, :] <= jnp.arange(Sq)[:, None])[None, None]
    x = ln(tgt + mha(tgt, tgt, p["wq1"], p["bq1"], p["wk1"], p["bk1"],
                     p["wv1"], p["bv1"], p["wo1"], p["bo1"], causal),
           p["n1a"], p["n1b"])
    x = ln(x + mha(x, src, p["wq2"], p["bq2"], p["wk2"], p["bk2"],
                   p["wv2"], p["bv2"], p["wo2"], p["bo2"], None),
           p["n2a"], p["n2b"])
    h = jnp.maximum(x @ p["wff1"] + p["bff1"], 0.0)
    x = ln(x + (h @ p["wff2"] + p["bff2"]), p["n2a"], p["n2b"])
    return x


def _ref_decoder(src, tgt, layer_params, n_heads):
    x = tgt
    for p in layer_params:
        x = _ref_layer(src, x, p, n_heads)
    return x


# ---------------------------------------------------------------------------
# Deterministic parameter init (matches module shapes; torch Linear-style init)
# ---------------------------------------------------------------------------
def init_layer_params(key, D):
    def lin(k, din, dout):
        bound = 1.0 / math.sqrt(din)
        k1, k2 = jax.random.split(k)
        w = jax.random.uniform(k1, (din, dout), jnp.float32, -bound, bound)
        b = jax.random.uniform(k2, (1, dout), jnp.float32, -bound, bound)
        return w, b

    keys = jax.random.split(key, 10)
    p = {}
    names = ["q1", "k1", "v1", "o1", "q2", "k2", "v2", "o2"]
    for i, nm in enumerate(names):
        w, b = lin(keys[i], D, D)
        p["w" + nm], p["b" + nm] = w, b
    p["n1a"] = jnp.ones((1, D), jnp.float32)
    p["n1b"] = jnp.zeros((1, D), jnp.float32)
    p["n2a"] = jnp.ones((1, D), jnp.float32)
    p["n2b"] = jnp.zeros((1, D), jnp.float32)
    w, b = lin(keys[8], D, 4 * D)
    p["wff1"], p["bff1"] = w, b
    w, b = lin(keys[9], 4 * D, D)
    p["wff2"], p["bff2"] = w, b
    return p


if __name__ == "__main__":
    B, S_SRC, S_TGT, D, H, L = 2, 12, 8, 32, 4, 2

    key = jax.random.PRNGKey(0)
    k_src, k_tgt, k_par = jax.random.split(key, 3)
    src = jax.random.normal(k_src, (B, S_SRC, D), jnp.float32)
    tgt = jax.random.normal(k_tgt, (B, S_TGT, D), jnp.float32)
    layer_params = [init_layer_params(k, D) for k in jax.random.split(k_par, L)]

    with jax.default_matmul_precision("highest"):
        ref = _ref_decoder(src, tgt, layer_params, H)
    ref = jax.block_until_ready(ref)

    # 1) f32 path, whole batch in one block (single fused call over all layers)
    out = transformer_decoder_pallas(src, tgt, layer_params, H)
    out = jax.block_until_ready(out)
    assert out.shape == (B, S_TGT, D)
    assert bool(jnp.all(jnp.isfinite(out)))
    assert bool(jnp.allclose(out, ref, atol=2e-2, rtol=2e-2)), (
        float(jnp.max(jnp.abs(out - ref))))

    # 2) f32 path with the batch split across the parallel grid axis
    #    (v7x-style: batch_tile = B // 2 keeps both TensorCores busy).
    out_bt = transformer_decoder_pallas(src, tgt, layer_params, H,
                                        batch_tile=B // 2)
    out_bt = jax.block_until_ready(out_bt)
    assert bool(jnp.allclose(out_bt, ref, atol=2e-2, rtol=2e-2)), (
        float(jnp.max(jnp.abs(out_bt - ref))))

    # 3) bf16 weights / matmul operands (production lever); LN/softmax stay f32
    out_bf16 = transformer_decoder_pallas(src, tgt, layer_params, H,
                                          compute_dtype=jnp.bfloat16)
    out_bf16 = jax.block_until_ready(out_bf16)
    assert bool(jnp.all(jnp.isfinite(out_bf16)))
    assert bool(jnp.allclose(out_bf16, ref, atol=2.5e-1, rtol=2.5e-1)), (
        float(jnp.max(jnp.abs(out_bf16 - ref))))

    print("KERNEL_OK")
</pallas_src>

<mosaic_0001>
module attributes {stable_mosaic.version = 11 : i64} {
  func.func @decoder_layer_kernel(%arg0: i32, %arg1: i32, %arg2: memref<2x12x32xf32, #tpu.memory_space<vmem>>, %arg3: memref<2x8x32xf32, #tpu.memory_space<vmem>>, %arg4: memref<1x32x32xf32, #tpu.memory_space<vmem>>, %arg5: memref<1x1x32xf32, #tpu.memory_space<vmem>>, %arg6: memref<1x32x32xf32, #tpu.memory_space<vmem>>, %arg7: memref<1x1x32xf32, #tpu.memory_space<vmem>>, %arg8: memref<1x32x32xf32, #tpu.memory_space<vmem>>, %arg9: memref<1x1x32xf32, #tpu.memory_space<vmem>>, %arg10: memref<1x32x32xf32, #tpu.memory_space<vmem>>, %arg11: memref<1x1x32xf32, #tpu.memory_space<vmem>>, %arg12: memref<1x32x32xf32, #tpu.memory_space<vmem>>, %arg13: memref<1x1x32xf32, #tpu.memory_space<vmem>>, %arg14: memref<1x32x32xf32, #tpu.memory_space<vmem>>, %arg15: memref<1x1x32xf32, #tpu.memory_space<vmem>>, %arg16: memref<1x32x32xf32, #tpu.memory_space<vmem>>, %arg17: memref<1x1x32xf32, #tpu.memory_space<vmem>>, %arg18: memref<1x32x32xf32, #tpu.memory_space<vmem>>, %arg19: memref<1x1x32xf32, #tpu.memory_space<vmem>>, %arg20: memref<1x1x32xf32, #tpu.memory_space<vmem>>, %arg21: memref<1x1x32xf32, #tpu.memory_space<vmem>>, %arg22: memref<1x1x32xf32, #tpu.memory_space<vmem>>, %arg23: memref<1x1x32xf32, #tpu.memory_space<vmem>>, %arg24: memref<1x32x128xf32, #tpu.memory_space<vmem>>, %arg25: memref<1x1x128xf32, #tpu.memory_space<vmem>>, %arg26: memref<1x128x32xf32, #tpu.memory_space<vmem>>, %arg27: memref<1x1x32xf32, #tpu.memory_space<vmem>>, %arg28: memref<2x8x32xf32, #tpu.memory_space<vmem>>) attributes {dimension_semantics = [#tpu.dimension_semantics<parallel>, #tpu.dimension_semantics<arbitrary>], iteration_bounds = array<i64: 1, 2>, scalar_prefetch = 0 : i64, scratch_operands = 0 : i64, tpu.core_type = #tpu.core_type<tc>, window_params = [{transform_indices = @transform_0, window_bounds = array<i64: 2, 12, 32>}, {transform_indices = @transform_1, window_bounds = array<i64: 2, 8, 32>}, {transform_indices = @transform_2, window_bounds = array<i64: 1, 32, 32>}, {transform_indices = @transform_3, window_bounds = array<i64: 1, 1, 32>}, {transform_indices = @transform_4, window_bounds = array<i64: 1, 32, 32>}, {transform_indices = @transform_5, window_bounds = array<i64: 1, 1, 32>}, {transform_indices = @transform_6, window_bounds = array<i64: 1, 32, 32>}, {transform_indices = @transform_7, window_bounds = array<i64: 1, 1, 32>}, {transform_indices = @transform_8, window_bounds = array<i64: 1, 32, 32>}, {transform_indices = @transform_9, window_bounds = array<i64: 1, 1, 32>}, {transform_indices = @transform_10, window_bounds = array<i64: 1, 32, 32>}, {transform_indices = @transform_11, window_bounds = array<i64: 1, 1, 32>}, {transform_indices = @transform_12, window_bounds = array<i64: 1, 32, 32>}, {transform_indices = @transform_13, window_bounds = array<i64: 1, 1, 32>}, {transform_indices = @transform_14, window_bounds = array<i64: 1, 32, 32>}, {transform_indices = @transform_15, window_bounds = array<i64: 1, 1, 32>}, {transform_indices = @transform_16, window_bounds = array<i64: 1, 32, 32>}, {transform_indices = @transform_17, window_bounds = array<i64: 1, 1, 32>}, {transform_indices = @transform_18, window_bounds = array<i64: 1, 1, 32>}, {transform_indices = @transform_19, window_bounds = array<i64: 1, 1, 32>}, {transform_indices = @transform_20, window_bounds = array<i64: 1, 1, 32>}, {transform_indices = @transform_21, window_bounds = array<i64: 1, 1, 32>}, {transform_indices = @transform_22, window_bounds = array<i64: 1, 32, 128>}, {transform_indices = @transform_23, window_bounds = array<i64: 1, 1, 128>}, {transform_indices = @transform_24, window_bounds = array<i64: 1, 128, 32>}, {transform_indices = @transform_25, window_bounds = array<i64: 1, 1, 32>}, {transform_indices = @transform_26, window_bounds = array<i64: 2, 8, 32>}]} {
    %c0_i32 = arith.constant 0 : i32
    %0 = arith.cmpi eq, %arg1, %c0_i32 : i32
    %1 = arith.extui %0 : i1 to i32
    %c0_i32_0 = arith.constant 0 : i32
    %2 = arith.cmpi ne, %1, %c0_i32_0 : i32
    scf.if %2 {
      %c0_148 = arith.constant 0 : index
      %c0_149 = arith.constant 0 : index
      %c0_150 = arith.constant 0 : index
      %339 = vector.load %arg3[%c0_148, %c0_149, %c0_150] : memref<2x8x32xf32, #tpu.memory_space<vmem>>, vector<2x8x32xf32>
      %c0_151 = arith.constant 0 : index
      %c0_152 = arith.constant 0 : index
      %c0_153 = arith.constant 0 : index
      %340 = vector.load %arg28[%c0_151, %c0_152, %c0_153] : memref<2x8x32xf32, #tpu.memory_space<vmem>>, vector<2x8x32xf32>
      tpu.vector_store %arg28[%c0_151, %c0_152, %c0_153], %339 {strides = array<i32>} : memref<2x8x32xf32, #tpu.memory_space<vmem>>, vector<2x8x32xf32>,
    } else {
    }
    %c0 = arith.constant 0 : index
    %c0_1 = arith.constant 0 : index
    %c0_2 = arith.constant 0 : index
    %3 = vector.load %arg28[%c0, %c0_1, %c0_2] : memref<2x8x32xf32, #tpu.memory_space<vmem>>, vector<2x8x32xf32>
    %4 = vector.shape_cast %3 : vector<2x8x32xf32> to vector<16x32xf32>
    %c0_3 = arith.constant 0 : index
    %c0_4 = arith.constant 0 : index
    %c0_5 = arith.constant 0 : index
    %5 = vector.load %arg2[%c0_3, %c0_4, %c0_5] : memref<2x12x32xf32, #tpu.memory_space<vmem>>, vector<2x12x32xf32>
    %6 = vector.shape_cast %5 : vector<2x12x32xf32> to vector<24x32xf32>
    %7 = tpu.iota {dimensions = array<i32: 0>} : vector<8x8xi32>
    %8 = tpu.iota {dimensions = array<i32: 1>} : vector<8x8xi32>
    %9 = arith.cmpi sle, %8, %7 : vector<8x8xi32>
    %10 = vector.shape_cast %9 : vector<8x8xi1> to vector<1x8x8xi1>
    %c0_6 = arith.constant 0 : index
    %c0_7 = arith.constant 0 : index
    %c0_8 = arith.constant 0 : index
    %11 = vector.load %arg4[%c0_6, %c0_7, %c0_8] : memref<1x32x32xf32, #tpu.memory_space<vmem>>, vector<1x32x32xf32>
    %12 = vector.shape_cast %11 : vector<1x32x32xf32> to vector<32x32xf32>
    %c0_9 = arith.constant 0 : index
    %c0_10 = arith.constant 0 : index
    %c0_11 = arith.constant 0 : index
    %13 = vector.load %arg5[%c0_9, %c0_10, %c0_11] : memref<1x1x32xf32, #tpu.memory_space<vmem>>, vector<1x1x32xf32>
    %14 = vector.shape_cast %13 : vector<1x1x32xf32> to vector<1x32xf32>
    %c0_12 = arith.constant 0 : index
    %c0_13 = arith.constant 0 : index
    %c0_14 = arith.constant 0 : index
    %15 = vector.load %arg6[%c0_12, %c0_13, %c0_14] : memref<1x32x32xf32, #tpu.memory_space<vmem>>, vector<1x32x32xf32>
    %16 = vector.shape_cast %15 : vector<1x32x32xf32> to vector<32x32xf32>
    %c0_15 = arith.constant 0 : index
    %c0_16 = arith.constant 0 : index
    %c0_17 = arith.constant 0 : index
    %17 = vector.load %arg7[%c0_15, %c0_16, %c0_17] : memref<1x1x32xf32, #tpu.memory_space<vmem>>, vector<1x1x32xf32>
    %18 = vector.shape_cast %17 : vector<1x1x32xf32> to vector<1x32xf32>
    %c0_18 = arith.constant 0 : index
    %c0_19 = arith.constant 0 : index
    %c0_20 = arith.constant 0 : index
    %19 = vector.load %arg8[%c0_18, %c0_19, %c0_20] : memref<1x32x32xf32, #tpu.memory_space<vmem>>, vector<1x32x32xf32>
    %20 = vector.shape_cast %19 : vector<1x32x32xf32> to vector<32x32xf32>
    %c0_21 = arith.constant 0 : index
    %c0_22 = arith.constant 0 : index
    %c0_23 = arith.constant 0 : index
    %21 = vector.load %arg9[%c0_21, %c0_22, %c0_23] : memref<1x1x32xf32, #tpu.memory_space<vmem>>, vector<1x1x32xf32>
    %22 = vector.shape_cast %21 : vector<1x1x32xf32> to vector<1x32xf32>
    %c0_24 = arith.constant 0 : index
    %c0_25 = arith.constant 0 : index
    %c0_26 = arith.constant 0 : index
    %23 = vector.load %arg10[%c0_24, %c0_25, %c0_26] : memref<1x32x32xf32, #tpu.memory_space<vmem>>, vector<1x32x32xf32>
    %24 = vector.shape_cast %23 : vector<1x32x32xf32> to vector<32x32xf32>
    %c0_27 = arith.constant 0 : index
    %c0_28 = arith.constant 0 : index
    %c0_29 = arith.constant 0 : index
    %25 = vector.load %arg11[%c0_27, %c0_28, %c0_29] : memref<1x1x32xf32, #tpu.memory_space<vmem>>, vector<1x1x32xf32>
    %26 = vector.shape_cast %25 : vector<1x1x32xf32> to vector<1x32xf32>
    %cst = arith.constant dense<0.000000e+00> : vector<16x32xf32>
    %27 = tpu.matmul %4, %12, %cst {dimension_numbers = #tpu.dot_dimension_numbers<[1], [0], [0], [1], [0, 0, 1, 1], [], []>} : vector<16x32xf32>, vector<32x32xf32>, vector<16x32xf32> -> vector<16x32xf32>
    %28 = vector.broadcast %14 : vector<1x32xf32> to vector<16x32xf32>
    %29 = arith.addf %27, %28 : vector<16x32xf32>
    %cst_30 = arith.constant dense<0.000000e+00> : vector<16x32xf32>
    %30 = tpu.matmul %4, %16, %cst_30 {dimension_numbers = #tpu.dot_dimension_numbers<[1], [0], [0], [1], [0, 0, 1, 1], [], []>} : vector<16x32xf32>, vector<32x32xf32>, vector<16x32xf32> -> vector<16x32xf32>
    %31 = vector.broadcast %18 : vector<1x32xf32> to vector<16x32xf32>
    %32 = arith.addf %30, %31 : vector<16x32xf32>
    %cst_31 = arith.constant dense<0.000000e+00> : vector<16x32xf32>
    %33 = tpu.matmul %4, %20, %cst_31 {dimension_numbers = #tpu.dot_dimension_numbers<[1], [0], [0], [1], [0, 0, 1, 1], [], []>} : vector<16x32xf32>, vector<32x32xf32>, vector<16x32xf32> -> vector<16x32xf32>
    %34 = vector.broadcast %22 : vector<1x32xf32> to vector<16x32xf32>
    %35 = arith.addf %33, %34 : vector<16x32xf32>
    %36 = vector.extract_strided_slice %29 {offsets = [0, 0], sizes = [16, 8], strides = [1, 1]} : vector<16x32xf32> to vector<16x8xf32>
    %37 = vector.shape_cast %36 : vector<16x8xf32> to vector<2x8x8xf32>
    %38 = vector.extract_strided_slice %32 {offsets = [0, 0], sizes = [16, 8], strides = [1, 1]} : vector<16x32xf32> to vector<16x8xf32>
    %39 = vector.shape_cast %38 : vector<16x8xf32> to vector<2x8x8xf32>
    %40 = vector.extract_strided_slice %35 {offsets = [0, 0], sizes = [16, 8], strides = [1, 1]} : vector<16x32xf32> to vector<16x8xf32>
    %41 = vector.shape_cast %40 : vector<16x8xf32> to vector<2x8x8xf32>
    "tpu.trace_start"() <{level = 10 : i32, message = "bqd,bkd->bqk"}> : () -> ()
    %cst_32 = arith.constant dense<0.000000e+00> : vector<2x8x8xf32>
    %42 = tpu.matmul %37, %39, %cst_32 {dimension_numbers = #tpu.dot_dimension_numbers<[2], [2], [1], [1], [0, 0, 0, 1, 1, 1], [0], [0]>} : vector<2x8x8xf32>, vector<2x8x8xf32>, vector<2x8x8xf32> -> vector<2x8x8xf32>
    %cst_33 = arith.constant -1.000000e+09 : f32
    "tpu.trace_stop"() : () -> ()
    %43 = vector.shape_cast %10 : vector<1x8x8xi1> to vector<1x8x8xi1>
    %44 = vector.broadcast %43 : vector<1x8x8xi1> to vector<2x8x8xi1>
    %45 = vector.broadcast %cst_33 : f32 to vector<2x8x8xf32>
    %46 = arith.select %44, %42, %45 : vector<2x8x8xi1>, vector<2x8x8xf32>
    %cst_34 = arith.constant dense<0xFF800000> : vector<2x8xf32>
    %47 = vector.multi_reduction <maximumf>, %46, %cst_34 [2] : vector<2x8x8xf32> to vector<2x8xf32>
    %48 = vector.shape_cast %47 : vector<2x8xf32> to vector<2x8x1xf32>
    %49 = vector.broadcast %48 : vector<2x8x1xf32> to vector<2x8x8xf32>
    %50 = arith.subf %46, %49 : vector<2x8x8xf32>
    %51 = math.exp %50 : vector<2x8x8xf32>
    %cst_35 = arith.constant dense<0.000000e+00> : vector<2x8xf32>
    %52 = vector.multi_reduction <add>, %51, %cst_35 [2] : vector<2x8x8xf32> to vector<2x8xf32>
    %53 = vector.shape_cast %52 : vector<2x8xf32> to vector<2x8x1xf32>
    %54 = tpu.reciprocal %53 {approx = true} : vector<2x8x1xf32> -> vector<2x8x1xf32>
    %55 = vector.broadcast %54 : vector<2x8x1xf32> to vector<2x8x8xf32>
    %56 = arith.mulf %51, %55 : vector<2x8x8xf32>
    "tpu.trace_start"() <{level = 10 : i32, message = "bqk,bkd->bqd"}> : () -> ()
    %cst_36 = arith.constant dense<0.000000e+00> : vector<2x8x8xf32>
    %57 = tpu.matmul %56, %41, %cst_36 {dimension_numbers = #tpu.dot_dimension_numbers<[2], [1], [1], [2], [0, 0, 0, 1, 1, 2], [0], [0]>} : vector<2x8x8xf32>, vector<2x8x8xf32>, vector<2x8x8xf32> -> vector<2x8x8xf32>
    "tpu.trace_stop"() : () -> ()
    %58 = vector.shape_cast %57 : vector<2x8x8xf32> to vector<16x8xf32>
    %59 = vector.extract_strided_slice %29 {offsets = [0, 8], sizes = [16, 8], strides = [1, 1]} : vector<16x32xf32> to vector<16x8xf32>
    %60 = vector.shape_cast %59 : vector<16x8xf32> to vector<2x8x8xf32>
    %61 = vector.extract_strided_slice %32 {offsets = [0, 8], sizes = [16, 8], strides = [1, 1]} : vector<16x32xf32> to vector<16x8xf32>
    %62 = vector.shape_cast %61 : vector<16x8xf32> to vector<2x8x8xf32>
    %63 = vector.extract_strided_slice %35 {offsets = [0, 8], sizes = [16, 8], strides = [1, 1]} : vector<16x32xf32> to vector<16x8xf32>
    %64 = vector.shape_cast %63 : vector<16x8xf32> to vector<2x8x8xf32>
    "tpu.trace_start"() <{level = 10 : i32, message = "bqd,bkd->bqk"}> : () -> ()
    %cst_37 = arith.constant dense<0.000000e+00> : vector<2x8x8xf32>
    %65 = tpu.matmul %60, %62, %cst_37 {dimension_numbers = #tpu.dot_dimension_numbers<[2], [2], [1], [1], [0, 0, 0, 1, 1, 1], [0], [0]>} : vector<2x8x8xf32>, vector<2x8x8xf32>, vector<2x8x8xf32> -> vector<2x8x8xf32>
    %cst_38 = arith.constant -1.000000e+09 : f32
    "tpu.trace_stop"() : () -> ()
    %66 = vector.shape_cast %10 : vector<1x8x8xi1> to vector<1x8x8xi1>
    %67 = vector.broadcast %66 : vector<1x8x8xi1> to vector<2x8x8xi1>
    %68 = vector.broadcast %cst_38 : f32 to vector<2x8x8xf32>
    %69 = arith.select %67, %65, %68 : vector<2x8x8xi1>, vector<2x8x8xf32>
    %cst_39 = arith.constant dense<0xFF800000> : vector<2x8xf32>
    %70 = vector.multi_reduction <maximumf>, %69, %cst_39 [2] : vector<2x8x8xf32> to vector<2x8xf32>
    %71 = vector.shape_cast %70 : vector<2x8xf32> to vector<2x8x1xf32>
    %72 = vector.broadcast %71 : vector<2x8x1xf32> to vector<2x8x8xf32>
    %73 = arith.subf %69, %72 : vector<2x8x8xf32>
    %74 = math.exp %73 : vector<2x8x8xf32>
    %cst_40 = arith.constant dense<0.000000e+00> : vector<2x8xf32>
    %75 = vector.multi_reduction <add>, %74, %cst_40 [2] : vector<2x8x8xf32> to vector<2x8xf32>
    %76 = vector.shape_cast %75 : vector<2x8xf32> to vector<2x8x1xf32>
    %77 = tpu.reciprocal %76 {approx = true} : vector<2x8x1xf32> -> vector<2x8x1xf32>
    %78 = vector.broadcast %77 : vector<2x8x1xf32> to vector<2x8x8xf32>
    %79 = arith.mulf %74, %78 : vector<2x8x8xf32>
    "tpu.trace_start"() <{level = 10 : i32, message = "bqk,bkd->bqd"}> : () -> ()
    %cst_41 = arith.constant dense<0.000000e+00> : vector<2x8x8xf32>
    %80 = tpu.matmul %79, %64, %cst_41 {dimension_numbers = #tpu.dot_dimension_numbers<[2], [1], [1], [2], [0, 0, 0, 1, 1, 2], [0], [0]>} : vector<2x8x8xf32>, vector<2x8x8xf32>, vector<2x8x8xf32> -> vector<2x8x8xf32>
    "tpu.trace_stop"() : () -> ()
    %81 = vector.shape_cast %80 : vector<2x8x8xf32> to vector<16x8xf32>
    %82 = vector.extract_strided_slice %29 {offsets = [0, 16], sizes = [16, 8], strides = [1, 1]} : vector<16x32xf32> to vector<16x8xf32>
    %83 = vector.shape_cast %82 : vector<16x8xf32> to vector<2x8x8xf32>
    %84 = vector.extract_strided_slice %32 {offsets = [0, 16], sizes = [16, 8], strides = [1, 1]} : vector<16x32xf32> to vector<16x8xf32>
    %85 = vector.shape_cast %84 : vector<16x8xf32> to vector<2x8x8xf32>
    %86 = vector.extract_strided_slice %35 {offsets = [0, 16], sizes = [16, 8], strides = [1, 1]} : vector<16x32xf32> to vector<16x8xf32>
    %87 = vector.shape_cast %86 : vector<16x8xf32> to vector<2x8x8xf32>
    "tpu.trace_start"() <{level = 10 : i32, message = "bqd,bkd->bqk"}> : () -> ()
    %cst_42 = arith.constant dense<0.000000e+00> : vector<2x8x8xf32>
    %88 = tpu.matmul %83, %85, %cst_42 {dimension_numbers = #tpu.dot_dimension_numbers<[2], [2], [1], [1], [0, 0, 0, 1, 1, 1], [0], [0]>} : vector<2x8x8xf32>, vector<2x8x8xf32>, vector<2x8x8xf32> -> vector<2x8x8xf32>
    %cst_43 = arith.constant -1.000000e+09 : f32
    "tpu.trace_stop"() : () -> ()
    %89 = vector.shape_cast %10 : vector<1x8x8xi1> to vector<1x8x8xi1>
    %90 = vector.broadcast %89 : vector<1x8x8xi1> to vector<2x8x8xi1>
    %91 = vector.broadcast %cst_43 : f32 to vector<2x8x8xf32>
    %92 = arith.select %90, %88, %91 : vector<2x8x8xi1>, vector<2x8x8xf32>
    %cst_44 = arith.constant dense<0xFF800000> : vector<2x8xf32>
    %93 = vector.multi_reduction <maximumf>, %92, %cst_44 [2] : vector<2x8x8xf32> to vector<2x8xf32>
    %94 = vector.shape_cast %93 : vector<2x8xf32> to vector<2x8x1xf32>
    %95 = vector.broadcast %94 : vector<2x8x1xf32> to vector<2x8x8xf32>
    %96 = arith.subf %92, %95 : vector<2x8x8xf32>
    %97 = math.exp %96 : vector<2x8x8xf32>
    %cst_45 = arith.constant dense<0.000000e+00> : vector<2x8xf32>
    %98 = vector.multi_reduction <add>, %97, %cst_45 [2] : vector<2x8x8xf32> to vector<2x8xf32>
    %99 = vector.shape_cast %98 : vector<2x8xf32> to vector<2x8x1xf32>
    %100 = tpu.reciprocal %99 {approx = true} : vector<2x8x1xf32> -> vector<2x8x1xf32>
    %101 = vector.broadcast %100 : vector<2x8x1xf32> to vector<2x8x8xf32>
    %102 = arith.mulf %97, %101 : vector<2x8x8xf32>
    "tpu.trace_start"() <{level = 10 : i32, message = "bqk,bkd->bqd"}> : () -> ()
    %cst_46 = arith.constant dense<0.000000e+00> : vector<2x8x8xf32>
    %103 = tpu.matmul %102, %87, %cst_46 {dimension_numbers = #tpu.dot_dimension_numbers<[2], [1], [1], [2], [0, 0, 0, 1, 1, 2], [0], [0]>} : vector<2x8x8xf32>, vector<2x8x8xf32>, vector<2x8x8xf32> -> vector<2x8x8xf32>
    "tpu.trace_stop"() : () -> ()
    %104 = vector.shape_cast %103 : vector<2x8x8xf32> to vector<16x8xf32>
    %105 = vector.extract_strided_slice %29 {offsets = [0, 24], sizes = [16, 8], strides = [1, 1]} : vector<16x32xf32> to vector<16x8xf32>
    %106 = vector.shape_cast %105 : vector<16x8xf32> to vector<2x8x8xf32>
    %107 = vector.extract_strided_slice %32 {offsets = [0, 24], sizes = [16, 8], strides = [1, 1]} : vector<16x32xf32> to vector<16x8xf32>
    %108 = vector.shape_cast %107 : vector<16x8xf32> to vector<2x8x8xf32>
    %109 = vector.extract_strided_slice %35 {offsets = [0, 24], sizes = [16, 8], strides = [1, 1]} : vector<16x32xf32> to vector<16x8xf32>
    %110 = vector.shape_cast %109 : vector<16x8xf32> to vector<2x8x8xf32>
    "tpu.trace_start"() <{level = 10 : i32, message = "bqd,bkd->bqk"}> : () -> ()
    %cst_47 = arith.constant dense<0.000000e+00> : vector<2x8x8xf32>
    %111 = tpu.matmul %106, %108, %cst_47 {dimension_numbers = #tpu.dot_dimension_numbers<[2], [2], [1], [1], [0, 0, 0, 1, 1, 1], [0], [0]>} : vector<2x8x8xf32>, vector<2x8x8xf32>, vector<2x8x8xf32> -> vector<2x8x8xf32>
    %cst_48 = arith.constant -1.000000e+09 : f32
    "tpu.trace_stop"() : () -> ()
    %112 = vector.shape_cast %10 : vector<1x8x8xi1> to vector<1x8x8xi1>
    %113 = vector.broadcast %112 : vector<1x8x8xi1> to vector<2x8x8xi1>
    %114 = vector.broadcast %cst_48 : f32 to vector<2x8x8xf32>
    %115 = arith.select %113, %111, %114 : vector<2x8x8xi1>, vector<2x8x8xf32>
    %cst_49 = arith.constant dense<0xFF800000> : vector<2x8xf32>
    %116 = vector.multi_reduction <maximumf>, %115, %cst_49 [2] : vector<2x8x8xf32> to vector<2x8xf32>
    %117 = vector.shape_cast %116 : vector<2x8xf32> to vector<2x8x1xf32>
    %118 = vector.broadcast %117 : vector<2x8x1xf32> to vector<2x8x8xf32>
    %119 = arith.subf %115, %118 : vector<2x8x8xf32>
    %120 = math.exp %119 : vector<2x8x8xf32>
    %cst_50 = arith.constant dense<0.000000e+00> : vector<2x8xf32>
    %121 = vector.multi_reduction <add>, %120, %cst_50 [2] : vector<2x8x8xf32> to vector<2x8xf32>
    %122 = vector.shape_cast %121 : vector<2x8xf32> to vector<2x8x1xf32>
    %123 = tpu.reciprocal %122 {approx = true} : vector<2x8x1xf32> -> vector<2x8x1xf32>
    %124 = vector.broadcast %123 : vector<2x8x1xf32> to vector<2x8x8xf32>
    %125 = arith.mulf %120, %124 : vector<2x8x8xf32>
    "tpu.trace_start"() <{level = 10 : i32, message = "bqk,bkd->bqd"}> : () -> ()
    %cst_51 = arith.constant dense<0.000000e+00> : vector<2x8x8xf32>
    %126 = tpu.matmul %125, %110, %cst_51 {dimension_numbers = #tpu.dot_dimension_numbers<[2], [1], [1], [2], [0, 0, 0, 1, 1, 2], [0], [0]>} : vector<2x8x8xf32>, vector<2x8x8xf32>, vector<2x8x8xf32> -> vector<2x8x8xf32>
    "tpu.trace_stop"() : () -> ()
    %127 = vector.shape_cast %126 : vector<2x8x8xf32> to vector<16x8xf32>
    %128 = tpu.concatenate %58, %81, %104, %127 in 1 : vector<16x8xf32>, vector<16x8xf32>, vector<16x8xf32>, vector<16x8xf32> -> vector<16x32xf32>
    %cst_52 = arith.constant dense<0.000000e+00> : vector<16x32xf32>
    %129 = tpu.matmul %128, %24, %cst_52 {dimension_numbers = #tpu.dot_dimension_numbers<[1], [0], [0], [1], [0, 0, 1, 1], [], []>} : vector<16x32xf32>, vector<32x32xf32>, vector<16x32xf32> -> vector<16x32xf32>
    %130 = vector.broadcast %26 : vector<1x32xf32> to vector<16x32xf32>
    %131 = arith.addf %129, %130 : vector<16x32xf32>
    %132 = arith.addf %4, %131 : vector<16x32xf32>
    %c0_53 = arith.constant 0 : index
    %c0_54 = arith.constant 0 : index
    %c0_55 = arith.constant 0 : index
    %133 = vector.load %arg20[%c0_53, %c0_54, %c0_55] : memref<1x1x32xf32, #tpu.memory_space<vmem>>, vector<1x1x32xf32>
    %134 = vector.shape_cast %133 : vector<1x1x32xf32> to vector<1x32xf32>
    %c0_56 = arith.constant 0 : index
    %c0_57 = arith.constant 0 : index
    %c0_58 = arith.constant 0 : index
    %135 = vector.load %arg21[%c0_56, %c0_57, %c0_58] : memref<1x1x32xf32, #tpu.memory_space<vmem>>, vector<1x1x32xf32>
    %136 = vector.shape_cast %135 : vector<1x1x32xf32> to vector<1x32xf32>
    %cst_59 = arith.constant dense<0.000000e+00> : vector<16xf32>
    %137 = vector.multi_reduction <add>, %132, %cst_59 [1] : vector<16x32xf32> to vector<16xf32>
    %138 = vector.shape_cast %137 : vector<16xf32> to vector<16x1xf32>
    %cst_60 = arith.constant 3.200000e+01 : f32
    %139 = vector.broadcast %cst_60 : f32 to vector<16x1xf32>
    %140 = arith.divf %138, %139 : vector<16x1xf32>
    %141 = vector.broadcast %140 : vector<16x1xf32> to vector<16x32xf32>
    %142 = arith.subf %132, %141 : vector<16x32xf32>
    %143 = arith.mulf %142, %142 : vector<16x32xf32>
    %cst_61 = arith.constant dense<0.000000e+00> : vector<16xf32>
    %144 = vector.multi_reduction <add>, %143, %cst_61 [1] : vector<16x32xf32> to vector<16xf32>
    %145 = vector.shape_cast %144 : vector<16xf32> to vector<16x1xf32>
    %cst_62 = arith.constant 0.0322580636 : f32
    %146 = vector.broadcast %cst_62 : f32 to vector<16x1xf32>
    %147 = arith.mulf %145, %146 : vector<16x1xf32>
    %148 = math.sqrt %147 : vector<16x1xf32>
    %cst_63 = arith.constant 9.99999997E-7 : f32
    %149 = vector.broadcast %cst_63 : f32 to vector<16x1xf32>
    %150 = arith.addf %148, %149 : vector<16x1xf32>
    %151 = tpu.reciprocal %150 {approx = true} : vector<16x1xf32> -> vector<16x1xf32>
    %152 = vector.broadcast %140 : vector<16x1xf32> to vector<16x32xf32>
    %153 = arith.subf %132, %152 : vector<16x32xf32>
    %154 = vector.broadcast %134 : vector<1x32xf32> to vector<16x32xf32>
    %155 = arith.mulf %154, %153 : vector<16x32xf32>
    %156 = vector.broadcast %151 : vector<16x1xf32> to vector<16x32xf32>
    %157 = arith.mulf %155, %156 : vector<16x32xf32>
    %158 = vector.broadcast %136 : vector<1x32xf32> to vector<16x32xf32>
    %159 = arith.addf %157, %158 : vector<16x32xf32>
    %c0_64 = arith.constant 0 : index
    %c0_65 = arith.constant 0 : index
    %c0_66 = arith.constant 0 : index
    %160 = vector.load %arg12[%c0_64, %c0_65, %c0_66] : memref<1x32x32xf32, #tpu.memory_space<vmem>>, vector<1x32x32xf32>
    %161 = vector.shape_cast %160 : vector<1x32x32xf32> to vector<32x32xf32>
    %c0_67 = arith.constant 0 : index
    %c0_68 = arith.constant 0 : index
    %c0_69 = arith.constant 0 : index
    %162 = vector.load %arg13[%c0_67, %c0_68, %c0_69] : memref<1x1x32xf32, #tpu.memory_space<vmem>>, vector<1x1x32xf32>
    %163 = vector.shape_cast %162 : vector<1x1x32xf32> to vector<1x32xf32>
    %c0_70 = arith.constant 0 : index
    %c0_71 = arith.constant 0 : index
    %c0_72 = arith.constant 0 : index
    %164 = vector.load %arg14[%c0_70, %c0_71, %c0_72] : memref<1x32x32xf32, #tpu.memory_space<vmem>>, vector<1x32x32xf32>
    %165 = vector.shape_cast %164 : vector<1x32x32xf32> to vector<32x32xf32>
    %c0_73 = arith.constant 0 : index
    %c0_74 = arith.constant 0 : index
    %c0_75 = arith.constant 0 : index
    %166 = vector.load %arg15[%c0_73, %c0_74, %c0_75] : memref<1x1x32xf32, #tpu.memory_space<vmem>>, vector<1x1x32xf32>
    %167 = vector.shape_cast %166 : vector<1x1x32xf32> to vector<1x32xf32>
    %c0_76 = arith.constant 0 : index
    %c0_77 = arith.constant 0 : index
    %c0_78 = arith.constant 0 : index
    %168 = vector.load %arg16[%c0_76, %c0_77, %c0_78] : memref<1x32x32xf32, #tpu.memory_space<vmem>>, vector<1x32x32xf32>
    %169 = vector.shape_cast %168 : vector<1x32x32xf32> to vector<32x32xf32>
    %c0_79 = arith.constant 0 : index
    %c0_80 = arith.constant 0 : index
    %c0_81 = arith.constant 0 : index
    %170 = vector.load %arg17[%c0_79, %c0_80, %c0_81] : memref<1x1x32xf32, #tpu.memory_space<vmem>>, vector<1x1x32xf32>
    %171 = vector.shape_cast %170 : vector<1x1x32xf32> to vector<1x32xf32>
    %c0_82 = arith.constant 0 : index
    %c0_83 = arith.constant 0 : index
    %c0_84 = arith.constant 0 : index
    %172 = vector.load %arg18[%c0_82, %c0_83, %c0_84] : memref<1x32x32xf32, #tpu.memory_space<vmem>>, vector<1x32x32xf32>
    %173 = vector.shape_cast %172 : vector<1x32x32xf32> to vector<32x32xf32>
    %c0_85 = arith.constant 0 : index
    %c0_86 = arith.constant 0 : index
    %c0_87 = arith.constant 0 : index
    %174 = vector.load %arg19[%c0_85, %c0_86, %c0_87] : memref<1x1x32xf32, #tpu.memory_space<vmem>>, vector<1x1x32xf32>
    %175 = vector.shape_cast %174 : vector<1x1x32xf32> to vector<1x32xf32>
    %cst_88 = arith.constant dense<0.000000e+00> : vector<16x32xf32>
    %176 = tpu.matmul %159, %161, %cst_88 {dimension_numbers = #tpu.dot_dimension_numbers<[1], [0], [0], [1], [0, 0, 1, 1], [], []>} : vector<16x32xf32>, vector<32x32xf32>, vector<16x32xf32> -> vector<16x32xf32>
    %177 = vector.broadcast %163 : vector<1x32xf32> to vector<16x32xf32>
    %178 = arith.addf %176, %177 : vector<16x32xf32>
    %cst_89 = arith.constant dense<0.000000e+00> : vector<24x32xf32>
    %179 = tpu.matmul %6, %165, %cst_89 {dimension_numbers = #tpu.dot_dimension_numbers<[1], [0], [0], [1], [0, 0, 1, 1], [], []>} : vector<24x32xf32>, vector<32x32xf32>, vector<24x32xf32> -> vector<24x32xf32>
    %180 = vector.broadcast %167 : vector<1x32xf32> to vector<24x32xf32>
    %181 = arith.addf %179, %180 : vector<24x32xf32>
    %cst_90 = arith.constant dense<0.000000e+00> : vector<24x32xf32>
    %182 = tpu.matmul %6, %169, %cst_90 {dimension_numbers = #tpu.dot_dimension_numbers<[1], [0], [0], [1], [0, 0, 1, 1], [], []>} : vector<24x32xf32>, vector<32x32xf32>, vector<24x32xf32> -> vector<24x32xf32>
    %183 = vector.broadcast %171 : vector<1x32xf32> to vector<24x32xf32>
    %184 = arith.addf %182, %183 : vector<24x32xf32>
    %185 = vector.extract_strided_slice %178 {offsets = [0, 0], sizes = [16, 8], strides = [1, 1]} : vector<16x32xf32> to vector<16x8xf32>
    %186 = vector.shape_cast %185 : vector<16x8xf32> to vector<2x8x8xf32>
    %187 = vector.extract_strided_slice %181 {offsets = [0, 0], sizes = [24, 8], strides = [1, 1]} : vector<24x32xf32> to vector<24x8xf32>
    %188 = vector.shape_cast %187 : vector<24x8xf32> to vector<2x12x8xf32>
    %189 = vector.extract_strided_slice %184 {offsets = [0, 0], sizes = [24, 8], strides = [1, 1]} : vector<24x32xf32> to vector<24x8xf32>
    %190 = vector.shape_cast %189 : vector<24x8xf32> to vector<2x12x8xf32>
    "tpu.trace_start"() <{level = 10 : i32, message = "bqd,bkd->bqk"}> : () -> ()
    %cst_91 = arith.constant dense<0.000000e+00> : vector<2x8x12xf32>
    %191 = tpu.matmul %186, %188, %cst_91 {dimension_numbers = #tpu.dot_dimension_numbers<[2], [2], [1], [1], [0, 0, 0, 1, 1, 1], [0], [0]>} : vector<2x8x8xf32>, vector<2x12x8xf32>, vector<2x8x12xf32> -> vector<2x8x12xf32>
    "tpu.trace_stop"() : () -> ()
    %cst_92 = arith.constant dense<0xFF800000> : vector<2x8xf32>
    %192 = vector.multi_reduction <maximumf>, %191, %cst_92 [2] : vector<2x8x12xf32> to vector<2x8xf32>
    %193 = vector.shape_cast %192 : vector<2x8xf32> to vector<2x8x1xf32>
    %194 = vector.broadcast %193 : vector<2x8x1xf32> to vector<2x8x12xf32>
    %195 = arith.subf %191, %194 : vector<2x8x12xf32>
    %196 = math.exp %195 : vector<2x8x12xf32>
    %cst_93 = arith.constant dense<0.000000e+00> : vector<2x8xf32>
    %197 = vector.multi_reduction <add>, %196, %cst_93 [2] : vector<2x8x12xf32> to vector<2x8xf32>
    %198 = vector.shape_cast %197 : vector<2x8xf32> to vector<2x8x1xf32>
    %199 = tpu.reciprocal %198 {approx = true} : vector<2x8x1xf32> -> vector<2x8x1xf32>
    %200 = vector.broadcast %199 : vector<2x8x1xf32> to vector<2x8x12xf32>
    %201 = arith.mulf %196, %200 : vector<2x8x12xf32>
    "tpu.trace_start"() <{level = 10 : i32, message = "bqk,bkd->bqd"}> : () -> ()
    %cst_94 = arith.constant dense<0.000000e+00> : vector<2x8x8xf32>
    %202 = tpu.matmul %201, %190, %cst_94 {dimension_numbers = #tpu.dot_dimension_numbers<[2], [1], [1], [2], [0, 0, 0, 1, 1, 2], [0], [0]>} : vector<2x8x12xf32>, vector<2x12x8xf32>, vector<2x8x8xf32> -> vector<2x8x8xf32>
    "tpu.trace_stop"() : () -> ()
    %203 = vector.shape_cast %202 : vector<2x8x8xf32> to vector<16x8xf32>
    %204 = vector.extract_strided_slice %178 {offsets = [0, 8], sizes = [16, 8], strides = [1, 1]} : vector<16x32xf32> to vector<16x8xf32>
    %205 = vector.shape_cast %204 : vector<16x8xf32> to vector<2x8x8xf32>
    %206 = vector.extract_strided_slice %181 {offsets = [0, 8], sizes = [24, 8], strides = [1, 1]} : vector<24x32xf32> to vector<24x8xf32>
    %207 = vector.shape_cast %206 : vector<24x8xf32> to vector<2x12x8xf32>
    %208 = vector.extract_strided_slice %184 {offsets = [0, 8], sizes = [24, 8], strides = [1, 1]} : vector<24x32xf32> to vector<24x8xf32>
    %209 = vector.shape_cast %208 : vector<24x8xf32> to vector<2x12x8xf32>
    "tpu.trace_start"() <{level = 10 : i32, message = "bqd,bkd->bqk"}> : () -> ()
    %cst_95 = arith.constant dense<0.000000e+00> : vector<2x8x12xf32>
    %210 = tpu.matmul %205, %207, %cst_95 {dimension_numbers = #tpu.dot_dimension_numbers<[2], [2], [1], [1], [0, 0, 0, 1, 1, 1], [0], [0]>} : vector<2x8x8xf32>, vector<2x12x8xf32>, vector<2x8x12xf32> -> vector<2x8x12xf32>
    "tpu.trace_stop"() : () -> ()
    %cst_96 = arith.constant dense<0xFF800000> : vector<2x8xf32>
    %211 = vector.multi_reduction <maximumf>, %210, %cst_96 [2] : vector<2x8x12xf32> to vector<2x8xf32>
    %212 = vector.shape_cast %211 : vector<2x8xf32> to vector<2x8x1xf32>
    %213 = vector.broadcast %212 : vector<2x8x1xf32> to vector<2x8x12xf32>
    %214 = arith.subf %210, %213 : vector<2x8x12xf32>
    %215 = math.exp %214 : vector<2x8x12xf32>
    %cst_97 = arith.constant dense<0.000000e+00> : vector<2x8xf32>
    %216 = vector.multi_reduction <add>, %215, %cst_97 [2] : vector<2x8x12xf32> to vector<2x8xf32>
    %217 = vector.shape_cast %216 : vector<2x8xf32> to vector<2x8x1xf32>
    %218 = tpu.reciprocal %217 {approx = true} : vector<2x8x1xf32> -> vector<2x8x1xf32>
    %219 = vector.broadcast %218 : vector<2x8x1xf32> to vector<2x8x12xf32>
    %220 = arith.mulf %215, %219 : vector<2x8x12xf32>
    "tpu.trace_start"() <{level = 10 : i32, message = "bqk,bkd->bqd"}> : () -> ()
    %cst_98 = arith.constant dense<0.000000e+00> : vector<2x8x8xf32>
    %221 = tpu.matmul %220, %209, %cst_98 {dimension_numbers = #tpu.dot_dimension_numbers<[2], [1], [1], [2], [0, 0, 0, 1, 1, 2], [0], [0]>} : vector<2x8x12xf32>, vector<2x12x8xf32>, vector<2x8x8xf32> -> vector<2x8x8xf32>
    "tpu.trace_stop"() : () -> ()
    %222 = vector.shape_cast %221 : vector<2x8x8xf32> to vector<16x8xf32>
    %223 = vector.extract_strided_slice %178 {offsets = [0, 16], sizes = [16, 8], strides = [1, 1]} : vector<16x32xf32> to vector<16x8xf32>
    %224 = vector.shape_cast %223 : vector<16x8xf32> to vector<2x8x8xf32>
    %225 = vector.extract_strided_slice %181 {offsets = [0, 16], sizes = [24, 8], strides = [1, 1]} : vector<24x32xf32> to vector<24x8xf32>
    %226 = vector.shape_cast %225 : vector<24x8xf32> to vector<2x12x8xf32>
    %227 = vector.extract_strided_slice %184 {offsets = [0, 16], sizes = [24, 8], strides = [1, 1]} : vector<24x32xf32> to vector<24x8xf32>
    %228 = vector.shape_cast %227 : vector<24x8xf32> to vector<2x12x8xf32>
    "tpu.trace_start"() <{level = 10 : i32, message = "bqd,bkd->bqk"}> : () -> ()
    %cst_99 = arith.constant dense<0.000000e+00> : vector<2x8x12xf32>
    %229 = tpu.matmul %224, %226, %cst_99 {dimension_numbers = #tpu.dot_dimension_numbers<[2], [2], [1], [1], [0, 0, 0, 1, 1, 1], [0], [0]>} : vector<2x8x8xf32>, vector<2x12x8xf32>, vector<2x8x12xf32> -> vector<2x8x12xf32>
    "tpu.trace_stop"() : () -> ()
    %cst_100 = arith.constant dense<0xFF800000> : vector<2x8xf32>
    %230 = vector.multi_reduction <maximumf>, %229, %cst_100 [2] : vector<2x8x12xf32> to vector<2x8xf32>
    %231 = vector.shape_cast %230 : vector<2x8xf32> to vector<2x8x1xf32>
    %232 = vector.broadcast %231 : vector<2x8x1xf32> to vector<2x8x12xf32>
    %233 = arith.subf %229, %232 : vector<2x8x12xf32>
    %234 = math.exp %233 : vector<2x8x12xf32>
    %cst_101 = arith.constant dense<0.000000e+00> : vector<2x8xf32>
    %235 = vector.multi_reduction <add>, %234, %cst_101 [2] : vector<2x8x12xf32> to vector<2x8xf32>
    %236 = vector.shape_cast %235 : vector<2x8xf32> to vector<2x8x1xf32>
    %237 = tpu.reciprocal %236 {approx = true} : vector<2x8x1xf32> -> vector<2x8x1xf32>
    %238 = vector.broadcast %237 : vector<2x8x1xf32> to vector<2x8x12xf32>
    %239 = arith.mulf %234, %238 : vector<2x8x12xf32>
    "tpu.trace_start"() <{level = 10 : i32, message = "bqk,bkd->bqd"}> : () -> ()
    %cst_102 = arith.constant dense<0.000000e+00> : vector<2x8x8xf32>
    %240 = tpu.matmul %239, %228, %cst_102 {dimension_numbers = #tpu.dot_dimension_numbers<[2], [1], [1], [2], [0, 0, 0, 1, 1, 2], [0], [0]>} : vector<2x8x12xf32>, vector<2x12x8xf32>, vector<2x8x8xf32> -> vector<2x8x8xf32>
    "tpu.trace_stop"() : () -> ()
    %241 = vector.shape_cast %240 : vector<2x8x8xf32> to vector<16x8xf32>
    %242 = vector.extract_strided_slice %178 {offsets = [0, 24], sizes = [16, 8], strides = [1, 1]} : vector<16x32xf32> to vector<16x8xf32>
    %243 = vector.shape_cast %242 : vector<16x8xf32> to vector<2x8x8xf32>
    %244 = vector.extract_strided_slice %181 {offsets = [0, 24], sizes = [24, 8], strides = [1, 1]} : vector<24x32xf32> to vector<24x8xf32>
    %245 = vector.shape_cast %244 : vector<24x8xf32> to vector<2x12x8xf32>
    %246 = vector.extract_strided_slice %184 {offsets = [0, 24], sizes = [24, 8], strides = [1, 1]} : vector<24x32xf32> to vector<24x8xf32>
    %247 = vector.shape_cast %246 : vector<24x8xf32> to vector<2x12x8xf32>
    "tpu.trace_start"() <{level = 10 : i32, message = "bqd,bkd->bqk"}> : () -> ()
    %cst_103 = arith.constant dense<0.000000e+00> : vector<2x8x12xf32>
    %248 = tpu.matmul %243, %245, %cst_103 {dimension_numbers = #tpu.dot_dimension_numbers<[2], [2], [1], [1], [0, 0, 0, 1, 1, 1], [0], [0]>} : vector<2x8x8xf32>, vector<2x12x8xf32>, vector<2x8x12xf32> -> vector<2x8x12xf32>
    "tpu.trace_stop"() : () -> ()
    %cst_104 = arith.constant dense<0xFF800000> : vector<2x8xf32>
    %249 = vector.multi_reduction <maximumf>, %248, %cst_104 [2] : vector<2x8x12xf32> to vector<2x8xf32>
    %250 = vector.shape_cast %249 : vector<2x8xf32> to vector<2x8x1xf32>
    %251 = vector.broadcast %250 : vector<2x8x1xf32> to vector<2x8x12xf32>
    %252 = arith.subf %248, %251 : vector<2x8x12xf32>
    %253 = math.exp %252 : vector<2x8x12xf32>
    %cst_105 = arith.constant dense<0.000000e+00> : vector<2x8xf32>
    %254 = vector.multi_reduction <add>, %253, %cst_105 [2] : vector<2x8x12xf32> to vector<2x8xf32>
    %255 = vector.shape_cast %254 : vector<2x8xf32> to vector<2x8x1xf32>
    %256 = tpu.reciprocal %255 {approx = true} : vector<2x8x1xf32> -> vector<2x8x1xf32>
    %257 = vector.broadcast %256 : vector<2x8x1xf32> to vector<2x8x12xf32>
    %258 = arith.mulf %253, %257 : vector<2x8x12xf32>
    "tpu.trace_start"() <{level = 10 : i32, message = "bqk,bkd->bqd"}> : () -> ()
    %cst_106 = arith.constant dense<0.000000e+00> : vector<2x8x8xf32>
    %259 = tpu.matmul %258, %247, %cst_106 {dimension_numbers = #tpu.dot_dimension_numbers<[2], [1], [1], [2], [0, 0, 0, 1, 1, 2], [0], [0]>} : vector<2x8x12xf32>, vector<2x12x8xf32>, vector<2x8x8xf32> -> vector<2x8x8xf32>
    "tpu.trace_stop"() : () -> ()
    %260 = vector.shape_cast %259 : vector<2x8x8xf32> to vector<16x8xf32>
    %261 = tpu.concatenate %203, %222, %241, %260 in 1 : vector<16x8xf32>, vector<16x8xf32>, vector<16x8xf32>, vector<16x8xf32> -> vector<16x32xf32>
    %cst_107 = arith.constant dense<0.000000e+00> : vector<16x32xf32>
    %262 = tpu.matmul %261, %173, %cst_107 {dimension_numbers = #tpu.dot_dimension_numbers<[1], [0], [0], [1], [0, 0, 1, 1], [], []>} : vector<16x32xf32>, vector<32x32xf32>, vector<16x32xf32> -> vector<16x32xf32>
    %263 = vector.broadcast %175 : vector<1x32xf32> to vector<16x32xf32>
    %264 = arith.addf %262, %263 : vector<16x32xf32>
    %265 = arith.addf %159, %264 : vector<16x32xf32>
    %c0_108 = arith.constant 0 : index
    %c0_109 = arith.constant 0 : index
    %c0_110 = arith.constant 0 : index
    %266 = vector.load %arg22[%c0_108, %c0_109, %c0_110] : memref<1x1x32xf32, #tpu.memory_space<vmem>>, vector<1x1x32xf32>
    %267 = vector.shape_cast %266 : vector<1x1x32xf32> to vector<1x32xf32>
    %c0_111 = arith.constant 0 : index
    %c0_112 = arith.constant 0 : index
    %c0_113 = arith.constant 0 : index
    %268 = vector.load %arg23[%c0_111, %c0_112, %c0_113] : memref<1x1x32xf32, #tpu.memory_space<vmem>>, vector<1x1x32xf32>
    %269 = vector.shape_cast %268 : vector<1x1x32xf32> to vector<1x32xf32>
    %cst_114 = arith.constant dense<0.000000e+00> : vector<16xf32>
    %270 = vector.multi_reduction <add>, %265, %cst_114 [1] : vector<16x32xf32> to vector<16xf32>
    %271 = vector.shape_cast %270 : vector<16xf32> to vector<16x1xf32>
    %cst_115 = arith.constant 3.200000e+01 : f32
    %272 = vector.broadcast %cst_115 : f32 to vector<16x1xf32>
    %273 = arith.divf %271, %272 : vector<16x1xf32>
    %274 = vector.broadcast %273 : vector<16x1xf32> to vector<16x32xf32>
    %275 = arith.subf %265, %274 : vector<16x32xf32>
    %276 = arith.mulf %275, %275 : vector<16x32xf32>
    %cst_116 = arith.constant dense<0.000000e+00> : vector<16xf32>
    %277 = vector.multi_reduction <add>, %276, %cst_116 [1] : vector<16x32xf32> to vector<16xf32>
    %278 = vector.shape_cast %277 : vector<16xf32> to vector<16x1xf32>
    %cst_117 = arith.constant 0.0322580636 : f32
    %279 = vector.broadcast %cst_117 : f32 to vector<16x1xf32>
    %280 = arith.mulf %278, %279 : vector<16x1xf32>
    %281 = math.sqrt %280 : vector<16x1xf32>
    %cst_118 = arith.constant 9.99999997E-7 : f32
    %282 = vector.broadcast %cst_118 : f32 to vector<16x1xf32>
    %283 = arith.addf %281, %282 : vector<16x1xf32>
    %284 = tpu.reciprocal %283 {approx = true} : vector<16x1xf32> -> vector<16x1xf32>
    %285 = vector.broadcast %273 : vector<16x1xf32> to vector<16x32xf32>
    %286 = arith.subf %265, %285 : vector<16x32xf32>
    %287 = vector.broadcast %267 : vector<1x32xf32> to vector<16x32xf32>
    %288 = arith.mulf %287, %286 : vector<16x32xf32>
    %289 = vector.broadcast %284 : vector<16x1xf32> to vector<16x32xf32>
    %290 = arith.mulf %288, %289 : vector<16x32xf32>
    %291 = vector.broadcast %269 : vector<1x32xf32> to vector<16x32xf32>
    %292 = arith.addf %290, %291 : vector<16x32xf32>
    %c0_119 = arith.constant 0 : index
    %c0_120 = arith.constant 0 : index
    %c0_121 = arith.constant 0 : index
    %293 = vector.load %arg24[%c0_119, %c0_120, %c0_121] : memref<1x32x128xf32, #tpu.memory_space<vmem>>, vector<1x32x128xf32>
    %294 = vector.shape_cast %293 : vector<1x32x128xf32> to vector<32x128xf32>
    %cst_122 = arith.constant dense<0.000000e+00> : vector<16x128xf32>
    %295 = tpu.matmul %292, %294, %cst_122 {dimension_numbers = #tpu.dot_dimension_numbers<[1], [0], [0], [1], [0, 0, 1, 1], [], []>} : vector<16x32xf32>, vector<32x128xf32>, vector<16x128xf32> -> vector<16x128xf32>
    %c0_123 = arith.constant 0 : index
    %c0_124 = arith.constant 0 : index
    %c0_125 = arith.constant 0 : index
    %296 = vector.load %arg25[%c0_123, %c0_124, %c0_125] : memref<1x1x128xf32, #tpu.memory_space<vmem>>, vector<1x1x128xf32>
    %297 = vector.shape_cast %296 : vector<1x1x128xf32> to vector<1x128xf32>
    %298 = vector.broadcast %297 : vector<1x128xf32> to vector<16x128xf32>
    %299 = arith.addf %295, %298 : vector<16x128xf32>
    %cst_126 = arith.constant 0.000000e+00 : f32
    %300 = vector.broadcast %cst_126 : f32 to vector<16x128xf32>
    %301 = arith.maximumf %299, %300 : vector<16x128xf32>
    %c0_127 = arith.constant 0 : index
    %c0_128 = arith.constant 0 : index
    %c0_129 = arith.constant 0 : index
    %302 = vector.load %arg26[%c0_127, %c0_128, %c0_129] : memref<1x128x32xf32, #tpu.memory_space<vmem>>, vector<1x128x32xf32>
    %303 = vector.shape_cast %302 : vector<1x128x32xf32> to vector<128x32xf32>
    %cst_130 = arith.constant dense<0.000000e+00> : vector<16x32xf32>
    %304 = tpu.matmul %301, %303, %cst_130 {dimension_numbers = #tpu.dot_dimension_numbers<[1], [0], [0], [1], [0, 0, 1, 1], [], []>} : vector<16x128xf32>, vector<128x32xf32>, vector<16x32xf32> -> vector<16x32xf32>
    %c0_131 = arith.constant 0 : index
    %c0_132 = arith.constant 0 : index
    %c0_133 = arith.constant 0 : index
    %305 = vector.load %arg27[%c0_131, %c0_132, %c0_133] : memref<1x1x32xf32, #tpu.memory_space<vmem>>, vector<1x1x32xf32>
    %306 = vector.shape_cast %305 : vector<1x1x32xf32> to vector<1x32xf32>
    %307 = vector.broadcast %306 : vector<1x32xf32> to vector<16x32xf32>
    %308 = arith.addf %304, %307 : vector<16x32xf32>
    %309 = arith.addf %292, %308 : vector<16x32xf32>
    %c0_134 = arith.constant 0 : index
    %c0_135 = arith.constant 0 : index
    %c0_136 = arith.constant 0 : index
    %310 = vector.load %arg22[%c0_134, %c0_135, %c0_136] : memref<1x1x32xf32, #tpu.memory_space<vmem>>, vector<1x1x32xf32>
    %311 = vector.shape_cast %310 : vector<1x1x32xf32> to vector<1x32xf32>
    %c0_137 = arith.constant 0 : index
    %c0_138 = arith.constant 0 : index
    %c0_139 = arith.constant 0 : index
    %312 = vector.load %arg23[%c0_137, %c0_138, %c0_139] : memref<1x1x32xf32, #tpu.memory_space<vmem>>, vector<1x1x32xf32>
    %313 = vector.shape_cast %312 : vector<1x1x32xf32> to vector<1x32xf32>
    %cst_140 = arith.constant dense<0.000000e+00> : vector<16xf32>
    %314 = vector.multi_reduction <add>, %309, %cst_140 [1] : vector<16x32xf32> to vector<16xf32>
    %315 = vector.shape_cast %314 : vector<16xf32> to vector<16x1xf32>
    %cst_141 = arith.constant 3.200000e+01 : f32
    %316 = vector.broadcast %cst_141 : f32 to vector<16x1xf32>
    %317 = arith.divf %315, %316 : vector<16x1xf32>
    %318 = vector.broadcast %317 : vector<16x1xf32> to vector<16x32xf32>
    %319 = arith.subf %309, %318 : vector<16x32xf32>
    %320 = arith.mulf %319, %319 : vector<16x32xf32>
    %cst_142 = arith.constant dense<0.000000e+00> : vector<16xf32>
    %321 = vector.multi_reduction <add>, %320, %cst_142 [1] : vector<16x32xf32> to vector<16xf32>
    %322 = vector.shape_cast %321 : vector<16xf32> to vector<16x1xf32>
    %cst_143 = arith.constant 0.0322580636 : f32
    %323 = vector.broadcast %cst_143 : f32 to vector<16x1xf32>
    %324 = arith.mulf %322, %323 : vector<16x1xf32>
    %325 = math.sqrt %324 : vector<16x1xf32>
    %cst_144 = arith.constant 9.99999997E-7 : f32
    %326 = vector.broadcast %cst_144 : f32 to vector<16x1xf32>
    %327 = arith.addf %325, %326 : vector<16x1xf32>
    %328 = tpu.reciprocal %327 {approx = true} : vector<16x1xf32> -> vector<16x1xf32>
    %329 = vector.broadcast %317 : vector<16x1xf32> to vector<16x32xf32>
    %330 = arith.subf %309, %329 : vector<16x32xf32>
    %331 = vector.broadcast %311 : vector<1x32xf32> to vector<16x32xf32>
    %332 = arith.mulf %331, %330 : vector<16x32xf32>
    %333 = vector.broadcast %328 : vector<16x1xf32> to vector<16x32xf32>
    %334 = arith.mulf %332, %333 : vector<16x32xf32>
    %335 = vector.broadcast %313 : vector<1x32xf32> to vector<16x32xf32>
    %336 = arith.addf %334, %335 : vector<16x32xf32>
    %337 = vector.shape_cast %336 : vector<16x32xf32> to vector<2x8x32xf32>
    %c0_145 = arith.constant 0 : index
    %c0_146 = arith.constant 0 : index
    %c0_147 = arith.constant 0 : index
    %338 = vector.load %arg28[%c0_145, %c0_146, %c0_147] : memref<2x8x32xf32, #tpu.memory_space<vmem>>, vector<2x8x32xf32>
    tpu.vector_store %arg28[%c0_145, %c0_146, %c0_147], %337 {strides = array<i32>} : memref<2x8x32xf32, #tpu.memory_space<vmem>>, vector<2x8x32xf32>,
    return
  }
  func.func @transform_0(%arg0: i32, %arg1: i32) -> (i32, i32, i32) {
    %c0_i32 = arith.constant 0 : i32
    %c0_i32_0 = arith.constant 0 : i32
    %c0_i32_1 = arith.constant 0 : i32
    return %arg0, %c0_i32, %c0_i32_0 : i32, i32, i32
  }
  func.func @transform_1(%arg0: i32, %arg1: i32) -> (i32, i32, i32) {
    %c0_i32 = arith.constant 0 : i32
    %c0_i32_0 = arith.constant 0 : i32
    %c0_i32_1 = arith.constant 0 : i32
    return %arg0, %c0_i32, %c0_i32_0 : i32, i32, i32
  }
  func.func @transform_2(%arg0: i32, %arg1: i32) -> (i32, i32, i32) {
    %c0_i32 = arith.constant 0 : i32
    %c0_i32_0 = arith.constant 0 : i32
    %c0_i32_1 = arith.constant 0 : i32
    return %arg1, %c0_i32, %c0_i32_0 : i32, i32, i32
  }
  func.func @transform_3(%arg0: i32, %arg1: i32) -> (i32, i32, i32) {
    %c0_i32 = arith.constant 0 : i32
    %c0_i32_0 = arith.constant 0 : i32
    %c0_i32_1 = arith.constant 0 : i32
    return %arg1, %c0_i32, %c0_i32_0 : i32, i32, i32
  }
  func.func @transform_4(%arg0: i32, %arg1: i32) -> (i32, i32, i32) {
    %c0_i32 = arith.constant 0 : i32
    %c0_i32_0 = arith.constant 0 : i32
    %c0_i32_1 = arith.constant 0 : i32
    return %arg1, %c0_i32, %c0_i32_0 : i32, i32, i32
  }
  func.func @transform_5(%arg0: i32, %arg1: i32) -> (i32, i32, i32) {
    %c0_i32 = arith.constant 0 : i32
    %c0_i32_0 = arith.constant 0 : i32
    %c0_i32_1 = arith.constant 0 : i32
    return %arg1, %c0_i32, %c0_i32_0 : i32, i32, i32
  }
  func.func @transform_6(%arg0: i32, %arg1: i32) -> (i32, i32, i32) {
    %c0_i32 = arith.constant 0 : i32
    %c0_i32_0 = arith.constant 0 : i32
    %c0_i32_1 = arith.constant 0 : i32
    return %arg1, %c0_i32, %c0_i32_0 : i32, i32, i32
  }
  func.func @transform_7(%arg0: i32, %arg1: i32) -> (i32, i32, i32) {
    %c0_i32 = arith.constant 0 : i32
    %c0_i32_0 = arith.constant 0 : i32
    %c0_i32_1 = arith.constant 0 : i32
    return %arg1, %c0_i32, %c0_i32_0 : i32, i32, i32
  }
  func.func @transform_8(%arg0: i32, %arg1: i32) -> (i32, i32, i32) {
    %c0_i32 = arith.constant 0 : i32
    %c0_i32_0 = arith.constant 0 : i32
    %c0_i32_1 = arith.constant 0 : i32
    return %arg1, %c0_i32, %c0_i32_0 : i32, i32, i32
  }
  func.func @transform_9(%arg0: i32, %arg1: i32) -> (i32, i32, i32) {
    %c0_i32 = arith.constant 0 : i32
    %c0_i32_0 = arith.constant 0 : i32
    %c0_i32_1 = arith.constant 0 : i32
    return %arg1, %c0_i32, %c0_i32_0 : i32, i32, i32
  }
  func.func @transform_10(%arg0: i32, %arg1: i32) -> (i32, i32, i32) {
    %c0_i32 = arith.constant 0 : i32
    %c0_i32_0 = arith.constant 0 : i32
    %c0_i32_1 = arith.constant 0 : i32
    return %arg1, %c0_i32, %c0_i32_0 : i32, i32, i32
  }
  func.func @transform_11(%arg0: i32, %arg1: i32) -> (i32, i32, i32) {
    %c0_i32 = arith.constant 0 : i32
    %c0_i32_0 = arith.constant 0 : i32
    %c0_i32_1 = arith.constant 0 : i32
    return %arg1, %c0_i32, %c0_i32_0 : i32, i32, i32
  }
  func.func @transform_12(%arg0: i32, %arg1: i32) -> (i32, i32, i32) {
    %c0_i32 = arith.constant 0 : i32
    %c0_i32_0 = arith.constant 0 : i32
    %c0_i32_1 = arith.constant 0 : i32
    return %arg1, %c0_i32, %c0_i32_0 : i32, i32, i32
  }
  func.func @transform_13(%arg0: i32, %arg1: i32) -> (i32, i32, i32) {
    %c0_i32 = arith.constant 0 : i32
    %c0_i32_0 = arith.constant 0 : i32
    %c0_i32_1 = arith.constant 0 : i32
    return %arg1, %c0_i32, %c0_i32_0 : i32, i32, i32
  }
  func.func @transform_14(%arg0: i32, %arg1: i32) -> (i32, i32, i32) {
    %c0_i32 = arith.constant 0 : i32
    %c0_i32_0 = arith.constant 0 : i32
    %c0_i32_1 = arith.constant 0 : i32
    return %arg1, %c0_i32, %c0_i32_0 : i32, i32, i32
  }
  func.func @transform_15(%arg0: i32, %arg1: i32) -> (i32, i32, i32) {
    %c0_i32 = arith.constant 0 : i32
    %c0_i32_0 = arith.constant 0 : i32
    %c0_i32_1 = arith.constant 0 : i32
    return %arg1, %c0_i32, %c0_i32_0 : i32, i32, i32
  }
  func.func @transform_16(%arg0: i32, %arg1: i32) -> (i32, i32, i32) {
    %c0_i32 = arith.constant 0 : i32
    %c0_i32_0 = arith.constant 0 : i32
    %c0_i32_1 = arith.constant 0 : i32
    return %arg1, %c0_i32, %c0_i32_0 : i32, i32, i32
  }
  func.func @transform_17(%arg0: i32, %arg1: i32) -> (i32, i32, i32) {
    %c0_i32 = arith.constant 0 : i32
    %c0_i32_0 = arith.constant 0 : i32
    %c0_i32_1 = arith.constant 0 : i32
    return %arg1, %c0_i32, %c0_i32_0 : i32, i32, i32
  }
  func.func @transform_18(%arg0: i32, %arg1: i32) -> (i32, i32, i32) {
    %c0_i32 = arith.constant 0 : i32
    %c0_i32_0 = arith.constant 0 : i32
    %c0_i32_1 = arith.constant 0 : i32
    return %arg1, %c0_i32, %c0_i32_0 : i32, i32, i32
  }
  func.func @transform_19(%arg0: i32, %arg1: i32) -> (i32, i32, i32) {
    %c0_i32 = arith.constant 0 : i32
    %c0_i32_0 = arith.constant 0 : i32
    %c0_i32_1 = arith.constant 0 : i32
    return %arg1, %c0_i32, %c0_i32_0 : i32, i32, i32
  }
  func.func @transform_20(%arg0: i32, %arg1: i32) -> (i32, i32, i32) {
    %c0_i32 = arith.constant 0 : i32
    %c0_i32_0 = arith.constant 0 : i32
    %c0_i32_1 = arith.constant 0 : i32
    return %arg1, %c0_i32, %c0_i32_0 : i32, i32, i32
  }
  func.func @transform_21(%arg0: i32, %arg1: i32) -> (i32, i32, i32) {
    %c0_i32 = arith.constant 0 : i32
    %c0_i32_0 = arith.constant 0 : i32
    %c0_i32_1 = arith.constant 0 : i32
    return %arg1, %c0_i32, %c0_i32_0 : i32, i32, i32
  }
  func.func @transform_22(%arg0: i32, %arg1: i32) -> (i32, i32, i32) {
    %c0_i32 = arith.constant 0 : i32
    %c0_i32_0 = arith.constant 0 : i32
    %c0_i32_1 = arith.constant 0 : i32
    return %arg1, %c0_i32, %c0_i32_0 : i32, i32, i32
  }
  func.func @transform_23(%arg0: i32, %arg1: i32) -> (i32, i32, i32) {
    %c0_i32 = arith.constant 0 : i32
    %c0_i32_0 = arith.constant 0 : i32
    %c0_i32_1 = arith.constant 0 : i32
    return %arg1, %c0_i32, %c0_i32_0 : i32, i32, i32
  }
  func.func @transform_24(%arg0: i32, %arg1: i32) -> (i32, i32, i32) {
    %c0_i32 = arith.constant 0 : i32
    %c0_i32_0 = arith.constant 0 : i32
    %c0_i32_1 = arith.constant 0 : i32
    return %arg1, %c0_i32, %c0_i32_0 : i32, i32, i32
  }
  func.func @transform_25(%arg0: i32, %arg1: i32) -> (i32, i32, i32) {
    %c0_i32 = arith.constant 0 : i32
    %c0_i32_0 = arith.constant 0 : i32
    %c0_i32_1 = arith.constant 0 : i32
    return %arg1, %c0_i32, %c0_i32_0 : i32, i32, i32
  }
  func.func @transform_26(%arg0: i32, %arg1: i32) -> (i32, i32, i32) {
    %c0_i32 = arith.constant 0 : i32
    %c0_i32_0 = arith.constant 0 : i32
    %c0_i32_1 = arith.constant 0 : i32
    return %arg0, %c0_i32, %c0_i32_0 : i32, i32, i32
  }
}

</mosaic_0001>

<llo_original>
// kernel: tpu_custom_call.1
$region0: #{tpu_custom_call.1}
  #allocation0 [shape = 'u32[]', space=smem, size = 0x4, offset = 0x4, fixed_abs, tag = 'smem constant byte address 0x4 - core index']
  #allocation1 [shape = 'u32[144,128]{1,0:T(1,128)}', space=vmem, size = 0x12000, scoped, tag = 'internal scratch']
  %s0 = inlined_call_operand.vmem [shape: f32[2,12,32], index: 0, kind: input, shape index: {}]
  %s1 = inlined_call_operand.hbm [shape: f32[2,8,32], index: 1, kind: input, shape index: {}]
  %s2 = inlined_call_operand.vmem [shape: f32[2,32,32], index: 2, kind: input, shape index: {}]
  %s3 = inlined_call_operand.vmem [shape: f32[2,1,32], index: 3, kind: input, shape index: {}]
  %s4 = inlined_call_operand.vmem [shape: f32[2,32,32], index: 4, kind: input, shape index: {}]
  %s5 = inlined_call_operand.hbm [shape: f32[2,1,32], index: 5, kind: input, shape index: {}]
  %s6 = inlined_call_operand.vmem [shape: f32[2,32,32], index: 6, kind: input, shape index: {}]
  %s7 = inlined_call_operand.hbm [shape: f32[2,1,32], index: 7, kind: input, shape index: {}]
  %s8 = inlined_call_operand.vmem [shape: f32[2,32,32], index: 8, kind: input, shape index: {}]
  %s9 = inlined_call_operand.hbm [shape: f32[2,1,32], index: 9, kind: input, shape index: {}]
  %s10 = inlined_call_operand.vmem [shape: f32[2,32,32], index: 10, kind: input, shape index: {}]
  %s11 = inlined_call_operand.hbm [shape: f32[2,1,32], index: 11, kind: input, shape index: {}]
  %s12 = inlined_call_operand.hbm [shape: f32[2,32,32], index: 12, kind: input, shape index: {}]
  %s13 = inlined_call_operand.hbm [shape: f32[2,1,32], index: 13, kind: input, shape index: {}]
  %s14 = inlined_call_operand.hbm [shape: f32[2,32,32], index: 14, kind: input, shape index: {}]
  %s15 = inlined_call_operand.hbm [shape: f32[2,1,32], index: 15, kind: input, shape index: {}]
  %s16 = inlined_call_operand.hbm [shape: f32[2,32,32], index: 16, kind: input, shape index: {}]
  %s17 = inlined_call_operand.hbm [shape: f32[2,1,32], index: 17, kind: input, shape index: {}]
  %s18 = inlined_call_operand.hbm [shape: f32[2,1,32], index: 18, kind: input, shape index: {}]
  %s19 = inlined_call_operand.hbm [shape: f32[2,1,32], index: 19, kind: input, shape index: {}]
  %s20 = inlined_call_operand.hbm [shape: f32[2,1,32], index: 20, kind: input, shape index: {}]
  %s21 = inlined_call_operand.hbm [shape: f32[2,1,32], index: 21, kind: input, shape index: {}]
  %s22 = inlined_call_operand.vmem [shape: f32[2,32,128], index: 22, kind: input, shape index: {}]
  %s23 = inlined_call_operand.vmem [shape: f32[2,1,128], index: 23, kind: input, shape index: {}]
  %s24 = inlined_call_operand.vmem [shape: f32[2,128,32], index: 24, kind: input, shape index: {}]
  %s25 = inlined_call_operand.vmem [shape: f32[2,1,32], index: 25, kind: input, shape index: {}]
  %s26 = inlined_call_operand.hbm [shape: f32[2,8,32], index: 26, kind: output, shape index: {}]
  %s27 = sld [smem:[#allocation0]]
  $region201: #{tpu_custom_call.1} parent=0
    _
  %s29 = ssub.s32 1, %s27
  %s30 = scalar_select 0, %s29, %s27
  $region1: #{tpu_custom_call.1} parent=0
    #allocation2 [shape = 'u8[8192]{0}', space=vmem, size = 0x2000, scoped, tag = 'input window, operand 1, single buffered']
    #allocation3 [shape = 's32[2]{0}', space=sflag, size = 0x8, scoped, tag = 'scoped memory for tpu_custom_call.1']
    #allocation4 [shape = 's32[2]{0}', space=sflag, size = 0x8, scoped, tag = 'scoped memory for tpu_custom_call.1']
    #allocation5 [shape = 'u8[1024]{0}', space=vmem, size = 0x400, scoped, tag = 'input window, operand 5']
    #allocation6 [shape = 's32[2]{0}', space=sflag, size = 0x8, scoped, tag = 'scoped memory for tpu_custom_call.1']
    #allocation7 [shape = 'u8[1024]{0}', space=vmem, size = 0x400, scoped, tag = 'input window, operand 7']
    #allocation8 [shape = 'u8[1024]{0}', space=vmem, size = 0x400, scoped, tag = 'input window, operand 9']
    #allocation9 [shape = 's32[2]{0}', space=sflag, size = 0x8, scoped, tag = 'scoped memory for tpu_custom_call.1']
    #allocation10 [shape = 'u8[1024]{0}', space=vmem, size = 0x400, scoped, tag = 'input window, operand 11']
    #allocation11 [shape = 'u8[32768]{0}', space=vmem, size = 0x8000, scoped, tag = 'input window, operand 12']
    #allocation12 [shape = 's32[2]{0}', space=sflag, size = 0x8, scoped, tag = 'scoped memory for tpu_custom_call.1']
    #allocation13 [shape = 'u8[1024]{0}', space=vmem, size = 0x400, scoped, tag = 'input window, operand 13']
    #allocation14 [shape = 'u8[32768]{0}', space=vmem, size = 0x8000, scoped, tag = 'input window, operand 14']
    #allocation15 [shape = 's32[2]{0}', space=sflag, size = 0x8, scoped, tag = 'scoped memory for tpu_custom_call.1']
    #allocation16 [shape = 'u8[1024]{0}', space=vmem, size = 0x400, scoped, tag = 'input window, operand 15']
    #allocation17 [shape = 'u8[32768]{0}', space=vmem, size = 0x8000, scoped, tag = 'input window, operand 16']
    #allocation18 [shape = 's32[2]{0}', space=sflag, size = 0x8, scoped, tag = 'scoped memory for tpu_custom_call.1']
    #allocation19 [shape = 'u8[1024]{0}', space=vmem, size = 0x400, scoped, tag = 'input window, operand 17']
    #allocation20 [shape = 'u8[1024]{0}', space=vmem, size = 0x400, scoped, tag = 'input window, operand 18']
    #allocation21 [shape = 's32[2]{0}', space=sflag, size = 0x8, scoped, tag = 'scoped memory for tpu_custom_call.1']
    #allocation22 [shape = 'u8[1024]{0}', space=vmem, size = 0x400, scoped, tag = 'input window, operand 19']
    #allocation23 [shape = 'u8[1024]{0}', space=vmem, size = 0x400, scoped, tag = 'input window, operand 20']
    #allocation24 [shape = 's32[2]{0}', space=sflag, size = 0x8, scoped, tag = 'scoped memory for tpu_custom_call.1']
    #allocation25 [shape = 'u8[1024]{0}', space=vmem, size = 0x400, scoped, tag = 'input window, operand 21']
    #allocation26 [shape = 'u8[8192]{0}', space=vmem, size = 0x2000, scoped, tag = 'output window, operand 0, single buffered']
    %31 = vsyncpa [#allocation3], 0
    %32 = vsyncpa [#allocation6], 0
    %s33 = scalar_lea.sflag [#allocation6], 1
    %34 = vsyncpa %s33, 0
    %35 = vsyncpa [#allocation9], 0
    %s36 = scalar_lea.sflag [#allocation9], 1
    %37 = vsyncpa %s36, 0
    %38 = vsyncpa [#allocation12], 0
    %s39 = scalar_lea.sflag [#allocation12], 1
    %40 = vsyncpa %s39, 0
    %41 = vsyncpa [#allocation15], 0
    %s42 = scalar_lea.sflag [#allocation15], 1
    %43 = vsyncpa %s42, 0
    %44 = vsyncpa [#allocation18], 0
    %s45 = scalar_lea.sflag [#allocation18], 1
    %46 = vsyncpa %s45, 0
    %47 = vsyncpa [#allocation21], 0
    %s48 = scalar_lea.sflag [#allocation21], 1
    %49 = vsyncpa %s48, 0
    %50 = vsyncpa [#allocation24], 0
    %s51 = scalar_lea.sflag [#allocation24], 1
    %52 = vsyncpa %s51, 0
    %53 = vsyncpa [#allocation4], 0
    loop: start=0, step=1, limit=4
    $region2: #{tpu_custom_call.1} parent=1 // loop_pre_header
      _
    $region3: #{tpu_custom_call.1} parent=1 // loop_header
      %s55 = sphi 0, %s59
      %p56 = scmp.ge.s32.totalorder %s55, 4
      %s62 = sphi 0, %s74
      %s63 = sphi 0, %s70
      %s64 = sphi 0, %s62
      %s65 = sphi 0, %s63
      %s66 = sphi 0, %s64
      %s67 = sphi 0, %s65
      %s77 = sphi 0, %s79
      %s80 = sphi 0, %s77
      %s81 = sphi 0, %s80
      %s97 = sphi 0, %s81
      %s103 = sphi 0, %s105
      %s106 = sphi 0, %s103
      %s107 = sphi 0, %s106
      %s123 = sphi 0, %s107
      %s129 = sphi 0, %s131
      %s132 = sphi 0, %s129
      %s133 = sphi 0, %s132
      %s149 = sphi 0, %s133
      %s155 = sphi 0, %s157
      %s158 = sphi 0, %s155
      %s159 = sphi 0, %s158
      %s175 = sphi 0, %s159
      %s181 = sphi 0, %s183
      %s184 = sphi 0, %s181
      %s185 = sphi 0, %s184
      %s201 = sphi 0, %s185
      %s207 = sphi 0, %s209
      %s210 = sphi 0, %s207
      %s211 = sphi 0, %s210
      %s227 = sphi 0, %s211
      %s233 = sphi 0, %s235
      %s236 = sphi 0, %s233
      %s237 = sphi 0, %s236
      %s253 = sphi 0, %s237
      %s259 = sphi 0, %s261
      %s262 = sphi 0, %s259
      %s263 = sphi 0, %s262
      %s279 = sphi 0, %s263
      %s285 = sphi 0, %s287
      %s288 = sphi 0, %s285
      %s289 = sphi 0, %s288
      %s305 = sphi 0, %s289
      %s311 = sphi 0, %s313
      %s314 = sphi 0, %s311
      %s315 = sphi 0, %s314
      %s331 = sphi 0, %s315
      %s337 = sphi 0, %s339
      %s340 = sphi 0, %s337
      %s341 = sphi 0, %s340
      %s357 = sphi 0, %s341
      %s363 = sphi 0, %s365
      %s366 = sphi 0, %s363
      %s367 = sphi 0, %s366
      %s383 = sphi 0, %s367
      %s389 = sphi 0, %s391
      %s392 = sphi 0, %s389
      %s393 = sphi 0, %s392
      %s409 = sphi 0, %s393
      %s415 = sphi 0, %s417
      %s418 = sphi 0, %s415
      %s419 = sphi 0, %s418
      %s435 = sphi 0, %s419
      %s441 = sphi 0, %s443
      %s444 = sphi 0, %s441
      %s445 = sphi 0, %s444
      %s461 = sphi 0, %s445
      %s467 = sphi 0, %s469
      %s470 = sphi 0, %s467
      %s471 = sphi 0, %s470
      %s487 = sphi 0, %s471
      %s493 = sphi 0, %s495
      %s496 = sphi 0, %s493
      %s497 = sphi 0, %s496
      %s513 = sphi 0, %s497
      %s519 = sphi 0, %s521
      %s522 = sphi 0, %s519
      %s523 = sphi 0, %s522
      %s539 = sphi 0, %s523
      %s545 = sphi 0, %s547
      %s548 = sphi 0, %s545
      %s549 = sphi 0, %s548
      %s565 = sphi 0, %s549
      %s571 = sphi 0, %s573
      %s574 = sphi 0, %s571
      %s575 = sphi 0, %s574
      %s591 = sphi 0, %s575
      %s597 = sphi 0, %s599
      %s600 = sphi 0, %s597
      %s601 = sphi 0, %s600
      %s617 = sphi 0, %s601
      %s623 = sphi 0, %s625
      %s626 = sphi 0, %s623
      %s627 = sphi 0, %s626
      %s643 = sphi 0, %s627
      %s649 = sphi 0, %s651
      %s652 = sphi 0, %s649
      %s653 = sphi 0, %s652
      %s669 = sphi 0, %s653
      %s675 = sphi 0, %s677
      %s678 = sphi 0, %s675
      %s679 = sphi 0, %s678
      %s695 = sphi 0, %s679
      %s701 = sphi 0, %s703
      %s704 = sphi 0, %s701
      %s705 = sphi 0, %s704
      %s721 = sphi 0, %s705
      %s727 = sphi 0, %s729
      %s730 = sphi 0, %s727
      %s731 = sphi 0, %s730
      %s747 = sphi 0, %s731
      %s753 = sphi 0, %s755
      %s756 = sphi 0, %s753
      %s757 = sphi 0, %s756
      %s773 = sphi 0, %s757
    $region4: #{tpu_custom_call.1} parent=1 // loop_header_branch
      %58 = sbr.rel (%p56) target = $region8
    $region5: #{tpu_custom_call.1} parent=1 // loop_body
      %s60 = ssub.s32 %s55, 1
      %s61 = ssub.s32 %s55, 2
      %s68 = sadd.s32 1, %s63
      %p69 = scmp.ge.s32.totalorder %s68, 2
      %s70 = scalar_select %p69, 0, %s68
      %s71 = sadd.s32 1, %s62
      %s72 = scalar_select %p69, %s71, %s62
      %p73 = scmp.ge.s32.totalorder %s72, 1
      %s74 = scalar_select %p73, 0, %s72
      %s75 = ssub.s32 %s62, %s74
      %p76 = scmp.eq.s32.totalorder %s75, 0
      %s78 = sadd.s32 %s77, 1
      %s79 = scalar_select %p76, %s77, %s78
      %p82 = pneg %p76
      %p83 = scmp.eq.s32.totalorder %s55, 1
      %p84 = por %p82, %p83
      %p85 = scmp.ne.s32.totalorder %s77, %s80
      %p86 = scmp.eq.s32.totalorder %s55, 0
      %p87 = por %p85, %p86
      %p88 = scmp.ne.s32.totalorder %s77, %s80
      %p89 = scmp.eq.s32.totalorder %s60, 1
      %p90 = por %p88, %p89
      %p91 = scmp.ne.s32.totalorder %s80, %s81
      %p92 = scmp.eq.s32.totalorder %s60, 0
      %p93 = por %p91, %p92
      %p94 = scmp.ne.s32.totalorder %s80, %s81
      %p95 = scmp.eq.s32.totalorder %s61, 1
      %p96 = por %p94, %p95
      %p98 = scmp.ne.s32.totalorder %s81, %s97
      %p99 = scmp.eq.s32.totalorder %s61, 0
      %p100 = por %p98, %p99
      %s101 = ssub.s32 %s62, %s74
      %p102 = scmp.eq.s32.totalorder %s101, 0
      %s104 = sadd.s32 %s103, 1
      %s105 = scalar_select %p102, %s103, %s104
      %p108 = pneg %p102
      %p109 = scmp.eq.s32.totalorder %s55, 1
      %p110 = por %p108, %p109
      %p111 = scmp.ne.s32.totalorder %s103, %s106
      %p112 = scmp.eq.s32.totalorder %s55, 0
      %p113 = por %p111, %p112
      %p114 = scmp.ne.s32.totalorder %s103, %s106
      %p115 = scmp.eq.s32.totalorder %s60, 1
      %p116 = por %p114, %p115
      %p117 = scmp.ne.s32.totalorder %s106, %s107
      %p118 = scmp.eq.s32.totalorder %s60, 0
      %p119 = por %p117, %p118
      %p120 = scmp.ne.s32.totalorder %s106, %s107
      %p121 = scmp.eq.s32.totalorder %s61, 1
      %p122 = por %p120, %p121
      %p124 = scmp.ne.s32.totalorder %s107, %s123
      %p125 = scmp.eq.s32.totalorder %s61, 0
      %p126 = por %p124, %p125
      %s127 = ssub.s32 %s63, %s70
      %p128 = scmp.eq.s32.totalorder %s127, 0
      %s130 = sadd.s32 %s129, 1
      %s131 = scalar_select %p128, %s129, %s130
      %p134 = pneg %p128
      %p135 = scmp.eq.s32.totalorder %s55, 1
      %p136 = por %p134, %p135
      %p137 = scmp.ne.s32.totalorder %s129, %s132
      %p138 = scmp.eq.s32.totalorder %s55, 0
      %p139 = por %p137, %p138
      %p140 = scmp.ne.s32.totalorder %s129, %s132
      %p141 = scmp.eq.s32.totalorder %s60, 1
      %p142 = por %p140, %p141
      %p143 = scmp.ne.s32.totalorder %s132, %s133
      %p144 = scmp.eq.s32.totalorder %s60, 0
      %p145 = por %p143, %p144
      %p146 = scmp.ne.s32.totalorder %s132, %s133
      %p147 = scmp.eq.s32.totalorder %s61, 1
      %p148 = por %p146, %p147
      %p150 = scmp.ne.s32.totalorder %s133, %s149
      %p151 = scmp.eq.s32.totalorder %s61, 0
      %p152 = por %p150, %p151
      %s153 = ssub.s32 %s63, %s70
      %p154 = scmp.eq.s32.totalorder %s153, 0
      %s156 = sadd.s32 %s155, 1
      %s157 = scalar_select %p154, %s155, %s156
      %p160 = pneg %p154
      %p161 = scmp.eq.s32.totalorder %s55, 1
      %p162 = por %p160, %p161
      %p163 = scmp.ne.s32.totalorder %s155, %s158
      %p164 = scmp.eq.s32.totalorder %s55, 0
      %p165 = por %p163, %p164
      %p166 = scmp.ne.s32.totalorder %s155, %s158
      %p167 = scmp.eq.s32.totalorder %s60, 1
      %p168 = por %p166, %p167
      %p169 = scmp.ne.s32.totalorder %s158, %s159
      %p170 = scmp.eq.s32.totalorder %s60, 0
      %p171 = por %p169, %p170
      %p172 = scmp.ne.s32.totalorder %s158, %s159
      %p173 = scmp.eq.s32.totalorder %s61, 1
      %p174 = por %p172, %p173
      %p176 = scmp.ne.s32.totalorder %s159, %s175
      %p177 = scmp.eq.s32.totalorder %s61, 0
      %p178 = por %p176, %p177
      %s179 = ssub.s32 %s63, %s70
      %p180 = scmp.eq.s32.totalorder %s179, 0
      %s182 = sadd.s32 %s181, 1
      %s183 = scalar_select %p180, %s181, %s182
      %p186 = pneg %p180
      %p187 = scmp.eq.s32.totalorder %s55, 1
      %p188 = por %p186, %p187
      %p189 = scmp.ne.s32.totalorder %s181, %s184
      %p190 = scmp.eq.s32.totalorder %s55, 0
      %p191 = por %p189, %p190
      %p192 = scmp.ne.s32.totalorder %s181, %s184
      %p193 = scmp.eq.s32.totalorder %s60, 1
      %p194 = por %p192, %p193
      %p195 = scmp.ne.s32.totalorder %s184, %s185
      %p196 = scmp.eq.s32.totalorder %s60, 0
      %p197 = por %p195, %p196
      %p198 = scmp.ne.s32.totalorder %s184, %s185
      %p199 = scmp.eq.s32.totalorder %s61, 1
      %p200 = por %p198, %p199
      %p202 = scmp.ne.s32.totalorder %s185, %s201
      %p203 = scmp.eq.s32.totalorder %s61, 0
      %p204 = por %p202, %p203
      %s205 = ssub.s32 %s63, %s70
      %p206 = scmp.eq.s32.totalorder %s205, 0
      %s208 = sadd.s32 %s207, 1
      %s209 = scalar_select %p206, %s207, %s208
      %p212 = pneg %p206
      %p213 = scmp.eq.s32.totalorder %s55, 1
      %p214 = por %p212, %p213
      %p215 = scmp.ne.s32.totalorder %s207, %s210
      %p216 = scmp.eq.s32.totalorder %s55, 0
      %p217 = por %p215, %p216
      %p218 = scmp.ne.s32.totalorder %s207, %s210
      %p219 = scmp.eq.s32.totalorder %s60, 1
      %p220 = por %p218, %p219
      %p221 = scmp.ne.s32.totalorder %s210, %s211
      %p222 = scmp.eq.s32.totalorder %s60, 0
      %p223 = por %p221, %p222
      %p224 = scmp.ne.s32.totalorder %s210, %s211
      %p225 = scmp.eq.s32.totalorder %s61, 1
      %p226 = por %p224, %p225
      %p228 = scmp.ne.s32.totalorder %s211, %s227
      %p229 = scmp.eq.s32.totalorder %s61, 0
      %p230 = por %p228, %p229
      %s231 = ssub.s32 %s63, %s70
      %p232 = scmp.eq.s32.totalorder %s231, 0
      %s234 = sadd.s32 %s233, 1
      %s235 = scalar_select %p232, %s233, %s234
      %p238 = pneg %p232
      %p239 = scmp.eq.s32.totalorder %s55, 1
      %p240 = por %p238, %p239
      %p241 = scmp.ne.s32.totalorder %s233, %s236
      %p242 = scmp.eq.s32.totalorder %s55, 0
      %p243 = por %p241, %p242
      %p244 = scmp.ne.s32.totalorder %s233, %s236
      %p245 = scmp.eq.s32.totalorder %s60, 1
      %p246 = por %p244, %p245
      %p247 = scmp.ne.s32.totalorder %s236, %s237
      %p248 = scmp.eq.s32.totalorder %s60, 0
      %p249 = por %p247, %p248
      %p250 = scmp.ne.s32.totalorder %s236, %s237
      %p251 = scmp.eq.s32.totalorder %s61, 1
      %p252 = por %p250, %p251
      %p254 = scmp.ne.s32.totalorder %s237, %s253
      %p255 = scmp.eq.s32.totalorder %s61, 0
      %p256 = por %p254, %p255
      %s257 = ssub.s32 %s63, %s70
      %p258 = scmp.eq.s32.totalorder %s257, 0
      %s260 = sadd.s32 %s259, 1
      %s261 = scalar_select %p258, %s259, %s260
      %p264 = pneg %p258
      %p265 = scmp.eq.s32.totalorder %s55, 1
      %p266 = por %p264, %p265
      %p267 = scmp.ne.s32.totalorder %s259, %s262
      %p268 = scmp.eq.s32.totalorder %s55, 0
      %p269 = por %p267, %p268
      %p270 = scmp.ne.s32.totalorder %s259, %s262
      %p271 = scmp.eq.s32.totalorder %s60, 1
      %p272 = por %p270, %p271
      %p273 = scmp.ne.s32.totalorder %s262, %s263
      %p274 = scmp.eq.s32.totalorder %s60, 0
      %p275 = por %p273, %p274
      %p276 = scmp.ne.s32.totalorder %s262, %s263
      %p277 = scmp.eq.s32.totalorder %s61, 1
      %p278 = por %p276, %p277
      %p280 = scmp.ne.s32.totalorder %s263, %s279
      %p281 = scmp.eq.s32.totalorder %s61, 0
      %p282 = por %p280, %p281
      %s283 = ssub.s32 %s63, %s70
      %p284 = scmp.eq.s32.totalorder %s283, 0
      %s286 = sadd.s32 %s285, 1
      %s287 = scalar_select %p284, %s285, %s286
      %p290 = pneg %p284
      %p291 = scmp.eq.s32.totalorder %s55, 1
      %p292 = por %p290, %p291
      %p293 = scmp.ne.s32.totalorder %s285, %s288
      %p294 = scmp.eq.s32.totalorder %s55, 0
      %p295 = por %p293, %p294
      %p296 = scmp.ne.s32.totalorder %s285, %s288
      %p297 = scmp.eq.s32.totalorder %s60, 1
      %p298 = por %p296, %p297
      %p299 = scmp.ne.s32.totalorder %s288, %s289
      %p300 = scmp.eq.s32.totalorder %s60, 0
      %p301 = por %p299, %p300
      %p302 = scmp.ne.s32.totalorder %s288, %s289
      %p303 = scmp.eq.s32.totalorder %s61, 1
      %p304 = por %p302, %p303
      %p306 = scmp.ne.s32.totalorder %s289, %s305
      %p307 = scmp.eq.s32.totalorder %s61, 0
      %p308 = por %p306, %p307
      %s309 = ssub.s32 %s63, %s70
      %p310 = scmp.eq.s32.totalorder %s309, 0
      %s312 = sadd.s32 %s311, 1
      %s313 = scalar_select %p310, %s311, %s312
      %p316 = pneg %p310
      %p317 = scmp.eq.s32.totalorder %s55, 1
      %p318 = por %p316, %p317
      %p319 = scmp.ne.s32.totalorder %s311, %s314
      %p320 = scmp.eq.s32.totalorder %s55, 0
      %p321 = por %p319, %p320
      %p322 = scmp.ne.s32.totalorder %s311, %s314
      %p323 = scmp.eq.s32.totalorder %s60, 1
      %p324 = por %p322, %p323
      %p325 = scmp.ne.s32.totalorder %s314, %s315
      %p326 = scmp.eq.s32.totalorder %s60, 0
      %p327 = por %p325, %p326
      %p328 = scmp.ne.s32.totalorder %s314, %s315
      %p329 = scmp.eq.s32.totalorder %s61, 1
      %p330 = por %p328, %p329
      %p332 = scmp.ne.s32.totalorder %s315, %s331
      %p333 = scmp.eq.s32.totalorder %s61, 0
      %p334 = por %p332, %p333
      %s335 = ssub.s32 %s63, %s70
      %p336 = scmp.eq.s32.totalorder %s335, 0
      %s338 = sadd.s32 %s337, 1
      %s339 = scalar_select %p336, %s337, %s338
      %p342 = pneg %p336
      %p343 = scmp.eq.s32.totalorder %s55, 1
      %p344 = por %p342, %p343
      %p345 = scmp.ne.s32.totalorder %s337, %s340
      %p346 = scmp.eq.s32.totalorder %s55, 0
      %p347 = por %p345, %p346
      %p348 = scmp.ne.s32.totalorder %s337, %s340
      %p349 = scmp.eq.s32.totalorder %s60, 1
      %p350 = por %p348, %p349
      %p351 = scmp.ne.s32.totalorder %s340, %s341
      %p352 = scmp.eq.s32.totalorder %s60, 0
      %p353 = por %p351, %p352
      %p354 = scmp.ne.s32.totalorder %s340, %s341
      %p355 = scmp.eq.s32.totalorder %s61, 1
      %p356 = por %p354, %p355
      %p358 = scmp.ne.s32.totalorder %s341, %s357
      %p359 = scmp.eq.s32.totalorder %s61, 0
      %p360 = por %p358, %p359
      %s361 = ssub.s32 %s63, %s70
      %p362 = scmp.eq.s32.totalorder %s361, 0
      %s364 = sadd.s32 %s363, 1
      %s365 = scalar_select %p362, %s363, %s364
      %p368 = pneg %p362
      %p369 = scmp.eq.s32.totalorder %s55, 1
      %p370 = por %p368, %p369
      %p371 = scmp.ne.s32.totalorder %s363, %s366
      %p372 = scmp.eq.s32.totalorder %s55, 0
      %p373 = por %p371, %p372
      %p374 = scmp.ne.s32.totalorder %s363, %s366
      %p375 = scmp.eq.s32.totalorder %s60, 1
      %p376 = por %p374, %p375
      %p377 = scmp.ne.s32.totalorder %s366, %s367
      %p378 = scmp.eq.s32.totalorder %s60, 0
      %p379 = por %p377, %p378
      %p380 = scmp.ne.s32.totalorder %s366, %s367
      %p381 = scmp.eq.s32.totalorder %s61, 1
      %p382 = por %p380, %p381
      %p384 = scmp.ne.s32.totalorder %s367, %s383
      %p385 = scmp.eq.s32.totalorder %s61, 0
      %p386 = por %p384, %p385
      %s387 = ssub.s32 %s63, %s70
      %p388 = scmp.eq.s32.totalorder %s387, 0
      %s390 = sadd.s32 %s389, 1
      %s391 = scalar_select %p388, %s389, %s390
      %p394 = pneg %p388
      %p395 = scmp.eq.s32.totalorder %s55, 1
      %p396 = por %p394, %p395
      %p397 = scmp.ne.s32.totalorder %s389, %s392
      %p398 = scmp.eq.s32.totalorder %s55, 0
      %p399 = por %p397, %p398
      %p400 = scmp.ne.s32.totalorder %s389, %s392
      %p401 = scmp.eq.s32.totalorder %s60, 1
      %p402 = por %p400, %p401
      %p403 = scmp.ne.s32.totalorder %s392, %s393
      %p404 = scmp.eq.s32.totalorder %s60, 0
      %p405 = por %p403, %p404
      %p406 = scmp.ne.s32.totalorder %s392, %s393
      %p407 = scmp.eq.s32.totalorder %s61, 1
      %p408 = por %p406, %p407
      %p410 = scmp.ne.s32.totalorder %s393, %s409
      %p411 = scmp.eq.s32.totalorder %s61, 0
      %p412 = por %p410, %p411
      %s413 = ssub.s32 %s63, %s70
      %p414 = scmp.eq.s32.totalorder %s413, 0
      %s416 = sadd.s32 %s415, 1
      %s417 = scalar_select %p414, %s415, %s416
      %p420 = pneg %p414
      %p421 = scmp.eq.s32.totalorder %s55, 1
      %p422 = por %p420, %p421
      %p423 = scmp.ne.s32.totalorder %s415, %s418
      %p424 = scmp.eq.s32.totalorder %s55, 0
      %p425 = por %p423, %p424
      %p426 = scmp.ne.s32.totalorder %s415, %s418
      %p427 = scmp.eq.s32.totalorder %s60, 1
      %p428 = por %p426, %p427
      %p429 = scmp.ne.s32.totalorder %s418, %s419
      %p430 = scmp.eq.s32.totalorder %s60, 0
      %p431 = por %p429, %p430
      %p432 = scmp.ne.s32.totalorder %s418, %s419
      %p433 = scmp.eq.s32.totalorder %s61, 1
      %p434 = por %p432, %p433
      %p436 = scmp.ne.s32.totalorder %s419, %s435
      %p437 = scmp.eq.s32.totalorder %s61, 0
      %p438 = por %p436, %p437
      %s439 = ssub.s32 %s63, %s70
      %p440 = scmp.eq.s32.totalorder %s439, 0
      %s442 = sadd.s32 %s441, 1
      %s443 = scalar_select %p440, %s441, %s442
      %p446 = pneg %p440
      %p447 = scmp.eq.s32.totalorder %s55, 1
      %p448 = por %p446, %p447
      %p449 = scmp.ne.s32.totalorder %s441, %s444
      %p450 = scmp.eq.s32.totalorder %s55, 0
      %p451 = por %p449, %p450
      %p452 = scmp.ne.s32.totalorder %s441, %s444
      %p453 = scmp.eq.s32.totalorder %s60, 1
      %p454 = por %p452, %p453
      %p455 = scmp.ne.s32.totalorder %s444, %s445
      %p456 = scmp.eq.s32.totalorder %s60, 0
      %p457 = por %p455, %p456
      %p458 = scmp.ne.s32.totalorder %s444, %s445
      %p459 = scmp.eq.s32.totalorder %s61, 1
      %p460 = por %p458, %p459
      %p462 = scmp.ne.s32.totalorder %s445, %s461
      %p463 = scmp.eq.s32.totalorder %s61, 0
      %p464 = por %p462, %p463
      %s465 = ssub.s32 %s63, %s70
      %p466 = scmp.eq.s32.totalorder %s465, 0
      %s468 = sadd.s32 %s467, 1
      %s469 = scalar_select %p466, %s467, %s468
      %p472 = pneg %p466
      %p473 = scmp.eq.s32.totalorder %s55, 1
      %p474 = por %p472, %p473
      %p475 = scmp.ne.s32.totalorder %s467, %s470
      %p476 = scmp.eq.s32.totalorder %s55, 0
      %p477 = por %p475, %p476
      %p478 = scmp.ne.s32.totalorder %s467, %s470
      %p479 = scmp.eq.s32.totalorder %s60, 1
      %p480 = por %p478, %p479
      %p481 = scmp.ne.s32.totalorder %s470, %s471
      %p482 = scmp.eq.s32.totalorder %s60, 0
      %p483 = por %p481, %p482
      %p484 = scmp.ne.s32.totalorder %s470, %s471
      %p485 = scmp.eq.s32.totalorder %s61, 1
      %p486 = por %p484, %p485
      %p488 = scmp.ne.s32.totalorder %s471, %s487
      %p489 = scmp.eq.s32.totalorder %s61, 0
      %p490 = por %p488, %p489
      %s491 = ssub.s32 %s63, %s70
      %p492 = scmp.eq.s32.totalorder %s491, 0
      %s494 = sadd.s32 %s493, 1
      %s495 = scalar_select %p492, %s493, %s494
      %p498 = pneg %p492
      %p499 = scmp.eq.s32.totalorder %s55, 1
      %p500 = por %p498, %p499
      %p501 = scmp.ne.s32.totalorder %s493, %s496
      %p502 = scmp.eq.s32.totalorder %s55, 0
      %p503 = por %p501, %p502
      %p504 = scmp.ne.s32.totalorder %s493, %s496
      %p505 = scmp.eq.s32.totalorder %s60, 1
      %p506 = por %p504, %p505
      %p507 = scmp.ne.s32.totalorder %s496, %s497
      %p508 = scmp.eq.s32.totalorder %s60, 0
      %p509 = por %p507, %p508
      %p510 = scmp.ne.s32.totalorder %s496, %s497
      %p511 = scmp.eq.s32.totalorder %s61, 1
      %p512 = por %p510, %p511
      %p514 = scmp.ne.s32.totalorder %s497, %s513
      %p515 = scmp.eq.s32.totalorder %s61, 0
      %p516 = por %p514, %p515
      %s517 = ssub.s32 %s63, %s70
      %p518 = scmp.eq.s32.totalorder %s517, 0
      %s520 = sadd.s32 %s519, 1
      %s521 = scalar_select %p518, %s519, %s520
      %p524 = pneg %p518
      %p525 = scmp.eq.s32.totalorder %s55, 1
      %p526 = por %p524, %p525
      %p527 = scmp.ne.s32.totalorder %s519, %s522
      %p528 = scmp.eq.s32.totalorder %s55, 0
      %p529 = por %p527, %p528
      %p530 = scmp.ne.s32.totalorder %s519, %s522
      %p531 = scmp.eq.s32.totalorder %s60, 1
      %p532 = por %p530, %p531
      %p533 = scmp.ne.s32.totalorder %s522, %s523
      %p534 = scmp.eq.s32.totalorder %s60, 0
      %p535 = por %p533, %p534
      %p536 = scmp.ne.s32.totalorder %s522, %s523
      %p537 = scmp.eq.s32.totalorder %s61, 1
      %p538 = por %p536, %p537
      %p540 = scmp.ne.s32.totalorder %s523, %s539
      %p541 = scmp.eq.s32.totalorder %s61, 0
      %p542 = por %p540, %p541
      %s543 = ssub.s32 %s63, %s70
      %p544 = scmp.eq.s32.totalorder %s543, 0
      %s546 = sadd.s32 %s545, 1
      %s547 = scalar_select %p544, %s545, %s546
      %p550 = pneg %p544
      %p551 = scmp.eq.s32.totalorder %s55, 1
      %p552 = por %p550, %p551
      %p553 = scmp.ne.s32.totalorder %s545, %s548
      %p554 = scmp.eq.s32.totalorder %s55, 0
      %p555 = por %p553, %p554
      %p556 = scmp.ne.s32.totalorder %s545, %s548
      %p557 = scmp.eq.s32.totalorder %s60, 1
      %p558 = por %p556, %p557
      %p559 = scmp.ne.s32.totalorder %s548, %s549
      %p560 = scmp.eq.s32.totalorder %s60, 0
      %p561 = por %p559, %p560
      %p562 = scmp.ne.s32.totalorder %s548, %s549
      %p563 = scmp.eq.s32.totalorder %s61, 1
      %p564 = por %p562, %p563
      %p566 = scmp.ne.s32.totalorder %s549, %s565
      %p567 = scmp.eq.s32.totalorder %s61, 0
      %p568 = por %p566, %p567
      %s569 = ssub.s32 %s63, %s70
      %p570 = scmp.eq.s32.totalorder %s569, 0
      %s572 = sadd.s32 %s571, 1
      %s573 = scalar_select %p570, %s571, %s572
      %p576 = pneg %p570
      %p577 = scmp.eq.s32.totalorder %s55, 1
      %p578 = por %p576, %p577
      %p579 = scmp.ne.s32.totalorder %s571, %s574
      %p580 = scmp.eq.s32.totalorder %s55, 0
      %p581 = por %p579, %p580
      %p582 = scmp.ne.s32.totalorder %s571, %s574
      %p583 = scmp.eq.s32.totalorder %s60, 1
      %p584 = por %p582, %p583
      %p585 = scmp.ne.s32.totalorder %s574, %s575
      %p586 = scmp.eq.s32.totalorder %s60, 0
      %p587 = por %p585, %p586
      %p588 = scmp.ne.s32.totalorder %s574, %s575
      %p589 = scmp.eq.s32.totalorder %s61, 1
      %p590 = por %p588, %p589
      %p592 = scmp.ne.s32.totalorder %s575, %s591
      %p593 = scmp.eq.s32.totalorder %s61, 0
      %p594 = por %p592, %p593
      %s595 = ssub.s32 %s63, %s70
      %p596 = scmp.eq.s32.totalorder %s595, 0
      %s598 = sadd.s32 %s597, 1
      %s599 = scalar_select %p596, %s597, %s598
      %p602 = pneg %p596
      %p603 = scmp.eq.s32.totalorder %s55, 1
      %p604 = por %p602, %p603
      %p605 = scmp.ne.s32.totalorder %s597, %s600
      %p606 = scmp.eq.s32.totalorder %s55, 0
      %p607 = por %p605, %p606
      %p608 = scmp.ne.s32.totalorder %s597, %s600
      %p609 = scmp.eq.s32.totalorder %s60, 1
      %p610 = por %p608, %p609
      %p611 = scmp.ne.s32.totalorder %s600, %s601
      %p612 = scmp.eq.s32.totalorder %s60, 0
      %p613 = por %p611, %p612
      %p614 = scmp.ne.s32.totalorder %s600, %s601
      %p615 = scmp.eq.s32.totalorder %s61, 1
      %p616 = por %p614, %p615
      %p618 = scmp.ne.s32.totalorder %s601, %s617
      %p619 = scmp.eq.s32.totalorder %s61, 0
      %p620 = por %p618, %p619
      %s621 = ssub.s32 %s63, %s70
      %p622 = scmp.eq.s32.totalorder %s621, 0
      %s624 = sadd.s32 %s623, 1
      %s625 = scalar_select %p622, %s623, %s624
      %p628 = pneg %p622
      %p629 = scmp.eq.s32.totalorder %s55, 1
      %p630 = por %p628, %p629
      %p631 = scmp.ne.s32.totalorder %s623, %s626
      %p632 = scmp.eq.s32.totalorder %s55, 0
      %p633 = por %p631, %p632
      %p634 = scmp.ne.s32.totalorder %s623, %s626
      %p635 = scmp.eq.s32.totalorder %s60, 1
      %p636 = por %p634, %p635
      %p637 = scmp.ne.s32.totalorder %s626, %s627
      %p638 = scmp.eq.s32.totalorder %s60, 0
      %p639 = por %p637, %p638
      %p640 = scmp.ne.s32.totalorder %s626, %s627
      %p641 = scmp.eq.s32.totalorder %s61, 1
      %p642 = por %p640, %p641
      %p644 = scmp.ne.s32.totalorder %s627, %s643
      %p645 = scmp.eq.s32.totalorder %s61, 0
      %p646 = por %p644, %p645
      %s647 = ssub.s32 %s63, %s70
      %p648 = scmp.eq.s32.totalorder %s647, 0
      %s650 = sadd.s32 %s649, 1
      %s651 = scalar_select %p648, %s649, %s650
      %p654 = pneg %p648
      %p655 = scmp.eq.s32.totalorder %s55, 1
      %p656 = por %p654, %p655
      %p657 = scmp.ne.s32.totalorder %s649, %s652
      %p658 = scmp.eq.s32.totalorder %s55, 0
      %p659 = por %p657, %p658
      %p660 = scmp.ne.s32.totalorder %s649, %s652
      %p661 = scmp.eq.s32.totalorder %s60, 1
      %p662 = por %p660, %p661
      %p663 = scmp.ne.s32.totalorder %s652, %s653
      %p664 = scmp.eq.s32.totalorder %s60, 0
      %p665 = por %p663, %p664
      %p666 = scmp.ne.s32.totalorder %s652, %s653
      %p667 = scmp.eq.s32.totalorder %s61, 1
      %p668 = por %p666, %p667
      %p670 = scmp.ne.s32.totalorder %s653, %s669
      %p671 = scmp.eq.s32.totalorder %s61, 0
      %p672 = por %p670, %p671
      %s673 = ssub.s32 %s63, %s70
      %p674 = scmp.eq.s32.totalorder %s673, 0
      %s676 = sadd.s32 %s675, 1
      %s677 = scalar_select %p674, %s675, %s676
      %p680 = pneg %p674
      %p681 = scmp.eq.s32.totalorder %s55, 1
      %p682 = por %p680, %p681
      %p683 = scmp.ne.s32.totalorder %s675, %s678
      %p684 = scmp.eq.s32.totalorder %s55, 0
      %p685 = por %p683, %p684
      %p686 = scmp.ne.s32.totalorder %s675, %s678
      %p687 = scmp.eq.s32.totalorder %s60, 1
      %p688 = por %p686, %p687
      %p689 = scmp.ne.s32.totalorder %s678, %s679
      %p690 = scmp.eq.s32.totalorder %s60, 0
      %p691 = por %p689, %p690
      %p692 = scmp.ne.s32.totalorder %s678, %s679
      %p693 = scmp.eq.s32.totalorder %s61, 1
      %p694 = por %p692, %p693
      %p696 = scmp.ne.s32.totalorder %s679, %s695
      %p697 = scmp.eq.s32.totalorder %s61, 0
      %p698 = por %p696, %p697
      %s699 = ssub.s32 %s63, %s70
      %p700 = scmp.eq.s32.totalorder %s699, 0
      %s702 = sadd.s32 %s701, 1
      %s703 = scalar_select %p700, %s701, %s702
      %p706 = pneg %p700
      %p707 = scmp.eq.s32.totalorder %s55, 1
      %p708 = por %p706, %p707
      %p709 = scmp.ne.s32.totalorder %s701, %s704
      %p710 = scmp.eq.s32.totalorder %s55, 0
      %p711 = por %p709, %p710
      %p712 = scmp.ne.s32.totalorder %s701, %s704
      %p713 = scmp.eq.s32.totalorder %s60, 1
      %p714 = por %p712, %p713
      %p715 = scmp.ne.s32.totalorder %s704, %s705
      %p716 = scmp.eq.s32.totalorder %s60, 0
      %p717 = por %p715, %p716
      %p718 = scmp.ne.s32.totalorder %s704, %s705
      %p719 = scmp.eq.s32.totalorder %s61, 1
      %p720 = por %p718, %p719
      %p722 = scmp.ne.s32.totalorder %s705, %s721
      %p723 = scmp.eq.s32.totalorder %s61, 0
      %p724 = por %p722, %p723
      %s725 = ssub.s32 %s63, %s70
      %p726 = scmp.eq.s32.totalorder %s725, 0
      %s728 = sadd.s32 %s727, 1
      %s729 = scalar_select %p726, %s727, %s728
      %p732 = pneg %p726
      %p733 = scmp.eq.s32.totalorder %s55, 1
      %p734 = por %p732, %p733
      %p735 = scmp.ne.s32.totalorder %s727, %s730
      %p736 = scmp.eq.s32.totalorder %s55, 0
      %p737 = por %p735, %p736
      %p738 = scmp.ne.s32.totalorder %s727, %s730
      %p739 = scmp.eq.s32.totalorder %s60, 1
      %p740 = por %p738, %p739
      %p741 = scmp.ne.s32.totalorder %s730, %s731
      %p742 = scmp.eq.s32.totalorder %s60, 0
      %p743 = por %p741, %p742
      %p744 = scmp.ne.s32.totalorder %s730, %s731
      %p745 = scmp.eq.s32.totalorder %s61, 1
      %p746 = por %p744, %p745
      %p748 = scmp.ne.s32.totalorder %s731, %s747
      %p749 = scmp.eq.s32.totalorder %s61, 0
      %p750 = por %p748, %p749
      %s751 = ssub.s32 %s62, %s74
      %p752 = scmp.eq.s32.totalorder %s751, 0
      %s754 = sadd.s32 %s753, 1
      %s755 = scalar_select %p752, %s753, %s754
      %p758 = pneg %p752
      %p759 = scmp.eq.s32.totalorder %s55, 1
      %p760 = por %p758, %p759
      %p761 = scmp.ne.s32.totalorder %s753, %s756
      %p762 = scmp.eq.s32.totalorder %s55, 0
      %p763 = por %p761, %p762
      %p764 = scmp.ne.s32.totalorder %s753, %s756
      %p765 = scmp.eq.s32.totalorder %s60, 1
      %p766 = por %p764, %p765
      %p767 = scmp.ne.s32.totalorder %s756, %s757
      %p768 = scmp.eq.s32.totalorder %s60, 0
      %p769 = por %p767, %p768
      %p770 = scmp.ne.s32.totalorder %s756, %s757
      %p771 = scmp.eq.s32.totalorder %s61, 1
      %p772 = por %p770, %p771
      %p774 = scmp.ne.s32.totalorder %s757, %s773
      %p775 = scmp.eq.s32.totalorder %s61, 0
      %p776 = por %p774, %p775
      %p777 = scmp.le.s32.totalorder 1, %s55
      %p778 = scmp.lt.s32.totalorder %s55, 3
      %p779 = pnand %p777, %p778
      %p780 = pneg %p779
      // Predicated region
      $region9: #{tpu_custom_call.1} parent=5 // pred_check
        _
      $region10: #{tpu_custom_call.1} parent=5 // pred_check_branch
        %782 = sbr.rel (%p779) target = $region12
      $region11: #{tpu_custom_call.1} parent=5 // pred_region
        %s783 = ssub.s32 %s55, 1
        // Predicated region
        $region13: #{tpu_custom_call.1} parent=11 // pred_check
          %p784 = pneg %p93
        $region14: #{tpu_custom_call.1} parent=11 // pred_check_branch
          %786 = sbr.rel (%p784) target = $region16
        $region15: #{tpu_custom_call.1} parent=11 // pred_region
          %s787 = smul.u32 2, %s64
          %p788 = scmp.lt.s32.totalorder %s787, 1
          %s789 = scalar_select %p788, %s787, 1
          %s790 = smul.addr %s789, 2
          %s791 = smul.addr %s790, 8
          %s792 = scalar_lea.vmem %s0, %s791
          %s793 = smul.u32 2, %s64
        $region16: #{tpu_custom_call.1} parent=11 // pred_fallthru
          _
        // Predicated region
        $region17: #{tpu_custom_call.1} parent=11 // pred_check
          %p794 = pneg %p119
        $region18: #{tpu_custom_call.1} parent=11 // pred_check_branch
          %796 = sbr.rel (%p794) target = $region20
        $region19: #{tpu_custom_call.1} parent=11 // pred_region
          %s797 = smul.u32 2, %s64
          %s799 = ssub.s32 256, 256
          %800 = vsyncadd [#allocation3], %s799
          %s801 = smul.addr %s797, 128
          %s802 = scalar_lea.hbm %s1, %s801
          %s803 = sshll.u32 [#allocation2], 4
          %s804 = int_to_ptr.vmem [resolvable:$true] %s803
          %809 = dma.hbm_to_vmem [thread:$0]  %s802, 256, %s804, [#allocation3], 128, 128, 8
        $region20: #{tpu_custom_call.1} parent=11 // pred_fallthru
          _
      $region12: #{tpu_custom_call.1} parent=5 // pred_fallthru
        _
      %p810 = scmp.lt.s32.totalorder %s55, 2
      // Predicated region
      $region21: #{tpu_custom_call.1} parent=5 // pred_check
        %p811 = pneg %p810
      $region22: #{tpu_custom_call.1} parent=5 // pred_check_branch
        %813 = sbr.rel (%p811) target = $region24
      $region23: #{tpu_custom_call.1} parent=5 // pred_region
        // Predicated region
        $region25: #{tpu_custom_call.1} parent=23 // pred_check
          %p814 = pneg %p139
        $region26: #{tpu_custom_call.1} parent=23 // pred_check_branch
          %816 = sbr.rel (%p814) target = $region28
        $region27: #{tpu_custom_call.1} parent=23 // pred_region
          %p817 = scmp.lt.s32.totalorder %s63, 1
          %s818 = scalar_select %p817, %s63, 1
          %s819 = smul.addr %s818, 4
          %s820 = smul.addr %s819, 8
          %s821 = scalar_lea.vmem %s2, %s820
        $region28: #{tpu_custom_call.1} parent=23 // pred_fallthru
          _
        // Predicated region
        $region29: #{tpu_custom_call.1} parent=23 // pred_check
          %p822 = pneg %p165
        $region30: #{tpu_custom_call.1} parent=23 // pred_check_branch
          %824 = sbr.rel (%p822) target = $region32
        $region31: #{tpu_custom_call.1} parent=23 // pred_region
          %p825 = scmp.lt.s32.totalorder %s63, 1
          %s826 = scalar_select %p825, %s63, 1
          %s827 = scalar_lea.vmem %s3, %s826
        $region32: #{tpu_custom_call.1} parent=23 // pred_fallthru
          _
        // Predicated region
        $region33: #{tpu_custom_call.1} parent=23 // pred_check
          %p828 = pneg %p191
        $region34: #{tpu_custom_call.1} parent=23 // pred_check_branch
          %830 = sbr.rel (%p828) target = $region36
        $region35: #{tpu_custom_call.1} parent=23 // pred_region
          %p831 = scmp.lt.s32.totalorder %s63, 1
          %s832 = scalar_select %p831, %s63, 1
          %s833 = smul.addr %s832, 4
          %s834 = smul.addr %s833, 8
          %s835 = scalar_lea.vmem %s4, %s834
        $region36: #{tpu_custom_call.1} parent=23 // pred_fallthru
          _
        // Predicated region
        $region37: #{tpu_custom_call.1} parent=23 // pred_check
          %p836 = pneg %p217
        $region38: #{tpu_custom_call.1} parent=23 // pred_check_branch
          %838 = sbr.rel (%p836) target = $region40
        $region39: #{tpu_custom_call.1} parent=23 // pred_region
          %s839 = sand.u32 %s55, 1
          %s840 = scalar_lea.sflag [#allocation6], %s839
          %s841 = sand.u32 %s207, 1
          %s842 = scalar_lea.vmem [#allocation5], %s841
          %s844 = ssub.s32 16, 16
          %845 = vsyncadd %s840, %s844
          %s846 = smul.addr %s63, 16
          %s847 = scalar_lea.hbm %s5, %s846
          %s849 = sshll.u32 %s842, 4
          %s850 = int_to_ptr.vmem [resolvable:$true] %s849
          %852 = dma.hbm_to_vmem [thread:$0]  %s847, 16, %s850, %s840
        $region40: #{tpu_custom_call.1} parent=23 // pred_fallthru
          _
        // Predicated region
        $region41: #{tpu_custom_call.1} parent=23 // pred_check
          %p853 = pneg %p243
        $region42: #{tpu_custom_call.1} parent=23 // pred_check_branch
          %855 = sbr.rel (%p853) target = $region44
        $region43: #{tpu_custom_call.1} parent=23 // pred_region
          %p856 = scmp.lt.s32.totalorder %s63, 1
          %s857 = scalar_select %p856, %s63, 1
          %s858 = smul.addr %s857, 4
          %s859 = smul.addr %s858, 8
          %s860 = scalar_lea.vmem %s6, %s859
        $region44: #{tpu_custom_call.1} parent=23 // pred_fallthru
          _
        // Predicated region
        $region45: #{tpu_custom_call.1} parent=23 // pred_check
          %p861 = pneg %p269
        $region46: #{tpu_custom_call.1} parent=23 // pred_check_branch
          %863 = sbr.rel (%p861) target = $region48
        $region47: #{tpu_custom_call.1} parent=23 // pred_region
          %s864 = sand.u32 %s55, 1
          %s865 = scalar_lea.sflag [#allocation6], %s864
          %s866 = sand.u32 %s259, 1
          %s867 = scalar_lea.vmem [#allocation7], %s866
          %s869 = ssub.s32 16, 16
          %870 = vsyncadd %s865, %s869
          %s871 = smul.addr %s63, 16
          %s872 = scalar_lea.hbm %s7, %s871
          %s874 = sshll.u32 %s867, 4
          %s875 = int_to_ptr.vmem [resolvable:$true] %s874
          %877 = dma.hbm_to_vmem [thread:$0]  %s872, 16, %s875, %s865
        $region48: #{tpu_custom_call.1} parent=23 // pred_fallthru
          _
        // Predicated region
        $region49: #{tpu_custom_call.1} parent=23 // pred_check
          %p878 = pneg %p295
        $region50: #{tpu_custom_call.1} parent=23 // pred_check_branch
          %880 = sbr.rel (%p878) target = $region52
        $region51: #{tpu_custom_call.1} parent=23 // pred_region
          %p881 = scmp.lt.s32.totalorder %s63, 1
          %s882 = scalar_select %p881, %s63, 1
          %s883 = smul.addr %s882, 4
          %s884 = smul.addr %s883, 8
          %s885 = scalar_lea.vmem %s8, %s884
        $region52: #{tpu_custom_call.1} parent=23 // pred_fallthru
          _
        // Predicated region
        $region53: #{tpu_custom_call.1} parent=23 // pred_check
          %p886 = pneg %p321
        $region54: #{tpu_custom_call.1} parent=23 // pred_check_branch
          %888 = sbr.rel (%p886) target = $region56
        $region55: #{tpu_custom_call.1} parent=23 // pred_region
          %s889 = sand.u32 %s55, 1
          %s890 = scalar_lea.sflag [#allocation9], %s889
          %s891 = sand.u32 %s311, 1
          %s892 = scalar_lea.vmem [#allocation8], %s891
          %s894 = ssub.s32 16, 16
          %895 = vsyncadd %s890, %s894
          %s896 = smul.addr %s63, 16
          %s897 = scalar_lea.hbm %s9, %s896
          %s899 = sshll.u32 %s892, 4
          %s900 = int_to_ptr.vmem [resolvable:$true] %s899
          %902 = dma.hbm_to_vmem [thread:$0]  %s897, 16, %s900, %s890
        $region56: #{tpu_custom_call.1} parent=23 // pred_fallthru
          _
        // Predicated region
        $region57: #{tpu_custom_call.1} parent=23 // pred_check
          %p903 = pneg %p347
        $region58: #{tpu_custom_call.1} parent=23 // pred_check_branch
          %905 = sbr.rel (%p903) target = $region60
        $region59: #{tpu_custom_call.1} parent=23 // pred_region
          %p906 = scmp.lt.s32.totalorder %s63, 1
          %s907 = scalar_select %p906, %s63, 1
          %s908 = smul.addr %s907, 4
          %s909 = smul.addr %s908, 8
          %s910 = scalar_lea.vmem %s10, %s909
        $region60: #{tpu_custom_call.1} parent=23 // pred_fallthru
          _
        // Predicated region
        $region61: #{tpu_custom_call.1} parent=23 // pred_check
          %p911 = pneg %p373
        $region62: #{tpu_custom_call.1} parent=23 // pred_check_branch
          %913 = sbr.rel (%p911) target = $region64
        $region63: #{tpu_custom_call.1} parent=23 // pred_region
          %s914 = sand.u32 %s55, 1
          %s915 = scalar_lea.sflag [#allocation9], %s914
          %s916 = sand.u32 %s363, 1
          %s917 = scalar_lea.vmem [#allocation10], %s916
          %s919 = ssub.s32 16, 16
          %920 = vsyncadd %s915, %s919
          %s921 = smul.addr %s63, 16
          %s922 = scalar_lea.hbm %s11, %s921
          %s924 = sshll.u32 %s917, 4
          %s925 = int_to_ptr.vmem [resolvable:$true] %s924
          %927 = dma.hbm_to_vmem [thread:$0]  %s922, 16, %s925, %s915
        $region64: #{tpu_custom_call.1} parent=23 // pred_fallthru
          _
        // Predicated region
        $region65: #{tpu_custom_call.1} parent=23 // pred_check
          %p928 = pneg %p399
        $region66: #{tpu_custom_call.1} parent=23 // pred_check_branch
          %930 = sbr.rel (%p928) target = $region68
        $region67: #{tpu_custom_call.1} parent=23 // pred_region
          %s931 = sand.u32 %s55, 1
          %s932 = scalar_lea.sflag [#allocation12], %s931
          %s933 = sand.u32 %s389, 1
          %s934 = smul.addr %s933, 32
          %s935 = scalar_lea.vmem [#allocation11], %s934
          %s937 = ssub.s32 512, 512
          %938 = vsyncadd %s932, %s937
          %s939 = smul.addr %s63, 4
          %s940 = smul.addr %s939, 128
          %s941 = scalar_lea.hbm %s12, %s940
          %s942 = sshll.u32 %s935, 4
          %s943 = int_to_ptr.vmem [resolvable:$true] %s942
          %948 = dma.hbm_to_vmem [thread:$0]  %s941, 512, %s943, %s932, 128, 128, 8
        $region68: #{tpu_custom_call.1} parent=23 // pred_fallthru
          _
        // Predicated region
        $region69: #{tpu_custom_call.1} parent=23 // pred_check
          %p949 = pneg %p425
        $region70: #{tpu_custom_call.1} parent=23 // pred_check_branch
          %951 = sbr.rel (%p949) target = $region72
        $region71: #{tpu_custom_call.1} parent=23 // pred_region
          %s952 = sand.u32 %s55, 1
          %s953 = scalar_lea.sflag [#allocation12], %s952
          %s954 = sand.u32 %s415, 1
          %s955 = scalar_lea.vmem [#allocation13], %s954
          %s957 = ssub.s32 16, 16
          %958 = vsyncadd %s953, %s957
          %s959 = smul.addr %s63, 16
          %s960 = scalar_lea.hbm %s13, %s959
          %s962 = sshll.u32 %s955, 4
          %s963 = int_to_ptr.vmem [resolvable:$true] %s962
          %965 = dma.hbm_to_vmem [thread:$0]  %s960, 16, %s963, %s953
        $region72: #{tpu_custom_call.1} parent=23 // pred_fallthru
          _
        // Predicated region
        $region73: #{tpu_custom_call.1} parent=23 // pred_check
          %p966 = pneg %p451
        $region74: #{tpu_custom_call.1} parent=23 // pred_check_branch
          %968 = sbr.rel (%p966) target = $region76
        $region75: #{tpu_custom_call.1} parent=23 // pred_region
          %s969 = sand.u32 %s55, 1
          %s970 = scalar_lea.sflag [#allocation15], %s969
          %s971 = sand.u32 %s441, 1
          %s972 = smul.addr %s971, 32
          %s973 = scalar_lea.vmem [#allocation14], %s972
          %s975 = ssub.s32 512, 512
          %976 = vsyncadd %s970, %s975
          %s977 = smul.addr %s63, 4
          %s978 = smul.addr %s977, 128
          %s979 = scalar_lea.hbm %s14, %s978
          %s980 = sshll.u32 %s973, 4
          %s981 = int_to_ptr.vmem [resolvable:$true] %s980
          %986 = dma.hbm_to_vmem [thread:$0]  %s979, 512, %s981, %s970, 128, 128, 8
        $region76: #{tpu_custom_call.1} parent=23 // pred_fallthru
          _
        // Predicated region
        $region77: #{tpu_custom_call.1} parent=23 // pred_check
          %p987 = pneg %p477
        $region78: #{tpu_custom_call.1} parent=23 // pred_check_branch
          %989 = sbr.rel (%p987) target = $region80
        $region79: #{tpu_custom_call.1} parent=23 // pred_region
          %s990 = sand.u32 %s55, 1
          %s991 = scalar_lea.sflag [#allocation15], %s990
          %s992 = sand.u32 %s467, 1
          %s993 = scalar_lea.vmem [#allocation16], %s992
          %s995 = ssub.s32 16, 16
          %996 = vsyncadd %s991, %s995
          %s997 = smul.addr %s63, 16
          %s998 = scalar_lea.hbm %s15, %s997
          %s1000 = sshll.u32 %s993, 4
          %s1001 = int_to_ptr.vmem [resolvable:$true] %s1000
          %1003 = dma.hbm_to_vmem [thread:$0]  %s998, 16, %s1001, %s991
        $region80: #{tpu_custom_call.1} parent=23 // pred_fallthru
          _
        // Predicated region
        $region81: #{tpu_custom_call.1} parent=23 // pred_check
          %p1004 = pneg %p503
        $region82: #{tpu_custom_call.1} parent=23 // pred_check_branch
          %1006 = sbr.rel (%p1004) target = $region84
        $region83: #{tpu_custom_call.1} parent=23 // pred_region
          %s1007 = sand.u32 %s55, 1
          %s1008 = scalar_lea.sflag [#allocation18], %s1007
          %s1009 = sand.u32 %s493, 1
          %s1010 = smul.addr %s1009, 32
          %s1011 = scalar_lea.vmem [#allocation17], %s1010
          %s1013 = ssub.s32 512, 512
          %1014 = vsyncadd %s1008, %s1013
          %s1015 = smul.addr %s63, 4
          %s1016 = smul.addr %s1015, 128
          %s1017 = scalar_lea.hbm %s16, %s1016
          %s1018 = sshll.u32 %s1011, 4
          %s1019 = int_to_ptr.vmem [resolvable:$true] %s1018
          %1024 = dma.hbm_to_vmem [thread:$0]  %s1017, 512, %s1019, %s1008, 128, 128, 8
        $region84: #{tpu_custom_call.1} parent=23 // pred_fallthru
          _
        // Predicated region
        $region85: #{tpu_custom_call.1} parent=23 // pred_check
          %p1025 = pneg %p529
        $region86: #{tpu_custom_call.1} parent=23 // pred_check_branch
          %1027 = sbr.rel (%p1025) target = $region88
        $region87: #{tpu_custom_call.1} parent=23 // pred_region
          %s1028 = sand.u32 %s55, 1
          %s1029 = scalar_lea.sflag [#allocation18], %s1028
          %s1030 = sand.u32 %s519, 1
          %s1031 = scalar_lea.vmem [#allocation19], %s1030
          %s1033 = ssub.s32 16, 16
          %1034 = vsyncadd %s1029, %s1033
          %s1035 = smul.addr %s63, 16
          %s1036 = scalar_lea.hbm %s17, %s1035
          %s1038 = sshll.u32 %s1031, 4
          %s1039 = int_to_ptr.vmem [resolvable:$true] %s1038
          %1041 = dma.hbm_to_vmem [thread:$0]  %s1036, 16, %s1039, %s1029
        $region88: #{tpu_custom_call.1} parent=23 // pred_fallthru
          _
        // Predicated region
        $region89: #{tpu_custom_call.1} parent=23 // pred_check
          %p1042 = pneg %p555
        $region90: #{tpu_custom_call.1} parent=23 // pred_check_branch
          %1044 = sbr.rel (%p1042) target = $region92
        $region91: #{tpu_custom_call.1} parent=23 // pred_region
          %s1045 = sand.u32 %s55, 1
          %s1046 = scalar_lea.sflag [#allocation21], %s1045
          %s1047 = sand.u32 %s545, 1
          %s1048 = scalar_lea.vmem [#allocation20], %s1047
          %s1050 = ssub.s32 16, 16
          %1051 = vsyncadd %s1046, %s1050
          %s1052 = smul.addr %s63, 16
          %s1053 = scalar_lea.hbm %s18, %s1052
          %s1055 = sshll.u32 %s1048, 4
          %s1056 = int_to_ptr.vmem [resolvable:$true] %s1055
          %1058 = dma.hbm_to_vmem [thread:$0]  %s1053, 16, %s1056, %s1046
        $region92: #{tpu_custom_call.1} parent=23 // pred_fallthru
          _
        // Predicated region
        $region93: #{tpu_custom_call.1} parent=23 // pred_check
          %p1059 = pneg %p581
        $region94: #{tpu_custom_call.1} parent=23 // pred_check_branch
          %1061 = sbr.rel (%p1059) target = $region96
        $region95: #{tpu_custom_call.1} parent=23 // pred_region
          %s1062 = sand.u32 %s55, 1
          %s1063 = scalar_lea.sflag [#allocation21], %s1062
          %s1064 = sand.u32 %s571, 1
          %s1065 = scalar_lea.vmem [#allocation22], %s1064
          %s1067 = ssub.s32 16, 16
          %1068 = vsyncadd %s1063, %s1067
          %s1069 = smul.addr %s63, 16
          %s1070 = scalar_lea.hbm %s19, %s1069
          %s1072 = sshll.u32 %s1065, 4
          %s1073 = int_to_ptr.vmem [resolvable:$true] %s1072
          %1075 = dma.hbm_to_vmem [thread:$0]  %s1070, 16, %s1073, %s1063
        $region96: #{tpu_custom_call.1} parent=23 // pred_fallthru
          _
        // Predicated region
        $region97: #{tpu_custom_call.1} parent=23 // pred_check
          %p1076 = pneg %p607
        $region98: #{tpu_custom_call.1} parent=23 // pred_check_branch
          %1078 = sbr.rel (%p1076) target = $region100
        $region99: #{tpu_custom_call.1} parent=23 // pred_region
          %s1079 = sand.u32 %s55, 1
          %s1080 = scalar_lea.sflag [#allocation24], %s1079
          %s1081 = sand.u32 %s597, 1
          %s1082 = scalar_lea.vmem [#allocation23], %s1081
          %s1084 = ssub.s32 16, 16
          %1085 = vsyncadd %s1080, %s1084
          %s1086 = smul.addr %s63, 16
          %s1087 = scalar_lea.hbm %s20, %s1086
          %s1089 = sshll.u32 %s1082, 4
          %s1090 = int_to_ptr.vmem [resolvable:$true] %s1089
          %1092 = dma.hbm_to_vmem [thread:$0]  %s1087, 16, %s1090, %s1080
        $region100: #{tpu_custom_call.1} parent=23 // pred_fallthru
          _
        // Predicated region
        $region101: #{tpu_custom_call.1} parent=23 // pred_check
          %p1093 = pneg %p633
        $region102: #{tpu_custom_call.1} parent=23 // pred_check_branch
          %1095 = sbr.rel (%p1093) target = $region104
        $region103: #{tpu_custom_call.1} parent=23 // pred_region
          %s1096 = sand.u32 %s55, 1
          %s1097 = scalar_lea.sflag [#allocation24], %s1096
          %s1098 = sand.u32 %s623, 1
          %s1099 = scalar_lea.vmem [#allocation25], %s1098
          %s1101 = ssub.s32 16, 16
          %1102 = vsyncadd %s1097, %s1101
          %s1103 = smul.addr %s63, 16
          %s1104 = scalar_lea.hbm %s21, %s1103
          %s1106 = sshll.u32 %s1099, 4
          %s1107 = int_to_ptr.vmem [resolvable:$true] %s1106
          %1109 = dma.hbm_to_vmem [thread:$0]  %s1104, 16, %s1107, %s1097
        $region104: #{tpu_custom_call.1} parent=23 // pred_fallthru
          _
        // Predicated region
        $region105: #{tpu_custom_call.1} parent=23 // pred_check
          %p1110 = pneg %p659
        $region106: #{tpu_custom_call.1} parent=23 // pred_check_branch
          %1112 = sbr.rel (%p1110) target = $region108
        $region107: #{tpu_custom_call.1} parent=23 // pred_region
          %p1113 = scmp.lt.s32.totalorder %s63, 1
          %s1114 = scalar_select %p1113, %s63, 1
          %s1115 = smul.addr %s1114, 4
          %s1116 = smul.addr %s1115, 8
          %s1117 = scalar_lea.vmem %s22, %s1116
        $region108: #{tpu_custom_call.1} parent=23 // pred_fallthru
          _
        // Predicated region
        $region109: #{tpu_custom_call.1} parent=23 // pred_check
          %p1118 = pneg %p685
        $region110: #{tpu_custom_call.1} parent=23 // pred_check_branch
          %1120 = sbr.rel (%p1118) target = $region112
        $region111: #{tpu_custom_call.1} parent=23 // pred_region
          %p1121 = scmp.lt.s32.totalorder %s63, 1
          %s1122 = scalar_select %p1121, %s63, 1
          %s1123 = scalar_lea.vmem %s23, %s1122
        $region112: #{tpu_custom_call.1} parent=23 // pred_fallthru
          _
        // Predicated region
        $region113: #{tpu_custom_call.1} parent=23 // pred_check
          %p1124 = pneg %p711
        $region114: #{tpu_custom_call.1} parent=23 // pred_check_branch
          %1126 = sbr.rel (%p1124) target = $region116
        $region115: #{tpu_custom_call.1} parent=23 // pred_region
          %p1127 = scmp.lt.s32.totalorder %s63, 1
          %s1128 = scalar_select %p1127, %s63, 1
          %s1129 = smul.addr %s1128, 16
          %s1130 = smul.addr %s1129, 8
          %s1131 = scalar_lea.vmem %s24, %s1130
        $region116: #{tpu_custom_call.1} parent=23 // pred_fallthru
          _
        // Predicated region
        $region117: #{tpu_custom_call.1} parent=23 // pred_check
          %p1132 = pneg %p737
        $region118: #{tpu_custom_call.1} parent=23 // pred_check_branch
          %1134 = sbr.rel (%p1132) target = $region120
        $region119: #{tpu_custom_call.1} parent=23 // pred_region
          %p1135 = scmp.lt.s32.totalorder %s63, 1
          %s1136 = scalar_select %p1135, %s63, 1
          %s1137 = scalar_lea.vmem %s25, %s1136
        $region120: #{tpu_custom_call.1} parent=23 // pred_fallthru
          _
      $region24: #{tpu_custom_call.1} parent=5 // pred_fallthru
        _
      %p1138 = scmp.le.s32.totalorder 1, %s55
      %p1139 = scmp.lt.s32.totalorder %s55, 3
      %p1140 = pnand %p1138, %p1139
      %p1141 = pneg %p1140
      // Predicated region
      $region121: #{tpu_custom_call.1} parent=5 // pred_check
        _
      $region122: #{tpu_custom_call.1} parent=5 // pred_check_branch
        %1143 = sbr.rel (%p1140) target = $region124
      $region123: #{tpu_custom_call.1} parent=5 // pred_region
        %s1144 = ssub.s32 %s55, 1
        // Predicated region
        $region125: #{tpu_custom_call.1} parent=123 // pred_check
          %p1145 = pneg %p119
        $region126: #{tpu_custom_call.1} parent=123 // pred_check_branch
          %1147 = sbr.rel (%p1145) target = $region128
        $region127: #{tpu_custom_call.1} parent=123 // pred_region
          %1148 = dma.done [#allocation3], 256
        $region128: #{tpu_custom_call.1} parent=123 // pred_fallthru
          _
        %s1149 = sand.u32 %s60, 1
        %s1150 = scalar_lea.sflag [#allocation6], %s1149
        %s1151 = sand.u32 %s210, 1
        %s1152 = scalar_lea.vmem [#allocation5], %s1151
        // Predicated region
        $region129: #{tpu_custom_call.1} parent=123 // pred_check
          %p1153 = pneg %p223
        $region130: #{tpu_custom_call.1} parent=123 // pred_check_branch
          %1155 = sbr.rel (%p1153) target = $region132
        $region131: #{tpu_custom_call.1} parent=123 // pred_region
          %1156 = dma.done %s1150, 16
        $region132: #{tpu_custom_call.1} parent=123 // pred_fallthru
          _
        %s1157 = sand.u32 %s60, 1
        %s1158 = scalar_lea.sflag [#allocation6], %s1157
        %s1159 = sand.u32 %s262, 1
        %s1160 = scalar_lea.vmem [#allocation7], %s1159
        // Predicated region
        $region133: #{tpu_custom_call.1} parent=123 // pred_check
          %p1161 = pneg %p275
        $region134: #{tpu_custom_call.1} parent=123 // pred_check_branch
          %1163 = sbr.rel (%p1161) target = $region136
        $region135: #{tpu_custom_call.1} parent=123 // pred_region
          %1164 = dma.done %s1158, 16
        $region136: #{tpu_custom_call.1} parent=123 // pred_fallthru
          _
        %s1165 = sand.u32 %s60, 1
        %s1166 = scalar_lea.sflag [#allocation9], %s1165
        %s1167 = sand.u32 %s314, 1
        %s1168 = scalar_lea.vmem [#allocation8], %s1167
        // Predicated region
        $region137: #{tpu_custom_call.1} parent=123 // pred_check
          %p1169 = pneg %p327
        $region138: #{tpu_custom_call.1} parent=123 // pred_check_branch
          %1171 = sbr.rel (%p1169) target = $region140
        $region139: #{tpu_custom_call.1} parent=123 // pred_region
          %1172 = dma.done %s1166, 16
        $region140: #{tpu_custom_call.1} parent=123 // pred_fallthru
          _
        %s1173 = sand.u32 %s60, 1
        %s1174 = scalar_lea.sflag [#allocation9], %s1173
        %s1175 = sand.u32 %s366, 1
        %s1176 = scalar_lea.vmem [#allocation10], %s1175
        // Predicated region
        $region141: #{tpu_custom_call.1} parent=123 // pred_check
          %p1177 = pneg %p379
        $region142: #{tpu_custom_call.1} parent=123 // pred_check_branch
          %1179 = sbr.rel (%p1177) target = $region144
        $region143: #{tpu_custom_call.1} parent=123 // pred_region
          %1180 = dma.done %s1174, 16
        $region144: #{tpu_custom_call.1} parent=123 // pred_fallthru
          _
        %s1181 = sand.u32 %s60, 1
        %s1182 = scalar_lea.sflag [#allocation12], %s1181
        %s1183 = sand.u32 %s392, 1
        %s1184 = smul.addr %s1183, 32
        %s1185 = scalar_lea.vmem [#allocation11], %s1184
        // Predicated region
        $region145: #{tpu_custom_call.1} parent=123 // pred_check
          %p1186 = pneg %p405
        $region146: #{tpu_custom_call.1} parent=123 // pred_check_branch
          %1188 = sbr.rel (%p1186) target = $region148
        $region147: #{tpu_custom_call.1} parent=123 // pred_region
          %1189 = dma.done %s1182, 512
        $region148: #{tpu_custom_call.1} parent=123 // pred_fallthru
          _
        %s1190 = sand.u32 %s60, 1
        %s1191 = scalar_lea.sflag [#allocation12], %s1190
        %s1192 = sand.u32 %s418, 1
        %s1193 = scalar_lea.vmem [#allocation13], %s1192
        // Predicated region
        $region149: #{tpu_custom_call.1} parent=123 // pred_check
          %p1194 = pneg %p431
        $region150: #{tpu_custom_call.1} parent=123 // pred_check_branch
          %1196 = sbr.rel (%p1194) target = $region152
        $region151: #{tpu_custom_call.1} parent=123 // pred_region
          %1197 = dma.done %s1191, 16
        $region152: #{tpu_custom_call.1} parent=123 // pred_fallthru
          _
        %s1198 = sand.u32 %s60, 1
        %s1199 = scalar_lea.sflag [#allocation15], %s1198
        %s1200 = sand.u32 %s444, 1
        %s1201 = smul.addr %s1200, 32
        %s1202 = scalar_lea.vmem [#allocation14], %s1201
        // Predicated region
        $region153: #{tpu_custom_call.1} parent=123 // pred_check
          %p1203 = pneg %p457
        $region154: #{tpu_custom_call.1} parent=123 // pred_check_branch
          %1205 = sbr.rel (%p1203) target = $region156
        $region155: #{tpu_custom_call.1} parent=123 // pred_region
          %1206 = dma.done %s1199, 512
        $region156: #{tpu_custom_call.1} parent=123 // pred_fallthru
          _
        %s1207 = sand.u32 %s60, 1
        %s1208 = scalar_lea.sflag [#allocation15], %s1207
        %s1209 = sand.u32 %s470, 1
        %s1210 = scalar_lea.vmem [#allocation16], %s1209
        // Predicated region
        $region157: #{tpu_custom_call.1} parent=123 // pred_check
          %p1211 = pneg %p483
        $region158: #{tpu_custom_call.1} parent=123 // pred_check_branch
          %1213 = sbr.rel (%p1211) target = $region160
        $region159: #{tpu_custom_call.1} parent=123 // pred_region
          %1214 = dma.done %s1208, 16
        $region160: #{tpu_custom_call.1} parent=123 // pred_fallthru
          _
        %s1215 = sand.u32 %s60, 1
        %s1216 = scalar_lea.sflag [#allocation18], %s1215
        %s1217 = sand.u32 %s496, 1
        %s1218 = smul.addr %s1217, 32
        %s1219 = scalar_lea.vmem [#allocation17], %s1218
        // Predicated region
        $region161: #{tpu_custom_call.1} parent=123 // pred_check
          %p1220 = pneg %p509
        $region162: #{tpu_custom_call.1} parent=123 // pred_check_branch
          %1222 = sbr.rel (%p1220) target = $region164
        $region163: #{tpu_custom_call.1} parent=123 // pred_region
          %1223 = dma.done %s1216, 512
        $region164: #{tpu_custom_call.1} parent=123 // pred_fallthru
          _
        %s1224 = sand.u32 %s60, 1
        %s1225 = scalar_lea.sflag [#allocation18], %s1224
        %s1226 = sand.u32 %s522, 1
        %s1227 = scalar_lea.vmem [#allocation19], %s1226
        // Predicated region
        $region165: #{tpu_custom_call.1} parent=123 // pred_check
          %p1228 = pneg %p535
        $region166: #{tpu_custom_call.1} parent=123 // pred_check_branch
          %1230 = sbr.rel (%p1228) target = $region168
        $region167: #{tpu_custom_call.1} parent=123 // pred_region
          %1231 = dma.done %s1225, 16
        $region168: #{tpu_custom_call.1} parent=123 // pred_fallthru
          _
        %s1232 = sand.u32 %s60, 1
        %s1233 = scalar_lea.sflag [#allocation21], %s1232
        %s1234 = sand.u32 %s548, 1
        %s1235 = scalar_lea.vmem [#allocation20], %s1234
        // Predicated region
        $region169: #{tpu_custom_call.1} parent=123 // pred_check
          %p1236 = pneg %p561
        $region170: #{tpu_custom_call.1} parent=123 // pred_check_branch
          %1238 = sbr.rel (%p1236) target = $region172
        $region171: #{tpu_custom_call.1} parent=123 // pred_region
          %1239 = dma.done %s1233, 16
        $region172: #{tpu_custom_call.1} parent=123 // pred_fallthru
          _
        %s1240 = sand.u32 %s60, 1
        %s1241 = scalar_lea.sflag [#allocation21], %s1240
        %s1242 = sand.u32 %s574, 1
        %s1243 = scalar_lea.vmem [#allocation22], %s1242
        // Predicated region
        $region173: #{tpu_custom_call.1} parent=123 // pred_check
          %p1244 = pneg %p587
        $region174: #{tpu_custom_call.1} parent=123 // pred_check_branch
          %1246 = sbr.rel (%p1244) target = $region176
        $region175: #{tpu_custom_call.1} parent=123 // pred_region
          %1247 = dma.done %s1241, 16
        $region176: #{tpu_custom_call.1} parent=123 // pred_fallthru
          _
        %s1248 = sand.u32 %s60, 1
        %s1249 = scalar_lea.sflag [#allocation24], %s1248
        %s1250 = sand.u32 %s600, 1
        %s1251 = scalar_lea.vmem [#allocation23], %s1250
        // Predicated region
        $region177: #{tpu_custom_call.1} parent=123 // pred_check
          %p1252 = pneg %p613
        $region178: #{tpu_custom_call.1} parent=123 // pred_check_branch
          %1254 = sbr.rel (%p1252) target = $region180
        $region179: #{tpu_custom_call.1} parent=123 // pred_region
          %1255 = dma.done %s1249, 16
        $region180: #{tpu_custom_call.1} parent=123 // pred_fallthru
          _
        %s1256 = sand.u32 %s60, 1
        %s1257 = scalar_lea.sflag [#allocation24], %s1256
        %s1258 = sand.u32 %s626, 1
        %s1259 = scalar_lea.vmem [#allocation25], %s1258
        // Predicated region
        $region181: #{tpu_custom_call.1} parent=123 // pred_check
          %p1260 = pneg %p639
        $region182: #{tpu_custom_call.1} parent=123 // pred_check_branch
          %1262 = sbr.rel (%p1260) target = $region184
        $region183: #{tpu_custom_call.1} parent=123 // pred_region
          %1263 = dma.done %s1257, 16
        $region184: #{tpu_custom_call.1} parent=123 // pred_fallthru
          _
        %s1264 = smul.u32 2, %s64
        %p1265 = scmp.lt.s32.totalorder %s1264, 1
        %s1266 = scalar_select %p1265, %s1264, 1
        %s1267 = smul.addr %s1266, 2
        %s1268 = smul.addr %s1267, 8
        %s1269 = scalar_lea.vmem %s0, %s1268
        %p1270 = pneg %p93
        %p1271 = pneg %p90
        %p1272 = pneg %p119
        %p1273 = pneg %p116
        %p1274 = scmp.lt.s32.totalorder %s65, 1
        %s1275 = scalar_select %p1274, %s65, 1
        %s1276 = smul.addr %s1275, 4
        %s1277 = smul.addr %s1276, 8
        %s1278 = scalar_lea.vmem %s2, %s1277
        %p1279 = pneg %p145
        %p1280 = pneg %p142
        %p1281 = scmp.lt.s32.totalorder %s65, 1
        %s1282 = scalar_select %p1281, %s65, 1
        %s1283 = scalar_lea.vmem %s3, %s1282
        %p1284 = pneg %p171
        %p1285 = pneg %p168
        %p1286 = scmp.lt.s32.totalorder %s65, 1
        %s1287 = scalar_select %p1286, %s65, 1
        %s1288 = smul.addr %s1287, 4
        %s1289 = smul.addr %s1288, 8
        %s1290 = scalar_lea.vmem %s4, %s1289
        %p1291 = pneg %p197
        %p1292 = pneg %p194
        %s1293 = sand.u32 %s60, 1
        %s1294 = scalar_lea.sflag [#allocation6], %s1293
        %s1295 = sand.u32 %s210, 1
        %s1296 = scalar_lea.vmem [#allocation5], %s1295
        %p1297 = pneg %p223
        %p1298 = pneg %p220
        %p1299 = scmp.lt.s32.totalorder %s65, 1
        %s1300 = scalar_select %p1299, %s65, 1
        %s1301 = smul.addr %s1300, 4
        %s1302 = smul.addr %s1301, 8
        %s1303 = scalar_lea.vmem %s6, %s1302
        %p1304 = pneg %p249
        %p1305 = pneg %p246
        %s1306 = sand.u32 %s60, 1
        %s1307 = scalar_lea.sflag [#allocation6], %s1306
        %s1308 = sand.u32 %s262, 1
        %s1309 = scalar_lea.vmem [#allocation7], %s1308
        %p1310 = pneg %p275
        %p1311 = pneg %p272
        %p1312 = scmp.lt.s32.totalorder %s65, 1
        %s1313 = scalar_select %p1312, %s65, 1
        %s1314 = smul.addr %s1313, 4
        %s1315 = smul.addr %s1314, 8
        %s1316 = scalar_lea.vmem %s8, %s1315
        %p1317 = pneg %p301
        %p1318 = pneg %p298
        %s1319 = sand.u32 %s60, 1
        %s1320 = scalar_lea.sflag [#allocation9], %s1319
        %s1321 = sand.u32 %s314, 1
        %s1322 = scalar_lea.vmem [#allocation8], %s1321
        %p1323 = pneg %p327
        %p1324 = pneg %p324
        %p1325 = scmp.lt.s32.totalorder %s65, 1
        %s1326 = scalar_select %p1325, %s65, 1
        %s1327 = smul.addr %s1326, 4
        %s1328 = smul.addr %s1327, 8
        %s1329 = scalar_lea.vmem %s10, %s1328
        %p1330 = pneg %p353
        %p1331 = pneg %p350
        %s1332 = sand.u32 %s60, 1
        %s1333 = scalar_lea.sflag [#allocation9], %s1332
        %s1334 = sand.u32 %s366, 1
        %s1335 = scalar_lea.vmem [#allocation10], %s1334
        %p1336 = pneg %p379
        %p1337 = pneg %p376
        %s1338 = sand.u32 %s60, 1
        %s1339 = scalar_lea.sflag [#allocation12], %s1338
        %s1340 = sand.u32 %s392, 1
        %s1341 = smul.addr %s1340, 32
        %s1342 = scalar_lea.vmem [#allocation11], %s1341
        %p1343 = pneg %p405
        %p1344 = pneg %p402
        %s1345 = sand.u32 %s60, 1
        %s1346 = scalar_lea.sflag [#allocation12], %s1345
        %s1347 = sand.u32 %s418, 1
        %s1348 = scalar_lea.vmem [#allocation13], %s1347
        %p1349 = pneg %p431
        %p1350 = pneg %p428
        %s1351 = sand.u32 %s60, 1
        %s1352 = scalar_lea.sflag [#allocation15], %s1351
        %s1353 = sand.u32 %s444, 1
        %s1354 = smul.addr %s1353, 32
        %s1355 = scalar_lea.vmem [#allocation14], %s1354
        %p1356 = pneg %p457
        %p1357 = pneg %p454
        %s1358 = sand.u32 %s60, 1
        %s1359 = scalar_lea.sflag [#allocation15], %s1358
        %s1360 = sand.u32 %s470, 1
        %s1361 = scalar_lea.vmem [#allocation16], %s1360
        %p1362 = pneg %p483
        %p1363 = pneg %p480
        %s1364 = sand.u32 %s60, 1
        %s1365 = scalar_lea.sflag [#allocation18], %s1364
        %s1366 = sand.u32 %s496, 1
        %s1367 = smul.addr %s1366, 32
        %s1368 = scalar_lea.vmem [#allocation17], %s1367
        %p1369 = pneg %p509
        %p1370 = pneg %p506
        %s1371 = sand.u32 %s60, 1
        %s1372 = scalar_lea.sflag [#allocation18], %s1371
        %s1373 = sand.u32 %s522, 1
        %s1374 = scalar_lea.vmem [#allocation19], %s1373
        %p1375 = pneg %p535
        %p1376 = pneg %p532
        %s1377 = sand.u32 %s60, 1
        %s1378 = scalar_lea.sflag [#allocation21], %s1377
        %s1379 = sand.u32 %s548, 1
        %s1380 = scalar_lea.vmem [#allocation20], %s1379
        %p1381 = pneg %p561
        %p1382 = pneg %p558
        %s1383 = sand.u32 %s60, 1
        %s1384 = scalar_lea.sflag [#allocation21], %s1383
        %s1385 = sand.u32 %s574, 1
        %s1386 = scalar_lea.vmem [#allocation22], %s1385
        %p1387 = pneg %p587
        %p1388 = pneg %p584
        %s1389 = sand.u32 %s60, 1
        %s1390 = scalar_lea.sflag [#allocation24], %s1389
        %s1391 = sand.u32 %s600, 1
        %s1392 = scalar_lea.vmem [#allocation23], %s1391
        %p1393 = pneg %p613
        %p1394 = pneg %p610
        %s1395 = sand.u32 %s60, 1
        %s1396 = scalar_lea.sflag [#allocation24], %s1395
        %s1397 = sand.u32 %s626, 1
        %s1398 = scalar_lea.vmem [#allocation25], %s1397
        %p1399 = pneg %p639
        %p1400 = pneg %p636
        %p1401 = scmp.lt.s32.totalorder %s65, 1
        %s1402 = scalar_select %p1401, %s65, 1
        %s1403 = smul.addr %s1402, 4
        %s1404 = smul.addr %s1403, 8
        %s1405 = scalar_lea.vmem %s22, %s1404
        %p1406 = pneg %p665
        %p1407 = pneg %p662
        %p1408 = scmp.lt.s32.totalorder %s65, 1
        %s1409 = scalar_select %p1408, %s65, 1
        %s1410 = scalar_lea.vmem %s23, %s1409
        %p1411 = pneg %p691
        %p1412 = pneg %p688
        %p1413 = scmp.lt.s32.totalorder %s65, 1
        %s1414 = scalar_select %p1413, %s65, 1
        %s1415 = smul.addr %s1414, 16
        %s1416 = smul.addr %s1415, 8
        %s1417 = scalar_lea.vmem %s24, %s1416
        %p1418 = pneg %p717
        %p1419 = pneg %p714
        %p1420 = scmp.lt.s32.totalorder %s65, 1
        %s1421 = scalar_select %p1420, %s65, 1
        %s1422 = scalar_lea.vmem %s25, %s1421
        %p1423 = pneg %p743
        %p1424 = pneg %p740
        %p1425 = pneg %p769
        %p1426 = pneg %p766
        %s1427 = smul.u32 2, %s64
        %p1428 = scmp.lt.s32.totalorder %s1427, 1
        %s1429 = scalar_select %p1428, %s1427, 1
        %s1430 = smul.addr %s1429, 2
        %s1431 = smul.addr %s1430, 8
        %s1432 = scalar_lea.vmem %s0, %s1431
        %s1433 = smul.u32 2, %s64
        %s1434 = smul.u32 2, %s64
        %p1435 = scmp.lt.s32.totalorder %s65, 1
        %s1436 = scalar_select %p1435, %s65, 1
        %s1437 = smul.addr %s1436, 4
        %s1438 = smul.addr %s1437, 8
        %s1439 = scalar_lea.vmem %s2, %s1438
        %p1440 = scmp.lt.s32.totalorder %s65, 1
        %s1441 = scalar_select %p1440, %s65, 1
        %s1442 = scalar_lea.vmem %s3, %s1441
        %p1443 = scmp.lt.s32.totalorder %s65, 1
        %s1444 = scalar_select %p1443, %s65, 1
        %s1445 = smul.addr %s1444, 4
        %s1446 = smul.addr %s1445, 8
        %s1447 = scalar_lea.vmem %s4, %s1446
        %p1448 = scmp.lt.s32.totalorder %s65, 1
        %s1449 = scalar_select %p1448, %s65, 1
        %s1450 = smul.addr %s1449, 4
        %s1451 = smul.addr %s1450, 8
        %s1452 = scalar_lea.vmem %s6, %s1451
        %p1453 = scmp.lt.s32.totalorder %s65, 1
        %s1454 = scalar_select %p1453, %s65, 1
        %s1455 = smul.addr %s1454, 4
        %s1456 = smul.addr %s1455, 8
        %s1457 = scalar_lea.vmem %s8, %s1456
        %p1458 = scmp.lt.s32.totalorder %s65, 1
        %s1459 = scalar_select %p1458, %s65, 1
        %s1460 = smul.addr %s1459, 4
        %s1461 = smul.addr %s1460, 8
        %s1462 = scalar_lea.vmem %s10, %s1461
        %p1463 = scmp.lt.s32.totalorder %s65, 1
        %s1464 = scalar_select %p1463, %s65, 1
        %s1465 = smul.addr %s1464, 4
        %s1466 = smul.addr %s1465, 8
        %s1467 = scalar_lea.vmem %s22, %s1466
        %p1468 = scmp.lt.s32.totalorder %s65, 1
        %s1469 = scalar_select %p1468, %s65, 1
        %s1470 = scalar_lea.vmem %s23, %s1469
        %p1471 = scmp.lt.s32.totalorder %s65, 1
        %s1472 = scalar_select %p1471, %s65, 1
        %s1473 = smul.addr %s1472, 16
        %s1474 = smul.addr %s1473, 8
        %s1475 = scalar_lea.vmem %s24, %s1474
        %p1476 = scmp.lt.s32.totalorder %s65, 1
        %s1477 = scalar_select %p1476, %s65, 1
        %s1478 = scalar_lea.vmem %s25, %s1477
        %s1479 = smul.u32 2, %s64
        %p1480 = scmp.eq.s32.totalorder %s65, 0
        // Predicated region
        $region185: #{tpu_custom_call.1} parent=123 // pred_check
          %p1481 = pneg %p1480
        $region186: #{tpu_custom_call.1} parent=123 // pred_check_branch
          %1483 = sbr.rel (%p1481) target = $region188
        $region187: #{tpu_custom_call.1} parent=123 // pred_region
          %v1484 = vld [vmem:[#allocation2] sm:$0xff]
          %v1485 = vld [vmem:[#allocation2 + $0x8] sm:$0xff]
          %vm1486 = vcmask 261120
          %1487 = vst.msk [vmem:[#allocation26] sm:$0xff] %vm1486, %v1484
          %1488 = vst.msk [vmem:[#allocation26 + $0x8] sm:$0xff] %vm1486, %v1485
        $region188: #{tpu_custom_call.1} parent=123 // pred_fallthru
          _
        %v1489 = vld [vmem:[#allocation26] sm:$0xff]
        %v1490 = vld [vmem:[#allocation26 + $0x8] sm:$0xff]
        %v1491 = vld [vmem:[%s1432] sm:$0xff]
        %v1492 = vld [vmem:[%s1432 + $0x8] sm:$0xf]
        %v1493 = vld [vmem:[%s1432 + $0x10] sm:$0xff]
        %v1494 = vld [vmem:[%s1432 + $0x18] sm:$0xf]
        %v1499 = vcombine.high %v1491, %v1491
        %v1500 = vcombine.high %v1493, %v1493
        %v1501 = vlaneseq
        %v1502 = vshrl.u32 %v1501, 7
        %v1503 = vlaneseq
        %v1504 = vand.u32 %v1503, 127
        %vm1505 = vcmp.le.s32.totalorder %v1504, %v1502
        %v1506 = vld [vmem:[%s1439] sm:$0xff]
        %v1507 = vld [vmem:[%s1439 + $0x8] sm:$0xff]
        %v1508 = vld [vmem:[%s1439 + $0x10] sm:$0xff]
        %v1509 = vld [vmem:[%s1439 + $0x18] sm:$0xff]
        %v1510 = vld [vmem:[%s1442] sm:$0x1]
        %v1511 = vld [vmem:[%s1447] sm:$0xff]
        %v1512 = vld [vmem:[%s1447 + $0x8] sm:$0xff]
        %v1513 = vld [vmem:[%s1447 + $0x10] sm:$0xff]
        %v1514 = vld [vmem:[%s1447 + $0x18] sm:$0xff]
        %v1515 = vld [vmem:[%s1152] sm:$0x1]
        %v1516 = vld [vmem:[%s1452] sm:$0xff]
        %v1517 = vld [vmem:[%s1452 + $0x8] sm:$0xff]
        %v1518 = vld [vmem:[%s1452 + $0x10] sm:$0xff]
        %v1519 = vld [vmem:[%s1452 + $0x18] sm:$0xff]
        %v1520 = vld [vmem:[%s1160] sm:$0x1]
        %v1521 = vld [vmem:[%s1457] sm:$0xff]
        %v1522 = vld [vmem:[%s1457 + $0x8] sm:$0xff]
        %v1523 = vld [vmem:[%s1457 + $0x10] sm:$0xff]
        %v1524 = vld [vmem:[%s1457 + $0x18] sm:$0xff]
        %v1525 = vld [vmem:[%s1168] sm:$0x1]
        %v1527 = vlaneseq
        %v1528 = vshrl.u32 %v1527, 7
        %v1529 = vsub.s32 0, %v1528
        %v1530 = vrot.slane %v1510, %v1529
        %vm1532 = vcmask 261120
        %v1534 = vsel %vm1532, %v1489, 0
        %v1537 = vsel %vm1532, %v1490, 0
        %1539 = vmatprep.subr.mxu0 0.0
        %1540 = vmatpush1.msra.mxu0 %v1506
        %1541 = vmatprep.subr.mxu0 0.0
        %1542 = vmatpush1.msra.mxu0 %v1507
        %1543 = vmatprep.subr.mxu0 0.0
        %1544 = vmatpush1.msra.mxu0 %v1508
        %1545 = vmatprep.subr.mxu0 0.0
        %1546 = vmatpush1.msra.mxu0 %v1509
        %1547 = vmatprep.subr.mxu0 0.0
        %1548 = vmatpush1.msra.mxu0 0.0
        %1549 = vmatprep.subr.mxu0 0.0
        %1550 = vmatpush1.msra.mxu0 0.0
        %1551 = vmatprep.subr.mxu0 0.0
        %1552 = vmatpush1.msra.mxu0 0.0
        %1553 = vmatprep.subr.mxu0 0.0
        %1554 = vmatpush1.msra.mxu0 0.0
        %1555 = vmatprep.subr.mxu0 0.0
        %1556 = vmatpush1.msra.mxu0 0.0
        %1557 = vmatprep.subr.mxu0 0.0
        %1558 = vmatpush1.msra.mxu0 0.0
        %1559 = vmatprep.subr.mxu0 0.0
        %1560 = vmatpush1.msra.mxu0 0.0
        %1561 = vmatprep.subr.mxu0 0.0
        %1562 = vmatpush1.msra.mxu0 0.0
        %1563 = vmatprep.subr.mxu0 0.0
        %1564 = vmatpush1.msra.mxu0 0.0
        %1565 = vmatprep.subr.mxu0 0.0
        %1566 = vmatpush1.msra.mxu0 0.0
        %1567 = vmatprep.subr.mxu0 0.0
        %1568 = vmatpush1.msra.mxu0 0.0
        %1569 = vmatprep.subr.mxu0 0.0
        %1570 = vmatpush1.msra.mxu0 0.0
        %1571 = vmatprep.subr.mxu0 0.0
        %1572 = vmatpush1.msra.mxu0 0.0
        %1573 = vmatprep.subr.mxu0 0.0
        %1574 = vmatpush1.msra.mxu0 0.0
        %1575 = vmatprep.subr.mxu0 0.0
        %1576 = vmatpush1.msra.mxu0 0.0
        %1577 = vmatprep.subr.mxu0 0.0
        %1578 = vmatpush1.msra.mxu0 0.0
        %1579 = vmatprep.subr.mxu0 0.0
        %1580 = vmatpush1.msra.mxu0 0.0
        %1581 = vmatprep.subr.mxu0 0.0
        %1582 = vmatpush1.msra.mxu0 0.0
        %1583 = vmatprep.subr.mxu0 0.0
        %1584 = vmatpush1.msra.mxu0 0.0
        %1585 = vmatprep.subr.mxu0 0.0
        %1586 = vmatpush1.msra.mxu0 0.0
        %1587 = vmatprep.subr.mxu0 0.0
        %1588 = vmatpush1.msra.mxu0 0.0
        %1589 = vmatprep.subr.mxu0 0.0
        %1590 = vmatpush1.msra.mxu0 0.0
        %1591 = vmatprep.subr.mxu0 0.0
        %1592 = vmatpush1.msra.mxu0 0.0
        %1593 = vmatprep.subr.mxu0 0.0
        %1594 = vmatpush1.msra.mxu0 0.0
        %1595 = vmatprep.subr.mxu0 0.0
        %1596 = vmatpush1.msra.mxu0 0.0
        %1597 = vmatprep.subr.mxu0 0.0
        %1598 = vmatpush1.msra.mxu0 0.0
        %1599 = vmatprep.subr.mxu0 0.0
        %1600 = vmatpush1.msra.mxu0 0.0
        %1601 = vmatprep.subr.mxu0 0.0
        %1602 = vmatpush1.msra.mxu0 0.0
        %1603 = vmatprep.mubr.f32.mxu0 0.0
        %1604 = vmatmul.mubr.f32.gmra.mrb[0].mxu0 %v1534
        %v1605 = vpop.f32.mrb[0].mxu0
        %v1606 = vadd.f32 %v1530, %v1605
        %v1607 = vpop.f32.mrb[0].mxu0
        %1608 = vmatprep.mubr.f32.mxu0 0.0
        %1609 = vmatmul.mubr.f32.gmra.mrb[0].mxu0 %v1537
        %v1610 = vpop.f32.mrb[0].mxu0
        %v1611 = vadd.f32 %v1530, %v1610
        %v1612 = vpop.f32.mrb[0].mxu0
        %1613 = vdwg.mxu0
        %v1615 = vlaneseq
        %v1616 = vshrl.u32 %v1615, 7
        %v1617 = vsub.s32 0, %v1616
        %v1618 = vrot.slane %v1515, %v1617
        %1620 = vmatprep.subr.mxu0 0.0
        %1621 = vmatpush1.msra.mxu0 %v1511
        %1622 = vmatprep.subr.mxu0 0.0
        %1623 = vmatpush1.msra.mxu0 %v1512
        %1624 = vmatprep.subr.mxu0 0.0
        %1625 = vmatpush1.msra.mxu0 %v1513
        %1626 = vmatprep.subr.mxu0 0.0
        %1627 = vmatpush1.msra.mxu0 %v1514
        %1628 = vmatprep.subr.mxu0 0.0
        %1629 = vmatpush1.msra.mxu0 0.0
        %1630 = vmatprep.subr.mxu0 0.0
        %1631 = vmatpush1.msra.mxu0 0.0
        %1632 = vmatprep.subr.mxu0 0.0
        %1633 = vmatpush1.msra.mxu0 0.0
        %1634 = vmatprep.subr.mxu0 0.0
        %1635 = vmatpush1.msra.mxu0 0.0
        %1636 = vmatprep.subr.mxu0 0.0
        %1637 = vmatpush1.msra.mxu0 0.0
        %1638 = vmatprep.subr.mxu0 0.0
        %1639 = vmatpush1.msra.mxu0 0.0
        %1640 = vmatprep.subr.mxu0 0.0
        %1641 = vmatpush1.msra.mxu0 0.0
        %1642 = vmatprep.subr.mxu0 0.0
        %1643 = vmatpush1.msra.mxu0 0.0
        %1644 = vmatprep.subr.mxu0 0.0
        %1645 = vmatpush1.msra.mxu0 0.0
        %1646 = vmatprep.subr.mxu0 0.0
        %1647 = vmatpush1.msra.mxu0 0.0
        %1648 = vmatprep.subr.mxu0 0.0
        %1649 = vmatpush1.msra.mxu0 0.0
        %1650 = vmatprep.subr.mxu0 0.0
        %1651 = vmatpush1.msra.mxu0 0.0
        %1652 = vmatprep.subr.mxu0 0.0
        %1653 = vmatpush1.msra.mxu0 0.0
        %1654 = vmatprep.subr.mxu0 0.0
        %1655 = vmatpush1.msra.mxu0 0.0
        %1656 = vmatprep.subr.mxu0 0.0
        %1657 = vmatpush1.msra.mxu0 0.0
        %1658 = vmatprep.subr.mxu0 0.0
        %1659 = vmatpush1.msra.mxu0 0.0
        %1660 = vmatprep.subr.mxu0 0.0
        %1661 = vmatpush1.msra.mxu0 0.0
        %1662 = vmatprep.subr.mxu0 0.0
        %1663 = vmatpush1.msra.mxu0 0.0
        %1664 = vmatprep.subr.mxu0 0.0
        %1665 = vmatpush1.msra.mxu0 0.0
        %1666 = vmatprep.subr.mxu0 0.0
        %1667 = vmatpush1.msra.mxu0 0.0
        %1668 = vmatprep.subr.mxu0 0.0
        %1669 = vmatpush1.msra.mxu0 0.0
        %1670 = vmatprep.subr.mxu0 0.0
        %1671 = vmatpush1.msra.mxu0 0.0
        %1672 = vmatprep.subr.mxu0 0.0
        %1673 = vmatpush1.msra.mxu0 0.0
        %1674 = vmatprep.subr.mxu0 0.0
        %1675 = vmatpush1.msra.mxu0 0.0
        %1676 = vmatprep.subr.mxu0 0.0
        %1677 = vmatpush1.msra.mxu0 0.0
        %1678 = vmatprep.subr.mxu0 0.0
        %1679 = vmatpush1.msra.mxu0 0.0
        %1680 = vmatprep.subr.mxu0 0.0
        %1681 = vmatpush1.msra.mxu0 0.0
        %1682 = vmatprep.subr.mxu0 0.0
        %1683 = vmatpush1.msra.mxu0 0.0
        %1684 = vmatprep.mubr.f32.mxu0 0.0
        %1685 = vmatmul.mubr.f32.gmra.mrb[0].mxu0 %v1534
        %v1686 = vpop.f32.mrb[0].mxu0
        %v1687 = vadd.f32 %v1618, %v1686
        %v1688 = vpop.f32.mrb[0].mxu0
        %1689 = vmatprep.mubr.f32.mxu0 0.0
        %1690 = vmatmul.mubr.f32.gmra.mrb[0].mxu0 %v1537
        %v1691 = vpop.f32.mrb[0].mxu0
        %v1692 = vadd.f32 %v1618, %v1691
        %v1693 = vpop.f32.mrb[0].mxu0
        %1694 = vdwg.mxu0
        %v1696 = vlaneseq
        %v1697 = vshrl.u32 %v1696, 7
        %v1698 = vsub.s32 0, %v1697
        %v1699 = vrot.slane %v1520, %v1698
        %1701 = vmatprep.subr.mxu0 0.0
        %1702 = vmatpush1.msra.mxu0 %v1516
        %1703 = vmatprep.subr.mxu0 0.0
        %1704 = vmatpush1.msra.mxu0 %v1517
        %1705 = vmatprep.subr.mxu0 0.0
        %1706 = vmatpush1.msra.mxu0 %v1518
        %1707 = vmatprep.subr.mxu0 0.0
        %1708 = vmatpush1.msra.mxu0 %v1519
        %1709 = vmatprep.subr.mxu0 0.0
        %1710 = vmatpush1.msra.mxu0 0.0
        %1711 = vmatprep.subr.mxu0 0.0
        %1712 = vmatpush1.msra.mxu0 0.0
        %1713 = vmatprep.subr.mxu0 0.0
        %1714 = vmatpush1.msra.mxu0 0.0
        %1715 = vmatprep.subr.mxu0 0.0
        %1716 = vmatpush1.msra.mxu0 0.0
        %1717 = vmatprep.subr.mxu0 0.0
        %1718 = vmatpush1.msra.mxu0 0.0
        %1719 = vmatprep.subr.mxu0 0.0
        %1720 = vmatpush1.msra.mxu0 0.0
        %1721 = vmatprep.subr.mxu0 0.0
        %1722 = vmatpush1.msra.mxu0 0.0
        %1723 = vmatprep.subr.mxu0 0.0
        %1724 = vmatpush1.msra.mxu0 0.0
        %1725 = vmatprep.subr.mxu0 0.0
        %1726 = vmatpush1.msra.mxu0 0.0
        %1727 = vmatprep.subr.mxu0 0.0
        %1728 = vmatpush1.msra.mxu0 0.0
        %1729 = vmatprep.subr.mxu0 0.0
        %1730 = vmatpush1.msra.mxu0 0.0
        %1731 = vmatprep.subr.mxu0 0.0
        %1732 = vmatpush1.msra.mxu0 0.0
        %1733 = vmatprep.subr.mxu0 0.0
        %1734 = vmatpush1.msra.mxu0 0.0
        %1735 = vmatprep.subr.mxu0 0.0
        %1736 = vmatpush1.msra.mxu0 0.0
        %1737 = vmatprep.subr.mxu0 0.0
        %1738 = vmatpush1.msra.mxu0 0.0
        %1739 = vmatprep.subr.mxu0 0.0
        %1740 = vmatpush1.msra.mxu0 0.0
        %1741 = vmatprep.subr.mxu0 0.0
        %1742 = vmatpush1.msra.mxu0 0.0
        %1743 = vmatprep.subr.mxu0 0.0
        %1744 = vmatpush1.msra.mxu0 0.0
        %1745 = vmatprep.subr.mxu0 0.0
        %1746 = vmatpush1.msra.mxu0 0.0
        %1747 = vmatprep.subr.mxu0 0.0
        %1748 = vmatpush1.msra.mxu0 0.0
        %1749 = vmatprep.subr.mxu0 0.0
        %1750 = vmatpush1.msra.mxu0 0.0
        %1751 = vmatprep.subr.mxu0 0.0
        %1752 = vmatpush1.msra.mxu0 0.0
        %1753 = vmatprep.subr.mxu0 0.0
        %1754 = vmatpush1.msra.mxu0 0.0
        %1755 = vmatprep.subr.mxu0 0.0
        %1756 = vmatpush1.msra.mxu0 0.0
        %1757 = vmatprep.subr.mxu0 0.0
        %1758 = vmatpush1.msra.mxu0 0.0
        %1759 = vmatprep.subr.mxu0 0.0
        %1760 = vmatpush1.msra.mxu0 0.0
        %1761 = vmatprep.subr.mxu0 0.0
        %1762 = vmatpush1.msra.mxu0 0.0
        %1763 = vmatprep.subr.mxu0 0.0
        %1764 = vmatpush1.msra.mxu0 0.0
        %1765 = vmatprep.mubr.f32.mxu0 0.0
        %1766 = vmatmul.mubr.f32.gmra.mrb[0].mxu0 %v1534
        %v1767 = vpop.f32.mrb[0].mxu0
        %v1768 = vadd.f32 %v1699, %v1767
        %v1769 = vpop.f32.mrb[0].mxu0
        %1770 = vmatprep.mubr.f32.mxu0 0.0
        %1771 = vmatmul.mubr.f32.gmra.mrb[0].mxu0 %v1537
        %v1772 = vpop.f32.mrb[0].mxu0
        %v1773 = vadd.f32 %v1699, %v1772
        %v1774 = vpop.f32.mrb[0].mxu0
        %1775 = vdwg.mxu0
        %vm1776 = vcmask 64512
        %v1778 = vsel %vm1776, %v1606, 0
        %v1781 = vsel %vm1776, %v1687, 0
        %1783 = vmatprep.subr.mxu0 0.0
        %1784 = vmatpush1.xpose.msra.mxu0 %v1781
        %1785 = vmatprep.subr.mxu0 0.0
        %1786 = vmatpush1.xpose.msra.mxu0 0.0
        %1787 = vmatprep.subr.mxu0 0.0
        %1788 = vmatpush1.xpose.msra.mxu0 0.0
        %1789 = vmatprep.subr.mxu0 0.0
        %1790 = vmatpush1.xpose.msra.mxu0 0.0
        %1791 = vmatprep.subr.mxu0 0.0
        %1792 = vmatpush1.xpose.msra.mxu0 0.0
        %1793 = vmatprep.subr.mxu0 0.0
        %1794 = vmatpush1.xpose.msra.mxu0 0.0
        %1795 = vmatprep.subr.mxu0 0.0
        %1796 = vmatpush1.xpose.msra.mxu0 0.0
        %1797 = vmatprep.subr.mxu0 0.0
        %1798 = vmatpush1.xpose.msra.mxu0 0.0
        %1799 = vmatprep.subr.mxu0 0.0
        %1800 = vmatpush1.xpose.msra.mxu0 0.0
        %1801 = vmatprep.subr.mxu0 0.0
        %1802 = vmatpush1.xpose.msra.mxu0 0.0
        %1803 = vmatprep.subr.mxu0 0.0
        %1804 = vmatpush1.xpose.msra.mxu0 0.0
        %1805 = vmatprep.subr.mxu0 0.0
        %1806 = vmatpush1.xpose.msra.mxu0 0.0
        %1807 = vmatprep.subr.mxu0 0.0
        %1808 = vmatpush1.xpose.msra.mxu0 0.0
        %1809 = vmatprep.subr.mxu0 0.0
        %1810 = vmatpush1.xpose.msra.mxu0 0.0
        %1811 = vmatprep.subr.mxu0 0.0
        %1812 = vmatpush1.xpose.msra.mxu0 0.0
        %1813 = vmatprep.subr.mxu0 0.0
        %1814 = vmatpush1.xpose.msra.mxu0 0.0
        %1815 = vmatprep.subr.mxu0 0.0
        %1816 = vmatpush1.xpose.msra.mxu0 0.0
        %1817 = vmatprep.subr.mxu0 0.0
        %1818 = vmatpush1.xpose.msra.mxu0 0.0
        %1819 = vmatprep.subr.mxu0 0.0
        %1820 = vmatpush1.xpose.msra.mxu0 0.0
        %1821 = vmatprep.subr.mxu0 0.0
        %1822 = vmatpush1.xpose.msra.mxu0 0.0
        %1823 = vmatprep.subr.mxu0 0.0
        %1824 = vmatpush1.xpose.msra.mxu0 0.0
        %1825 = vmatprep.subr.mxu0 0.0
        %1826 = vmatpush1.xpose.msra.mxu0 0.0
        %1827 = vmatprep.subr.mxu0 0.0
        %1828 = vmatpush1.xpose.msra.mxu0 0.0
        %1829 = vmatprep.subr.mxu0 0.0
        %1830 = vmatpush1.xpose.msra.mxu0 0.0
        %1831 = vmatprep.subr.mxu0 0.0
        %1832 = vmatpush1.xpose.msra.mxu0 0.0
        %1833 = vmatprep.subr.mxu0 0.0
        %1834 = vmatpush1.xpose.msra.mxu0 0.0
        %1835 = vmatprep.subr.mxu0 0.0
        %1836 = vmatpush1.xpose.msra.mxu0 0.0
        %1837 = vmatprep.subr.mxu0 0.0
        %1838 = vmatpush1.xpose.msra.mxu0 0.0
        %1839 = vmatprep.subr.mxu0 0.0
        %1840 = vmatpush1.xpose.msra.mxu0 0.0
        %1841 = vmatprep.subr.mxu0 0.0
        %1842 = vmatpush1.xpose.msra.mxu0 0.0
        %1843 = vmatprep.subr.mxu0 0.0
        %1844 = vmatpush1.xpose.msra.mxu0 0.0
        %1845 = vmatprep.subr.mxu0 0.0
        %1846 = vmatpush1.xpose.msra.mxu0 0.0
        %1847 = vmatprep.mubr.f32.mxu0 0.0
        %1848 = vmatmul.mubr.f32.gmra.mrb[0].mxu0 %v1778
        %v1849 = vpop.f32.mrb[0].mxu0
        %v1850 = vadd.f32 0.0, %v1849
        %v1851 = vpop.f32.mrb[0].mxu0
        %1852 = vdwg.mxu0
        %v1854 = vsel %vm1776, %v1611, 0
        %v1857 = vsel %vm1776, %v1692, 0
        %1859 = vmatprep.subr.mxu0 0.0
        %1860 = vmatpush1.xpose.msra.mxu0 %v1857
        %1861 = vmatprep.subr.mxu0 0.0
        %1862 = vmatpush1.xpose.msra.mxu0 0.0
        %1863 = vmatprep.subr.mxu0 0.0
        %1864 = vmatpush1.xpose.msra.mxu0 0.0
        %1865 = vmatprep.subr.mxu0 0.0
        %1866 = vmatpush1.xpose.msra.mxu0 0.0
        %1867 = vmatprep.subr.mxu0 0.0
        %1868 = vmatpush1.xpose.msra.mxu0 0.0
        %1869 = vmatprep.subr.mxu0 0.0
        %1870 = vmatpush1.xpose.msra.mxu0 0.0
        %1871 = vmatprep.subr.mxu0 0.0
        %1872 = vmatpush1.xpose.msra.mxu0 0.0
        %1873 = vmatprep.subr.mxu0 0.0
        %1874 = vmatpush1.xpose.msra.mxu0 0.0
        %1875 = vmatprep.subr.mxu0 0.0
        %1876 = vmatpush1.xpose.msra.mxu0 0.0
        %1877 = vmatprep.subr.mxu0 0.0
        %1878 = vmatpush1.xpose.msra.mxu0 0.0
        %1879 = vmatprep.subr.mxu0 0.0
        %1880 = vmatpush1.xpose.msra.mxu0 0.0
        %1881 = vmatprep.subr.mxu0 0.0
        %1882 = vmatpush1.xpose.msra.mxu0 0.0
        %1883 = vmatprep.subr.mxu0 0.0
        %1884 = vmatpush1.xpose.msra.mxu0 0.0
        %1885 = vmatprep.subr.mxu0 0.0
        %1886 = vmatpush1.xpose.msra.mxu0 0.0
        %1887 = vmatprep.subr.mxu0 0.0
        %1888 = vmatpush1.xpose.msra.mxu0 0.0
        %1889 = vmatprep.subr.mxu0 0.0
        %1890 = vmatpush1.xpose.msra.mxu0 0.0
        %1891 = vmatprep.subr.mxu0 0.0
        %1892 = vmatpush1.xpose.msra.mxu0 0.0
        %1893 = vmatprep.subr.mxu0 0.0
        %1894 = vmatpush1.xpose.msra.mxu0 0.0
        %1895 = vmatprep.subr.mxu0 0.0
        %1896 = vmatpush1.xpose.msra.mxu0 0.0
        %1897 = vmatprep.subr.mxu0 0.0
        %1898 = vmatpush1.xpose.msra.mxu0 0.0
        %1899 = vmatprep.subr.mxu0 0.0
        %1900 = vmatpush1.xpose.msra.mxu0 0.0
        %1901 = vmatprep.subr.mxu0 0.0
        %1902 = vmatpush1.xpose.msra.mxu0 0.0
        %1903 = vmatprep.subr.mxu0 0.0
        %1904 = vmatpush1.xpose.msra.mxu0 0.0
        %1905 = vmatprep.subr.mxu0 0.0
        %1906 = vmatpush1.xpose.msra.mxu0 0.0
        %1907 = vmatprep.subr.mxu0 0.0
        %1908 = vmatpush1.xpose.msra.mxu0 0.0
        %1909 = vmatprep.subr.mxu0 0.0
        %1910 = vmatpush1.xpose.msra.mxu0 0.0
        %1911 = vmatprep.subr.mxu0 0.0
        %1912 = vmatpush1.xpose.msra.mxu0 0.0
        %1913 = vmatprep.subr.mxu0 0.0
        %1914 = vmatpush1.xpose.msra.mxu0 0.0
        %1915 = vmatprep.subr.mxu0 0.0
        %1916 = vmatpush1.xpose.msra.mxu0 0.0
        %1917 = vmatprep.subr.mxu0 0.0
        %1918 = vmatpush1.xpose.msra.mxu0 0.0
        %1919 = vmatprep.subr.mxu0 0.0
        %1920 = vmatpush1.xpose.msra.mxu0 0.0
        %1921 = vmatprep.subr.mxu0 0.0
        %1922 = vmatpush1.xpose.msra.mxu0 0.0
        %1923 = vmatprep.mubr.f32.mxu0 0.0
        %1924 = vmatmul.mubr.f32.gmra.mrb[0].mxu0 %v1854
        %v1925 = vpop.f32.mrb[0].mxu0
        %v1926 = vadd.f32 0.0, %v1925
        %v1927 = vpop.f32.mrb[0].mxu0
        %1928 = vdwg.mxu0
        %v1929 = vsel %vm1505, 1, 0
        %vm1930 = vcmp.eq.s32.totalorder %v1929, 1
        %v1931 = vsel %vm1930, %v1850, -1e+09
        %v1932 = vsel %vm1930, %v1926, -1e+09
        %v1933 = vsel %vm1776, %v1931, -inf
        %1934 = vmax.xlane.f32.xlu0 %v1933
        %v1935 = vpop.xlane.xlu0 %1934
        %v1936 = vsel %vm1776, %v1932, -inf
        %1937 = vmax.xlane.f32.xlu0 %v1936
        %v1938 = vpop.xlane.xlu0 %1937
        %v1939 = vsub.f32 %v1931, %v1935
        %v1940 = vsub.f32 %v1932, %v1938
        %v1941 = vmul.f32 %v1939, 1.442695
        %v1942 = vpow.pop %v1941
        %v1943 = vmul.f32 %v1940, 1.442695
        %v1944 = vpow.pop %v1943
        %v1945 = vsel %vm1776, %v1942, 0.0
        %1946 = vadd.xlane.f32.xlu0 %v1945
        %v1947 = vpop.xlane.xlu0 %1946
        %v1948 = vsel %vm1776, %v1944, 0.0
        %1949 = vadd.xlane.f32.xlu0 %v1948
        %v1950 = vpop.xlane.xlu0 %1949
        %v1951 = vrcp.pop %v1947
        %v1952 = vrcp.pop %v1950
        %v1953 = vmul.f32 %v1942, %v1951
        %v1954 = vmul.f32 %v1944, %v1952
        %v1956 = vsel %vm1776, %v1953, 0
        %1958 = vmatprep.subr.mxu0 0.0
        %1959 = vmatpush1.msra.mxu0 %v1768
        %1960 = vmatprep.subr.mxu0 0.0
        %1961 = vmatpush1.msra.mxu0 0.0
        %1962 = vmatprep.subr.mxu0 0.0
        %1963 = vmatpush1.msra.mxu0 0.0
        %1964 = vmatprep.subr.mxu0 0.0
        %1965 = vmatpush1.msra.mxu0 0.0
        %1966 = vmatprep.subr.mxu0 0.0
        %1967 = vmatpush1.msra.mxu0 0.0
        %1968 = vmatprep.subr.mxu0 0.0
        %1969 = vmatpush1.msra.mxu0 0.0
        %1970 = vmatprep.subr.mxu0 0.0
        %1971 = vmatpush1.msra.mxu0 0.0
        %1972 = vmatprep.subr.mxu0 0.0
        %1973 = vmatpush1.msra.mxu0 0.0
        %1974 = vmatprep.subr.mxu0 0.0
        %1975 = vmatpush1.msra.mxu0 0.0
        %1976 = vmatprep.subr.mxu0 0.0
        %1977 = vmatpush1.msra.mxu0 0.0
        %1978 = vmatprep.subr.mxu0 0.0
        %1979 = vmatpush1.msra.mxu0 0.0
        %1980 = vmatprep.subr.mxu0 0.0
        %1981 = vmatpush1.msra.mxu0 0.0
        %1982 = vmatprep.subr.mxu0 0.0
        %1983 = vmatpush1.msra.mxu0 0.0
        %1984 = vmatprep.subr.mxu0 0.0
        %1985 = vmatpush1.msra.mxu0 0.0
        %1986 = vmatprep.subr.mxu0 0.0
        %1987 = vmatpush1.msra.mxu0 0.0
        %1988 = vmatprep.subr.mxu0 0.0
        %1989 = vmatpush1.msra.mxu0 0.0
        %1990 = vmatprep.subr.mxu0 0.0
        %1991 = vmatpush1.msra.mxu0 0.0
        %1992 = vmatprep.subr.mxu0 0.0
        %1993 = vmatpush1.msra.mxu0 0.0
        %1994 = vmatprep.subr.mxu0 0.0
        %1995 = vmatpush1.msra.mxu0 0.0
        %1996 = vmatprep.subr.mxu0 0.0
        %1997 = vmatpush1.msra.mxu0 0.0
        %1998 = vmatprep.subr.mxu0 0.0
        %1999 = vmatpush1.msra.mxu0 0.0
        %2000 = vmatprep.subr.mxu0 0.0
        %2001 = vmatpush1.msra.mxu0 0.0
        %2002 = vmatprep.subr.mxu0 0.0
        %2003 = vmatpush1.msra.mxu0 0.0
        %2004 = vmatprep.subr.mxu0 0.0
        %2005 = vmatpush1.msra.mxu0 0.0
        %2006 = vmatprep.subr.mxu0 0.0
        %2007 = vmatpush1.msra.mxu0 0.0
        %2008 = vmatprep.subr.mxu0 0.0
        %2009 = vmatpush1.msra.mxu0 0.0
        %2010 = vmatprep.subr.mxu0 0.0
        %2011 = vmatpush1.msra.mxu0 0.0
        %2012 = vmatprep.subr.mxu0 0.0
        %2013 = vmatpush1.msra.mxu0 0.0
        %2014 = vmatprep.subr.mxu0 0.0
        %2015 = vmatpush1.msra.mxu0 0.0
        %2016 = vmatprep.subr.mxu0 0.0
        %2017 = vmatpush1.msra.mxu0 0.0
        %2018 = vmatprep.subr.mxu0 0.0
        %2019 = vmatpush1.msra.mxu0 0.0
        %2020 = vmatprep.subr.mxu0 0.0
        %2021 = vmatpush1.msra.mxu0 0.0
        %2022 = vmatprep.mubr.f32.mxu0 0.0
        %2023 = vmatmul.mubr.f32.gmra.mrb[0].mxu0 %v1956
        %v2024 = vpop.f32.mrb[0].mxu0
        %v2025 = vadd.f32 0.0, %v2024
        %v2026 = vpop.f32.mrb[0].mxu0
        %2027 = vdwg.mxu0
        %v2029 = vsel %vm1776, %v1954, 0
        %2031 = vmatprep.subr.mxu0 0.0
        %2032 = vmatpush1.msra.mxu0 %v1773
        %2033 = vmatprep.subr.mxu0 0.0
        %2034 = vmatpush1.msra.mxu0 0.0
        %2035 = vmatprep.subr.mxu0 0.0
        %2036 = vmatpush1.msra.mxu0 0.0
        %2037 = vmatprep.subr.mxu0 0.0
        %2038 = vmatpush1.msra.mxu0 0.0
        %2039 = vmatprep.subr.mxu0 0.0
        %2040 = vmatpush1.msra.mxu0 0.0
        %2041 = vmatprep.subr.mxu0 0.0
        %2042 = vmatpush1.msra.mxu0 0.0
        %2043 = vmatprep.subr.mxu0 0.0
        %2044 = vmatpush1.msra.mxu0 0.0
        %2045 = vmatprep.subr.mxu0 0.0
        %2046 = vmatpush1.msra.mxu0 0.0
        %2047 = vmatprep.subr.mxu0 0.0
        %2048 = vmatpush1.msra.mxu0 0.0
        %2049 = vmatprep.subr.mxu0 0.0
        %2050 = vmatpush1.msra.mxu0 0.0
        %2051 = vmatprep.subr.mxu0 0.0
        %2052 = vmatpush1.msra.mxu0 0.0
        %2053 = vmatprep.subr.mxu0 0.0
        %2054 = vmatpush1.msra.mxu0 0.0
        %2055 = vmatprep.subr.mxu0 0.0
        %2056 = vmatpush1.msra.mxu0 0.0
        %2057 = vmatprep.subr.mxu0 0.0
        %2058 = vmatpush1.msra.mxu0 0.0
        %2059 = vmatprep.subr.mxu0 0.0
        %2060 = vmatpush1.msra.mxu0 0.0
        %2061 = vmatprep.subr.mxu0 0.0
        %2062 = vmatpush1.msra.mxu0 0.0
        %2063 = vmatprep.subr.mxu0 0.0
        %2064 = vmatpush1.msra.mxu0 0.0
        %2065 = vmatprep.subr.mxu0 0.0
        %2066 = vmatpush1.msra.mxu0 0.0
        %2067 = vmatprep.subr.mxu0 0.0
        %2068 = vmatpush1.msra.mxu0 0.0
        %2069 = vmatprep.subr.mxu0 0.0
        %2070 = vmatpush1.msra.mxu0 0.0
        %2071 = vmatprep.subr.mxu0 0.0
        %2072 = vmatpush1.msra.mxu0 0.0
        %2073 = vmatprep.subr.mxu0 0.0
        %2074 = vmatpush1.msra.mxu0 0.0
        %2075 = vmatprep.subr.mxu0 0.0
        %2076 = vmatpush1.msra.mxu0 0.0
        %2077 = vmatprep.subr.mxu0 0.0
        %2078 = vmatpush1.msra.mxu0 0.0
        %2079 = vmatprep.subr.mxu0 0.0
        %2080 = vmatpush1.msra.mxu0 0.0
        %2081 = vmatprep.subr.mxu0 0.0
        %2082 = vmatpush1.msra.mxu0 0.0
        %2083 = vmatprep.subr.mxu0 0.0
        %2084 = vmatpush1.msra.mxu0 0.0
        %2085 = vmatprep.subr.mxu0 0.0
        %2086 = vmatpush1.msra.mxu0 0.0
        %2087 = vmatprep.subr.mxu0 0.0
        %2088 = vmatpush1.msra.mxu0 0.0
        %2089 = vmatprep.subr.mxu0 0.0
        %2090 = vmatpush1.msra.mxu0 0.0
        %2091 = vmatprep.subr.mxu0 0.0
        %2092 = vmatpush1.msra.mxu0 0.0
        %2093 = vmatprep.subr.mxu0 0.0
        %2094 = vmatpush1.msra.mxu0 0.0
        %2095 = vmatprep.mubr.f32.mxu0 0.0
        %2096 = vmatmul.mubr.f32.gmra.mrb[0].mxu0 %v2029
        %v2097 = vpop.f32.mrb[0].mxu0
        %v2098 = vadd.f32 0.0, %v2097
        %v2099 = vpop.f32.mrb[0].mxu0
        %2100 = vdwg.mxu0
        %2101 = vrot.lane.b32.xlu0 %v1606, 120
        %v2102 = vpop.permute.xlu0 %2101
        %2103 = vrot.lane.b32.xlu0 %v1687, 120
        %v2104 = vpop.permute.xlu0 %2103
        %v2105 = vsel %vm1776, %v2102, 0
        %v2107 = vsel %vm1776, %v2104, 0
        %2109 = vmatprep.subr.mxu0 0.0
        %2110 = vmatpush1.xpose.msra.mxu0 %v2107
        %2111 = vmatprep.subr.mxu0 0.0
        %2112 = vmatpush1.xpose.msra.mxu0 0.0
        %2113 = vmatprep.subr.mxu0 0.0
        %2114 = vmatpush1.xpose.msra.mxu0 0.0
        %2115 = vmatprep.subr.mxu0 0.0
        %2116 = vmatpush1.xpose.msra.mxu0 0.0
        %2117 = vmatprep.subr.mxu0 0.0
        %2118 = vmatpush1.xpose.msra.mxu0 0.0
        %2119 = vmatprep.subr.mxu0 0.0
        %2120 = vmatpush1.xpose.msra.mxu0 0.0
        %2121 = vmatprep.subr.mxu0 0.0
        %2122 = vmatpush1.xpose.msra.mxu0 0.0
        %2123 = vmatprep.subr.mxu0 0.0
        %2124 = vmatpush1.xpose.msra.mxu0 0.0
        %2125 = vmatprep.subr.mxu0 0.0
        %2126 = vmatpush1.xpose.msra.mxu0 0.0
        %2127 = vmatprep.subr.mxu0 0.0
        %2128 = vmatpush1.xpose.msra.mxu0 0.0
        %2129 = vmatprep.subr.mxu0 0.0
        %2130 = vmatpush1.xpose.msra.mxu0 0.0
        %2131 = vmatprep.subr.mxu0 0.0
        %2132 = vmatpush1.xpose.msra.mxu0 0.0
        %2133 = vmatprep.subr.mxu0 0.0
        %2134 = vmatpush1.xpose.msra.mxu0 0.0
        %2135 = vmatprep.subr.mxu0 0.0
        %2136 = vmatpush1.xpose.msra.mxu0 0.0
        %2137 = vmatprep.subr.mxu0 0.0
        %2138 = vmatpush1.xpose.msra.mxu0 0.0
        %2139 = vmatprep.subr.mxu0 0.0
        %2140 = vmatpush1.xpose.msra.mxu0 0.0
        %2141 = vmatprep.subr.mxu0 0.0
        %2142 = vmatpush1.xpose.msra.mxu0 0.0
        %2143 = vmatprep.subr.mxu0 0.0
        %2144 = vmatpush1.xpose.msra.mxu0 0.0
        %2145 = vmatprep.subr.mxu0 0.0
        %2146 = vmatpush1.xpose.msra.mxu0 0.0
        %2147 = vmatprep.subr.mxu0 0.0
        %2148 = vmatpush1.xpose.msra.mxu0 0.0
        %2149 = vmatprep.subr.mxu0 0.0
        %2150 = vmatpush1.xpose.msra.mxu0 0.0
        %2151 = vmatprep.subr.mxu0 0.0
        %2152 = vmatpush1.xpose.msra.mxu0 0.0
        %2153 = vmatprep.subr.mxu0 0.0
        %2154 = vmatpush1.xpose.msra.mxu0 0.0
        %2155 = vmatprep.subr.mxu0 0.0
        %2156 = vmatpush1.xpose.msra.mxu0 0.0
        %2157 = vmatprep.subr.mxu0 0.0
        %2158 = vmatpush1.xpose.msra.mxu0 0.0
        %2159 = vmatprep.subr.mxu0 0.0
        %2160 = vmatpush1.xpose.msra.mxu0 0.0
        %2161 = vmatprep.subr.mxu0 0.0
        %2162 = vmatpush1.xpose.msra.mxu0 0.0
        %2163 = vmatprep.subr.mxu0 0.0
        %2164 = vmatpush1.xpose.msra.mxu0 0.0
        %2165 = vmatprep.subr.mxu0 0.0
        %2166 = vmatpush1.xpose.msra.mxu0 0.0
        %2167 = vmatprep.subr.mxu0 0.0
        %2168 = vmatpush1.xpose.msra.mxu0 0.0
        %2169 = vmatprep.subr.mxu0 0.0
        %2170 = vmatpush1.xpose.msra.mxu0 0.0
        %2171 = vmatprep.subr.mxu0 0.0
        %2172 = vmatpush1.xpose.msra.mxu0 0.0
        %2173 = vmatprep.mubr.f32.mxu0 0.0
        %2174 = vmatmul.mubr.f32.gmra.mrb[0].mxu0 %v2105
        %v2175 = vpop.f32.mrb[0].mxu0
        %v2176 = vadd.f32 0.0, %v2175
        %v2177 = vpop.f32.mrb[0].mxu0
        %2178 = vdwg.mxu0
        %2179 = vrot.lane.b32.xlu0 %v1611, 120
        %v2180 = vpop.permute.xlu0 %2179
        %2181 = vrot.lane.b32.xlu0 %v1692, 120
        %v2182 = vpop.permute.xlu0 %2181
        %v2183 = vsel %vm1776, %v2180, 0
        %v2185 = vsel %vm1776, %v2182, 0
        %2187 = vmatprep.subr.mxu0 0.0
        %2188 = vmatpush1.xpose.msra.mxu0 %v2185
        %2189 = vmatprep.subr.mxu0 0.0
        %2190 = vmatpush1.xpose.msra.mxu0 0.0
        %2191 = vmatprep.subr.mxu0 0.0
        %2192 = vmatpush1.xpose.msra.mxu0 0.0
        %2193 = vmatprep.subr.mxu0 0.0
        %2194 = vmatpush1.xpose.msra.mxu0 0.0
        %2195 = vmatprep.subr.mxu0 0.0
        %2196 = vmatpush1.xpose.msra.mxu0 0.0
        %2197 = vmatprep.subr.mxu0 0.0
        %2198 = vmatpush1.xpose.msra.mxu0 0.0
        %2199 = vmatprep.subr.mxu0 0.0
        %2200 = vmatpush1.xpose.msra.mxu0 0.0
        %2201 = vmatprep.subr.mxu0 0.0
        %2202 = vmatpush1.xpose.msra.mxu0 0.0
        %2203 = vmatprep.subr.mxu0 0.0
        %2204 = vmatpush1.xpose.msra.mxu0 0.0
        %2205 = vmatprep.subr.mxu0 0.0
        %2206 = vmatpush1.xpose.msra.mxu0 0.0
        %2207 = vmatprep.subr.mxu0 0.0
        %2208 = vmatpush1.xpose.msra.mxu0 0.0
        %2209 = vmatprep.subr.mxu0 0.0
        %2210 = vmatpush1.xpose.msra.mxu0 0.0
        %2211 = vmatprep.subr.mxu0 0.0
        %2212 = vmatpush1.xpose.msra.mxu0 0.0
        %2213 = vmatprep.subr.mxu0 0.0
        %2214 = vmatpush1.xpose.msra.mxu0 0.0
        %2215 = vmatprep.subr.mxu0 0.0
        %2216 = vmatpush1.xpose.msra.mxu0 0.0
        %2217 = vmatprep.subr.mxu0 0.0
        %2218 = vmatpush1.xpose.msra.mxu0 0.0
        %2219 = vmatprep.subr.mxu0 0.0
        %2220 = vmatpush1.xpose.msra.mxu0 0.0
        %2221 = vmatprep.subr.mxu0 0.0
        %2222 = vmatpush1.xpose.msra.mxu0 0.0
        %2223 = vmatprep.subr.mxu0 0.0
        %2224 = vmatpush1.xpose.msra.mxu0 0.0
        %2225 = vmatprep.subr.mxu0 0.0
        %2226 = vmatpush1.xpose.msra.mxu0 0.0
        %2227 = vmatprep.subr.mxu0 0.0
        %2228 = vmatpush1.xpose.msra.mxu0 0.0
        %2229 = vmatprep.subr.mxu0 0.0
        %2230 = vmatpush1.xpose.msra.mxu0 0.0
        %2231 = vmatprep.subr.mxu0 0.0
        %2232 = vmatpush1.xpose.msra.mxu0 0.0
        %2233 = vmatprep.subr.mxu0 0.0
        %2234 = vmatpush1.xpose.msra.mxu0 0.0
        %2235 = vmatprep.subr.mxu0 0.0
        %2236 = vmatpush1.xpose.msra.mxu0 0.0
        %2237 = vmatprep.subr.mxu0 0.0
        %2238 = vmatpush1.xpose.msra.mxu0 0.0
        %2239 = vmatprep.subr.mxu0 0.0
        %2240 = vmatpush1.xpose.msra.mxu0 0.0
        %2241 = vmatprep.subr.mxu0 0.0
        %2242 = vmatpush1.xpose.msra.mxu0 0.0
        %2243 = vmatprep.subr.mxu0 0.0
        %2244 = vmatpush1.xpose.msra.mxu0 0.0
        %2245 = vmatprep.subr.mxu0 0.0
        %2246 = vmatpush1.xpose.msra.mxu0 0.0
        %2247 = vmatprep.subr.mxu0 0.0
        %2248 = vmatpush1.xpose.msra.mxu0 0.0
        %2249 = vmatprep.subr.mxu0 0.0
        %2250 = vmatpush1.xpose.msra.mxu0 0.0
        %2251 = vmatprep.mubr.f32.mxu0 0.0
        %2252 = vmatmul.mubr.f32.gmra.mrb[0].mxu0 %v2183
        %v2253 = vpop.f32.mrb[0].mxu0
        %v2254 = vadd.f32 0.0, %v2253
        %v2255 = vpop.f32.mrb[0].mxu0
        %2256 = vdwg.mxu0
        %v2257 = vsel %vm1930, %v2176, -1e+09
        %v2258 = vsel %vm1930, %v2254, -1e+09
        %v2259 = vsel %vm1776, %v2257, -inf
        %2260 = vmax.xlane.f32.xlu0 %v2259
        %v2261 = vpop.xlane.xlu0 %2260
        %v2262 = vsel %vm1776, %v2258, -inf
        %2263 = vmax.xlane.f32.xlu0 %v2262
        %v2264 = vpop.xlane.xlu0 %2263
        %v2265 = vsub.f32 %v2257, %v2261
        %v2266 = vsub.f32 %v2258, %v2264
        %v2267 = vmul.f32 %v2265, 1.442695
        %v2268 = vpow.pop %v2267
        %v2269 = vmul.f32 %v2266, 1.442695
        %v2270 = vpow.pop %v2269
        %v2271 = vsel %vm1776, %v2268, 0.0
        %2272 = vadd.xlane.f32.xlu0 %v2271
        %v2273 = vpop.xlane.xlu0 %2272
        %v2274 = vsel %vm1776, %v2270, 0.0
        %2275 = vadd.xlane.f32.xlu0 %v2274
        %v2276 = vpop.xlane.xlu0 %2275
        %v2277 = vrcp.pop %v2273
        %v2278 = vrcp.pop %v2276
        %v2279 = vmul.f32 %v2268, %v2277
        %v2280 = vmul.f32 %v2270, %v2278
        %2282 = vrot.lane.b32.xlu0 %v1768, 120
        %v2283 = vpop.permute.xlu0 %2282
        %v2286 = vsel %vm1776, %v2279, 0
        %2288 = vmatprep.subr.mxu0 0.0
        %2289 = vmatpush1.msra.mxu0 %v2283
        %2290 = vmatprep.subr.mxu0 0.0
        %2291 = vmatpush1.msra.mxu0 0.0
        %2292 = vmatprep.subr.mxu0 0.0
        %2293 = vmatpush1.msra.mxu0 0.0
        %2294 = vmatprep.subr.mxu0 0.0
        %2295 = vmatpush1.msra.mxu0 0.0
        %2296 = vmatprep.subr.mxu0 0.0
        %2297 = vmatpush1.msra.mxu0 0.0
        %2298 = vmatprep.subr.mxu0 0.0
        %2299 = vmatpush1.msra.mxu0 0.0
        %2300 = vmatprep.subr.mxu0 0.0
        %2301 = vmatpush1.msra.mxu0 0.0
        %2302 = vmatprep.subr.mxu0 0.0
        %2303 = vmatpush1.msra.mxu0 0.0
        %2304 = vmatprep.subr.mxu0 0.0
        %2305 = vmatpush1.msra.mxu0 0.0
        %2306 = vmatprep.subr.mxu0 0.0
        %2307 = vmatpush1.msra.mxu0 0.0
        %2308 = vmatprep.subr.mxu0 0.0
        %2309 = vmatpush1.msra.mxu0 0.0
        %2310 = vmatprep.subr.mxu0 0.0
        %2311 = vmatpush1.msra.mxu0 0.0
        %2312 = vmatprep.subr.mxu0 0.0
        %2313 = vmatpush1.msra.mxu0 0.0
        %2314 = vmatprep.subr.mxu0 0.0
        %2315 = vmatpush1.msra.mxu0 0.0
        %2316 = vmatprep.subr.mxu0 0.0
        %2317 = vmatpush1.msra.mxu0 0.0
        %2318 = vmatprep.subr.mxu0 0.0
        %2319 = vmatpush1.msra.mxu0 0.0
        %2320 = vmatprep.subr.mxu0 0.0
        %2321 = vmatpush1.msra.mxu0 0.0
        %2322 = vmatprep.subr.mxu0 0.0
        %2323 = vmatpush1.msra.mxu0 0.0
        %2324 = vmatprep.subr.mxu0 0.0
        %2325 = vmatpush1.msra.mxu0 0.0
        %2326 = vmatprep.subr.mxu0 0.0
        %2327 = vmatpush1.msra.mxu0 0.0
        %2328 = vmatprep.subr.mxu0 0.0
        %2329 = vmatpush1.msra.mxu0 0.0
        %2330 = vmatprep.subr.mxu0 0.0
        %2331 = vmatpush1.msra.mxu0 0.0
        %2332 = vmatprep.subr.mxu0 0.0
        %2333 = vmatpush1.msra.mxu0 0.0
        %2334 = vmatprep.subr.mxu0 0.0
        %2335 = vmatpush1.msra.mxu0 0.0
        %2336 = vmatprep.subr.mxu0 0.0
        %2337 = vmatpush1.msra.mxu0 0.0
        %2338 = vmatprep.subr.mxu0 0.0
        %2339 = vmatpush1.msra.mxu0 0.0
        %2340 = vmatprep.subr.mxu0 0.0
        %2341 = vmatpush1.msra.mxu0 0.0
        %2342 = vmatprep.subr.mxu0 0.0
        %2343 = vmatpush1.msra.mxu0 0.0
        %2344 = vmatprep.subr.mxu0 0.0
        %2345 = vmatpush1.msra.mxu0 0.0
        %2346 = vmatprep.subr.mxu0 0.0
        %2347 = vmatpush1.msra.mxu0 0.0
        %2348 = vmatprep.subr.mxu0 0.0
        %2349 = vmatpush1.msra.mxu0 0.0
        %2350 = vmatprep.subr.mxu0 0.0
        %2351 = vmatpush1.msra.mxu0 0.0
        %2352 = vmatprep.mubr.f32.mxu0 0.0
        %2353 = vmatmul.mubr.f32.gmra.mrb[0].mxu0 %v2286
        %v2354 = vpop.f32.mrb[0].mxu0
        %v2355 = vadd.f32 0.0, %v2354
        %v2356 = vpop.f32.mrb[0].mxu0
        %2357 = vdwg.mxu0
        %2359 = vrot.lane.b32.xlu0 %v1773, 120
        %v2360 = vpop.permute.xlu0 %2359
        %v2363 = vsel %vm1776, %v2280, 0
        %2365 = vmatprep.subr.mxu0 0.0
        %2366 = vmatpush1.msra.mxu0 %v2360
        %2367 = vmatprep.subr.mxu0 0.0
        %2368 = vmatpush1.msra.mxu0 0.0
        %2369 = vmatprep.subr.mxu0 0.0
        %2370 = vmatpush1.msra.mxu0 0.0
        %2371 = vmatprep.subr.mxu0 0.0
        %2372 = vmatpush1.msra.mxu0 0.0
        %2373 = vmatprep.subr.mxu0 0.0
        %2374 = vmatpush1.msra.mxu0 0.0
        %2375 = vmatprep.subr.mxu0 0.0
        %2376 = vmatpush1.msra.mxu0 0.0
        %2377 = vmatprep.subr.mxu0 0.0
        %2378 = vmatpush1.msra.mxu0 0.0
        %2379 = vmatprep.subr.mxu0 0.0
        %2380 = vmatpush1.msra.mxu0 0.0
        %2381 = vmatprep.subr.mxu0 0.0
        %2382 = vmatpush1.msra.mxu0 0.0
        %2383 = vmatprep.subr.mxu0 0.0
        %2384 = vmatpush1.msra.mxu0 0.0
        %2385 = vmatprep.subr.mxu0 0.0
        %2386 = vmatpush1.msra.mxu0 0.0
        %2387 = vmatprep.subr.mxu0 0.0
        %2388 = vmatpush1.msra.mxu0 0.0
        %2389 = vmatprep.subr.mxu0 0.0
        %2390 = vmatpush1.msra.mxu0 0.0
        %2391 = vmatprep.subr.mxu0 0.0
        %2392 = vmatpush1.msra.mxu0 0.0
        %2393 = vmatprep.subr.mxu0 0.0
        %2394 = vmatpush1.msra.mxu0 0.0
        %2395 = vmatprep.subr.mxu0 0.0
        %2396 = vmatpush1.msra.mxu0 0.0
        %2397 = vmatprep.subr.mxu0 0.0
        %2398 = vmatpush1.msra.mxu0 0.0
        %2399 = vmatprep.subr.mxu0 0.0
        %2400 = vmatpush1.msra.mxu0 0.0
        %2401 = vmatprep.subr.mxu0 0.0
        %2402 = vmatpush1.msra.mxu0 0.0
        %2403 = vmatprep.subr.mxu0 0.0
        %2404 = vmatpush1.msra.mxu0 0.0
        %2405 = vmatprep.subr.mxu0 0.0
        %2406 = vmatpush1.msra.mxu0 0.0
        %2407 = vmatprep.subr.mxu0 0.0
        %2408 = vmatpush1.msra.mxu0 0.0
        %2409 = vmatprep.subr.mxu0 0.0
        %2410 = vmatpush1.msra.mxu0 0.0
        %2411 = vmatprep.subr.mxu0 0.0
        %2412 = vmatpush1.msra.mxu0 0.0
        %2413 = vmatprep.subr.mxu0 0.0
        %2414 = vmatpush1.msra.mxu0 0.0
        %2415 = vmatprep.subr.mxu0 0.0
        %2416 = vmatpush1.msra.mxu0 0.0
        %2417 = vmatprep.subr.mxu0 0.0
        %2418 = vmatpush1.msra.mxu0 0.0
        %2419 = vmatprep.subr.mxu0 0.0
        %2420 = vmatpush1.msra.mxu0 0.0
        %2421 = vmatprep.subr.mxu0 0.0
        %2422 = vmatpush1.msra.mxu0 0.0
        %2423 = vmatprep.subr.mxu0 0.0
        %2424 = vmatpush1.msra.mxu0 0.0
        %2425 = vmatprep.subr.mxu0 0.0
        %2426 = vmatpush1.msra.mxu0 0.0
        %2427 = vmatprep.subr.mxu0 0.0
        %2428 = vmatpush1.msra.mxu0 0.0
        %2429 = vmatprep.mubr.f32.mxu0 0.0
        %2430 = vmatmul.mubr.f32.gmra.mrb[0].mxu0 %v2363
        %v2431 = vpop.f32.mrb[0].mxu0
        %v2432 = vadd.f32 0.0, %v2431
        %v2433 = vpop.f32.mrb[0].mxu0
        %2434 = vdwg.mxu0
        %2435 = vrot.lane.b32.xlu0 %v1606, 112
        %v2436 = vpop.permute.xlu0 %2435
        %2437 = vrot.lane.b32.xlu0 %v1687, 112
        %v2438 = vpop.permute.xlu0 %2437
        %v2439 = vsel %vm1776, %v2436, 0
        %v2441 = vsel %vm1776, %v2438, 0
        %2443 = vmatprep.subr.mxu0 0.0
        %2444 = vmatpush1.xpose.msra.mxu0 %v2441
        %2445 = vmatprep.subr.mxu0 0.0
        %2446 = vmatpush1.xpose.msra.mxu0 0.0
        %2447 = vmatprep.subr.mxu0 0.0
        %2448 = vmatpush1.xpose.msra.mxu0 0.0
        %2449 = vmatprep.subr.mxu0 0.0
        %2450 = vmatpush1.xpose.msra.mxu0 0.0
        %2451 = vmatprep.subr.mxu0 0.0
        %2452 = vmatpush1.xpose.msra.mxu0 0.0
        %2453 = vmatprep.subr.mxu0 0.0
        %2454 = vmatpush1.xpose.msra.mxu0 0.0
        %2455 = vmatprep.subr.mxu0 0.0
        %2456 = vmatpush1.xpose.msra.mxu0 0.0
        %2457 = vmatprep.subr.mxu0 0.0
        %2458 = vmatpush1.xpose.msra.mxu0 0.0
        %2459 = vmatprep.subr.mxu0 0.0
        %2460 = vmatpush1.xpose.msra.mxu0 0.0
        %2461 = vmatprep.subr.mxu0 0.0
        %2462 = vmatpush1.xpose.msra.mxu0 0.0
        %2463 = vmatprep.subr.mxu0 0.0
        %2464 = vmatpush1.xpose.msra.mxu0 0.0
        %2465 = vmatprep.subr.mxu0 0.0
        %2466 = vmatpush1.xpose.msra.mxu0 0.0
        %2467 = vmatprep.subr.mxu0 0.0
        %2468 = vmatpush1.xpose.msra.mxu0 0.0
        %2469 = vmatprep.subr.mxu0 0.0
        %2470 = vmatpush1.xpose.msra.mxu0 0.0
        %2471 = vmatprep.subr.mxu0 0.0
        %2472 = vmatpush1.xpose.msra.mxu0 0.0
        %2473 = vmatprep.subr.mxu0 0.0
        %2474 = vmatpush1.xpose.msra.mxu0 0.0
        %2475 = vmatprep.subr.mxu0 0.0
        %2476 = vmatpush1.xpose.msra.mxu0 0.0
        %2477 = vmatprep.subr.mxu0 0.0
        %2478 = vmatpush1.xpose.msra.mxu0 0.0
        %2479 = vmatprep.subr.mxu0 0.0
        %2480 = vmatpush1.xpose.msra.mxu0 0.0
        %2481 = vmatprep.subr.mxu0 0.0
        %2482 = vmatpush1.xpose.msra.mxu0 0.0
        %2483 = vmatprep.subr.mxu0 0.0
        %2484 = vmatpush1.xpose.msra.mxu0 0.0
        %2485 = vmatprep.subr.mxu0 0.0
        %2486 = vmatpush1.xpose.msra.mxu0 0.0
        %2487 = vmatprep.subr.mxu0 0.0
        %2488 = vmatpush1.xpose.msra.mxu0 0.0
        %2489 = vmatprep.subr.mxu0 0.0
        %2490 = vmatpush1.xpose.msra.mxu0 0.0
        %2491 = vmatprep.subr.mxu0 0.0
        %2492 = vmatpush1.xpose.msra.mxu0 0.0
        %2493 = vmatprep.subr.mxu0 0.0
        %2494 = vmatpush1.xpose.msra.mxu0 0.0
        %2495 = vmatprep.subr.mxu0 0.0
        %2496 = vmatpush1.xpose.msra.mxu0 0.0
        %2497 = vmatprep.subr.mxu0 0.0
        %2498 = vmatpush1.xpose.msra.mxu0 0.0
        %2499 = vmatprep.subr.mxu0 0.0
        %2500 = vmatpush1.xpose.msra.mxu0 0.0
        %2501 = vmatprep.subr.mxu0 0.0
        %2502 = vmatpush1.xpose.msra.mxu0 0.0
        %2503 = vmatprep.subr.mxu0 0.0
        %2504 = vmatpush1.xpose.msra.mxu0 0.0
        %2505 = vmatprep.subr.mxu0 0.0
        %2506 = vmatpush1.xpose.msra.mxu0 0.0
        %2507 = vmatprep.mubr.f32.mxu0 0.0
        %2508 = vmatmul.mubr.f32.gmra.mrb[0].mxu0 %v2439
        %v2509 = vpop.f32.mrb[0].mxu0
        %v2510 = vadd.f32 0.0, %v2509
        %v2511 = vpop.f32.mrb[0].mxu0
        %2512 = vdwg.mxu0
        %2513 = vrot.lane.b32.xlu0 %v1611, 112
        %v2514 = vpop.permute.xlu0 %2513
        %2515 = vrot.lane.b32.xlu0 %v1692, 112
        %v2516 = vpop.permute.xlu0 %2515
        %v2517 = vsel %vm1776, %v2514, 0
        %v2519 = vsel %vm1776, %v2516, 0
        %2521 = vmatprep.subr.mxu0 0.0
        %2522 = vmatpush1.xpose.msra.mxu0 %v2519
        %2523 = vmatprep.subr.mxu0 0.0
        %2524 = vmatpush1.xpose.msra.mxu0 0.0
        %2525 = vmatprep.subr.mxu0 0.0
        %2526 = vmatpush1.xpose.msra.mxu0 0.0
        %2527 = vmatprep.subr.mxu0 0.0
        %2528 = vmatpush1.xpose.msra.mxu0 0.0
        %2529 = vmatprep.subr.mxu0 0.0
        %2530 = vmatpush1.xpose.msra.mxu0 0.0
        %2531 = vmatprep.subr.mxu0 0.0
        %2532 = vmatpush1.xpose.msra.mxu0 0.0
        %2533 = vmatprep.subr.mxu0 0.0
        %2534 = vmatpush1.xpose.msra.mxu0 0.0
        %2535 = vmatprep.subr.mxu0 0.0
        %2536 = vmatpush1.xpose.msra.mxu0 0.0
        %2537 = vmatprep.subr.mxu0 0.0
        %2538 = vmatpush1.xpose.msra.mxu0 0.0
        %2539 = vmatprep.subr.mxu0 0.0
        %2540 = vmatpush1.xpose.msra.mxu0 0.0
        %2541 = vmatprep.subr.mxu0 0.0
        %2542 = vmatpush1.xpose.msra.mxu0 0.0
        %2543 = vmatprep.subr.mxu0 0.0
        %2544 = vmatpush1.xpose.msra.mxu0 0.0
        %2545 = vmatprep.subr.mxu0 0.0
        %2546 = vmatpush1.xpose.msra.mxu0 0.0
        %2547 = vmatprep.subr.mxu0 0.0
        %2548 = vmatpush1.xpose.msra.mxu0 0.0
        %2549 = vmatprep.subr.mxu0 0.0
        %2550 = vmatpush1.xpose.msra.mxu0 0.0
        %2551 = vmatprep.subr.mxu0 0.0
        %2552 = vmatpush1.xpose.msra.mxu0 0.0
        %2553 = vmatprep.subr.mxu0 0.0
        %2554 = vmatpush1.xpose.msra.mxu0 0.0
        %2555 = vmatprep.subr.mxu0 0.0
        %2556 = vmatpush1.xpose.msra.mxu0 0.0
        %2557 = vmatprep.subr.mxu0 0.0
        %2558 = vmatpush1.xpose.msra.mxu0 0.0
        %2559 = vmatprep.subr.mxu0 0.0
        %2560 = vmatpush1.xpose.msra.mxu0 0.0
        %2561 = vmatprep.subr.mxu0 0.0
        %2562 = vmatpush1.xpose.msra.mxu0 0.0
        %2563 = vmatprep.subr.mxu0 0.0
        %2564 = vmatpush1.xpose.msra.mxu0 0.0
        %2565 = vmatprep.subr.mxu0 0.0
        %2566 = vmatpush1.xpose.msra.mxu0 0.0
        %2567 = vmatprep.subr.mxu0 0.0
        %2568 = vmatpush1.xpose.msra.mxu0 0.0
        %2569 = vmatprep.subr.mxu0 0.0
        %2570 = vmatpush1.xpose.msra.mxu0 0.0
        %2571 = vmatprep.subr.mxu0 0.0
        %2572 = vmatpush1.xpose.msra.mxu0 0.0
        %2573 = vmatprep.subr.mxu0 0.0
        %2574 = vmatpush1.xpose.msra.mxu0 0.0
        %2575 = vmatprep.subr.mxu0 0.0
        %2576 = vmatpush1.xpose.msra.mxu0 0.0
        %2577 = vmatprep.subr.mxu0 0.0
        %2578 = vmatpush1.xpose.msra.mxu0 0.0
        %2579 = vmatprep.subr.mxu0 0.0
        %2580 = vmatpush1.xpose.msra.mxu0 0.0
        %2581 = vmatprep.subr.mxu0 0.0
        %2582 = vmatpush1.xpose.msra.mxu0 0.0
        %2583 = vmatprep.subr.mxu0 0.0
        %2584 = vmatpush1.xpose.msra.mxu0 0.0
        %2585 = vmatprep.mubr.f32.mxu0 0.0
        %2586 = vmatmul.mubr.f32.gmra.mrb[0].mxu0 %v2517
        %v2587 = vpop.f32.mrb[0].mxu0
        %v2588 = vadd.f32 0.0, %v2587
        %v2589 = vpop.f32.mrb[0].mxu0
        %2590 = vdwg.mxu0
        %v2591 = vsel %vm1930, %v2510, -1e+09
        %v2592 = vsel %vm1930, %v2588, -1e+09
        %v2593 = vsel %vm1776, %v2591, -inf
        %2594 = vmax.xlane.f32.xlu0 %v2593
        %v2595 = vpop.xlane.xlu0 %2594
        %v2596 = vsel %vm1776, %v2592, -inf
        %2597 = vmax.xlane.f32.xlu0 %v2596
        %v2598 = vpop.xlane.xlu0 %2597
        %v2599 = vsub.f32 %v2591, %v2595
        %v2600 = vsub.f32 %v2592, %v2598
        %v2601 = vmul.f32 %v2599, 1.442695
        %v2602 = vpow.pop %v2601
        %v2603 = vmul.f32 %v2600, 1.442695
        %v2604 = vpow.pop %v2603
        %v2605 = vsel %vm1776, %v2602, 0.0
        %2606 = vadd.xlane.f32.xlu0 %v2605
        %v2607 = vpop.xlane.xlu0 %2606
        %v2608 = vsel %vm1776, %v2604, 0.0
        %2609 = vadd.xlane.f32.xlu0 %v2608
        %v2610 = vpop.xlane.xlu0 %2609
        %v2611 = vrcp.pop %v2607
        %v2612 = vrcp.pop %v2610
        %v2613 = vmul.f32 %v2602, %v2611
        %v2614 = vmul.f32 %v2604, %v2612
        %2615 = vrot.lane.b32.xlu0 %v1768, 112
        %v2616 = vpop.permute.xlu0 %2615
        %v2619 = vsel %vm1776, %v2613, 0
        %2621 = vmatprep.subr.mxu0 0.0
        %2622 = vmatpush1.msra.mxu0 %v2616
        %2623 = vmatprep.subr.mxu0 0.0
        %2624 = vmatpush1.msra.mxu0 0.0
        %2625 = vmatprep.subr.mxu0 0.0
        %2626 = vmatpush1.msra.mxu0 0.0
        %2627 = vmatprep.subr.mxu0 0.0
        %2628 = vmatpush1.msra.mxu0 0.0
        %2629 = vmatprep.subr.mxu0 0.0
        %2630 = vmatpush1.msra.mxu0 0.0
        %2631 = vmatprep.subr.mxu0 0.0
        %2632 = vmatpush1.msra.mxu0 0.0
        %2633 = vmatprep.subr.mxu0 0.0
        %2634 = vmatpush1.msra.mxu0 0.0
        %2635 = vmatprep.subr.mxu0 0.0
        %2636 = vmatpush1.msra.mxu0 0.0
        %2637 = vmatprep.subr.mxu0 0.0
        %2638 = vmatpush1.msra.mxu0 0.0
        %2639 = vmatprep.subr.mxu0 0.0
        %2640 = vmatpush1.msra.mxu0 0.0
        %2641 = vmatprep.subr.mxu0 0.0
        %2642 = vmatpush1.msra.mxu0 0.0
        %2643 = vmatprep.subr.mxu0 0.0
        %2644 = vmatpush1.msra.mxu0 0.0
        %2645 = vmatprep.subr.mxu0 0.0
        %2646 = vmatpush1.msra.mxu0 0.0
        %2647 = vmatprep.subr.mxu0 0.0
        %2648 = vmatpush1.msra.mxu0 0.0
        %2649 = vmatprep.subr.mxu0 0.0
        %2650 = vmatpush1.msra.mxu0 0.0
        %2651 = vmatprep.subr.mxu0 0.0
        %2652 = vmatpush1.msra.mxu0 0.0
        %2653 = vmatprep.subr.mxu0 0.0
        %2654 = vmatpush1.msra.mxu0 0.0
        %2655 = vmatprep.subr.mxu0 0.0
        %2656 = vmatpush1.msra.mxu0 0.0
        %2657 = vmatprep.subr.mxu0 0.0
        %2658 = vmatpush1.msra.mxu0 0.0
        %2659 = vmatprep.subr.mxu0 0.0
        %2660 = vmatpush1.msra.mxu0 0.0
        %2661 = vmatprep.subr.mxu0 0.0
        %2662 = vmatpush1.msra.mxu0 0.0
        %2663 = vmatprep.subr.mxu0 0.0
        %2664 = vmatpush1.msra.mxu0 0.0
        %2665 = vmatprep.subr.mxu0 0.0
        %2666 = vmatpush1.msra.mxu0 0.0
        %2667 = vmatprep.subr.mxu0 0.0
        %2668 = vmatpush1.msra.mxu0 0.0
        %2669 = vmatprep.subr.mxu0 0.0
        %2670 = vmatpush1.msra.mxu0 0.0
        %2671 = vmatprep.subr.mxu0 0.0
        %2672 = vmatpush1.msra.mxu0 0.0
        %2673 = vmatprep.subr.mxu0 0.0
        %2674 = vmatpush1.msra.mxu0 0.0
        %2675 = vmatprep.subr.mxu0 0.0
        %2676 = vmatpush1.msra.mxu0 0.0
        %2677 = vmatprep.subr.mxu0 0.0
        %2678 = vmatpush1.msra.mxu0 0.0
        %2679 = vmatprep.subr.mxu0 0.0
        %2680 = vmatpush1.msra.mxu0 0.0
        %2681 = vmatprep.subr.mxu0 0.0
        %2682 = vmatpush1.msra.mxu0 0.0
        %2683 = vmatprep.subr.mxu0 0.0
        %2684 = vmatpush1.msra.mxu0 0.0
        %2685 = vmatprep.mubr.f32.mxu0 0.0
        %2686 = vmatmul.mubr.f32.gmra.mrb[0].mxu0 %v2619
        %v2687 = vpop.f32.mrb[0].mxu0
        %v2688 = vadd.f32 0.0, %v2687
        %v2689 = vpop.f32.mrb[0].mxu0
        %2690 = vdwg.mxu0
        %2691 = vrot.lane.b32.xlu0 %v1773, 112
        %v2692 = vpop.permute.xlu0 %2691
        %v2695 = vsel %vm1776, %v2614, 0
        %2697 = vmatprep.subr.mxu0 0.0
        %2698 = vmatpush1.msra.mxu0 %v2692
        %2699 = vmatprep.subr.mxu0 0.0
        %2700 = vmatpush1.msra.mxu0 0.0
        %2701 = vmatprep.subr.mxu0 0.0
        %2702 = vmatpush1.msra.mxu0 0.0
        %2703 = vmatprep.subr.mxu0 0.0
        %2704 = vmatpush1.msra.mxu0 0.0
        %2705 = vmatprep.subr.mxu0 0.0
        %2706 = vmatpush1.msra.mxu0 0.0
        %2707 = vmatprep.subr.mxu0 0.0
        %2708 = vmatpush1.msra.mxu0 0.0
        %2709 = vmatprep.subr.mxu0 0.0
        %2710 = vmatpush1.msra.mxu0 0.0
        %2711 = vmatprep.subr.mxu0 0.0
        %2712 = vmatpush1.msra.mxu0 0.0
        %2713 = vmatprep.subr.mxu0 0.0
        %2714 = vmatpush1.msra.mxu0 0.0
        %2715 = vmatprep.subr.mxu0 0.0
        %2716 = vmatpush1.msra.mxu0 0.0
        %2717 = vmatprep.subr.mxu0 0.0
        %2718 = vmatpush1.msra.mxu0 0.0
        %2719 = vmatprep.subr.mxu0 0.0
        %2720 = vmatpush1.msra.mxu0 0.0
        %2721 = vmatprep.subr.mxu0 0.0
        %2722 = vmatpush1.msra.mxu0 0.0
        %2723 = vmatprep.subr.mxu0 0.0
        %2724 = vmatpush1.msra.mxu0 0.0
        %2725 = vmatprep.subr.mxu0 0.0
        %2726 = vmatpush1.msra.mxu0 0.0
        %2727 = vmatprep.subr.mxu0 0.0
        %2728 = vmatpush1.msra.mxu0 0.0
        %2729 = vmatprep.subr.mxu0 0.0
        %2730 = vmatpush1.msra.mxu0 0.0
        %2731 = vmatprep.subr.mxu0 0.0
        %2732 = vmatpush1.msra.mxu0 0.0
        %2733 = vmatprep.subr.mxu0 0.0
        %2734 = vmatpush1.msra.mxu0 0.0
        %2735 = vmatprep.subr.mxu0 0.0
        %2736 = vmatpush1.msra.mxu0 0.0
        %2737 = vmatprep.subr.mxu0 0.0
        %2738 = vmatpush1.msra.mxu0 0.0
        %2739 = vmatprep.subr.mxu0 0.0
        %2740 = vmatpush1.msra.mxu0 0.0
        %2741 = vmatprep.subr.mxu0 0.0
        %2742 = vmatpush1.msra.mxu0 0.0
        %2743 = vmatprep.subr.mxu0 0.0
        %2744 = vmatpush1.msra.mxu0 0.0
        %2745 = vmatprep.subr.mxu0 0.0
        %2746 = vmatpush1.msra.mxu0 0.0
        %2747 = vmatprep.subr.mxu0 0.0
        %2748 = vmatpush1.msra.mxu0 0.0
        %2749 = vmatprep.subr.mxu0 0.0
        %2750 = vmatpush1.msra.mxu0 0.0
        %2751 = vmatprep.subr.mxu0 0.0
        %2752 = vmatpush1.msra.mxu0 0.0
        %2753 = vmatprep.subr.mxu0 0.0
        %2754 = vmatpush1.msra.mxu0 0.0
        %2755 = vmatprep.subr.mxu0 0.0
        %2756 = vmatpush1.msra.mxu0 0.0
        %2757 = vmatprep.subr.mxu0 0.0
        %2758 = vmatpush1.msra.mxu0 0.0
        %2759 = vmatprep.subr.mxu0 0.0
        %2760 = vmatpush1.msra.mxu0 0.0
        %2761 = vmatprep.mubr.f32.mxu0 0.0
        %2762 = vmatmul.mubr.f32.gmra.mrb[0].mxu0 %v2695
        %v2763 = vpop.f32.mrb[0].mxu0
        %v2764 = vadd.f32 0.0, %v2763
        %v2765 = vpop.f32.mrb[0].mxu0
        %2766 = vdwg.mxu0
        %2767 = vrot.lane.b32.xlu0 %v1606, 104
        %v2768 = vpop.permute.xlu0 %2767
        %2769 = vrot.lane.b32.xlu0 %v1687, 104
        %v2770 = vpop.permute.xlu0 %2769
        %v2771 = vsel %vm1776, %v2768, 0
        %v2773 = vsel %vm1776, %v2770, 0
        %2775 = vmatprep.subr.mxu0 0.0
        %2776 = vmatpush1.xpose.msra.mxu0 %v2773
        %2777 = vmatprep.subr.mxu0 0.0
        %2778 = vmatpush1.xpose.msra.mxu0 0.0
        %2779 = vmatprep.subr.mxu0 0.0
        %2780 = vmatpush1.xpose.msra.mxu0 0.0
        %2781 = vmatprep.subr.mxu0 0.0
        %2782 = vmatpush1.xpose.msra.mxu0 0.0
        %2783 = vmatprep.subr.mxu0 0.0
        %2784 = vmatpush1.xpose.msra.mxu0 0.0
        %2785 = vmatprep.subr.mxu0 0.0
        %2786 = vmatpush1.xpose.msra.mxu0 0.0
        %2787 = vmatprep.subr.mxu0 0.0
        %2788 = vmatpush1.xpose.msra.mxu0 0.0
        %2789 = vmatprep.subr.mxu0 0.0
        %2790 = vmatpush1.xpose.msra.mxu0 0.0
        %2791 = vmatprep.subr.mxu0 0.0
        %2792 = vmatpush1.xpose.msra.mxu0 0.0
        %2793 = vmatprep.subr.mxu0 0.0
        %2794 = vmatpush1.xpose.msra.mxu0 0.0
        %2795 = vmatprep.subr.mxu0 0.0
        %2796 = vmatpush1.xpose.msra.mxu0 0.0
        %2797 = vmatprep.subr.mxu0 0.0
        %2798 = vmatpush1.xpose.msra.mxu0 0.0
        %2799 = vmatprep.subr.mxu0 0.0
        %2800 = vmatpush1.xpose.msra.mxu0 0.0
        %2801 = vmatprep.subr.mxu0 0.0
        %2802 = vmatpush1.xpose.msra.mxu0 0.0
        %2803 = vmatprep.subr.mxu0 0.0
        %2804 = vmatpush1.xpose.msra.mxu0 0.0
        %2805 = vmatprep.subr.mxu0 0.0
        %2806 = vmatpush1.xpose.msra.mxu0 0.0
        %2807 = vmatprep.subr.mxu0 0.0
        %2808 = vmatpush1.xpose.msra.mxu0 0.0
        %2809 = vmatprep.subr.mxu0 0.0
        %2810 = vmatpush1.xpose.msra.mxu0 0.0
        %2811 = vmatprep.subr.mxu0 0.0
        %2812 = vmatpush1.xpose.msra.mxu0 0.0
        %2813 = vmatprep.subr.mxu0 0.0
        %2814 = vmatpush1.xpose.msra.mxu0 0.0
        %2815 = vmatprep.subr.mxu0 0.0
        %2816 = vmatpush1.xpose.msra.mxu0 0.0
        %2817 = vmatprep.subr.mxu0 0.0
        %2818 = vmatpush1.xpose.msra.mxu0 0.0
        %2819 = vmatprep.subr.mxu0 0.0
        %2820 = vmatpush1.xpose.msra.mxu0 0.0
        %2821 = vmatprep.subr.mxu0 0.0
        %2822 = vmatpush1.xpose.msra.mxu0 0.0
        %2823 = vmatprep.subr.mxu0 0.0
        %2824 = vmatpush1.xpose.msra.mxu0 0.0
        %2825 = vmatprep.subr.mxu0 0.0
        %2826 = vmatpush1.xpose.msra.mxu0 0.0
        %2827 = vmatprep.subr.mxu0 0.0
        %2828 = vmatpush1.xpose.msra.mxu0 0.0
        %2829 = vmatprep.subr.mxu0 0.0
        %2830 = vmatpush1.xpose.msra.mxu0 0.0
        %2831 = vmatprep.subr.mxu0 0.0
        %2832 = vmatpush1.xpose.msra.mxu0 0.0
        %2833 = vmatprep.subr.mxu0 0.0
        %2834 = vmatpush1.xpose.msra.mxu0 0.0
        %2835 = vmatprep.subr.mxu0 0.0
        %2836 = vmatpush1.xpose.msra.mxu0 0.0
        %2837 = vmatprep.subr.mxu0 0.0
        %2838 = vmatpush1.xpose.msra.mxu0 0.0
        %2839 = vmatprep.mubr.f32.mxu0 0.0
        %2840 = vmatmul.mubr.f32.gmra.mrb[0].mxu0 %v2771
        %v2841 = vpop.f32.mrb[0].mxu0
        %v2842 = vadd.f32 0.0, %v2841
        %v2843 = vpop.f32.mrb[0].mxu0
        %2844 = vdwg.mxu0
        %2845 = vrot.lane.b32.xlu0 %v1611, 104
        %v2846 = vpop.permute.xlu0 %2845
        %2847 = vrot.lane.b32.xlu0 %v1692, 104
        %v2848 = vpop.permute.xlu0 %2847
        %v2849 = vsel %vm1776, %v2846, 0
        %v2851 = vsel %vm1776, %v2848, 0
        %2853 = vmatprep.subr.mxu0 0.0
        %2854 = vmatpush1.xpose.msra.mxu0 %v2851
        %2855 = vmatprep.subr.mxu0 0.0
        %2856 = vmatpush1.xpose.msra.mxu0 0.0
        %2857 = vmatprep.subr.mxu0 0.0
        %2858 = vmatpush1.xpose.msra.mxu0 0.0
        %2859 = vmatprep.subr.mxu0 0.0
        %2860 = vmatpush1.xpose.msra.mxu0 0.0
        %2861 = vmatprep.subr.mxu0 0.0
        %2862 = vmatpush1.xpose.msra.mxu0 0.0
        %2863 = vmatprep.subr.mxu0 0.0
        %2864 = vmatpush1.xpose.msra.mxu0 0.0
        %2865 = vmatprep.subr.mxu0 0.0
        %2866 = vmatpush1.xpose.msra.mxu0 0.0
        %2867 = vmatprep.subr.mxu0 0.0
        %2868 = vmatpush1.xpose.msra.mxu0 0.0
        %2869 = vmatprep.subr.mxu0 0.0
        %2870 = vmatpush1.xpose.msra.mxu0 0.0
        %2871 = vmatprep.subr.mxu0 0.0
        %2872 = vmatpush1.xpose.msra.mxu0 0.0
        %2873 = vmatprep.subr.mxu0 0.0
        %2874 = vmatpush1.xpose.msra.mxu0 0.0
        %2875 = vmatprep.subr.mxu0 0.0
        %2876 = vmatpush1.xpose.msra.mxu0 0.0
        %2877 = vmatprep.subr.mxu0 0.0
        %2878 = vmatpush1.xpose.msra.mxu0 0.0
        %2879 = vmatprep.subr.mxu0 0.0
        %2880 = vmatpush1.xpose.msra.mxu0 0.0
        %2881 = vmatprep.subr.mxu0 0.0
        %2882 = vmatpush1.xpose.msra.mxu0 0.0
        %2883 = vmatprep.subr.mxu0 0.0
        %2884 = vmatpush1.xpose.msra.mxu0 0.0
        %2885 = vmatprep.subr.mxu0 0.0
        %2886 = vmatpush1.xpose.msra.mxu0 0.0
        %2887 = vmatprep.subr.mxu0 0.0
        %2888 = vmatpush1.xpose.msra.mxu0 0.0
        %2889 = vmatprep.subr.mxu0 0.0
        %2890 = vmatpush1.xpose.msra.mxu0 0.0
        %2891 = vmatprep.subr.mxu0 0.0
        %2892 = vmatpush1.xpose.msra.mxu0 0.0
        %2893 = vmatprep.subr.mxu0 0.0
        %2894 = vmatpush1.xpose.msra.mxu0 0.0
        %2895 = vmatprep.subr.mxu0 0.0
        %2896 = vmatpush1.xpose.msra.mxu0 0.0
        %2897 = vmatprep.subr.mxu0 0.0
        %2898 = vmatpush1.xpose.msra.mxu0 0.0
        %2899 = vmatprep.subr.mxu0 0.0
        %2900 = vmatpush1.xpose.msra.mxu0 0.0
        %2901 = vmatprep.subr.mxu0 0.0
        %2902 = vmatpush1.xpose.msra.mxu0 0.0
        %2903 = vmatprep.subr.mxu0 0.0
        %2904 = vmatpush1.xpose.msra.mxu0 0.0
        %2905 = vmatprep.subr.mxu0 0.0
        %2906 = vmatpush1.xpose.msra.mxu0 0.0
        %2907 = vmatprep.subr.mxu0 0.0
        %2908 = vmatpush1.xpose.msra.mxu0 0.0
        %2909 = vmatprep.subr.mxu0 0.0
        %2910 = vmatpush1.xpose.msra.mxu0 0.0
        %2911 = vmatprep.subr.mxu0 0.0
        %2912 = vmatpush1.xpose.msra.mxu0 0.0
        %2913 = vmatprep.subr.mxu0 0.0
        %2914 = vmatpush1.xpose.msra.mxu0 0.0
        %2915 = vmatprep.subr.mxu0 0.0
        %2916 = vmatpush1.xpose.msra.mxu0 0.0
        %2917 = vmatprep.mubr.f32.mxu0 0.0
        %2918 = vmatmul.mubr.f32.gmra.mrb[0].mxu0 %v2849
        %v2919 = vpop.f32.mrb[0].mxu0
        %v2920 = vadd.f32 0.0, %v2919
        %v2921 = vpop.f32.mrb[0].mxu0
        %2922 = vdwg.mxu0
        %v2923 = vsel %vm1930, %v2842, -1e+09
        %v2924 = vsel %vm1930, %v2920, -1e+09
        %v2925 = vsel %vm1776, %v2923, -inf
        %2926 = vmax.xlane.f32.xlu0 %v2925
        %v2927 = vpop.xlane.xlu0 %2926
        %v2928 = vsel %vm1776, %v2924, -inf
        %2929 = vmax.xlane.f32.xlu0 %v2928
        %v2930 = vpop.xlane.xlu0 %2929
        %v2931 = vsub.f32 %v2923, %v2927
        %v2932 = vsub.f32 %v2924, %v2930
        %v2933 = vmul.f32 %v2931, 1.442695
        %v2934 = vpow.pop %v2933
        %v2935 = vmul.f32 %v2932, 1.442695
        %v2936 = vpow.pop %v2935
        %v2937 = vsel %vm1776, %v2934, 0.0
        %2938 = vadd.xlane.f32.xlu0 %v2937
        %v2939 = vpop.xlane.xlu0 %2938
        %v2940 = vsel %vm1776, %v2936, 0.0
        %2941 = vadd.xlane.f32.xlu0 %v2940
        %v2942 = vpop.xlane.xlu0 %2941
        %v2943 = vrcp.pop %v2939
        %v2944 = vrcp.pop %v2942
        %v2945 = vmul.f32 %v2934, %v2943
        %v2946 = vmul.f32 %v2936, %v2944
        %2947 = vrot.lane.b32.xlu0 %v1768, 104
        %v2948 = vpop.permute.xlu0 %2947
        %v2951 = vsel %vm1776, %v2945, 0
        %2953 = vmatprep.subr.mxu0 0.0
        %2954 = vmatpush1.msra.mxu0 %v2948
        %2955 = vmatprep.subr.mxu0 0.0
        %2956 = vmatpush1.msra.mxu0 0.0
        %2957 = vmatprep.subr.mxu0 0.0
        %2958 = vmatpush1.msra.mxu0 0.0
        %2959 = vmatprep.subr.mxu0 0.0
        %2960 = vmatpush1.msra.mxu0 0.0
        %2961 = vmatprep.subr.mxu0 0.0
        %2962 = vmatpush1.msra.mxu0 0.0
        %2963 = vmatprep.subr.mxu0 0.0
        %2964 = vmatpush1.msra.mxu0 0.0
        %2965 = vmatprep.subr.mxu0 0.0
        %2966 = vmatpush1.msra.mxu0 0.0
        %2967 = vmatprep.subr.mxu0 0.0
        %2968 = vmatpush1.msra.mxu0 0.0
        %2969 = vmatprep.subr.mxu0 0.0
        %2970 = vmatpush1.msra.mxu0 0.0
        %2971 = vmatprep.subr.mxu0 0.0
        %2972 = vmatpush1.msra.mxu0 0.0
        %2973 = vmatprep.subr.mxu0 0.0
        %2974 = vmatpush1.msra.mxu0 0.0
        %2975 = vmatprep.subr.mxu0 0.0
        %2976 = vmatpush1.msra.mxu0 0.0
        %2977 = vmatprep.subr.mxu0 0.0
        %2978 = vmatpush1.msra.mxu0 0.0
        %2979 = vmatprep.subr.mxu0 0.0
        %2980 = vmatpush1.msra.mxu0 0.0
        %2981 = vmatprep.subr.mxu0 0.0
        %2982 = vmatpush1.msra.mxu0 0.0
        %2983 = vmatprep.subr.mxu0 0.0
        %2984 = vmatpush1.msra.mxu0 0.0
        %2985 = vmatprep.subr.mxu0 0.0
        %2986 = vmatpush1.msra.mxu0 0.0
        %2987 = vmatprep.subr.mxu0 0.0
        %2988 = vmatpush1.msra.mxu0 0.0
        %2989 = vmatprep.subr.mxu0 0.0
        %2990 = vmatpush1.msra.mxu0 0.0
        %2991 = vmatprep.subr.mxu0 0.0
        %2992 = vmatpush1.msra.mxu0 0.0
        %2993 = vmatprep.subr.mxu0 0.0
        %2994 = vmatpush1.msra.mxu0 0.0
        %2995 = vmatprep.subr.mxu0 0.0
        %2996 = vmatpush1.msra.mxu0 0.0
        %2997 = vmatprep.subr.mxu0 0.0
        %2998 = vmatpush1.msra.mxu0 0.0
        %2999 = vmatprep.subr.mxu0 0.0
        %3000 = vmatpush1.msra.mxu0 0.0
        %3001 = vmatprep.subr.mxu0 0.0
        %3002 = vmatpush1.msra.mxu0 0.0
        %3003 = vmatprep.subr.mxu0 0.0
        %3004 = vmatpush1.msra.mxu0 0.0
        %3005 = vmatprep.subr.mxu0 0.0
        %3006 = vmatpush1.msra.mxu0 0.0
        %3007 = vmatprep.subr.mxu0 0.0
        %3008 = vmatpush1.msra.mxu0 0.0
        %3009 = vmatprep.subr.mxu0 0.0
        %3010 = vmatpush1.msra.mxu0 0.0
        %3011 = vmatprep.subr.mxu0 0.0
        %3012 = vmatpush1.msra.mxu0 0.0
        %3013 = vmatprep.subr.mxu0 0.0
        %3014 = vmatpush1.msra.mxu0 0.0
        %3015 = vmatprep.subr.mxu0 0.0
        %3016 = vmatpush1.msra.mxu0 0.0
        %3017 = vmatprep.mubr.f32.mxu0 0.0
        %3018 = vmatmul.mubr.f32.gmra.mrb[0].mxu0 %v2951
        %v3019 = vpop.f32.mrb[0].mxu0
        %v3020 = vadd.f32 0.0, %v3019
        %v3021 = vpop.f32.mrb[0].mxu0
        %3022 = vdwg.mxu0
        %3023 = vrot.lane.b32.xlu0 %v1773, 104
        %v3024 = vpop.permute.xlu0 %3023
        %v3027 = vsel %vm1776, %v2946, 0
        %3029 = vmatprep.subr.mxu0 0.0
        %3030 = vmatpush1.msra.mxu0 %v3024
        %3031 = vmatprep.subr.mxu0 0.0
        %3032 = vmatpush1.msra.mxu0 0.0
        %3033 = vmatprep.subr.mxu0 0.0
        %3034 = vmatpush1.msra.mxu0 0.0
        %3035 = vmatprep.subr.mxu0 0.0
        %3036 = vmatpush1.msra.mxu0 0.0
        %3037 = vmatprep.subr.mxu0 0.0
        %3038 = vmatpush1.msra.mxu0 0.0
        %3039 = vmatprep.subr.mxu0 0.0
        %3040 = vmatpush1.msra.mxu0 0.0
        %3041 = vmatprep.subr.mxu0 0.0
        %3042 = vmatpush1.msra.mxu0 0.0
        %3043 = vmatprep.subr.mxu0 0.0
        %3044 = vmatpush1.msra.mxu0 0.0
        %3045 = vmatprep.subr.mxu0 0.0
        %3046 = vmatpush1.msra.mxu0 0.0
        %3047 = vmatprep.subr.mxu0 0.0
        %3048 = vmatpush1.msra.mxu0 0.0
        %3049 = vmatprep.subr.mxu0 0.0
        %3050 = vmatpush1.msra.mxu0 0.0
        %3051 = vmatprep.subr.mxu0 0.0
        %3052 = vmatpush1.msra.mxu0 0.0
        %3053 = vmatprep.subr.mxu0 0.0
        %3054 = vmatpush1.msra.mxu0 0.0
        %3055 = vmatprep.subr.mxu0 0.0
        %3056 = vmatpush1.msra.mxu0 0.0
        %3057 = vmatprep.subr.mxu0 0.0
        %3058 = vmatpush1.msra.mxu0 0.0
        %3059 = vmatprep.subr.mxu0 0.0
        %3060 = vmatpush1.msra.mxu0 0.0
        %3061 = vmatprep.subr.mxu0 0.0
        %3062 = vmatpush1.msra.mxu0 0.0
        %3063 = vmatprep.subr.mxu0 0.0
        %3064 = vmatpush1.msra.mxu0 0.0
        %3065 = vmatprep.subr.mxu0 0.0
        %3066 = vmatpush1.msra.mxu0 0.0
        %3067 = vmatprep.subr.mxu0 0.0
        %3068 = vmatpush1.msra.mxu0 0.0
        %3069 = vmatprep.subr.mxu0 0.0
        %3070 = vmatpush1.msra.mxu0 0.0
        %3071 = vmatprep.subr.mxu0 0.0
        %3072 = vmatpush1.msra.mxu0 0.0
        %3073 = vmatprep.subr.mxu0 0.0
        %3074 = vmatpush1.msra.mxu0 0.0
        %3075 = vmatprep.subr.mxu0 0.0
        %3076 = vmatpush1.msra.mxu0 0.0
        %3077 = vmatprep.subr.mxu0 0.0
        %3078 = vmatpush1.msra.mxu0 0.0
        %3079 = vmatprep.subr.mxu0 0.0
        %3080 = vmatpush1.msra.mxu0 0.0
        %3081 = vmatprep.subr.mxu0 0.0
        %3082 = vmatpush1.msra.mxu0 0.0
        %3083 = vmatprep.subr.mxu0 0.0
        %3084 = vmatpush1.msra.mxu0 0.0
        %3085 = vmatprep.subr.mxu0 0.0
        %3086 = vmatpush1.msra.mxu0 0.0
        %3087 = vmatprep.subr.mxu0 0.0
        %3088 = vmatpush1.msra.mxu0 0.0
        %3089 = vmatprep.subr.mxu0 0.0
        %3090 = vmatpush1.msra.mxu0 0.0
        %3091 = vmatprep.subr.mxu0 0.0
        %3092 = vmatpush1.msra.mxu0 0.0
        %3093 = vmatprep.mubr.f32.mxu0 0.0
        %3094 = vmatmul.mubr.f32.gmra.mrb[0].mxu0 %v3027
        %v3095 = vpop.f32.mrb[0].mxu0
        %v3096 = vadd.f32 0.0, %v3095
        %v3097 = vpop.f32.mrb[0].mxu0
        %3098 = vdwg.mxu0
        %3101 = vrot.lane.b32.xlu0 %v2355, 8
        %v3102 = vpop.permute.xlu0 %3101
        %3103 = vrot.lane.b32.xlu0 %v2432, 8
        %v3104 = vpop.permute.xlu0 %3103
        %3109 = vrot.lane.b32.xlu0 %v2688, 16
        %v3110 = vpop.permute.xlu0 %3109
        %3111 = vrot.lane.b32.xlu0 %v2764, 16
        %v3112 = vpop.permute.xlu0 %3111
        %3117 = vrot.lane.b32.xlu0 %v3020, 24
        %v3118 = vpop.permute.xlu0 %3117
        %3119 = vrot.lane.b32.xlu0 %v3096, 24
        %v3120 = vpop.permute.xlu0 %3119
        %v3123 = vsel %vm1776, %v2025, %v3102
        %v3124 = vsel %vm1776, %v2098, %v3104
        %vm3125 = vcmask 130048
        %v3126 = vsel %vm3125, %v3123, %v3110
        %v3127 = vsel %vm3125, %v3124, %v3112
        %vm3128 = vcmask 195584
        %v3129 = vsel %vm3128, %v3126, %v3118
        %v3130 = vsel %vm3128, %v3127, %v3120
        %v3132 = vlaneseq
        %v3133 = vshrl.u32 %v3132, 7
        %v3134 = vsub.s32 0, %v3133
        %v3135 = vrot.slane %v1525, %v3134
        %v3138 = vsel %vm1532, %v3129, 0
        %v3141 = vsel %vm1532, %v3130, 0
        %3143 = vmatprep.subr.mxu0 0.0
        %3144 = vmatpush1.msra.mxu0 %v1521
        %3145 = vmatprep.subr.mxu0 0.0
        %3146 = vmatpush1.msra.mxu0 %v1522
        %3147 = vmatprep.subr.mxu0 0.0
        %3148 = vmatpush1.msra.mxu0 %v1523
        %3149 = vmatprep.subr.mxu0 0.0
        %3150 = vmatpush1.msra.mxu0 %v1524
        %3151 = vmatprep.subr.mxu0 0.0
        %3152 = vmatpush1.msra.mxu0 0.0
        %3153 = vmatprep.subr.mxu0 0.0
        %3154 = vmatpush1.msra.mxu0 0.0
        %3155 = vmatprep.subr.mxu0 0.0
        %3156 = vmatpush1.msra.mxu0 0.0
        %3157 = vmatprep.subr.mxu0 0.0
        %3158 = vmatpush1.msra.mxu0 0.0
        %3159 = vmatprep.subr.mxu0 0.0
        %3160 = vmatpush1.msra.mxu0 0.0
        %3161 = vmatprep.subr.mxu0 0.0
        %3162 = vmatpush1.msra.mxu0 0.0
        %3163 = vmatprep.subr.mxu0 0.0
        %3164 = vmatpush1.msra.mxu0 0.0
        %3165 = vmatprep.subr.mxu0 0.0
        %3166 = vmatpush1.msra.mxu0 0.0
        %3167 = vmatprep.subr.mxu0 0.0
        %3168 = vmatpush1.msra.mxu0 0.0
        %3169 = vmatprep.subr.mxu0 0.0
        %3170 = vmatpush1.msra.mxu0 0.0
        %3171 = vmatprep.subr.mxu0 0.0
        %3172 = vmatpush1.msra.mxu0 0.0
        %3173 = vmatprep.subr.mxu0 0.0
        %3174 = vmatpush1.msra.mxu0 0.0
        %3175 = vmatprep.subr.mxu0 0.0
        %3176 = vmatpush1.msra.mxu0 0.0
        %3177 = vmatprep.subr.mxu0 0.0
        %3178 = vmatpush1.msra.mxu0 0.0
        %3179 = vmatprep.subr.mxu0 0.0
        %3180 = vmatpush1.msra.mxu0 0.0
        %3181 = vmatprep.subr.mxu0 0.0
        %3182 = vmatpush1.msra.mxu0 0.0
        %3183 = vmatprep.subr.mxu0 0.0
        %3184 = vmatpush1.msra.mxu0 0.0
        %3185 = vmatprep.subr.mxu0 0.0
        %3186 = vmatpush1.msra.mxu0 0.0
        %3187 = vmatprep.subr.mxu0 0.0
        %3188 = vmatpush1.msra.mxu0 0.0
        %3189 = vmatprep.subr.mxu0 0.0
        %3190 = vmatpush1.msra.mxu0 0.0
        %3191 = vmatprep.subr.mxu0 0.0
        %3192 = vmatpush1.msra.mxu0 0.0
        %3193 = vmatprep.subr.mxu0 0.0
        %3194 = vmatpush1.msra.mxu0 0.0
        %3195 = vmatprep.subr.mxu0 0.0
        %3196 = vmatpush1.msra.mxu0 0.0
        %3197 = vmatprep.subr.mxu0 0.0
        %3198 = vmatpush1.msra.mxu0 0.0
        %3199 = vmatprep.subr.mxu0 0.0
        %3200 = vmatpush1.msra.mxu0 0.0
        %3201 = vmatprep.subr.mxu0 0.0
        %3202 = vmatpush1.msra.mxu0 0.0
        %3203 = vmatprep.subr.mxu0 0.0
        %3204 = vmatpush1.msra.mxu0 0.0
        %3205 = vmatprep.subr.mxu0 0.0
        %3206 = vmatpush1.msra.mxu0 0.0
        %3207 = vmatprep.mubr.f32.mxu0 0.0
        %3208 = vmatmul.mubr.f32.gmra.mrb[0].mxu0 %v3138
        %v3209 = vpop.f32.mrb[0].mxu0
        %v3210 = vadd.f32 %v3135, %v3209
        %v3211 = vpop.f32.mrb[0].mxu0
        %3212 = vmatprep.mubr.f32.mxu0 0.0
        %3213 = vmatmul.mubr.f32.gmra.mrb[0].mxu0 %v3141
        %v3214 = vpop.f32.mrb[0].mxu0
        %v3215 = vadd.f32 %v3135, %v3214
        %v3216 = vpop.f32.mrb[0].mxu0
        %3217 = vdwg.mxu0
        %v3218 = vadd.f32 %v1489, %v3210
        %v3219 = vadd.f32 %v1490, %v3215
        %v3220 = vld [vmem:[%s1235] sm:$0x1]
        %v3221 = vld [vmem:[%s1243] sm:$0x1]
        %v3222 = vsel %vm1532, %v3218, 0.0
        %3223 = vadd.xlane.f32.xlu0 %v3222
        %v3224 = vpop.xlane.xlu0 %3223
        %v3225 = vsel %vm1532, %v3219, 0.0
        %3226 = vadd.xlane.f32.xlu0 %v3225
        %v3227 = vpop.xlane.xlu0 %3226
        %v3228 = vrcp.pop 32.0
        %v3229 = vmul.f32 %v3224, %v3228
        %v3230 = vmul.f32 %v3227, %v3228
        %v3231 = vsub.f32 %v3218, %v3229
        %v3232 = vsub.f32 %v3219, %v3230
        %v3233 = vmul.f32 %v3231, %v3231
        %v3234 = vmul.f32 %v3232, %v3232
        %v3235 = vsel %vm1532, %v3233, 0.0
        %3236 = vadd.xlane.f32.xlu0 %v3235
        %v3237 = vpop.xlane.xlu0 %3236
        %v3238 = vsel %vm1532, %v3234, 0.0
        %3239 = vadd.xlane.f32.xlu0 %v3238
        %v3240 = vpop.xlane.xlu0 %3239
        %v3241 = vmul.f32 %v3237, 0.032258064
        %v3242 = vmul.f32 %v3240, 0.032258064
        %v3243 = vrsqrt.pop %v3241
        %v3244 = vmul.f32 %v3241, %v3243
        %vm3245 = vcmp.eq.f32.partialorder %v3241, inf
        %v3246 = vsel %vm3245, %v3241, %v3244
        %vm3247 = vcmp.eq.f32.partialorder %v3241, 0.0
        %v3248 = vand.u32 %v3241, 2147483648
        %v3249 = vsel %vm3247, %v3248, %v3246
        %v3250 = vrsqrt.pop %v3242
        %v3251 = vmul.f32 %v3242, %v3250
        %vm3252 = vcmp.eq.f32.partialorder %v3242, inf
        %v3253 = vsel %vm3252, %v3242, %v3251
        %vm3254 = vcmp.eq.f32.partialorder %v3242, 0.0
        %v3255 = vand.u32 %v3242, 2147483648
        %v3256 = vsel %vm3254, %v3255, %v3253
        %v3257 = vadd.f32 %v3249, 1e-06
        %v3258 = vadd.f32 %v3256, 1e-06
        %v3259 = vrcp.pop %v3257
        %v3260 = vrcp.pop %v3258
        %v3262 = vlaneseq
        %v3263 = vshrl.u32 %v3262, 7
        %v3264 = vsub.s32 0, %v3263
        %v3265 = vrot.slane %v3220, %v3264
        %v3267 = vmul.f32 %v3265, %v3231
        %v3268 = vmul.f32 %v3265, %v3232
        %v3269 = vmul.f32 %v3267, %v3259
        %v3270 = vmul.f32 %v3268, %v3260
        %v3272 = vlaneseq
        %v3273 = vshrl.u32 %v3272, 7
        %v3274 = vsub.s32 0, %v3273
        %v3275 = vrot.slane %v3221, %v3274
        %v3277 = vadd.f32 %v3269, %v3275
        %v3278 = vadd.f32 %v3270, %v3275
        %v3279 = vld [vmem:[%s1462] sm:$0xff]
        %v3280 = vld [vmem:[%s1462 + $0x8] sm:$0xff]
        %v3281 = vld [vmem:[%s1462 + $0x10] sm:$0xff]
        %v3282 = vld [vmem:[%s1462 + $0x18] sm:$0xff]
        %v3283 = vld [vmem:[%s1176] sm:$0x1]
        %v3284 = vld [vmem:[%s1185] sm:$0xff]
        %v3285 = vld [vmem:[%s1185 + $0x8] sm:$0xff]
        %v3286 = vld [vmem:[%s1185 + $0x10] sm:$0xff]
        %v3287 = vld [vmem:[%s1185 + $0x18] sm:$0xff]
        %v3288 = vld [vmem:[%s1193] sm:$0x1]
        %v3289 = vld [vmem:[%s1202] sm:$0xff]
        %v3290 = vld [vmem:[%s1202 + $0x8] sm:$0xff]
        %v3291 = vld [vmem:[%s1202 + $0x10] sm:$0xff]
        %v3292 = vld [vmem:[%s1202 + $0x18] sm:$0xff]
        %v3293 = vld [vmem:[%s1210] sm:$0x1]
        %v3294 = vld [vmem:[%s1219] sm:$0xff]
        %v3295 = vld [vmem:[%s1219 + $0x8] sm:$0xff]
        %v3296 = vld [vmem:[%s1219 + $0x10] sm:$0xff]
        %v3297 = vld [vmem:[%s1219 + $0x18] sm:$0xff]
        %v3298 = vld [vmem:[%s1227] sm:$0x1]
        %v3300 = vlaneseq
        %v3301 = vshrl.u32 %v3300, 7
        %v3302 = vsub.s32 0, %v3301
        %v3303 = vrot.slane %v3283, %v3302
        %v3306 = vsel %vm1532, %v3277, 0
        %v3309 = vsel %vm1532, %v3278, 0
        %3311 = vmatprep.subr.mxu0 0.0
        %3312 = vmatpush1.msra.mxu0 %v3279
        %3313 = vmatprep.subr.mxu0 0.0
        %3314 = vmatpush1.msra.mxu0 %v3280
        %3315 = vmatprep.subr.mxu0 0.0
        %3316 = vmatpush1.msra.mxu0 %v3281
        %3317 = vmatprep.subr.mxu0 0.0
        %3318 = vmatpush1.msra.mxu0 %v3282
        %3319 = vmatprep.subr.mxu0 0.0
        %3320 = vmatpush1.msra.mxu0 0.0
        %3321 = vmatprep.subr.mxu0 0.0
        %3322 = vmatpush1.msra.mxu0 0.0
        %3323 = vmatprep.subr.mxu0 0.0
        %3324 = vmatpush1.msra.mxu0 0.0
        %3325 = vmatprep.subr.mxu0 0.0
        %3326 = vmatpush1.msra.mxu0 0.0
        %3327 = vmatprep.subr.mxu0 0.0
        %3328 = vmatpush1.msra.mxu0 0.0
        %3329 = vmatprep.subr.mxu0 0.0
        %3330 = vmatpush1.msra.mxu0 0.0
        %3331 = vmatprep.subr.mxu0 0.0
        %3332 = vmatpush1.msra.mxu0 0.0
        %3333 = vmatprep.subr.mxu0 0.0
        %3334 = vmatpush1.msra.mxu0 0.0
        %3335 = vmatprep.subr.mxu0 0.0
        %3336 = vmatpush1.msra.mxu0 0.0
        %3337 = vmatprep.subr.mxu0 0.0
        %3338 = vmatpush1.msra.mxu0 0.0
        %3339 = vmatprep.subr.mxu0 0.0
        %3340 = vmatpush1.msra.mxu0 0.0
        %3341 = vmatprep.subr.mxu0 0.0
        %3342 = vmatpush1.msra.mxu0 0.0
        %3343 = vmatprep.subr.mxu0 0.0
        %3344 = vmatpush1.msra.mxu0 0.0
        %3345 = vmatprep.subr.mxu0 0.0
        %3346 = vmatpush1.msra.mxu0 0.0
        %3347 = vmatprep.subr.mxu0 0.0
        %3348 = vmatpush1.msra.mxu0 0.0
        %3349 = vmatprep.subr.mxu0 0.0
        %3350 = vmatpush1.msra.mxu0 0.0
        %3351 = vmatprep.subr.mxu0 0.0
        %3352 = vmatpush1.msra.mxu0 0.0
        %3353 = vmatprep.subr.mxu0 0.0
        %3354 = vmatpush1.msra.mxu0 0.0
        %3355 = vmatprep.subr.mxu0 0.0
        %3356 = vmatpush1.msra.mxu0 0.0
        %3357 = vmatprep.subr.mxu0 0.0
        %3358 = vmatpush1.msra.mxu0 0.0
        %3359 = vmatprep.subr.mxu0 0.0
        %3360 = vmatpush1.msra.mxu0 0.0
        %3361 = vmatprep.subr.mxu0 0.0
        %3362 = vmatpush1.msra.mxu0 0.0
        %3363 = vmatprep.subr.mxu0 0.0
        %3364 = vmatpush1.msra.mxu0 0.0
        %3365 = vmatprep.subr.mxu0 0.0
        %3366 = vmatpush1.msra.mxu0 0.0
        %3367 = vmatprep.subr.mxu0 0.0
        %3368 = vmatpush1.msra.mxu0 0.0
        %3369 = vmatprep.subr.mxu0 0.0
        %3370 = vmatpush1.msra.mxu0 0.0
        %3371 = vmatprep.subr.mxu0 0.0
        %3372 = vmatpush1.msra.mxu0 0.0
        %3373 = vmatprep.subr.mxu0 0.0
        %3374 = vmatpush1.msra.mxu0 0.0
        %3375 = vmatprep.mubr.f32.mxu0 0.0
        %3376 = vmatmul.mubr.f32.gmra.mrb[0].mxu0 %v3306
        %v3377 = vpop.f32.mrb[0].mxu0
        %v3378 = vadd.f32 %v3303, %v3377
        %v3379 = vpop.f32.mrb[0].mxu0
        %3380 = vmatprep.mubr.f32.mxu0 0.0
        %3381 = vmatmul.mubr.f32.gmra.mrb[0].mxu0 %v3309
        %v3382 = vpop.f32.mrb[0].mxu0
        %v3383 = vadd.f32 %v3303, %v3382
        %v3384 = vpop.f32.mrb[0].mxu0
        %3385 = vdwg.mxu0
        %v3387 = vlaneseq
        %v3388 = vshrl.u32 %v3387, 7
        %v3389 = vsub.s32 0, %v3388
        %v3390 = vrot.slane %v3288, %v3389
        %v3392 = vcombine.low %v1491, %v1499
        %v3393 = vcombine.low %v1492, %v1493
        %v3394 = vcombine.low %v1500, %v1494
        %v3395 = vsel %vm1532, %v3392, 0
        %v3397 = vsel %vm1532, %v3393, 0
        %v3399 = vsel %vm1532, %v3394, 0
        %3401 = vmatprep.subr.mxu0 0.0
        %3402 = vmatpush1.msra.mxu0 %v3284
        %3403 = vmatprep.subr.mxu0 0.0
        %3404 = vmatpush1.msra.mxu0 %v3285
        %3405 = vmatprep.subr.mxu0 0.0
        %3406 = vmatpush1.msra.mxu0 %v3286
        %3407 = vmatprep.subr.mxu0 0.0
        %3408 = vmatpush1.msra.mxu0 %v3287
        %3409 = vmatprep.subr.mxu0 0.0
        %3410 = vmatpush1.msra.mxu0 0.0
        %3411 = vmatprep.subr.mxu0 0.0
        %3412 = vmatpush1.msra.mxu0 0.0
        %3413 = vmatprep.subr.mxu0 0.0
        %3414 = vmatpush1.msra.mxu0 0.0
        %3415 = vmatprep.subr.mxu0 0.0
        %3416 = vmatpush1.msra.mxu0 0.0
        %3417 = vmatprep.subr.mxu0 0.0
        %3418 = vmatpush1.msra.mxu0 0.0
        %3419 = vmatprep.subr.mxu0 0.0
        %3420 = vmatpush1.msra.mxu0 0.0
        %3421 = vmatprep.subr.mxu0 0.0
        %3422 = vmatpush1.msra.mxu0 0.0
        %3423 = vmatprep.subr.mxu0 0.0
        %3424 = vmatpush1.msra.mxu0 0.0
        %3425 = vmatprep.subr.mxu0 0.0
        %3426 = vmatpush1.msra.mxu0 0.0
        %3427 = vmatprep.subr.mxu0 0.0
        %3428 = vmatpush1.msra.mxu0 0.0
        %3429 = vmatprep.subr.mxu0 0.0
        %3430 = vmatpush1.msra.mxu0 0.0
        %3431 = vmatprep.subr.mxu0 0.0
        %3432 = vmatpush1.msra.mxu0 0.0
        %3433 = vmatprep.subr.mxu0 0.0
        %3434 = vmatpush1.msra.mxu0 0.0
        %3435 = vmatprep.subr.mxu0 0.0
        %3436 = vmatpush1.msra.mxu0 0.0
        %3437 = vmatprep.subr.mxu0 0.0
        %3438 = vmatpush1.msra.mxu0 0.0
        %3439 = vmatprep.subr.mxu0 0.0
        %3440 = vmatpush1.msra.mxu0 0.0
        %3441 = vmatprep.subr.mxu0 0.0
        %3442 = vmatpush1.msra.mxu0 0.0
        %3443 = vmatprep.subr.mxu0 0.0
        %3444 = vmatpush1.msra.mxu0 0.0
        %3445 = vmatprep.subr.mxu0 0.0
        %3446 = vmatpush1.msra.mxu0 0.0
        %3447 = vmatprep.subr.mxu0 0.0
        %3448 = vmatpush1.msra.mxu0 0.0
        %3449 = vmatprep.subr.mxu0 0.0
        %3450 = vmatpush1.msra.mxu0 0.0
        %3451 = vmatprep.subr.mxu0 0.0
        %3452 = vmatpush1.msra.mxu0 0.0
        %3453 = vmatprep.subr.mxu0 0.0
        %3454 = vmatpush1.msra.mxu0 0.0
        %3455 = vmatprep.subr.mxu0 0.0
        %3456 = vmatpush1.msra.mxu0 0.0
        %3457 = vmatprep.subr.mxu0 0.0
        %3458 = vmatpush1.msra.mxu0 0.0
        %3459 = vmatprep.subr.mxu0 0.0
        %3460 = vmatpush1.msra.mxu0 0.0
        %3461 = vmatprep.subr.mxu0 0.0
        %3462 = vmatpush1.msra.mxu0 0.0
        %3463 = vmatprep.subr.mxu0 0.0
        %3464 = vmatpush1.msra.mxu0 0.0
        %3465 = vmatprep.mubr.f32.mxu0 0.0
        %3466 = vmatmul.mubr.f32.gmra.mrb[0].mxu0 %v3395
        %v3467 = vpop.f32.mrb[0].mxu0
        %v3468 = vadd.f32 %v3390, %v3467
        %v3469 = vpop.f32.mrb[0].mxu0
        %3470 = vmatprep.mubr.f32.mxu0 0.0
        %3471 = vmatmul.mubr.f32.gmra.mrb[0].mxu0 %v3397
        %v3472 = vpop.f32.mrb[0].mxu0
        %v3473 = vadd.f32 %v3390, %v3472
        %v3474 = vpop.f32.mrb[0].mxu0
        %3475 = vmatprep.mubr.f32.mxu0 0.0
        %3476 = vmatmul.mubr.f32.gmra.mrb[0].mxu0 %v3399
        %v3477 = vpop.f32.mrb[0].mxu0
        %v3478 = vadd.f32 %v3390, %v3477
        %v3479 = vpop.f32.mrb[0].mxu0
        %3480 = vdwg.mxu0
        %v3482 = vlaneseq
        %v3483 = vshrl.u32 %v3482, 7
        %v3484 = vsub.s32 0, %v3483
        %v3485 = vrot.slane %v3293, %v3484
        %3487 = vmatprep.subr.mxu0 0.0
        %3488 = vmatpush1.msra.mxu0 %v3289
        %3489 = vmatprep.subr.mxu0 0.0
        %3490 = vmatpush1.msra.mxu0 %v3290
        %3491 = vmatprep.subr.mxu0 0.0
        %3492 = vmatpush1.msra.mxu0 %v3291
        %3493 = vmatprep.subr.mxu0 0.0
        %3494 = vmatpush1.msra.mxu0 %v3292
        %3495 = vmatprep.subr.mxu0 0.0
        %3496 = vmatpush1.msra.mxu0 0.0
        %3497 = vmatprep.subr.mxu0 0.0
        %3498 = vmatpush1.msra.mxu0 0.0
        %3499 = vmatprep.subr.mxu0 0.0
        %3500 = vmatpush1.msra.mxu0 0.0
        %3501 = vmatprep.subr.mxu0 0.0
        %3502 = vmatpush1.msra.mxu0 0.0
        %3503 = vmatprep.subr.mxu0 0.0
        %3504 = vmatpush1.msra.mxu0 0.0
        %3505 = vmatprep.subr.mxu0 0.0
        %3506 = vmatpush1.msra.mxu0 0.0
        %3507 = vmatprep.subr.mxu0 0.0
        %3508 = vmatpush1.msra.mxu0 0.0
        %3509 = vmatprep.subr.mxu0 0.0
        %3510 = vmatpush1.msra.mxu0 0.0
        %3511 = vmatprep.subr.mxu0 0.0
        %3512 = vmatpush1.msra.mxu0 0.0
        %3513 = vmatprep.subr.mxu0 0.0
        %3514 = vmatpush1.msra.mxu0 0.0
        %3515 = vmatprep.subr.mxu0 0.0
        %3516 = vmatpush1.msra.mxu0 0.0
        %3517 = vmatprep.subr.mxu0 0.0
        %3518 = vmatpush1.msra.mxu0 0.0
        %3519 = vmatprep.subr.mxu0 0.0
        %3520 = vmatpush1.msra.mxu0 0.0
        %3521 = vmatprep.subr.mxu0 0.0
        %3522 = vmatpush1.msra.mxu0 0.0
        %3523 = vmatprep.subr.mxu0 0.0
        %3524 = vmatpush1.msra.mxu0 0.0
        %3525 = vmatprep.subr.mxu0 0.0
        %3526 = vmatpush1.msra.mxu0 0.0
        %3527 = vmatprep.subr.mxu0 0.0
        %3528 = vmatpush1.msra.mxu0 0.0
        %3529 = vmatprep.subr.mxu0 0.0
        %3530 = vmatpush1.msra.mxu0 0.0
        %3531 = vmatprep.subr.mxu0 0.0
        %3532 = vmatpush1.msra.mxu0 0.0
        %3533 = vmatprep.subr.mxu0 0.0
        %3534 = vmatpush1.msra.mxu0 0.0
        %3535 = vmatprep.subr.mxu0 0.0
        %3536 = vmatpush1.msra.mxu0 0.0
        %3537 = vmatprep.subr.mxu0 0.0
        %3538 = vmatpush1.msra.mxu0 0.0
        %3539 = vmatprep.subr.mxu0 0.0
        %3540 = vmatpush1.msra.mxu0 0.0
        %3541 = vmatprep.subr.mxu0 0.0
        %3542 = vmatpush1.msra.mxu0 0.0
        %3543 = vmatprep.subr.mxu0 0.0
        %3544 = vmatpush1.msra.mxu0 0.0
        %3545 = vmatprep.subr.mxu0 0.0
        %3546 = vmatpush1.msra.mxu0 0.0
        %3547 = vmatprep.subr.mxu0 0.0
        %3548 = vmatpush1.msra.mxu0 0.0
        %3549 = vmatprep.subr.mxu0 0.0
        %3550 = vmatpush1.msra.mxu0 0.0
        %3551 = vmatprep.mubr.f32.mxu0 0.0
        %3552 = vmatmul.mubr.f32.gmra.mrb[0].mxu0 %v3395
        %v3553 = vpop.f32.mrb[0].mxu0
        %v3554 = vadd.f32 %v3485, %v3553
        %v3555 = vpop.f32.mrb[0].mxu0
        %3556 = vmatprep.mubr.f32.mxu0 0.0
        %3557 = vmatmul.mubr.f32.gmra.mrb[0].mxu0 %v3397
        %v3558 = vpop.f32.mrb[0].mxu0
        %v3559 = vadd.f32 %v3485, %v3558
        %v3560 = vpop.f32.mrb[0].mxu0
        %3561 = vmatprep.mubr.f32.mxu0 0.0
        %3562 = vmatmul.mubr.f32.gmra.mrb[0].mxu0 %v3399
        %v3563 = vpop.f32.mrb[0].mxu0
        %v3564 = vadd.f32 %v3485, %v3563
        %v3565 = vpop.f32.mrb[0].mxu0
        %3566 = vdwg.mxu0
        %v3570 = vcombine.high %v3468, %v3468
        %v3571 = vcombine.high %v3473, %v3473
        %v3572 = vcombine.high %v3478, %v3478
        %v3576 = vcombine.high %v3554, %v3554
        %v3577 = vcombine.high %v3559, %v3559
        %v3578 = vcombine.high %v3564, %v3564
        %v3579 = vcombine.low %v3468, %v3570
        %v3581 = vsel %vm1776, %v3378, 0
        %v3583 = vsel %vm1776, %v3579, 0
        %v3585 = vsel %vm1776, %v3473, 0
        %3587 = vmatprep.subr.mxu0 0.0
        %3588 = vmatpush1.xpose.msra.mxu0 %v3583
        %3589 = vmatprep.subr.mxu0 0.0
        %3590 = vmatpush1.xpose.msra.mxu0 %v3585
        %3591 = vmatprep.subr.mxu0 0.0
        %3592 = vmatpush1.xpose.msra.mxu0 0.0
        %3593 = vmatprep.subr.mxu0 0.0
        %3594 = vmatpush1.xpose.msra.mxu0 0.0
        %3595 = vmatprep.subr.mxu0 0.0
        %3596 = vmatpush1.xpose.msra.mxu0 0.0
        %3597 = vmatprep.subr.mxu0 0.0
        %3598 = vmatpush1.xpose.msra.mxu0 0.0
        %3599 = vmatprep.subr.mxu0 0.0
        %3600 = vmatpush1.xpose.msra.mxu0 0.0
        %3601 = vmatprep.subr.mxu0 0.0
        %3602 = vmatpush1.xpose.msra.mxu0 0.0
        %3603 = vmatprep.subr.mxu0 0.0
        %3604 = vmatpush1.xpose.msra.mxu0 0.0
        %3605 = vmatprep.subr.mxu0 0.0
        %3606 = vmatpush1.xpose.msra.mxu0 0.0
        %3607 = vmatprep.subr.mxu0 0.0
        %3608 = vmatpush1.xpose.msra.mxu0 0.0
        %3609 = vmatprep.subr.mxu0 0.0
        %3610 = vmatpush1.xpose.msra.mxu0 0.0
        %3611 = vmatprep.subr.mxu0 0.0
        %3612 = vmatpush1.xpose.msra.mxu0 0.0
        %3613 = vmatprep.subr.mxu0 0.0
        %3614 = vmatpush1.xpose.msra.mxu0 0.0
        %3615 = vmatprep.subr.mxu0 0.0
        %3616 = vmatpush1.xpose.msra.mxu0 0.0
        %3617 = vmatprep.subr.mxu0 0.0
        %3618 = vmatpush1.xpose.msra.mxu0 0.0
        %3619 = vmatprep.subr.mxu0 0.0
        %3620 = vmatpush1.xpose.msra.mxu0 0.0
        %3621 = vmatprep.subr.mxu0 0.0
        %3622 = vmatpush1.xpose.msra.mxu0 0.0
        %3623 = vmatprep.subr.mxu0 0.0
        %3624 = vmatpush1.xpose.msra.mxu0 0.0
        %3625 = vmatprep.subr.mxu0 0.0
        %3626 = vmatpush1.xpose.msra.mxu0 0.0
        %3627 = vmatprep.subr.mxu0 0.0
        %3628 = vmatpush1.xpose.msra.mxu0 0.0
        %3629 = vmatprep.subr.mxu0 0.0
        %3630 = vmatpush1.xpose.msra.mxu0 0.0
        %3631 = vmatprep.subr.mxu0 0.0
        %3632 = vmatpush1.xpose.msra.mxu0 0.0
        %3633 = vmatprep.subr.mxu0 0.0
        %3634 = vmatpush1.xpose.msra.mxu0 0.0
        %3635 = vmatprep.subr.mxu0 0.0
        %3636 = vmatpush1.xpose.msra.mxu0 0.0
        %3637 = vmatprep.subr.mxu0 0.0
        %3638 = vmatpush1.xpose.msra.mxu0 0.0
        %3639 = vmatprep.subr.mxu0 0.0
        %3640 = vmatpush1.xpose.msra.mxu0 0.0
        %3641 = vmatprep.subr.mxu0 0.0
        %3642 = vmatpush1.xpose.msra.mxu0 0.0
        %3643 = vmatprep.subr.mxu0 0.0
        %3644 = vmatpush1.xpose.msra.mxu0 0.0
        %3645 = vmatprep.subr.mxu0 0.0
        %3646 = vmatpush1.xpose.msra.mxu0 0.0
        %3647 = vmatprep.subr.mxu0 0.0
        %3648 = vmatpush1.xpose.msra.mxu0 0.0
        %3649 = vmatprep.subr.mxu0 0.0
        %3650 = vmatpush1.xpose.msra.mxu0 0.0
        %3651 = vmatprep.mubr.f32.mxu0 0.0
        %3652 = vmatmul.mubr.f32.gmra.mrb[0].mxu0 %v3581
        %v3653 = vpop.f32.mrb[0].mxu0
        %v3654 = vadd.f32 0.0, %v3653
        %v3655 = vpop.f32.mrb[0].mxu0
        %3656 = vdwg.mxu0
        %v3657 = vcombine.low %v3571, %v3478
        %v3659 = vsel %vm1776, %v3383, 0
        %v3661 = vsel %vm1776, %v3657, 0
        %v3663 = vsel %vm1776, %v3572, 0
        %3665 = vmatprep.subr.mxu0 0.0
        %3666 = vmatpush1.xpose.msra.mxu0 %v3661
        %3667 = vmatprep.subr.mxu0 0.0
        %3668 = vmatpush1.xpose.msra.mxu0 %v3663
        %3669 = vmatprep.subr.mxu0 0.0
        %3670 = vmatpush1.xpose.msra.mxu0 0.0
        %3671 = vmatprep.subr.mxu0 0.0
        %3672 = vmatpush1.xpose.msra.mxu0 0.0
        %3673 = vmatprep.subr.mxu0 0.0
        %3674 = vmatpush1.xpose.msra.mxu0 0.0
        %3675 = vmatprep.subr.mxu0 0.0
        %3676 = vmatpush1.xpose.msra.mxu0 0.0
        %3677 = vmatprep.subr.mxu0 0.0
        %3678 = vmatpush1.xpose.msra.mxu0 0.0
        %3679 = vmatprep.subr.mxu0 0.0
        %3680 = vmatpush1.xpose.msra.mxu0 0.0
        %3681 = vmatprep.subr.mxu0 0.0
        %3682 = vmatpush1.xpose.msra.mxu0 0.0
        %3683 = vmatprep.subr.mxu0 0.0
        %3684 = vmatpush1.xpose.msra.mxu0 0.0
        %3685 = vmatprep.subr.mxu0 0.0
        %3686 = vmatpush1.xpose.msra.mxu0 0.0
        %3687 = vmatprep.subr.mxu0 0.0
        %3688 = vmatpush1.xpose.msra.mxu0 0.0
        %3689 = vmatprep.subr.mxu0 0.0
        %3690 = vmatpush1.xpose.msra.mxu0 0.0
        %3691 = vmatprep.subr.mxu0 0.0
        %3692 = vmatpush1.xpose.msra.mxu0 0.0
        %3693 = vmatprep.subr.mxu0 0.0
        %3694 = vmatpush1.xpose.msra.mxu0 0.0
        %3695 = vmatprep.subr.mxu0 0.0
        %3696 = vmatpush1.xpose.msra.mxu0 0.0
        %3697 = vmatprep.subr.mxu0 0.0
        %3698 = vmatpush1.xpose.msra.mxu0 0.0
        %3699 = vmatprep.subr.mxu0 0.0
        %3700 = vmatpush1.xpose.msra.mxu0 0.0
        %3701 = vmatprep.subr.mxu0 0.0
        %3702 = vmatpush1.xpose.msra.mxu0 0.0
        %3703 = vmatprep.subr.mxu0 0.0
        %3704 = vmatpush1.xpose.msra.mxu0 0.0
        %3705 = vmatprep.subr.mxu0 0.0
        %3706 = vmatpush1.xpose.msra.mxu0 0.0
        %3707 = vmatprep.subr.mxu0 0.0
        %3708 = vmatpush1.xpose.msra.mxu0 0.0
        %3709 = vmatprep.subr.mxu0 0.0
        %3710 = vmatpush1.xpose.msra.mxu0 0.0
        %3711 = vmatprep.subr.mxu0 0.0
        %3712 = vmatpush1.xpose.msra.mxu0 0.0
        %3713 = vmatprep.subr.mxu0 0.0
        %3714 = vmatpush1.xpose.msra.mxu0 0.0
        %3715 = vmatprep.subr.mxu0 0.0
        %3716 = vmatpush1.xpose.msra.mxu0 0.0
        %3717 = vmatprep.subr.mxu0 0.0
        %3718 = vmatpush1.xpose.msra.mxu0 0.0
        %3719 = vmatprep.subr.mxu0 0.0
        %3720 = vmatpush1.xpose.msra.mxu0 0.0
        %3721 = vmatprep.subr.mxu0 0.0
        %3722 = vmatpush1.xpose.msra.mxu0 0.0
        %3723 = vmatprep.subr.mxu0 0.0
        %3724 = vmatpush1.xpose.msra.mxu0 0.0
        %3725 = vmatprep.subr.mxu0 0.0
        %3726 = vmatpush1.xpose.msra.mxu0 0.0
        %3727 = vmatprep.subr.mxu0 0.0
        %3728 = vmatpush1.xpose.msra.mxu0 0.0
        %3729 = vmatprep.mubr.f32.mxu0 0.0
        %3730 = vmatmul.mubr.f32.gmra.mrb[0].mxu0 %v3659
        %v3731 = vpop.f32.mrb[0].mxu0
        %v3732 = vadd.f32 0.0, %v3731
        %v3733 = vpop.f32.mrb[0].mxu0
        %3734 = vdwg.mxu0
        %vm3735 = vcmask 97280
        %v3736 = vsel %vm3735, %v3654, -inf
        %3737 = vmax.xlane.f32.xlu0 %v3736
        %v3738 = vpop.xlane.xlu0 %3737
        %v3739 = vsel %vm3735, %v3732, -inf
        %3740 = vmax.xlane.f32.xlu0 %v3739
        %v3741 = vpop.xlane.xlu0 %3740
        %v3742 = vsub.f32 %v3654, %v3738
        %v3743 = vsub.f32 %v3732, %v3741
        %v3744 = vmul.f32 %v3742, 1.442695
        %v3745 = vpow.pop %v3744
        %v3746 = vmul.f32 %v3743, 1.442695
        %v3747 = vpow.pop %v3746
        %v3748 = vsel %vm3735, %v3745, 0.0
        %3749 = vadd.xlane.f32.xlu0 %v3748
        %v3750 = vpop.xlane.xlu0 %3749
        %v3751 = vsel %vm3735, %v3747, 0.0
        %3752 = vadd.xlane.f32.xlu0 %v3751
        %v3753 = vpop.xlane.xlu0 %3752
        %v3754 = vrcp.pop %v3750
        %v3755 = vrcp.pop %v3753
        %v3756 = vmul.f32 %v3745, %v3754
        %v3757 = vmul.f32 %v3747, %v3755
        %v3758 = vcombine.low %v3554, %v3576
        %v3761 = vsel %vm3735, %v3756, 0
        %vm3763 = vcmask 1043456
        %v3764 = vsel %vm3763, %v3559, 0
        %3766 = vmatprep.subr.mxu0 0.0
        %3767 = vmatpush1.msra.mxu0 %v3758
        %3768 = vmatprep.subr.mxu0 0.0
        %3769 = vmatpush1.msra.mxu0 %v3764
        %3770 = vmatprep.subr.mxu0 0.0
        %3771 = vmatpush1.msra.mxu0 0.0
        %3772 = vmatprep.subr.mxu0 0.0
        %3773 = vmatpush1.msra.mxu0 0.0
        %3774 = vmatprep.subr.mxu0 0.0
        %3775 = vmatpush1.msra.mxu0 0.0
        %3776 = vmatprep.subr.mxu0 0.0
        %3777 = vmatpush1.msra.mxu0 0.0
        %3778 = vmatprep.subr.mxu0 0.0
        %3779 = vmatpush1.msra.mxu0 0.0
        %3780 = vmatprep.subr.mxu0 0.0
        %3781 = vmatpush1.msra.mxu0 0.0
        %3782 = vmatprep.subr.mxu0 0.0
        %3783 = vmatpush1.msra.mxu0 0.0
        %3784 = vmatprep.subr.mxu0 0.0
        %3785 = vmatpush1.msra.mxu0 0.0
        %3786 = vmatprep.subr.mxu0 0.0
        %3787 = vmatpush1.msra.mxu0 0.0
        %3788 = vmatprep.subr.mxu0 0.0
        %3789 = vmatpush1.msra.mxu0 0.0
        %3790 = vmatprep.subr.mxu0 0.0
        %3791 = vmatpush1.msra.mxu0 0.0
        %3792 = vmatprep.subr.mxu0 0.0
        %3793 = vmatpush1.msra.mxu0 0.0
        %3794 = vmatprep.subr.mxu0 0.0
        %3795 = vmatpush1.msra.mxu0 0.0
        %3796 = vmatprep.subr.mxu0 0.0
        %3797 = vmatpush1.msra.mxu0 0.0
        %3798 = vmatprep.subr.mxu0 0.0
        %3799 = vmatpush1.msra.mxu0 0.0
        %3800 = vmatprep.subr.mxu0 0.0
        %3801 = vmatpush1.msra.mxu0 0.0
        %3802 = vmatprep.subr.mxu0 0.0
        %3803 = vmatpush1.msra.mxu0 0.0
        %3804 = vmatprep.subr.mxu0 0.0
        %3805 = vmatpush1.msra.mxu0 0.0
        %3806 = vmatprep.subr.mxu0 0.0
        %3807 = vmatpush1.msra.mxu0 0.0
        %3808 = vmatprep.subr.mxu0 0.0
        %3809 = vmatpush1.msra.mxu0 0.0
        %3810 = vmatprep.subr.mxu0 0.0
        %3811 = vmatpush1.msra.mxu0 0.0
        %3812 = vmatprep.subr.mxu0 0.0
        %3813 = vmatpush1.msra.mxu0 0.0
        %3814 = vmatprep.subr.mxu0 0.0
        %3815 = vmatpush1.msra.mxu0 0.0
        %3816 = vmatprep.subr.mxu0 0.0
        %3817 = vmatpush1.msra.mxu0 0.0
        %3818 = vmatprep.subr.mxu0 0.0
        %3819 = vmatpush1.msra.mxu0 0.0
        %3820 = vmatprep.subr.mxu0 0.0
        %3821 = vmatpush1.msra.mxu0 0.0
        %3822 = vmatprep.subr.mxu0 0.0
        %3823 = vmatpush1.msra.mxu0 0.0
        %3824 = vmatprep.subr.mxu0 0.0
        %3825 = vmatpush1.msra.mxu0 0.0
        %3826 = vmatprep.subr.mxu0 0.0
        %3827 = vmatpush1.msra.mxu0 0.0
        %3828 = vmatprep.subr.mxu0 0.0
        %3829 = vmatpush1.msra.mxu0 0.0
        %3830 = vmatprep.mubr.f32.mxu0 0.0
        %3831 = vmatmul.mubr.f32.gmra.mrb[0].mxu0 %v3761
        %v3832 = vpop.f32.mrb[0].mxu0
        %v3833 = vadd.f32 0.0, %v3832
        %v3834 = vpop.f32.mrb[0].mxu0
        %3835 = vdwg.mxu0
        %v3836 = vcombine.low %v3577, %v3564
        %v3839 = vsel %vm3735, %v3757, 0
        %v3841 = vsel %vm3763, %v3578, 0
        %3843 = vmatprep.subr.mxu0 0.0
        %3844 = vmatpush1.msra.mxu0 %v3836
        %3845 = vmatprep.subr.mxu0 0.0
        %3846 = vmatpush1.msra.mxu0 %v3841
        %3847 = vmatprep.subr.mxu0 0.0
        %3848 = vmatpush1.msra.mxu0 0.0
        %3849 = vmatprep.subr.mxu0 0.0
        %3850 = vmatpush1.msra.mxu0 0.0
        %3851 = vmatprep.subr.mxu0 0.0
        %3852 = vmatpush1.msra.mxu0 0.0
        %3853 = vmatprep.subr.mxu0 0.0
        %3854 = vmatpush1.msra.mxu0 0.0
        %3855 = vmatprep.subr.mxu0 0.0
        %3856 = vmatpush1.msra.mxu0 0.0
        %3857 = vmatprep.subr.mxu0 0.0
        %3858 = vmatpush1.msra.mxu0 0.0
        %3859 = vmatprep.subr.mxu0 0.0
        %3860 = vmatpush1.msra.mxu0 0.0
        %3861 = vmatprep.subr.mxu0 0.0
        %3862 = vmatpush1.msra.mxu0 0.0
        %3863 = vmatprep.subr.mxu0 0.0
        %3864 = vmatpush1.msra.mxu0 0.0
        %3865 = vmatprep.subr.mxu0 0.0
        %3866 = vmatpush1.msra.mxu0 0.0
        %3867 = vmatprep.subr.mxu0 0.0
        %3868 = vmatpush1.msra.mxu0 0.0
        %3869 = vmatprep.subr.mxu0 0.0
        %3870 = vmatpush1.msra.mxu0 0.0
        %3871 = vmatprep.subr.mxu0 0.0
        %3872 = vmatpush1.msra.mxu0 0.0
        %3873 = vmatprep.subr.mxu0 0.0
        %3874 = vmatpush1.msra.mxu0 0.0
        %3875 = vmatprep.subr.mxu0 0.0
        %3876 = vmatpush1.msra.mxu0 0.0
        %3877 = vmatprep.subr.mxu0 0.0
        %3878 = vmatpush1.msra.mxu0 0.0
        %3879 = vmatprep.subr.mxu0 0.0
        %3880 = vmatpush1.msra.mxu0 0.0
        %3881 = vmatprep.subr.mxu0 0.0
        %3882 = vmatpush1.msra.mxu0 0.0
        %3883 = vmatprep.subr.mxu0 0.0
        %3884 = vmatpush1.msra.mxu0 0.0
        %3885 = vmatprep.subr.mxu0 0.0
        %3886 = vmatpush1.msra.mxu0 0.0
        %3887 = vmatprep.subr.mxu0 0.0
        %3888 = vmatpush1.msra.mxu0 0.0
        %3889 = vmatprep.subr.mxu0 0.0
        %3890 = vmatpush1.msra.mxu0 0.0
        %3891 = vmatprep.subr.mxu0 0.0
        %3892 = vmatpush1.msra.mxu0 0.0
        %3893 = vmatprep.subr.mxu0 0.0
        %3894 = vmatpush1.msra.mxu0 0.0
        %3895 = vmatprep.subr.mxu0 0.0
        %3896 = vmatpush1.msra.mxu0 0.0
        %3897 = vmatprep.subr.mxu0 0.0
        %3898 = vmatpush1.msra.mxu0 0.0
        %3899 = vmatprep.subr.mxu0 0.0
        %3900 = vmatpush1.msra.mxu0 0.0
        %3901 = vmatprep.subr.mxu0 0.0
        %3902 = vmatpush1.msra.mxu0 0.0
        %3903 = vmatprep.subr.mxu0 0.0
        %3904 = vmatpush1.msra.mxu0 0.0
        %3905 = vmatprep.subr.mxu0 0.0
        %3906 = vmatpush1.msra.mxu0 0.0
        %3907 = vmatprep.mubr.f32.mxu0 0.0
        %3908 = vmatmul.mubr.f32.gmra.mrb[0].mxu0 %v3839
        %v3909 = vpop.f32.mrb[0].mxu0
        %v3910 = vadd.f32 0.0, %v3909
        %v3911 = vpop.f32.mrb[0].mxu0
        %3912 = vdwg.mxu0
        %3913 = vrot.lane.b32.xlu0 %v3378, 120
        %v3914 = vpop.permute.xlu0 %3913
        %3915 = vrot.lane.b32.xlu0 %v3579, 120
        %v3916 = vpop.permute.xlu0 %3915
        %3917 = vrot.lane.b32.xlu0 %v3473, 120
        %v3918 = vpop.permute.xlu0 %3917
        %v3919 = vsel %vm1776, %v3914, 0
        %v3921 = vsel %vm1776, %v3916, 0
        %v3923 = vsel %vm1776, %v3918, 0
        %3925 = vmatprep.subr.mxu0 0.0
        %3926 = vmatpush1.xpose.msra.mxu0 %v3921
        %3927 = vmatprep.subr.mxu0 0.0
        %3928 = vmatpush1.xpose.msra.mxu0 %v3923
        %3929 = vmatprep.subr.mxu0 0.0
        %3930 = vmatpush1.xpose.msra.mxu0 0.0
        %3931 = vmatprep.subr.mxu0 0.0
        %3932 = vmatpush1.xpose.msra.mxu0 0.0
        %3933 = vmatprep.subr.mxu0 0.0
        %3934 = vmatpush1.xpose.msra.mxu0 0.0
        %3935 = vmatprep.subr.mxu0 0.0
        %3936 = vmatpush1.xpose.msra.mxu0 0.0
        %3937 = vmatprep.subr.mxu0 0.0
        %3938 = vmatpush1.xpose.msra.mxu0 0.0
        %3939 = vmatprep.subr.mxu0 0.0
        %3940 = vmatpush1.xpose.msra.mxu0 0.0
        %3941 = vmatprep.subr.mxu0 0.0
        %3942 = vmatpush1.xpose.msra.mxu0 0.0
        %3943 = vmatprep.subr.mxu0 0.0
        %3944 = vmatpush1.xpose.msra.mxu0 0.0
        %3945 = vmatprep.subr.mxu0 0.0
        %3946 = vmatpush1.xpose.msra.mxu0 0.0
        %3947 = vmatprep.subr.mxu0 0.0
        %3948 = vmatpush1.xpose.msra.mxu0 0.0
        %3949 = vmatprep.subr.mxu0 0.0
        %3950 = vmatpush1.xpose.msra.mxu0 0.0
        %3951 = vmatprep.subr.mxu0 0.0
        %3952 = vmatpush1.xpose.msra.mxu0 0.0
        %3953 = vmatprep.subr.mxu0 0.0
        %3954 = vmatpush1.xpose.msra.mxu0 0.0
        %3955 = vmatprep.subr.mxu0 0.0
        %3956 = vmatpush1.xpose.msra.mxu0 0.0
        %3957 = vmatprep.subr.mxu0 0.0
        %3958 = vmatpush1.xpose.msra.mxu0 0.0
        %3959 = vmatprep.subr.mxu0 0.0
        %3960 = vmatpush1.xpose.msra.mxu0 0.0
        %3961 = vmatprep.subr.mxu0 0.0
        %3962 = vmatpush1.xpose.msra.mxu0 0.0
        %3963 = vmatprep.subr.mxu0 0.0
        %3964 = vmatpush1.xpose.msra.mxu0 0.0
        %3965 = vmatprep.subr.mxu0 0.0
        %3966 = vmatpush1.xpose.msra.mxu0 0.0
        %3967 = vmatprep.subr.mxu0 0.0
        %3968 = vmatpush1.xpose.msra.mxu0 0.0
        %3969 = vmatprep.subr.mxu0 0.0
        %3970 = vmatpush1.xpose.msra.mxu0 0.0
        %3971 = vmatprep.subr.mxu0 0.0
        %3972 = vmatpush1.xpose.msra.mxu0 0.0
        %3973 = vmatprep.subr.mxu0 0.0
        %3974 = vmatpush1.xpose.msra.mxu0 0.0
        %3975 = vmatprep.subr.mxu0 0.0
        %3976 = vmatpush1.xpose.msra.mxu0 0.0
        %3977 = vmatprep.subr.mxu0 0.0
        %3978 = vmatpush1.xpose.msra.mxu0 0.0
        %3979 = vmatprep.subr.mxu0 0.0
        %3980 = vmatpush1.xpose.msra.mxu0 0.0
        %3981 = vmatprep.subr.mxu0 0.0
        %3982 = vmatpush1.xpose.msra.mxu0 0.0
        %3983 = vmatprep.subr.mxu0 0.0
        %3984 = vmatpush1.xpose.msra.mxu0 0.0
        %3985 = vmatprep.subr.mxu0 0.0
        %3986 = vmatpush1.xpose.msra.mxu0 0.0
        %3987 = vmatprep.subr.mxu0 0.0
        %3988 = vmatpush1.xpose.msra.mxu0 0.0
        %3989 = vmatprep.mubr.f32.mxu0 0.0
        %3990 = vmatmul.mubr.f32.gmra.mrb[0].mxu0 %v3919
        %v3991 = vpop.f32.mrb[0].mxu0
        %v3992 = vadd.f32 0.0, %v3991
        %v3993 = vpop.f32.mrb[0].mxu0
        %3994 = vdwg.mxu0
        %3995 = vrot.lane.b32.xlu0 %v3383, 120
        %v3996 = vpop.permute.xlu0 %3995
        %3997 = vrot.lane.b32.xlu0 %v3657, 120
        %v3998 = vpop.permute.xlu0 %3997
        %3999 = vrot.lane.b32.xlu0 %v3572, 120
        %v4000 = vpop.permute.xlu0 %3999
        %v4001 = vsel %vm1776, %v3996, 0
        %v4003 = vsel %vm1776, %v3998, 0
        %v4005 = vsel %vm1776, %v4000, 0
        %4007 = vmatprep.subr.mxu0 0.0
        %4008 = vmatpush1.xpose.msra.mxu0 %v4003
        %4009 = vmatprep.subr.mxu0 0.0
        %4010 = vmatpush1.xpose.msra.mxu0 %v4005
        %4011 = vmatprep.subr.mxu0 0.0
        %4012 = vmatpush1.xpose.msra.mxu0 0.0
        %4013 = vmatprep.subr.mxu0 0.0
        %4014 = vmatpush1.xpose.msra.mxu0 0.0
        %4015 = vmatprep.subr.mxu0 0.0
        %4016 = vmatpush1.xpose.msra.mxu0 0.0
        %4017 = vmatprep.subr.mxu0 0.0
        %4018 = vmatpush1.xpose.msra.mxu0 0.0
        %4019 = vmatprep.subr.mxu0 0.0
        %4020 = vmatpush1.xpose.msra.mxu0 0.0
        %4021 = vmatprep.subr.mxu0 0.0
        %4022 = vmatpush1.xpose.msra.mxu0 0.0
        %4023 = vmatprep.subr.mxu0 0.0
        %4024 = vmatpush1.xpose.msra.mxu0 0.0
        %4025 = vmatprep.subr.mxu0 0.0
        %4026 = vmatpush1.xpose.msra.mxu0 0.0
        %4027 = vmatprep.subr.mxu0 0.0
        %4028 = vmatpush1.xpose.msra.mxu0 0.0
        %4029 = vmatprep.subr.mxu0 0.0
        %4030 = vmatpush1.xpose.msra.mxu0 0.0
        %4031 = vmatprep.subr.mxu0 0.0
        %4032 = vmatpush1.xpose.msra.mxu0 0.0
        %4033 = vmatprep.subr.mxu0 0.0
        %4034 = vmatpush1.xpose.msra.mxu0 0.0
        %4035 = vmatprep.subr.mxu0 0.0
        %4036 = vmatpush1.xpose.msra.mxu0 0.0
        %4037 = vmatprep.subr.mxu0 0.0
        %4038 = vmatpush1.xpose.msra.mxu0 0.0
        %4039 = vmatprep.subr.mxu0 0.0
        %4040 = vmatpush1.xpose.msra.mxu0 0.0
        %4041 = vmatprep.subr.mxu0 0.0
        %4042 = vmatpush1.xpose.msra.mxu0 0.0
        %4043 = vmatprep.subr.mxu0 0.0
        %4044 = vmatpush1.xpose.msra.mxu0 0.0
        %4045 = vmatprep.subr.mxu0 0.0
        %4046 = vmatpush1.xpose.msra.mxu0 0.0
        %4047 = vmatprep.subr.mxu0 0.0
        %4048 = vmatpush1.xpose.msra.mxu0 0.0
        %4049 = vmatprep.subr.mxu0 0.0
        %4050 = vmatpush1.xpose.msra.mxu0 0.0
        %4051 = vmatprep.subr.mxu0 0.0
        %4052 = vmatpush1.xpose.msra.mxu0 0.0
        %4053 = vmatprep.subr.mxu0 0.0
        %4054 = vmatpush1.xpose.msra.mxu0 0.0
        %4055 = vmatprep.subr.mxu0 0.0
        %4056 = vmatpush1.xpose.msra.mxu0 0.0
        %4057 = vmatprep.subr.mxu0 0.0
        %4058 = vmatpush1.xpose.msra.mxu0 0.0
        %4059 = vmatprep.subr.mxu0 0.0
        %4060 = vmatpush1.xpose.msra.mxu0 0.0
        %4061 = vmatprep.subr.mxu0 0.0
        %4062 = vmatpush1.xpose.msra.mxu0 0.0
        %4063 = vmatprep.subr.mxu0 0.0
        %4064 = vmatpush1.xpose.msra.mxu0 0.0
        %4065 = vmatprep.subr.mxu0 0.0
        %4066 = vmatpush1.xpose.msra.mxu0 0.0
        %4067 = vmatprep.subr.mxu0 0.0
        %4068 = vmatpush1.xpose.msra.mxu0 0.0
        %4069 = vmatprep.subr.mxu0 0.0
        %4070 = vmatpush1.xpose.msra.mxu0 0.0
        %4071 = vmatprep.mubr.f32.mxu0 0.0
        %4072 = vmatmul.mubr.f32.gmra.mrb[0].mxu0 %v4001
        %v4073 = vpop.f32.mrb[0].mxu0
        %v4074 = vadd.f32 0.0, %v4073
        %v4075 = vpop.f32.mrb[0].mxu0
        %4076 = vdwg.mxu0
        %v4077 = vsel %vm3735, %v3992, -inf
        %4078 = vmax.xlane.f32.xlu0 %v4077
        %v4079 = vpop.xlane.xlu0 %4078
        %v4080 = vsel %vm3735, %v4074, -inf
        %4081 = vmax.xlane.f32.xlu0 %v4080
        %v4082 = vpop.xlane.xlu0 %4081
        %v4083 = vsub.f32 %v3992, %v4079
        %v4084 = vsub.f32 %v4074, %v4082
        %v4085 = vmul.f32 %v4083, 1.442695
        %v4086 = vpow.pop %v4085
        %v4087 = vmul.f32 %v4084, 1.442695
        %v4088 = vpow.pop %v4087
        %v4089 = vsel %vm3735, %v4086, 0.0
        %4090 = vadd.xlane.f32.xlu0 %v4089
        %v4091 = vpop.xlane.xlu0 %4090
        %v4092 = vsel %vm3735, %v4088, 0.0
        %4093 = vadd.xlane.f32.xlu0 %v4092
        %v4094 = vpop.xlane.xlu0 %4093
        %v4095 = vrcp.pop %v4091
        %v4096 = vrcp.pop %v4094
        %v4097 = vmul.f32 %v4086, %v4095
        %v4098 = vmul.f32 %v4088, %v4096
        %4099 = vrot.lane.b32.xlu0 %v3758, 120
        %v4100 = vpop.permute.xlu0 %4099
        %4101 = vrot.lane.b32.xlu0 %v3559, 120
        %v4102 = vpop.permute.xlu0 %4101
        %v4105 = vsel %vm3735, %v4097, 0
        %v4107 = vsel %vm3763, %v4102, 0
        %4109 = vmatprep.subr.mxu0 0.0
        %4110 = vmatpush1.msra.mxu0 %v4100
        %4111 = vmatprep.subr.mxu0 0.0
        %4112 = vmatpush1.msra.mxu0 %v4107
        %4113 = vmatprep.subr.mxu0 0.0
        %4114 = vmatpush1.msra.mxu0 0.0
        %4115 = vmatprep.subr.mxu0 0.0
        %4116 = vmatpush1.msra.mxu0 0.0
        %4117 = vmatprep.subr.mxu0 0.0
        %4118 = vmatpush1.msra.mxu0 0.0
        %4119 = vmatprep.subr.mxu0 0.0
        %4120 = vmatpush1.msra.mxu0 0.0
        %4121 = vmatprep.subr.mxu0 0.0
        %4122 = vmatpush1.msra.mxu0 0.0
        %4123 = vmatprep.subr.mxu0 0.0
        %4124 = vmatpush1.msra.mxu0 0.0
        %4125 = vmatprep.subr.mxu0 0.0
        %4126 = vmatpush1.msra.mxu0 0.0
        %4127 = vmatprep.subr.mxu0 0.0
        %4128 = vmatpush1.msra.mxu0 0.0
        %4129 = vmatprep.subr.mxu0 0.0
        %4130 = vmatpush1.msra.mxu0 0.0
        %4131 = vmatprep.subr.mxu0 0.0
        %4132 = vmatpush1.msra.mxu0 0.0
        %4133 = vmatprep.subr.mxu0 0.0
        %4134 = vmatpush1.msra.mxu0 0.0
        %4135 = vmatprep.subr.mxu0 0.0
        %4136 = vmatpush1.msra.mxu0 0.0
        %4137 = vmatprep.subr.mxu0 0.0
        %4138 = vmatpush1.msra.mxu0 0.0
        %4139 = vmatprep.subr.mxu0 0.0
        %4140 = vmatpush1.msra.mxu0 0.0
        %4141 = vmatprep.subr.mxu0 0.0
        %4142 = vmatpush1.msra.mxu0 0.0
        %4143 = vmatprep.subr.mxu0 0.0
        %4144 = vmatpush1.msra.mxu0 0.0
        %4145 = vmatprep.subr.mxu0 0.0
        %4146 = vmatpush1.msra.mxu0 0.0
        %4147 = vmatprep.subr.mxu0 0.0
        %4148 = vmatpush1.msra.mxu0 0.0
        %4149 = vmatprep.subr.mxu0 0.0
        %4150 = vmatpush1.msra.mxu0 0.0
        %4151 = vmatprep.subr.mxu0 0.0
        %4152 = vmatpush1.msra.mxu0 0.0
        %4153 = vmatprep.subr.mxu0 0.0
        %4154 = vmatpush1.msra.mxu0 0.0
        %4155 = vmatprep.subr.mxu0 0.0
        %4156 = vmatpush1.msra.mxu0 0.0
        %4157 = vmatprep.subr.mxu0 0.0
        %4158 = vmatpush1.msra.mxu0 0.0
        %4159 = vmatprep.subr.mxu0 0.0
        %4160 = vmatpush1.msra.mxu0 0.0
        %4161 = vmatprep.subr.mxu0 0.0
        %4162 = vmatpush1.msra.mxu0 0.0
        %4163 = vmatprep.subr.mxu0 0.0
        %4164 = vmatpush1.msra.mxu0 0.0
        %4165 = vmatprep.subr.mxu0 0.0
        %4166 = vmatpush1.msra.mxu0 0.0
        %4167 = vmatprep.subr.mxu0 0.0
        %4168 = vmatpush1.msra.mxu0 0.0
        %4169 = vmatprep.subr.mxu0 0.0
        %4170 = vmatpush1.msra.mxu0 0.0
        %4171 = vmatprep.subr.mxu0 0.0
        %4172 = vmatpush1.msra.mxu0 0.0
        %4173 = vmatprep.mubr.f32.mxu0 0.0
        %4174 = vmatmul.mubr.f32.gmra.mrb[0].mxu0 %v4105
        %v4175 = vpop.f32.mrb[0].mxu0
        %v4176 = vadd.f32 0.0, %v4175
        %v4177 = vpop.f32.mrb[0].mxu0
        %4178 = vdwg.mxu0
        %4179 = vrot.lane.b32.xlu0 %v3836, 120
        %v4180 = vpop.permute.xlu0 %4179
        %4181 = vrot.lane.b32.xlu0 %v3578, 120
        %v4182 = vpop.permute.xlu0 %4181
        %v4185 = vsel %vm3735, %v4098, 0
        %v4187 = vsel %vm3763, %v4182, 0
        %4189 = vmatprep.subr.mxu0 0.0
        %4190 = vmatpush1.msra.mxu0 %v4180
        %4191 = vmatprep.subr.mxu0 0.0
        %4192 = vmatpush1.msra.mxu0 %v4187
        %4193 = vmatprep.subr.mxu0 0.0
        %4194 = vmatpush1.msra.mxu0 0.0
        %4195 = vmatprep.subr.mxu0 0.0
        %4196 = vmatpush1.msra.mxu0 0.0
        %4197 = vmatprep.subr.mxu0 0.0
        %4198 = vmatpush1.msra.mxu0 0.0
        %4199 = vmatprep.subr.mxu0 0.0
        %4200 = vmatpush1.msra.mxu0 0.0
        %4201 = vmatprep.subr.mxu0 0.0
        %4202 = vmatpush1.msra.mxu0 0.0
        %4203 = vmatprep.subr.mxu0 0.0
        %4204 = vmatpush1.msra.mxu0 0.0
        %4205 = vmatprep.subr.mxu0 0.0
        %4206 = vmatpush1.msra.mxu0 0.0
        %4207 = vmatprep.subr.mxu0 0.0
        %4208 = vmatpush1.msra.mxu0 0.0
        %4209 = vmatprep.subr.mxu0 0.0
        %4210 = vmatpush1.msra.mxu0 0.0
        %4211 = vmatprep.subr.mxu0 0.0
        %4212 = vmatpush1.msra.mxu0 0.0
        %4213 = vmatprep.subr.mxu0 0.0
        %4214 = vmatpush1.msra.mxu0 0.0
        %4215 = vmatprep.subr.mxu0 0.0
        %4216 = vmatpush1.msra.mxu0 0.0
        %4217 = vmatprep.subr.mxu0 0.0
        %4218 = vmatpush1.msra.mxu0 0.0
        %4219 = vmatprep.subr.mxu0 0.0
        %4220 = vmatpush1.msra.mxu0 0.0
        %4221 = vmatprep.subr.mxu0 0.0
        %4222 = vmatpush1.msra.mxu0 0.0
        %4223 = vmatprep.subr.mxu0 0.0
        %4224 = vmatpush1.msra.mxu0 0.0
        %4225 = vmatprep.subr.mxu0 0.0
        %4226 = vmatpush1.msra.mxu0 0.0
        %4227 = vmatprep.subr.mxu0 0.0
        %4228 = vmatpush1.msra.mxu0 0.0
        %4229 = vmatprep.subr.mxu0 0.0
        %4230 = vmatpush1.msra.mxu0 0.0
        %4231 = vmatprep.subr.mxu0 0.0
        %4232 = vmatpush1.msra.mxu0 0.0
        %4233 = vmatprep.subr.mxu0 0.0
        %4234 = vmatpush1.msra.mxu0 0.0
        %4235 = vmatprep.subr.mxu0 0.0
        %4236 = vmatpush1.msra.mxu0 0.0
        %4237 = vmatprep.subr.mxu0 0.0
        %4238 = vmatpush1.msra.mxu0 0.0
        %4239 = vmatprep.subr.mxu0 0.0
        %4240 = vmatpush1.msra.mxu0 0.0
        %4241 = vmatprep.subr.mxu0 0.0
        %4242 = vmatpush1.msra.mxu0 0.0
        %4243 = vmatprep.subr.mxu0 0.0
        %4244 = vmatpush1.msra.mxu0 0.0
        %4245 = vmatprep.subr.mxu0 0.0
        %4246 = vmatpush1.msra.mxu0 0.0
        %4247 = vmatprep.subr.mxu0 0.0
        %4248 = vmatpush1.msra.mxu0 0.0
        %4249 = vmatprep.subr.mxu0 0.0
        %4250 = vmatpush1.msra.mxu0 0.0
        %4251 = vmatprep.subr.mxu0 0.0
        %4252 = vmatpush1.msra.mxu0 0.0
        %4253 = vmatprep.mubr.f32.mxu0 0.0
        %4254 = vmatmul.mubr.f32.gmra.mrb[0].mxu0 %v4185
        %v4255 = vpop.f32.mrb[0].mxu0
        %v4256 = vadd.f32 0.0, %v4255
        %v4257 = vpop.f32.mrb[0].mxu0
        %4258 = vdwg.mxu0
        %4259 = vrot.lane.b32.xlu0 %v3378, 112
        %v4260 = vpop.permute.xlu0 %4259
        %4261 = vrot.lane.b32.xlu0 %v3579, 112
        %v4262 = vpop.permute.xlu0 %4261
        %4263 = vrot.lane.b32.xlu0 %v3473, 112
        %v4264 = vpop.permute.xlu0 %4263
        %v4265 = vsel %vm1776, %v4260, 0
        %v4267 = vsel %vm1776, %v4262, 0
        %v4269 = vsel %vm1776, %v4264, 0
        %4271 = vmatprep.subr.mxu0 0.0
        %4272 = vmatpush1.xpose.msra.mxu0 %v4267
        %4273 = vmatprep.subr.mxu0 0.0
        %4274 = vmatpush1.xpose.msra.mxu0 %v4269
        %4275 = vmatprep.subr.mxu0 0.0
        %4276 = vmatpush1.xpose.msra.mxu0 0.0
        %4277 = vmatprep.subr.mxu0 0.0
        %4278 = vmatpush1.xpose.msra.mxu0 0.0
        %4279 = vmatprep.subr.mxu0 0.0
        %4280 = vmatpush1.xpose.msra.mxu0 0.0
        %4281 = vmatprep.subr.mxu0 0.0
        %4282 = vmatpush1.xpose.msra.mxu0 0.0
        %4283 = vmatprep.subr.mxu0 0.0
        %4284 = vmatpush1.xpose.msra.mxu0 0.0
        %4285 = vmatprep.subr.mxu0 0.0
        %4286 = vmatpush1.xpose.msra.mxu0 0.0
        %4287 = vmatprep.subr.mxu0 0.0
        %4288 = vmatpush1.xpose.msra.mxu0 0.0
        %4289 = vmatprep.subr.mxu0 0.0
        %4290 = vmatpush1.xpose.msra.mxu0 0.0
        %4291 = vmatprep.subr.mxu0 0.0
        %4292 = vmatpush1.xpose.msra.mxu0 0.0
        %4293 = vmatprep.subr.mxu0 0.0
        %4294 = vmatpush1.xpose.msra.mxu0 0.0
        %4295 = vmatprep.subr.mxu0 0.0
        %4296 = vmatpush1.xpose.msra.mxu0 0.0
        %4297 = vmatprep.subr.mxu0 0.0
        %4298 = vmatpush1.xpose.msra.mxu0 0.0
        %4299 = vmatprep.subr.mxu0 0.0
        %4300 = vmatpush1.xpose.msra.mxu0 0.0
        %4301 = vmatprep.subr.mxu0 0.0
        %4302 = vmatpush1.xpose.msra.mxu0 0.0
        %4303 = vmatprep.subr.mxu0 0.0
        %4304 = vmatpush1.xpose.msra.mxu0 0.0
        %4305 = vmatprep.subr.mxu0 0.0
        %4306 = vmatpush1.xpose.msra.mxu0 0.0
        %4307 = vmatprep.subr.mxu0 0.0
        %4308 = vmatpush1.xpose.msra.mxu0 0.0
        %4309 = vmatprep.subr.mxu0 0.0
        %4310 = vmatpush1.xpose.msra.mxu0 0.0
        %4311 = vmatprep.subr.mxu0 0.0
        %4312 = vmatpush1.xpose.msra.mxu0 0.0
        %4313 = vmatprep.subr.mxu0 0.0
        %4314 = vmatpush1.xpose.msra.mxu0 0.0
        %4315 = vmatprep.subr.mxu0 0.0
        %4316 = vmatpush1.xpose.msra.mxu0 0.0
        %4317 = vmatprep.subr.mxu0 0.0
        %4318 = vmatpush1.xpose.msra.mxu0 0.0
        %4319 = vmatprep.subr.mxu0 0.0
        %4320 = vmatpush1.xpose.msra.mxu0 0.0
        %4321 = vmatprep.subr.mxu0 0.0
        %4322 = vmatpush1.xpose.msra.mxu0 0.0
        %4323 = vmatprep.subr.mxu0 0.0
        %4324 = vmatpush1.xpose.msra.mxu0 0.0
        %4325 = vmatprep.subr.mxu0 0.0
        %4326 = vmatpush1.xpose.msra.mxu0 0.0
        %4327 = vmatprep.subr.mxu0 0.0
        %4328 = vmatpush1.xpose.msra.mxu0 0.0
        %4329 = vmatprep.subr.mxu0 0.0
        %4330 = vmatpush1.xpose.msra.mxu0 0.0
        %4331 = vmatprep.subr.mxu0 0.0
        %4332 = vmatpush1.xpose.msra.mxu0 0.0
        %4333 = vmatprep.subr.mxu0 0.0
        %4334 = vmatpush1.xpose.msra.mxu0 0.0
        %4335 = vmatprep.mubr.f32.mxu0 0.0
        %4336 = vmatmul.mubr.f32.gmra.mrb[0].mxu0 %v4265
        %v4337 = vpop.f32.mrb[0].mxu0
        %v4338 = vadd.f32 0.0, %v4337
        %v4339 = vpop.f32.mrb[0].mxu0
        %4340 = vdwg.mxu0
        %4341 = vrot.lane.b32.xlu0 %v3383, 112
        %v4342 = vpop.permute.xlu0 %4341
        %4343 = vrot.lane.b32.xlu0 %v3657, 112
        %v4344 = vpop.permute.xlu0 %4343
        %4345 = vrot.lane.b32.xlu0 %v3572, 112
        %v4346 = vpop.permute.xlu0 %4345
        %v4347 = vsel %vm1776, %v4342, 0
        %v4349 = vsel %vm1776, %v4344, 0
        %v4351 = vsel %vm1776, %v4346, 0
        %4353 = vmatprep.subr.mxu0 0.0
        %4354 = vmatpush1.xpose.msra.mxu0 %v4349
        %4355 = vmatprep.subr.mxu0 0.0
        %4356 = vmatpush1.xpose.msra.mxu0 %v4351
        %4357 = vmatprep.subr.mxu0 0.0
        %4358 = vmatpush1.xpose.msra.mxu0 0.0
        %4359 = vmatprep.subr.mxu0 0.0
        %4360 = vmatpush1.xpose.msra.mxu0 0.0
        %4361 = vmatprep.subr.mxu0 0.0
        %4362 = vmatpush1.xpose.msra.mxu0 0.0
        %4363 = vmatprep.subr.mxu0 0.0
        %4364 = vmatpush1.xpose.msra.mxu0 0.0
        %4365 = vmatprep.subr.mxu0 0.0
        %4366 = vmatpush1.xpose.msra.mxu0 0.0
        %4367 = vmatprep.subr.mxu0 0.0
        %4368 = vmatpush1.xpose.msra.mxu0 0.0
        %4369 = vmatprep.subr.mxu0 0.0
        %4370 = vmatpush1.xpose.msra.mxu0 0.0
        %4371 = vmatprep.subr.mxu0 0.0
        %4372 = vmatpush1.xpose.msra.mxu0 0.0
        %4373 = vmatprep.subr.mxu0 0.0
        %4374 = vmatpush1.xpose.msra.mxu0 0.0
        %4375 = vmatprep.subr.mxu0 0.0
        %4376 = vmatpush1.xpose.msra.mxu0 0.0
        %4377 = vmatprep.subr.mxu0 0.0
        %4378 = vmatpush1.xpose.msra.mxu0 0.0
        %4379 = vmatprep.subr.mxu0 0.0
        %4380 = vmatpush1.xpose.msra.mxu0 0.0
        %4381 = vmatprep.subr.mxu0 0.0
        %4382 = vmatpush1.xpose.msra.mxu0 0.0
        %4383 = vmatprep.subr.mxu0 0.0
        %4384 = vmatpush1.xpose.msra.mxu0 0.0
        %4385 = vmatprep.subr.mxu0 0.0
        %4386 = vmatpush1.xpose.msra.mxu0 0.0
        %4387 = vmatprep.subr.mxu0 0.0
        %4388 = vmatpush1.xpose.msra.mxu0 0.0
        %4389 = vmatprep.subr.mxu0 0.0
        %4390 = vmatpush1.xpose.msra.mxu0 0.0
        %4391 = vmatprep.subr.mxu0 0.0
        %4392 = vmatpush1.xpose.msra.mxu0 0.0
        %4393 = vmatprep.subr.mxu0 0.0
        %4394 = vmatpush1.xpose.msra.mxu0 0.0
        %4395 = vmatprep.subr.mxu0 0.0
        %4396 = vmatpush1.xpose.msra.mxu0 0.0
        %4397 = vmatprep.subr.mxu0 0.0
        %4398 = vmatpush1.xpose.msra.mxu0 0.0
        %4399 = vmatprep.subr.mxu0 0.0
        %4400 = vmatpush1.xpose.msra.mxu0 0.0
        %4401 = vmatprep.subr.mxu0 0.0
        %4402 = vmatpush1.xpose.msra.mxu0 0.0
        %4403 = vmatprep.subr.mxu0 0.0
        %4404 = vmatpush1.xpose.msra.mxu0 0.0
        %4405 = vmatprep.subr.mxu0 0.0
        %4406 = vmatpush1.xpose.msra.mxu0 0.0
        %4407 = vmatprep.subr.mxu0 0.0
        %4408 = vmatpush1.xpose.msra.mxu0 0.0
        %4409 = vmatprep.subr.mxu0 0.0
        %4410 = vmatpush1.xpose.msra.mxu0 0.0
        %4411 = vmatprep.subr.mxu0 0.0
        %4412 = vmatpush1.xpose.msra.mxu0 0.0
        %4413 = vmatprep.subr.mxu0 0.0
        %4414 = vmatpush1.xpose.msra.mxu0 0.0
        %4415 = vmatprep.subr.mxu0 0.0
        %4416 = vmatpush1.xpose.msra.mxu0 0.0
        %4417 = vmatprep.mubr.f32.mxu0 0.0
        %4418 = vmatmul.mubr.f32.gmra.mrb[0].mxu0 %v4347
        %v4419 = vpop.f32.mrb[0].mxu0
        %v4420 = vadd.f32 0.0, %v4419
        %v4421 = vpop.f32.mrb[0].mxu0
        %4422 = vdwg.mxu0
        %v4423 = vsel %vm3735, %v4338, -inf
        %4424 = vmax.xlane.f32.xlu0 %v4423
        %v4425 = vpop.xlane.xlu0 %4424
        %v4426 = vsel %vm3735, %v4420, -inf
        %4427 = vmax.xlane.f32.xlu0 %v4426
        %v4428 = vpop.xlane.xlu0 %4427
        %v4429 = vsub.f32 %v4338, %v4425
        %v4430 = vsub.f32 %v4420, %v4428
        %v4431 = vmul.f32 %v4429, 1.442695
        %v4432 = vpow.pop %v4431
        %v4433 = vmul.f32 %v4430, 1.442695
        %v4434 = vpow.pop %v4433
        %v4435 = vsel %vm3735, %v4432, 0.0
        %4436 = vadd.xlane.f32.xlu0 %v4435
        %v4437 = vpop.xlane.xlu0 %4436
        %v4438 = vsel %vm3735, %v4434, 0.0
        %4439 = vadd.xlane.f32.xlu0 %v4438
        %v4440 = vpop.xlane.xlu0 %4439
        %v4441 = vrcp.pop %v4437
        %v4442 = vrcp.pop %v4440
        %v4443 = vmul.f32 %v4432, %v4441
        %v4444 = vmul.f32 %v4434, %v4442
        %4445 = vrot.lane.b32.xlu0 %v3758, 112
        %v4446 = vpop.permute.xlu0 %4445
        %4447 = vrot.lane.b32.xlu0 %v3559, 112
        %v4448 = vpop.permute.xlu0 %4447
        %v4451 = vsel %vm3735, %v4443, 0
        %v4453 = vsel %vm3763, %v4448, 0
        %4455 = vmatprep.subr.mxu0 0.0
        %4456 = vmatpush1.msra.mxu0 %v4446
        %4457 = vmatprep.subr.mxu0 0.0
        %4458 = vmatpush1.msra.mxu0 %v4453
        %4459 = vmatprep.subr.mxu0 0.0
        %4460 = vmatpush1.msra.mxu0 0.0
        %4461 = vmatprep.subr.mxu0 0.0
        %4462 = vmatpush1.msra.mxu0 0.0
        %4463 = vmatprep.subr.mxu0 0.0
        %4464 = vmatpush1.msra.mxu0 0.0
        %4465 = vmatprep.subr.mxu0 0.0
        %4466 = vmatpush1.msra.mxu0 0.0
        %4467 = vmatprep.subr.mxu0 0.0
        %4468 = vmatpush1.msra.mxu0 0.0
        %4469 = vmatprep.subr.mxu0 0.0
        %4470 = vmatpush1.msra.mxu0 0.0
        %4471 = vmatprep.subr.mxu0 0.0
        %4472 = vmatpush1.msra.mxu0 0.0
        %4473 = vmatprep.subr.mxu0 0.0
        %4474 = vmatpush1.msra.mxu0 0.0
        %4475 = vmatprep.subr.mxu0 0.0
        %4476 = vmatpush1.msra.mxu0 0.0
        %4477 = vmatprep.subr.mxu0 0.0
        %4478 = vmatpush1.msra.mxu0 0.0
        %4479 = vmatprep.subr.mxu0 0.0
        %4480 = vmatpush1.msra.mxu0 0.0
        %4481 = vmatprep.subr.mxu0 0.0
        %4482 = vmatpush1.msra.mxu0 0.0
        %4483 = vmatprep.subr.mxu0 0.0
        %4484 = vmatpush1.msra.mxu0 0.0
        %4485 = vmatprep.subr.mxu0 0.0
        %4486 = vmatpush1.msra.mxu0 0.0
        %4487 = vmatprep.subr.mxu0 0.0
        %4488 = vmatpush1.msra.mxu0 0.0
        %4489 = vmatprep.subr.mxu0 0.0
        %4490 = vmatpush1.msra.mxu0 0.0
        %4491 = vmatprep.subr.mxu0 0.0
        %4492 = vmatpush1.msra.mxu0 0.0
        %4493 = vmatprep.subr.mxu0 0.0
        %4494 = vmatpush1.msra.mxu0 0.0
        %4495 = vmatprep.subr.mxu0 0.0
        %4496 = vmatpush1.msra.mxu0 0.0
        %4497 = vmatprep.subr.mxu0 0.0
        %4498 = vmatpush1.msra.mxu0 0.0
        %4499 = vmatprep.subr.mxu0 0.0
        %4500 = vmatpush1.msra.mxu0 0.0
        %4501 = vmatprep.subr.mxu0 0.0
        %4502 = vmatpush1.msra.mxu0 0.0
        %4503 = vmatprep.subr.mxu0 0.0
        %4504 = vmatpush1.msra.mxu0 0.0
        %4505 = vmatprep.subr.mxu0 0.0
        %4506 = vmatpush1.msra.mxu0 0.0
        %4507 = vmatprep.subr.mxu0 0.0
        %4508 = vmatpush1.msra.mxu0 0.0
        %4509 = vmatprep.subr.mxu0 0.0
        %4510 = vmatpush1.msra.mxu0 0.0
        %4511 = vmatprep.subr.mxu0 0.0
        %4512 = vmatpush1.msra.mxu0 0.0
        %4513 = vmatprep.subr.mxu0 0.0
        %4514 = vmatpush1.msra.mxu0 0.0
        %4515 = vmatprep.subr.mxu0 0.0
        %4516 = vmatpush1.msra.mxu0 0.0
        %4517 = vmatprep.subr.mxu0 0.0
        %4518 = vmatpush1.msra.mxu0 0.0
        %4519 = vmatprep.mubr.f32.mxu0 0.0
        %4520 = vmatmul.mubr.f32.gmra.mrb[0].mxu0 %v4451
        %v4521 = vpop.f32.mrb[0].mxu0
        %v4522 = vadd.f32 0.0, %v4521
        %v4523 = vpop.f32.mrb[0].mxu0
        %4524 = vdwg.mxu0
        %4525 = vrot.lane.b32.xlu0 %v3836, 112
        %v4526 = vpop.permute.xlu0 %4525
        %4527 = vrot.lane.b32.xlu0 %v3578, 112
        %v4528 = vpop.permute.xlu0 %4527
        %v4531 = vsel %vm3735, %v4444, 0
        %v4533 = vsel %vm3763, %v4528, 0
        %4535 = vmatprep.subr.mxu0 0.0
        %4536 = vmatpush1.msra.mxu0 %v4526
        %4537 = vmatprep.subr.mxu0 0.0
        %4538 = vmatpush1.msra.mxu0 %v4533
        %4539 = vmatprep.subr.mxu0 0.0
        %4540 = vmatpush1.msra.mxu0 0.0
        %4541 = vmatprep.subr.mxu0 0.0
        %4542 = vmatpush1.msra.mxu0 0.0
        %4543 = vmatprep.subr.mxu0 0.0
        %4544 = vmatpush1.msra.mxu0 0.0
        %4545 = vmatprep.subr.mxu0 0.0
        %4546 = vmatpush1.msra.mxu0 0.0
        %4547 = vmatprep.subr.mxu0 0.0
        %4548 = vmatpush1.msra.mxu0 0.0
        %4549 = vmatprep.subr.mxu0 0.0
        %4550 = vmatpush1.msra.mxu0 0.0
        %4551 = vmatprep.subr.mxu0 0.0
        %4552 = vmatpush1.msra.mxu0 0.0
        %4553 = vmatprep.subr.mxu0 0.0
        %4554 = vmatpush1.msra.mxu0 0.0
        %4555 = vmatprep.subr.mxu0 0.0
        %4556 = vmatpush1.msra.mxu0 0.0
        %4557 = vmatprep.subr.mxu0 0.0
        %4558 = vmatpush1.msra.mxu0 0.0
        %4559 = vmatprep.subr.mxu0 0.0
        %4560 = vmatpush1.msra.mxu0 0.0
        %4561 = vmatprep.subr.mxu0 0.0
        %4562 = vmatpush1.msra.mxu0 0.0
        %4563 = vmatprep.subr.mxu0 0.0
        %4564 = vmatpush1.msra.mxu0 0.0
        %4565 = vmatprep.subr.mxu0 0.0
        %4566 = vmatpush1.msra.mxu0 0.0
        %4567 = vmatprep.subr.mxu0 0.0
        %4568 = vmatpush1.msra.mxu0 0.0
        %4569 = vmatprep.subr.mxu0 0.0
        %4570 = vmatpush1.msra.mxu0 0.0
        %4571 = vmatprep.subr.mxu0 0.0
        %4572 = vmatpush1.msra.mxu0 0.0
        %4573 = vmatprep.subr.mxu0 0.0
        %4574 = vmatpush1.msra.mxu0 0.0
        %4575 = vmatprep.subr.mxu0 0.0
        %4576 = vmatpush1.msra.mxu0 0.0
        %4577 = vmatprep.subr.mxu0 0.0
        %4578 = vmatpush1.msra.mxu0 0.0
        %4579 = vmatprep.subr.mxu0 0.0
        %4580 = vmatpush1.msra.mxu0 0.0
        %4581 = vmatprep.subr.mxu0 0.0
        %4582 = vmatpush1.msra.mxu0 0.0
        %4583 = vmatprep.subr.mxu0 0.0
        %4584 = vmatpush1.msra.mxu0 0.0
        %4585 = vmatprep.subr.mxu0 0.0
        %4586 = vmatpush1.msra.mxu0 0.0
        %4587 = vmatprep.subr.mxu0 0.0
        %4588 = vmatpush1.msra.mxu0 0.0
        %4589 = vmatprep.subr.mxu0 0.0
        %4590 = vmatpush1.msra.mxu0 0.0
        %4591 = vmatprep.subr.mxu0 0.0
        %4592 = vmatpush1.msra.mxu0 0.0
        %4593 = vmatprep.subr.mxu0 0.0
        %4594 = vmatpush1.msra.mxu0 0.0
        %4595 = vmatprep.subr.mxu0 0.0
        %4596 = vmatpush1.msra.mxu0 0.0
        %4597 = vmatprep.subr.mxu0 0.0
        %4598 = vmatpush1.msra.mxu0 0.0
        %4599 = vmatprep.mubr.f32.mxu0 0.0
        %4600 = vmatmul.mubr.f32.gmra.mrb[0].mxu0 %v4531
        %v4601 = vpop.f32.mrb[0].mxu0
        %v4602 = vadd.f32 0.0, %v4601
        %v4603 = vpop.f32.mrb[0].mxu0
        %4604 = vdwg.mxu0
        %4605 = vrot.lane.b32.xlu0 %v3378, 104
        %v4606 = vpop.permute.xlu0 %4605
        %4607 = vrot.lane.b32.xlu0 %v3579, 104
        %v4608 = vpop.permute.xlu0 %4607
        %4609 = vrot.lane.b32.xlu0 %v3473, 104
        %v4610 = vpop.permute.xlu0 %4609
        %v4611 = vsel %vm1776, %v4606, 0
        %v4613 = vsel %vm1776, %v4608, 0
        %v4615 = vsel %vm1776, %v4610, 0
        %4617 = vmatprep.subr.mxu0 0.0
        %4618 = vmatpush1.xpose.msra.mxu0 %v4613
        %4619 = vmatprep.subr.mxu0 0.0
        %4620 = vmatpush1.xpose.msra.mxu0 %v4615
        %4621 = vmatprep.subr.mxu0 0.0
        %4622 = vmatpush1.xpose.msra.mxu0 0.0
        %4623 = vmatprep.subr.mxu0 0.0
        %4624 = vmatpush1.xpose.msra.mxu0 0.0
        %4625 = vmatprep.subr.mxu0 0.0
        %4626 = vmatpush1.xpose.msra.mxu0 0.0
        %4627 = vmatprep.subr.mxu0 0.0
        %4628 = vmatpush1.xpose.msra.mxu0 0.0
        %4629 = vmatprep.subr.mxu0 0.0
        %4630 = vmatpush1.xpose.msra.mxu0 0.0
        %4631 = vmatprep.subr.mxu0 0.0
        %4632 = vmatpush1.xpose.msra.mxu0 0.0
        %4633 = vmatprep.subr.mxu0 0.0
        %4634 = vmatpush1.xpose.msra.mxu0 0.0
        %4635 = vmatprep.subr.mxu0 0.0
        %4636 = vmatpush1.xpose.msra.mxu0 0.0
        %4637 = vmatprep.subr.mxu0 0.0
        %4638 = vmatpush1.xpose.msra.mxu0 0.0
        %4639 = vmatprep.subr.mxu0 0.0
        %4640 = vmatpush1.xpose.msra.mxu0 0.0
        %4641 = vmatprep.subr.mxu0 0.0
        %4642 = vmatpush1.xpose.msra.mxu0 0.0
        %4643 = vmatprep.subr.mxu0 0.0
        %4644 = vmatpush1.xpose.msra.mxu0 0.0
        %4645 = vmatprep.subr.mxu0 0.0
        %4646 = vmatpush1.xpose.msra.mxu0 0.0
        %4647 = vmatprep.subr.mxu0 0.0
        %4648 = vmatpush1.xpose.msra.mxu0 0.0
        %4649 = vmatprep.subr.mxu0 0.0
        %4650 = vmatpush1.xpose.msra.mxu0 0.0
        %4651 = vmatprep.subr.mxu0 0.0
        %4652 = vmatpush1.xpose.msra.mxu0 0.0
        %4653 = vmatprep.subr.mxu0 0.0
        %4654 = vmatpush1.xpose.msra.mxu0 0.0
        %4655 = vmatprep.subr.mxu0 0.0
        %4656 = vmatpush1.xpose.msra.mxu0 0.0
        %4657 = vmatprep.subr.mxu0 0.0
        %4658 = vmatpush1.xpose.msra.mxu0 0.0
        %4659 = vmatprep.subr.mxu0 0.0
        %4660 = vmatpush1.xpose.msra.mxu0 0.0
        %4661 = vmatprep.subr.mxu0 0.0
        %4662 = vmatpush1.xpose.msra.mxu0 0.0
        %4663 = vmatprep.subr.mxu0 0.0
        %4664 = vmatpush1.xpose.msra.mxu0 0.0
        %4665 = vmatprep.subr.mxu0 0.0
        %4666 = vmatpush1.xpose.msra.mxu0 0.0
        %4667 = vmatprep.subr.mxu0 0.0
        %4668 = vmatpush1.xpose.msra.mxu0 0.0
        %4669 = vmatprep.subr.mxu0 0.0
        %4670 = vmatpush1.xpose.msra.mxu0 0.0
        %4671 = vmatprep.subr.mxu0 0.0
        %4672 = vmatpush1.xpose.msra.mxu0 0.0
        %4673 = vmatprep.subr.mxu0 0.0
        %4674 = vmatpush1.xpose.msra.mxu0 0.0
        %4675 = vmatprep.subr.mxu0 0.0
        %4676 = vmatpush1.xpose.msra.mxu0 0.0
        %4677 = vmatprep.subr.mxu0 0.0
        %4678 = vmatpush1.xpose.msra.mxu0 0.0
        %4679 = vmatprep.subr.mxu0 0.0
        %4680 = vmatpush1.xpose.msra.mxu0 0.0
        %4681 = vmatprep.mubr.f32.mxu0 0.0
        %4682 = vmatmul.mubr.f32.gmra.mrb[0].mxu0 %v4611
        %v4683 = vpop.f32.mrb[0].mxu0
        %v4684 = vadd.f32 0.0, %v4683
        %v4685 = vpop.f32.mrb[0].mxu0
        %4686 = vdwg.mxu0
        %4687 = vrot.lane.b32.xlu0 %v3383, 104
        %v4688 = vpop.permute.xlu0 %4687
        %4689 = vrot.lane.b32.xlu0 %v3657, 104
        %v4690 = vpop.permute.xlu0 %4689
        %4691 = vrot.lane.b32.xlu0 %v3572, 104
        %v4692 = vpop.permute.xlu0 %4691
        %v4693 = vsel %vm1776, %v4688, 0
        %v4695 = vsel %vm1776, %v4690, 0
        %v4697 = vsel %vm1776, %v4692, 0
        %4699 = vmatprep.subr.mxu0 0.0
        %4700 = vmatpush1.xpose.msra.mxu0 %v4695
        %4701 = vmatprep.subr.mxu0 0.0
        %4702 = vmatpush1.xpose.msra.mxu0 %v4697
        %4703 = vmatprep.subr.mxu0 0.0
        %4704 = vmatpush1.xpose.msra.mxu0 0.0
        %4705 = vmatprep.subr.mxu0 0.0
        %4706 = vmatpush1.xpose.msra.mxu0 0.0
        %4707 = vmatprep.subr.mxu0 0.0
        %4708 = vmatpush1.xpose.msra.mxu0 0.0
        %4709 = vmatprep.subr.mxu0 0.0
        %4710 = vmatpush1.xpose.msra.mxu0 0.0
        %4711 = vmatprep.subr.mxu0 0.0
        %4712 = vmatpush1.xpose.msra.mxu0 0.0
        %4713 = vmatprep.subr.mxu0 0.0
        %4714 = vmatpush1.xpose.msra.mxu0 0.0
        %4715 = vmatprep.subr.mxu0 0.0
        %4716 = vmatpush1.xpose.msra.mxu0 0.0
        %4717 = vmatprep.subr.mxu0 0.0
        %4718 = vmatpush1.xpose.msra.mxu0 0.0
        %4719 = vmatprep.subr.mxu0 0.0
        %4720 = vmatpush1.xpose.msra.mxu0 0.0
        %4721 = vmatprep.subr.mxu0 0.0
        %4722 = vmatpush1.xpose.msra.mxu0 0.0
        %4723 = vmatprep.subr.mxu0 0.0
        %4724 = vmatpush1.xpose.msra.mxu0 0.0
        %4725 = vmatprep.subr.mxu0 0.0
        %4726 = vmatpush1.xpose.msra.mxu0 0.0
        %4727 = vmatprep.subr.mxu0 0.0
        %4728 = vmatpush1.xpose.msra.mxu0 0.0
        %4729 = vmatprep.subr.mxu0 0.0
        %4730 = vmatpush1.xpose.msra.mxu0 0.0
        %4731 = vmatprep.subr.mxu0 0.0
        %4732 = vmatpush1.xpose.msra.mxu0 0.0
        %4733 = vmatprep.subr.mxu0 0.0
        %4734 = vmatpush1.xpose.msra.mxu0 0.0
        %4735 = vmatprep.subr.mxu0 0.0
        %4736 = vmatpush1.xpose.msra.mxu0 0.0
        %4737 = vmatprep.subr.mxu0 0.0
        %4738 = vmatpush1.xpose.msra.mxu0 0.0
        %4739 = vmatprep.subr.mxu0 0.0
        %4740 = vmatpush1.xpose.msra.mxu0 0.0
        %4741 = vmatprep.subr.mxu0 0.0
        %4742 = vmatpush1.xpose.msra.mxu0 0.0
        %4743 = vmatprep.subr.mxu0 0.0
        %4744 = vmatpush1.xpose.msra.mxu0 0.0
        %4745 = vmatprep.subr.mxu0 0.0
        %4746 = vmatpush1.xpose.msra.mxu0 0.0
        %4747 = vmatprep.subr.mxu0 0.0
        %4748 = vmatpush1.xpose.msra.mxu0 0.0
        %4749 = vmatprep.subr.mxu0 0.0
        %4750 = vmatpush1.xpose.msra.mxu0 0.0
        %4751 = vmatprep.subr.mxu0 0.0
        %4752 = vmatpush1.xpose.msra.mxu0 0.0
        %4753 = vmatprep.subr.mxu0 0.0
        %4754 = vmatpush1.xpose.msra.mxu0 0.0
        %4755 = vmatprep.subr.mxu0 0.0
        %4756 = vmatpush1.xpose.msra.mxu0 0.0
        %4757 = vmatprep.subr.mxu0 0.0
        %4758 = vmatpush1.xpose.msra.mxu0 0.0
        %4759 = vmatprep.subr.mxu0 0.0
        %4760 = vmatpush1.xpose.msra.mxu0 0.0
        %4761 = vmatprep.subr.mxu0 0.0
        %4762 = vmatpush1.xpose.msra.mxu0 0.0
        %4763 = vmatprep.mubr.f32.mxu0 0.0
        %4764 = vmatmul.mubr.f32.gmra.mrb[0].mxu0 %v4693
        %v4765 = vpop.f32.mrb[0].mxu0
        %v4766 = vadd.f32 0.0, %v4765
        %v4767 = vpop.f32.mrb[0].mxu0
        %4768 = vdwg.mxu0
        %v4769 = vsel %vm3735, %v4684, -inf
        %4770 = vmax.xlane.f32.xlu0 %v4769
        %v4771 = vpop.xlane.xlu0 %4770
        %v4772 = vsel %vm3735, %v4766, -inf
        %4773 = vmax.xlane.f32.xlu0 %v4772
        %v4774 = vpop.xlane.xlu0 %4773
        %v4775 = vsub.f32 %v4684, %v4771
        %v4776 = vsub.f32 %v4766, %v4774
        %v4777 = vmul.f32 %v4775, 1.442695
        %v4778 = vpow.pop %v4777
        %v4779 = vmul.f32 %v4776, 1.442695
        %v4780 = vpow.pop %v4779
        %v4781 = vsel %vm3735, %v4778, 0.0
        %4782 = vadd.xlane.f32.xlu0 %v4781
        %v4783 = vpop.xlane.xlu0 %4782
        %v4784 = vsel %vm3735, %v4780, 0.0
        %4785 = vadd.xlane.f32.xlu0 %v4784
        %v4786 = vpop.xlane.xlu0 %4785
        %v4787 = vrcp.pop %v4783
        %v4788 = vrcp.pop %v4786
        %v4789 = vmul.f32 %v4778, %v4787
        %v4790 = vmul.f32 %v4780, %v4788
        %4791 = vrot.lane.b32.xlu0 %v3758, 104
        %v4792 = vpop.permute.xlu0 %4791
        %4793 = vrot.lane.b32.xlu0 %v3559, 104
        %v4794 = vpop.permute.xlu0 %4793
        %v4797 = vsel %vm3735, %v4789, 0
        %v4799 = vsel %vm3763, %v4794, 0
        %4801 = vmatprep.subr.mxu0 0.0
        %4802 = vmatpush1.msra.mxu0 %v4792
        %4803 = vmatprep.subr.mxu0 0.0
        %4804 = vmatpush1.msra.mxu0 %v4799
        %4805 = vmatprep.subr.mxu0 0.0
        %4806 = vmatpush1.msra.mxu0 0.0
        %4807 = vmatprep.subr.mxu0 0.0
        %4808 = vmatpush1.msra.mxu0 0.0
        %4809 = vmatprep.subr.mxu0 0.0
        %4810 = vmatpush1.msra.mxu0 0.0
        %4811 = vmatprep.subr.mxu0 0.0
        %4812 = vmatpush1.msra.mxu0 0.0
        %4813 = vmatprep.subr.mxu0 0.0
        %4814 = vmatpush1.msra.mxu0 0.0
        %4815 = vmatprep.subr.mxu0 0.0
        %4816 = vmatpush1.msra.mxu0 0.0
        %4817 = vmatprep.subr.mxu0 0.0
        %4818 = vmatpush1.msra.mxu0 0.0
        %4819 = vmatprep.subr.mxu0 0.0
        %4820 = vmatpush1.msra.mxu0 0.0
        %4821 = vmatprep.subr.mxu0 0.0
        %4822 = vmatpush1.msra.mxu0 0.0
        %4823 = vmatprep.subr.mxu0 0.0
        %4824 = vmatpush1.msra.mxu0 0.0
        %4825 = vmatprep.subr.mxu0 0.0
        %4826 = vmatpush1.msra.mxu0 0.0
        %4827 = vmatprep.subr.mxu0 0.0
        %4828 = vmatpush1.msra.mxu0 0.0
        %4829 = vmatprep.subr.mxu0 0.0
        %4830 = vmatpush1.msra.mxu0 0.0
        %4831 = vmatprep.subr.mxu0 0.0
        %4832 = vmatpush1.msra.mxu0 0.0
        %4833 = vmatprep.subr.mxu0 0.0
        %4834 = vmatpush1.msra.mxu0 0.0
        %4835 = vmatprep.subr.mxu0 0.0
        %4836 = vmatpush1.msra.mxu0 0.0
        %4837 = vmatprep.subr.mxu0 0.0
        %4838 = vmatpush1.msra.mxu0 0.0
        %4839 = vmatprep.subr.mxu0 0.0
        %4840 = vmatpush1.msra.mxu0 0.0
        %4841 = vmatprep.subr.mxu0 0.0
        %4842 = vmatpush1.msra.mxu0 0.0
        %4843 = vmatprep.subr.mxu0 0.0
        %4844 = vmatpush1.msra.mxu0 0.0
        %4845 = vmatprep.subr.mxu0 0.0
        %4846 = vmatpush1.msra.mxu0 0.0
        %4847 = vmatprep.subr.mxu0 0.0
        %4848 = vmatpush1.msra.mxu0 0.0
        %4849 = vmatprep.subr.mxu0 0.0
        %4850 = vmatpush1.msra.mxu0 0.0
        %4851 = vmatprep.subr.mxu0 0.0
        %4852 = vmatpush1.msra.mxu0 0.0
        %4853 = vmatprep.subr.mxu0 0.0
        %4854 = vmatpush1.msra.mxu0 0.0
        %4855 = vmatprep.subr.mxu0 0.0
        %4856 = vmatpush1.msra.mxu0 0.0
        %4857 = vmatprep.subr.mxu0 0.0
        %4858 = vmatpush1.msra.mxu0 0.0
        %4859 = vmatprep.subr.mxu0 0.0
        %4860 = vmatpush1.msra.mxu0 0.0
        %4861 = vmatprep.subr.mxu0 0.0
        %4862 = vmatpush1.msra.mxu0 0.0
        %4863 = vmatprep.subr.mxu0 0.0
        %4864 = vmatpush1.msra.mxu0 0.0
        %4865 = vmatprep.mubr.f32.mxu0 0.0
        %4866 = vmatmul.mubr.f32.gmra.mrb[0].mxu0 %v4797
        %v4867 = vpop.f32.mrb[0].mxu0
        %v4868 = vadd.f32 0.0, %v4867
        %v4869 = vpop.f32.mrb[0].mxu0
        %4870 = vdwg.mxu0
        %4871 = vrot.lane.b32.xlu0 %v3836, 104
        %v4872 = vpop.permute.xlu0 %4871
        %4873 = vrot.lane.b32.xlu0 %v3578, 104
        %v4874 = vpop.permute.xlu0 %4873
        %v4877 = vsel %vm3735, %v4790, 0
        %v4879 = vsel %vm3763, %v4874, 0
        %4881 = vmatprep.subr.mxu0 0.0
        %4882 = vmatpush1.msra.mxu0 %v4872
        %4883 = vmatprep.subr.mxu0 0.0
        %4884 = vmatpush1.msra.mxu0 %v4879
        %4885 = vmatprep.subr.mxu0 0.0
        %4886 = vmatpush1.msra.mxu0 0.0
        %4887 = vmatprep.subr.mxu0 0.0
        %4888 = vmatpush1.msra.mxu0 0.0
        %4889 = vmatprep.subr.mxu0 0.0
        %4890 = vmatpush1.msra.mxu0 0.0
        %4891 = vmatprep.subr.mxu0 0.0
        %4892 = vmatpush1.msra.mxu0 0.0
        %4893 = vmatprep.subr.mxu0 0.0
        %4894 = vmatpush1.msra.mxu0 0.0
        %4895 = vmatprep.subr.mxu0 0.0
        %4896 = vmatpush1.msra.mxu0 0.0
        %4897 = vmatprep.subr.mxu0 0.0
        %4898 = vmatpush1.msra.mxu0 0.0
        %4899 = vmatprep.subr.mxu0 0.0
        %4900 = vmatpush1.msra.mxu0 0.0
        %4901 = vmatprep.subr.mxu0 0.0
        %4902 = vmatpush1.msra.mxu0 0.0
        %4903 = vmatprep.subr.mxu0 0.0
        %4904 = vmatpush1.msra.mxu0 0.0
        %4905 = vmatprep.subr.mxu0 0.0
        %4906 = vmatpush1.msra.mxu0 0.0
        %4907 = vmatprep.subr.mxu0 0.0
        %4908 = vmatpush1.msra.mxu0 0.0
        %4909 = vmatprep.subr.mxu0 0.0
        %4910 = vmatpush1.msra.mxu0 0.0
        %4911 = vmatprep.subr.mxu0 0.0
        %4912 = vmatpush1.msra.mxu0 0.0
        %4913 = vmatprep.subr.mxu0 0.0
        %4914 = vmatpush1.msra.mxu0 0.0
        %4915 = vmatprep.subr.mxu0 0.0
        %4916 = vmatpush1.msra.mxu0 0.0
        %4917 = vmatprep.subr.mxu0 0.0
        %4918 = vmatpush1.msra.mxu0 0.0
        %4919 = vmatprep.subr.mxu0 0.0
        %4920 = vmatpush1.msra.mxu0 0.0
        %4921 = vmatprep.subr.mxu0 0.0
        %4922 = vmatpush1.msra.mxu0 0.0
        %4923 = vmatprep.subr.mxu0 0.0
        %4924 = vmatpush1.msra.mxu0 0.0
        %4925 = vmatprep.subr.mxu0 0.0
        %4926 = vmatpush1.msra.mxu0 0.0
        %4927 = vmatprep.subr.mxu0 0.0
        %4928 = vmatpush1.msra.mxu0 0.0
        %4929 = vmatprep.subr.mxu0 0.0
        %4930 = vmatpush1.msra.mxu0 0.0
        %4931 = vmatprep.subr.mxu0 0.0
        %4932 = vmatpush1.msra.mxu0 0.0
        %4933 = vmatprep.subr.mxu0 0.0
        %4934 = vmatpush1.msra.mxu0 0.0
        %4935 = vmatprep.subr.mxu0 0.0
        %4936 = vmatpush1.msra.mxu0 0.0
        %4937 = vmatprep.subr.mxu0 0.0
        %4938 = vmatpush1.msra.mxu0 0.0
        %4939 = vmatprep.subr.mxu0 0.0
        %4940 = vmatpush1.msra.mxu0 0.0
        %4941 = vmatprep.subr.mxu0 0.0
        %4942 = vmatpush1.msra.mxu0 0.0
        %4943 = vmatprep.subr.mxu0 0.0
        %4944 = vmatpush1.msra.mxu0 0.0
        %4945 = vmatprep.mubr.f32.mxu0 0.0
        %4946 = vmatmul.mubr.f32.gmra.mrb[0].mxu0 %v4877
        %v4947 = vpop.f32.mrb[0].mxu0
        %v4948 = vadd.f32 0.0, %v4947
        %v4949 = vpop.f32.mrb[0].mxu0
        %4950 = vdwg.mxu0
        %4953 = vrot.lane.b32.xlu0 %v4176, 8
        %v4954 = vpop.permute.xlu0 %4953
        %4955 = vrot.lane.b32.xlu0 %v4256, 8
        %v4956 = vpop.permute.xlu0 %4955
        %4961 = vrot.lane.b32.xlu0 %v4522, 16
        %v4962 = vpop.permute.xlu0 %4961
        %4963 = vrot.lane.b32.xlu0 %v4602, 16
        %v4964 = vpop.permute.xlu0 %4963
        %4969 = vrot.lane.b32.xlu0 %v4868, 24
        %v4970 = vpop.permute.xlu0 %4969
        %4971 = vrot.lane.b32.xlu0 %v4948, 24
        %v4972 = vpop.permute.xlu0 %4971
        %v4975 = vsel %vm1776, %v3833, %v4954
        %v4976 = vsel %vm1776, %v3910, %v4956
        %v4977 = vsel %vm3125, %v4975, %v4962
        %v4978 = vsel %vm3125, %v4976, %v4964
        %v4979 = vsel %vm3128, %v4977, %v4970
        %v4980 = vsel %vm3128, %v4978, %v4972
        %v4982 = vlaneseq
        %v4983 = vshrl.u32 %v4982, 7
        %v4984 = vsub.s32 0, %v4983
        %v4985 = vrot.slane %v3298, %v4984
        %v4988 = vsel %vm1532, %v4979, 0
        %v4991 = vsel %vm1532, %v4980, 0
        %4993 = vmatprep.subr.mxu0 0.0
        %4994 = vmatpush1.msra.mxu0 %v3294
        %4995 = vmatprep.subr.mxu0 0.0
        %4996 = vmatpush1.msra.mxu0 %v3295
        %4997 = vmatprep.subr.mxu0 0.0
        %4998 = vmatpush1.msra.mxu0 %v3296
        %4999 = vmatprep.subr.mxu0 0.0
        %5000 = vmatpush1.msra.mxu0 %v3297
        %5001 = vmatprep.subr.mxu0 0.0
        %5002 = vmatpush1.msra.mxu0 0.0
        %5003 = vmatprep.subr.mxu0 0.0
        %5004 = vmatpush1.msra.mxu0 0.0
        %5005 = vmatprep.subr.mxu0 0.0
        %5006 = vmatpush1.msra.mxu0 0.0
        %5007 = vmatprep.subr.mxu0 0.0
        %5008 = vmatpush1.msra.mxu0 0.0
        %5009 = vmatprep.subr.mxu0 0.0
        %5010 = vmatpush1.msra.mxu0 0.0
        %5011 = vmatprep.subr.mxu0 0.0
        %5012 = vmatpush1.msra.mxu0 0.0
        %5013 = vmatprep.subr.mxu0 0.0
        %5014 = vmatpush1.msra.mxu0 0.0
        %5015 = vmatprep.subr.mxu0 0.0
        %5016 = vmatpush1.msra.mxu0 0.0
        %5017 = vmatprep.subr.mxu0 0.0
        %5018 = vmatpush1.msra.mxu0 0.0
        %5019 = vmatprep.subr.mxu0 0.0
        %5020 = vmatpush1.msra.mxu0 0.0
        %5021 = vmatprep.subr.mxu0 0.0
        %5022 = vmatpush1.msra.mxu0 0.0
        %5023 = vmatprep.subr.mxu0 0.0
        %5024 = vmatpush1.msra.mxu0 0.0
        %5025 = vmatprep.subr.mxu0 0.0
        %5026 = vmatpush1.msra.mxu0 0.0
        %5027 = vmatprep.subr.mxu0 0.0
        %5028 = vmatpush1.msra.mxu0 0.0
        %5029 = vmatprep.subr.mxu0 0.0
        %5030 = vmatpush1.msra.mxu0 0.0
        %5031 = vmatprep.subr.mxu0 0.0
        %5032 = vmatpush1.msra.mxu0 0.0
        %5033 = vmatprep.subr.mxu0 0.0
        %5034 = vmatpush1.msra.mxu0 0.0
        %5035 = vmatprep.subr.mxu0 0.0
        %5036 = vmatpush1.msra.mxu0 0.0
        %5037 = vmatprep.subr.mxu0 0.0
        %5038 = vmatpush1.msra.mxu0 0.0
        %5039 = vmatprep.subr.mxu0 0.0
        %5040 = vmatpush1.msra.mxu0 0.0
        %5041 = vmatprep.subr.mxu0 0.0
        %5042 = vmatpush1.msra.mxu0 0.0
        %5043 = vmatprep.subr.mxu0 0.0
        %5044 = vmatpush1.msra.mxu0 0.0
        %5045 = vmatprep.subr.mxu0 0.0
        %5046 = vmatpush1.msra.mxu0 0.0
        %5047 = vmatprep.subr.mxu0 0.0
        %5048 = vmatpush1.msra.mxu0 0.0
        %5049 = vmatprep.subr.mxu0 0.0
        %5050 = vmatpush1.msra.mxu0 0.0
        %5051 = vmatprep.subr.mxu0 0.0
        %5052 = vmatpush1.msra.mxu0 0.0
        %5053 = vmatprep.subr.mxu0 0.0
        %5054 = vmatpush1.msra.mxu0 0.0
        %5055 = vmatprep.subr.mxu0 0.0
        %5056 = vmatpush1.msra.mxu0 0.0
        %5057 = vmatprep.mubr.f32.mxu0 0.0
        %5058 = vmatmul.mubr.f32.gmra.mrb[0].mxu0 %v4988
        %v5059 = vpop.f32.mrb[0].mxu0
        %v5060 = vadd.f32 %v4985, %v5059
        %v5061 = vpop.f32.mrb[0].mxu0
        %5062 = vmatprep.mubr.f32.mxu0 0.0
        %5063 = vmatmul.mubr.f32.gmra.mrb[0].mxu0 %v4991
        %v5064 = vpop.f32.mrb[0].mxu0
        %v5065 = vadd.f32 %v4985, %v5064
        %v5066 = vpop.f32.mrb[0].mxu0
        %5067 = vdwg.mxu0
        %v5068 = vadd.f32 %v3277, %v5060
        %v5069 = vadd.f32 %v3278, %v5065
        %v5070 = vld [vmem:[%s1251] sm:$0x1]
        %v5071 = vld [vmem:[%s1259] sm:$0x1]
        %v5072 = vsel %vm1532, %v5068, 0.0
        %5073 = vadd.xlane.f32.xlu0 %v5072
        %v5074 = vpop.xlane.xlu0 %5073
        %v5075 = vsel %vm1532, %v5069, 0.0
        %5076 = vadd.xlane.f32.xlu0 %v5075
        %v5077 = vpop.xlane.xlu0 %5076
        %v5078 = vmul.f32 %v5074, %v3228
        %v5079 = vmul.f32 %v5077, %v3228
        %v5080 = vsub.f32 %v5068, %v5078
        %v5081 = vsub.f32 %v5069, %v5079
        %v5082 = vmul.f32 %v5080, %v5080
        %v5083 = vmul.f32 %v5081, %v5081
        %v5084 = vsel %vm1532, %v5082, 0.0
        %5085 = vadd.xlane.f32.xlu0 %v5084
        %v5086 = vpop.xlane.xlu0 %5085
        %v5087 = vsel %vm1532, %v5083, 0.0
        %5088 = vadd.xlane.f32.xlu0 %v5087
        %v5089 = vpop.xlane.xlu0 %5088
        %v5090 = vmul.f32 %v5086, 0.032258064
        %v5091 = vmul.f32 %v5089, 0.032258064
        %v5092 = vrsqrt.pop %v5090
        %v5093 = vmul.f32 %v5090, %v5092
        %vm5094 = vcmp.eq.f32.partialorder %v5090, inf
        %v5095 = vsel %vm5094, %v5090, %v5093
        %vm5096 = vcmp.eq.f32.partialorder %v5090, 0.0
        %v5097 = vand.u32 %v5090, 2147483648
        %v5098 = vsel %vm5096, %v5097, %v5095
        %v5099 = vrsqrt.pop %v5091
        %v5100 = vmul.f32 %v5091, %v5099
        %vm5101 = vcmp.eq.f32.partialorder %v5091, inf
        %v5102 = vsel %vm5101, %v5091, %v5100
        %vm5103 = vcmp.eq.f32.partialorder %v5091, 0.0
        %v5104 = vand.u32 %v5091, 2147483648
        %v5105 = vsel %vm5103, %v5104, %v5102
        %v5106 = vadd.f32 %v5098, 1e-06
        %v5107 = vadd.f32 %v5105, 1e-06
        %v5108 = vrcp.pop %v5106
        %v5109 = vrcp.pop %v5107
        %v5111 = vlaneseq
        %v5112 = vshrl.u32 %v5111, 7
        %v5113 = vsub.s32 0, %v5112
        %v5114 = vrot.slane %v5070, %v5113
        %v5116 = vmul.f32 %v5114, %v5080
        %v5117 = vmul.f32 %v5114, %v5081
        %v5118 = vmul.f32 %v5116, %v5108
        %v5119 = vmul.f32 %v5117, %v5109
        %v5121 = vlaneseq
        %v5122 = vshrl.u32 %v5121, 7
        %v5123 = vsub.s32 0, %v5122
        %v5124 = vrot.slane %v5071, %v5123
        %v5126 = vadd.f32 %v5118, %v5124
        %v5127 = vadd.f32 %v5119, %v5124
        %v5128 = vld [vmem:[%s1467] sm:$0xff]
        %v5129 = vld [vmem:[%s1467 + $0x8] sm:$0xff]
        %v5130 = vld [vmem:[%s1467 + $0x10] sm:$0xff]
        %v5131 = vld [vmem:[%s1467 + $0x18] sm:$0xff]
        %v5132 = vld [vmem:[%s1470] sm:$0x1]
        %v5134 = vlaneseq
        %v5135 = vshrl.u32 %v5134, 7
        %v5136 = vsub.s32 0, %v5135
        %v5137 = vrot.slane %v5132, %v5136
        %v5140 = vsel %vm1532, %v5126, 0
        %v5143 = vsel %vm1532, %v5127, 0
        %5145 = vmatprep.subr.mxu0 0.0
        %5146 = vmatpush1.msra.mxu0 %v5128
        %5147 = vmatprep.subr.mxu0 0.0
        %5148 = vmatpush1.msra.mxu0 %v5129
        %5149 = vmatprep.subr.mxu0 0.0
        %5150 = vmatpush1.msra.mxu0 %v5130
        %5151 = vmatprep.subr.mxu0 0.0
        %5152 = vmatpush1.msra.mxu0 %v5131
        %5153 = vmatprep.subr.mxu0 0.0
        %5154 = vmatpush1.msra.mxu0 0.0
        %5155 = vmatprep.subr.mxu0 0.0
        %5156 = vmatpush1.msra.mxu0 0.0
        %5157 = vmatprep.subr.mxu0 0.0
        %5158 = vmatpush1.msra.mxu0 0.0
        %5159 = vmatprep.subr.mxu0 0.0
        %5160 = vmatpush1.msra.mxu0 0.0
        %5161 = vmatprep.subr.mxu0 0.0
        %5162 = vmatpush1.msra.mxu0 0.0
        %5163 = vmatprep.subr.mxu0 0.0
        %5164 = vmatpush1.msra.mxu0 0.0
        %5165 = vmatprep.subr.mxu0 0.0
        %5166 = vmatpush1.msra.mxu0 0.0
        %5167 = vmatprep.subr.mxu0 0.0
        %5168 = vmatpush1.msra.mxu0 0.0
        %5169 = vmatprep.subr.mxu0 0.0
        %5170 = vmatpush1.msra.mxu0 0.0
        %5171 = vmatprep.subr.mxu0 0.0
        %5172 = vmatpush1.msra.mxu0 0.0
        %5173 = vmatprep.subr.mxu0 0.0
        %5174 = vmatpush1.msra.mxu0 0.0
        %5175 = vmatprep.subr.mxu0 0.0
        %5176 = vmatpush1.msra.mxu0 0.0
        %5177 = vmatprep.subr.mxu0 0.0
        %5178 = vmatpush1.msra.mxu0 0.0
        %5179 = vmatprep.subr.mxu0 0.0
        %5180 = vmatpush1.msra.mxu0 0.0
        %5181 = vmatprep.subr.mxu0 0.0
        %5182 = vmatpush1.msra.mxu0 0.0
        %5183 = vmatprep.subr.mxu0 0.0
        %5184 = vmatpush1.msra.mxu0 0.0
        %5185 = vmatprep.subr.mxu0 0.0
        %5186 = vmatpush1.msra.mxu0 0.0
        %5187 = vmatprep.subr.mxu0 0.0
        %5188 = vmatpush1.msra.mxu0 0.0
        %5189 = vmatprep.subr.mxu0 0.0
        %5190 = vmatpush1.msra.mxu0 0.0
        %5191 = vmatprep.subr.mxu0 0.0
        %5192 = vmatpush1.msra.mxu0 0.0
        %5193 = vmatprep.subr.mxu0 0.0
        %5194 = vmatpush1.msra.mxu0 0.0
        %5195 = vmatprep.subr.mxu0 0.0
        %5196 = vmatpush1.msra.mxu0 0.0
        %5197 = vmatprep.subr.mxu0 0.0
        %5198 = vmatpush1.msra.mxu0 0.0
        %5199 = vmatprep.subr.mxu0 0.0
        %5200 = vmatpush1.msra.mxu0 0.0
        %5201 = vmatprep.subr.mxu0 0.0
        %5202 = vmatpush1.msra.mxu0 0.0
        %5203 = vmatprep.subr.mxu0 0.0
        %5204 = vmatpush1.msra.mxu0 0.0
        %5205 = vmatprep.subr.mxu0 0.0
        %5206 = vmatpush1.msra.mxu0 0.0
        %5207 = vmatprep.subr.mxu0 0.0
        %5208 = vmatpush1.msra.mxu0 0.0
        %5209 = vmatprep.mubr.f32.mxu0 0.0
        %5210 = vmatmul.mubr.f32.gmra.mrb[0].mxu0 %v5140
        %v5211 = vpop.f32.mrb[0].mxu0
        %v5212 = vadd.f32 %v5137, %v5211
        %v5213 = vpop.f32.mrb[0].mxu0
        %5214 = vmatprep.mubr.f32.mxu0 0.0
        %5215 = vmatmul.mubr.f32.gmra.mrb[0].mxu0 %v5143
        %v5216 = vpop.f32.mrb[0].mxu0
        %v5217 = vadd.f32 %v5137, %v5216
        %v5218 = vpop.f32.mrb[0].mxu0
        %5219 = vdwg.mxu0
        %v5220 = vmax.f32 %v5212, 0.0
        %v5221 = vmax.f32 %v5217, 0.0
        %v5222 = vld [vmem:[%s1475] sm:$0xff]
        %v5223 = vld [vmem:[%s1475 + $0x8] sm:$0xff]
        %v5224 = vld [vmem:[%s1475 + $0x10] sm:$0xff]
        %v5225 = vld [vmem:[%s1475 + $0x18] sm:$0xff]
        %v5226 = vld [vmem:[%s1475 + $0x20] sm:$0xff]
        %v5227 = vld [vmem:[%s1475 + $0x28] sm:$0xff]
        %v5228 = vld [vmem:[%s1475 + $0x30] sm:$0xff]
        %v5229 = vld [vmem:[%s1475 + $0x38] sm:$0xff]
        %v5230 = vld [vmem:[%s1475 + $0x40] sm:$0xff]
        %v5231 = vld [vmem:[%s1475 + $0x48] sm:$0xff]
        %v5232 = vld [vmem:[%s1475 + $0x50] sm:$0xff]
        %v5233 = vld [vmem:[%s1475 + $0x58] sm:$0xff]
        %v5234 = vld [vmem:[%s1475 + $0x60] sm:$0xff]
        %v5235 = vld [vmem:[%s1475 + $0x68] sm:$0xff]
        %v5236 = vld [vmem:[%s1475 + $0x70] sm:$0xff]
        %v5237 = vld [vmem:[%s1475 + $0x78] sm:$0xff]
        %v5238 = vld [vmem:[%s1478] sm:$0x1]
        %v5240 = vlaneseq
        %v5241 = vshrl.u32 %v5240, 7
        %v5242 = vsub.s32 0, %v5241
        %v5243 = vrot.slane %v5238, %v5242
        %5245 = vmatprep.subr.mxu0 0.0
        %5246 = vmatpush1.msra.mxu0 %v5222
        %5247 = vmatprep.subr.mxu0 0.0
        %5248 = vmatpush1.msra.mxu0 %v5223
        %5249 = vmatprep.subr.mxu0 0.0
        %5250 = vmatpush1.msra.mxu0 %v5224
        %5251 = vmatprep.subr.mxu0 0.0
        %5252 = vmatpush1.msra.mxu0 %v5225
        %5253 = vmatprep.subr.mxu0 0.0
        %5254 = vmatpush1.msra.mxu0 %v5226
        %5255 = vmatprep.subr.mxu0 0.0
        %5256 = vmatpush1.msra.mxu0 %v5227
        %5257 = vmatprep.subr.mxu0 0.0
        %5258 = vmatpush1.msra.mxu0 %v5228
        %5259 = vmatprep.subr.mxu0 0.0
        %5260 = vmatpush1.msra.mxu0 %v5229
        %5261 = vmatprep.subr.mxu0 0.0
        %5262 = vmatpush1.msra.mxu0 %v5230
        %5263 = vmatprep.subr.mxu0 0.0
        %5264 = vmatpush1.msra.mxu0 %v5231
        %5265 = vmatprep.subr.mxu0 0.0
        %5266 = vmatpush1.msra.mxu0 %v5232
        %5267 = vmatprep.subr.mxu0 0.0
        %5268 = vmatpush1.msra.mxu0 %v5233
        %5269 = vmatprep.subr.mxu0 0.0
        %5270 = vmatpush1.msra.mxu0 %v5234
        %5271 = vmatprep.subr.mxu0 0.0
        %5272 = vmatpush1.msra.mxu0 %v5235
        %5273 = vmatprep.subr.mxu0 0.0
        %5274 = vmatpush1.msra.mxu0 %v5236
        %5275 = vmatprep.subr.mxu0 0.0
        %5276 = vmatpush1.msra.mxu0 %v5237
        %5277 = vmatprep.subr.mxu0 0.0
        %5278 = vmatpush1.msra.mxu0 0.0
        %5279 = vmatprep.subr.mxu0 0.0
        %5280 = vmatpush1.msra.mxu0 0.0
        %5281 = vmatprep.subr.mxu0 0.0
        %5282 = vmatpush1.msra.mxu0 0.0
        %5283 = vmatprep.subr.mxu0 0.0
        %5284 = vmatpush1.msra.mxu0 0.0
        %5285 = vmatprep.subr.mxu0 0.0
        %5286 = vmatpush1.msra.mxu0 0.0
        %5287 = vmatprep.subr.mxu0 0.0
        %5288 = vmatpush1.msra.mxu0 0.0
        %5289 = vmatprep.subr.mxu0 0.0
        %5290 = vmatpush1.msra.mxu0 0.0
        %5291 = vmatprep.subr.mxu0 0.0
        %5292 = vmatpush1.msra.mxu0 0.0
        %5293 = vmatprep.subr.mxu0 0.0
        %5294 = vmatpush1.msra.mxu0 0.0
        %5295 = vmatprep.subr.mxu0 0.0
        %5296 = vmatpush1.msra.mxu0 0.0
        %5297 = vmatprep.subr.mxu0 0.0
        %5298 = vmatpush1.msra.mxu0 0.0
        %5299 = vmatprep.subr.mxu0 0.0
        %5300 = vmatpush1.msra.mxu0 0.0
        %5301 = vmatprep.subr.mxu0 0.0
        %5302 = vmatpush1.msra.mxu0 0.0
        %5303 = vmatprep.subr.mxu0 0.0
        %5304 = vmatpush1.msra.mxu0 0.0
        %5305 = vmatprep.subr.mxu0 0.0
        %5306 = vmatpush1.msra.mxu0 0.0
        %5307 = vmatprep.subr.mxu0 0.0
        %5308 = vmatpush1.msra.mxu0 0.0
        %5309 = vmatprep.mubr.f32.mxu0 0.0
        %5310 = vmatmul.mubr.f32.gmra.mrb[0].mxu0 %v5220
        %v5311 = vpop.f32.mrb[0].mxu0
        %v5312 = vadd.f32 %v5243, %v5311
        %v5313 = vpop.f32.mrb[0].mxu0
        %5314 = vmatprep.mubr.f32.mxu0 0.0
        %5315 = vmatmul.mubr.f32.gmra.mrb[0].mxu0 %v5221
        %v5316 = vpop.f32.mrb[0].mxu0
        %v5317 = vadd.f32 %v5243, %v5316
        %v5318 = vpop.f32.mrb[0].mxu0
        %5319 = vdwg.mxu0
        %v5320 = vadd.f32 %v5126, %v5312
        %v5321 = vadd.f32 %v5127, %v5317
        %v5322 = vsel %vm1532, %v5320, 0.0
        %5323 = vadd.xlane.f32.xlu0 %v5322
        %v5324 = vpop.xlane.xlu0 %5323
        %v5325 = vsel %vm1532, %v5321, 0.0
        %5326 = vadd.xlane.f32.xlu0 %v5325
        %v5327 = vpop.xlane.xlu0 %5326
        %v5328 = vmul.f32 %v5324, %v3228
        %v5329 = vmul.f32 %v5327, %v3228
        %v5330 = vsub.f32 %v5320, %v5328
        %v5331 = vsub.f32 %v5321, %v5329
        %v5332 = vmul.f32 %v5330, %v5330
        %v5333 = vmul.f32 %v5331, %v5331
        %v5334 = vsel %vm1532, %v5332, 0.0
        %5335 = vadd.xlane.f32.xlu0 %v5334
        %v5336 = vpop.xlane.xlu0 %5335
        %v5337 = vsel %vm1532, %v5333, 0.0
        %5338 = vadd.xlane.f32.xlu0 %v5337
        %v5339 = vpop.xlane.xlu0 %5338
        %v5340 = vmul.f32 %v5336, 0.032258064
        %v5341 = vmul.f32 %v5339, 0.032258064
        %v5342 = vrsqrt.pop %v5340
        %v5343 = vmul.f32 %v5340, %v5342
        %vm5344 = vcmp.eq.f32.partialorder %v5340, inf
        %v5345 = vsel %vm5344, %v5340, %v5343
        %vm5346 = vcmp.eq.f32.partialorder %v5340, 0.0
        %v5347 = vand.u32 %v5340, 2147483648
        %v5348 = vsel %vm5346, %v5347, %v5345
        %v5349 = vrsqrt.pop %v5341
        %v5350 = vmul.f32 %v5341, %v5349
        %vm5351 = vcmp.eq.f32.partialorder %v5341, inf
        %v5352 = vsel %vm5351, %v5341, %v5350
        %vm5353 = vcmp.eq.f32.partialorder %v5341, 0.0
        %v5354 = vand.u32 %v5341, 2147483648
        %v5355 = vsel %vm5353, %v5354, %v5352
        %v5356 = vadd.f32 %v5348, 1e-06
        %v5357 = vadd.f32 %v5355, 1e-06
        %v5358 = vrcp.pop %v5356
        %v5359 = vrcp.pop %v5357
        %v5360 = vmul.f32 %v5114, %v5330
        %v5361 = vmul.f32 %v5114, %v5331
        %v5362 = vmul.f32 %v5360, %v5358
        %v5363 = vmul.f32 %v5361, %v5359
        %v5364 = vadd.f32 %v5362, %v5124
        %v5365 = vadd.f32 %v5363, %v5124
        %5366 = vst.msk [vmem:[#allocation26] sm:$0xff] %vm1532, %v5364
        %5367 = vst.msk [vmem:[#allocation26 + $0x8] sm:$0xff] %vm1532, %v5365
        // Predicated region
        $region189: #{tpu_custom_call.1} parent=123 // pred_check
          %p5368 = pneg %p766
        $region190: #{tpu_custom_call.1} parent=123 // pred_check_branch
          %5370 = sbr.rel (%p5368) target = $region192
        $region191: #{tpu_custom_call.1} parent=123 // pred_region
          %s5371 = smul.u32 2, %s64
          %s5373 = ssub.s32 256, 256
          %5374 = vsyncadd [#allocation4], %s5373
          %s5375 = smul.addr %s5371, 128
          %s5376 = scalar_lea.hbm %s26, %s5375
          %s5377 = sshll.u32 [#allocation26], 4
          %s5378 = int_to_ptr.vmem [resolvable:$true] %s5377
          %5383 = dma.vmem_to_hbm [thread:$0]  %s5378, 256, %s5376, [#allocation4], 128, 128, 8
        $region192: #{tpu_custom_call.1} parent=123 // pred_fallthru
          _
        // Predicated region
        $region193: #{tpu_custom_call.1} parent=123 // pred_check
          %p5384 = pneg %p766
        $region194: #{tpu_custom_call.1} parent=123 // pred_check_branch
          %5386 = sbr.rel (%p5384) target = $region196
        $region195: #{tpu_custom_call.1} parent=123 // pred_region
          %5387 = dma.done [#allocation4], 256
        $region196: #{tpu_custom_call.1} parent=123 // pred_fallthru
          _
      $region124: #{tpu_custom_call.1} parent=5 // pred_fallthru
        _
      %p5388 = scmp.le.s32.totalorder 2, %s55
      // Predicated region
      $region197: #{tpu_custom_call.1} parent=5 // pred_check
        %p5389 = pneg %p5388
      $region198: #{tpu_custom_call.1} parent=5 // pred_check_branch
        %5391 = sbr.rel (%p5389) target = $region200
      $region199: #{tpu_custom_call.1} parent=5 // pred_region
        %s5392 = ssub.s32 %s55, 2
      $region200: #{tpu_custom_call.1} parent=5 // pred_fallthru
        _
    $region6: #{tpu_custom_call.1} parent=1 // loop_footer
      %s59 = sadd.s32 1, %s55
    $region7: #{tpu_custom_call.1} parent=1 // loop_footer_branch
      %54 = sbr.rel target = $region3
    $region8: #{tpu_custom_call.1} parent=1 // loop_exit
      _
    %5393 = vsyncpa [#allocation3], 1
    %s5394 = scalar_lea.sflag [#allocation3], 1
    %5395 = vsyncpa %s5394, 1
    %5396 = vsyncpa [#allocation6], 1
    %s5397 = scalar_lea.sflag [#allocation6], 1
    %5398 = vsyncpa %s5397, 1
    %5399 = vsyncpa [#allocation9], 1
    %s5400 = scalar_lea.sflag [#allocation9], 1
    %5401 = vsyncpa %s5400, 1
    %5402 = vsyncpa [#allocation12], 1
    %s5403 = scalar_lea.sflag [#allocation12], 1
    %5404 = vsyncpa %s5403, 1
    %5405 = vsyncpa [#allocation15], 1
    %s5406 = scalar_lea.sflag [#allocation15], 1
    %5407 = vsyncpa %s5406, 1
    %5408 = vsyncpa [#allocation18], 1
    %s5409 = scalar_lea.sflag [#allocation18], 1
    %5410 = vsyncpa %s5409, 1
    %5411 = vsyncpa [#allocation21], 1
    %s5412 = scalar_lea.sflag [#allocation21], 1
    %5413 = vsyncpa %s5412, 1
    %5414 = vsyncpa [#allocation24], 1
    %s5415 = scalar_lea.sflag [#allocation24], 1
    %5416 = vsyncpa %s5415, 1
    %5417 = vsyncpa [#allocation4], 1
    %s5418 = scalar_lea.sflag [#allocation4], 1
    %5419 = vsyncpa %s5418, 1

</llo_original>
